<compile_context>
chip_gen: v6e
topology: v6e:2x2x1
jax: 0.10.0
libtpu: 0.0.40
codegen_flags: <defaults>
</compile_context>

<pallas_src>
import functools

import jax
import jax.numpy as jnp
from jax.experimental import pallas as pl
from jax.experimental.pallas import tpu as pltpu

# Problem sizes (static).
I_DIM = 28      # RNN input size
H_DIM = 128     # RNN hidden size
C_DIM = 10      # FC classes
C_PAD = 128     # lane-dense padded output width
B_PAD = 8       # batch padded to one sublane group

# Weight-slab row offsets (all section starts are multiples of 8 sublanes).
ROW_WIH = 0          # rows [0, 28):    W_ih^T                  (I, H)
ROW_B2 = 32          # row  32:         b_ih + b_hh             (1, H)
ROW_WHH = 40         # rows [40, 168):  W_hh^T                  (H, H)
ROW_WFC = 168        # rows [168, 296): W_fc^T, cols padded     (H, C_PAD)
ROW_BFC = 296        # row  296:        b_fc,  cols padded      (1, C_PAD)
SLAB_ROWS = 304      # multiple of 8

_HIGHEST = jax.lax.Precision.HIGHEST


def rnn_kernel(x_ref, w_ref, out_ref, *, T, B):
    """x_ref: (T*B, I) time-major inputs; w_ref: (SLAB_ROWS, 128) packed
    weights; out_ref: (B, C_PAD) lane-dense logits."""
    # Batched input projection for ALL timesteps in a single MXU call, with the
    # fused RNN bias (b_ih + b_hh) added once -- all off the serial path.
    wih = w_ref[ROW_WIH:ROW_WIH + I_DIM, :]              # (I, H)
    b2 = w_ref[ROW_B2:ROW_B2 + 1, :]                     # (1, H)
    xproj = jnp.dot(x_ref[...], wih,
                    preferred_element_type=jnp.float32,
                    precision=_HIGHEST) + b2             # (T*B, H)

    whh = w_ref[ROW_WHH:ROW_WHH + H_DIM, :]              # (H, H), vreg-resident
    h = jnp.zeros((B, H_DIM), jnp.float32)               # h_0 = 0 (torch hx=None)

    # Unrolled tanh recurrence (T small & static).  With B == 8 each slice
    # xproj[t*B:(t+1)*B, :] is exactly one (8,128) vreg (zero-cost view), so
    # the per-step serial chain is just h @ W_hh^T (MXU) + add + tanh (EUP).
    for t in range(T):
        h = jnp.tanh(xproj[t * B:(t + 1) * B, :]
                     + jnp.dot(h, whh,
                               preferred_element_type=jnp.float32,
                               precision=_HIGHEST))

    # Lane-dense FC: (B, H) @ (H, C_PAD) + b_fc -> unmasked (8,128) store.
    wfc = w_ref[ROW_WFC:ROW_WFC + H_DIM, :]              # (H, C_PAD)
    bfc = w_ref[ROW_BFC:ROW_BFC + 1, :]                  # (1, C_PAD)
    out_ref[...] = (jnp.dot(h, wfc,
                            preferred_element_type=jnp.float32,
                            precision=_HIGHEST) + bfc).astype(out_ref.dtype)


def prepare_rnn_params(w_ih, w_hh, b_ih, b_hh, w_fc, b_fc):
    """One-time weight layout (parameter-load time, NOT per forward call):
    transpose to row-major (K, N), fuse the two RNN biases, pad the FC to 128
    lanes and pack everything into a single (SLAB_ROWS, 128) f32 slab so the
    kernel needs exactly one weight DMA."""
    H, I = w_ih.shape
    C = w_fc.shape[0]
    assert (I, H, C) == (I_DIM, H_DIM, C_DIM)
    slab = jnp.zeros((SLAB_ROWS, H_DIM), jnp.float32)
    slab = slab.at[ROW_WIH:ROW_WIH + I, :].set(w_ih.T.astype(jnp.float32))
    slab = slab.at[ROW_B2, :].set((b_ih + b_hh).astype(jnp.float32))
    slab = slab.at[ROW_WHH:ROW_WHH + H, :].set(w_hh.T.astype(jnp.float32))
    slab = slab.at[ROW_WFC:ROW_WFC + H, :C].set(w_fc.T.astype(jnp.float32))
    slab = slab.at[ROW_BFC, :C].set(b_fc.astype(jnp.float32))
    return slab


def rnn_net_forward(x, slab):
    """x: (B, T, I) float32; slab: output of prepare_rnn_params().
    Returns logits (B, C_DIM)."""
    B, T, I = x.shape
    assert I == I_DIM and B <= B_PAD
    assert slab.shape == (SLAB_ROWS, H_DIM)

    # Per-call input layout: time-major + batch padded to one sublane group so
    # the kernel's per-step slices are vreg-aligned (~7 KB of layout plumbing).
    x_tm = jnp.transpose(x, (1, 0, 2)).astype(jnp.float32)    # (T, B, I)
    x_tm = jnp.pad(x_tm, ((0, 0), (0, B_PAD - B), (0, 0)))    # (T, B_PAD, I)
    x_flat = x_tm.reshape(T * B_PAD, I)

    kernel = functools.partial(rnn_kernel, T=T, B=B_PAD)

    out_pad = pl.pallas_call(
        kernel,
        out_shape=jax.ShapeDtypeStruct((B_PAD, C_PAD), jnp.float32),
        grid_spec=pltpu.PrefetchScalarGridSpec(
            num_scalar_prefetch=0,
            grid=(1,),                                        # single invocation
            in_specs=[
                pl.BlockSpec((T * B_PAD, I_DIM), lambda i: (0, 0)),  # x: 1 DMA
                pl.BlockSpec((SLAB_ROWS, H_DIM), lambda i: (0, 0)),  # weights: 1 DMA
            ],
            out_specs=pl.BlockSpec((B_PAD, C_PAD), lambda i: (0, 0)),
        ),
        compiler_params=pltpu.CompilerParams(
            dimension_semantics=("arbitrary",)),
        # TODO(synk): for production batches on v7x, add a batch grid axis
        # marked "parallel" so both TensorCores run; at B=2 one point is right.
    )(x_flat, slab)

    return out_pad[:B, :C_DIM]


def rnn_net_reference(x, w_ih, w_hh, b_ih, b_hh, w_fc, b_fc):
    """Pure-JAX f32 reference matching torch.nn.RNN(batch_first) + Linear,
    with matmul precision pinned so the check is deterministic."""
    B, T, I = x.shape
    H = w_ih.shape[0]
    h0 = jnp.zeros((B, H), jnp.float32)

    def step(h, x_t):
        h = jnp.tanh(jnp.dot(x_t, w_ih.T, precision=_HIGHEST) + b_ih
                     + jnp.dot(h, w_hh.T, precision=_HIGHEST) + b_hh)
        return h, None

    h_T, _ = jax.lax.scan(step, h0, jnp.transpose(x, (1, 0, 2)))
    return jnp.dot(h_T, w_fc.T, precision=_HIGHEST) + b_fc


if __name__ == "__main__":
    B, T, I, H, C = 2, 8, 28, 128, 10

    key = jax.random.PRNGKey(0)
    k = jax.random.split(key, 7)
    s_rnn = 1.0 / jnp.sqrt(H)
    s_fc = 1.0 / jnp.sqrt(H)

    x = jax.random.normal(k[0], (B, T, I), jnp.float32)
    w_ih = jax.random.uniform(k[1], (H, I), jnp.float32, -s_rnn, s_rnn)
    w_hh = jax.random.uniform(k[2], (H, H), jnp.float32, -s_rnn, s_rnn)
    b_ih = jax.random.uniform(k[3], (H,), jnp.float32, -s_rnn, s_rnn)
    b_hh = jax.random.uniform(k[4], (H,), jnp.float32, -s_rnn, s_rnn)
    w_fc = jax.random.uniform(k[5], (C, H), jnp.float32, -s_fc, s_fc)
    b_fc = jax.random.uniform(k[6], (C,), jnp.float32, -s_fc, s_fc)

    # One-time weight layout (parameter-load time).
    slab = jax.block_until_ready(
        prepare_rnn_params(w_ih, w_hh, b_ih, b_hh, w_fc, b_fc))

    out = rnn_net_forward(x, slab)
    out = jax.block_until_ready(out)

    ref = rnn_net_reference(x, w_ih, w_hh, b_ih, b_hh, w_fc, b_fc)
    assert out.shape == (B, C)
    assert jnp.allclose(out, ref, atol=1e-4, rtol=1e-4), (out, ref)

    print("KERNEL_OK")
</pallas_src>

<mosaic_0001>
module attributes {stable_mosaic.version = 11 : i64} {
  func.func @rnn_kernel(%arg0: i32, %arg1: memref<64x28xf32, #tpu.memory_space<vmem>>, %arg2: memref<304x128xf32, #tpu.memory_space<vmem>>, %arg3: memref<8x128xf32, #tpu.memory_space<vmem>>) attributes {dimension_semantics = [#tpu.dimension_semantics<arbitrary>], iteration_bounds = array<i64: 1>, scalar_prefetch = 0 : i64, scratch_operands = 0 : i64, tpu.core_type = #tpu.core_type<tc>, window_params = [{pipeline_mode = #tpu.pipeline_mode<synchronous>, transform_indices = @transform_0, window_bounds = array<i64: 64, 28>}, {pipeline_mode = #tpu.pipeline_mode<synchronous>, transform_indices = @transform_1, window_bounds = array<i64: 304, 128>}, {pipeline_mode = #tpu.pipeline_mode<synchronous>, transform_indices = @transform_2, window_bounds = array<i64: 8, 128>}]} {
    %c0 = arith.constant 0 : index
    %c0_0 = arith.constant 0 : index
    %0 = vector.load %arg2[%c0, %c0_0] : memref<304x128xf32, #tpu.memory_space<vmem>>, vector<28x128xf32>
    %c32 = arith.constant 32 : index
    %c0_1 = arith.constant 0 : index
    %1 = vector.load %arg2[%c32, %c0_1] : memref<304x128xf32, #tpu.memory_space<vmem>>, vector<1x128xf32>
    %c0_2 = arith.constant 0 : index
    %c0_3 = arith.constant 0 : index
    %2 = vector.load %arg1[%c0_2, %c0_3] : memref<64x28xf32, #tpu.memory_space<vmem>>, vector<64x28xf32>
    %cst = arith.constant dense<0.000000e+00> : vector<64x128xf32>
    %3 = tpu.matmul %2, %0, %cst {dimension_numbers = #tpu.dot_dimension_numbers<[1], [0], [0], [1], [0, 0, 1, 1], [], []>, precision = #tpu.contract_precision<fp32>} : vector<64x28xf32>, vector<28x128xf32>, vector<64x128xf32> -> vector<64x128xf32>
    %4 = vector.broadcast %1 : vector<1x128xf32> to vector<64x128xf32>
    %5 = arith.addf %3, %4 : vector<64x128xf32>
    %c40 = arith.constant 40 : index
    %c0_4 = arith.constant 0 : index
    %6 = vector.load %arg2[%c40, %c0_4] : memref<304x128xf32, #tpu.memory_space<vmem>>, vector<128x128xf32>
    %cst_5 = arith.constant 0.000000e+00 : f32
    %7 = vector.broadcast %cst_5 : f32 to vector<8x128xf32>
    %8 = vector.extract_strided_slice %5 {offsets = [0, 0], sizes = [8, 128], strides = [1, 1]} : vector<64x128xf32> to vector<8x128xf32>
    %cst_6 = arith.constant dense<0.000000e+00> : vector<8x128xf32>
    %9 = tpu.matmul %7, %6, %cst_6 {dimension_numbers = #tpu.dot_dimension_numbers<[1], [0], [0], [1], [0, 0, 1, 1], [], []>, precision = #tpu.contract_precision<fp32>} : vector<8x128xf32>, vector<128x128xf32>, vector<8x128xf32> -> vector<8x128xf32>
    %10 = arith.addf %8, %9 : vector<8x128xf32>
    %11 = math.tanh %10 : vector<8x128xf32>
    %12 = vector.extract_strided_slice %5 {offsets = [8, 0], sizes = [8, 128], strides = [1, 1]} : vector<64x128xf32> to vector<8x128xf32>
    %cst_7 = arith.constant dense<0.000000e+00> : vector<8x128xf32>
    %13 = tpu.matmul %11, %6, %cst_7 {dimension_numbers = #tpu.dot_dimension_numbers<[1], [0], [0], [1], [0, 0, 1, 1], [], []>, precision = #tpu.contract_precision<fp32>} : vector<8x128xf32>, vector<128x128xf32>, vector<8x128xf32> -> vector<8x128xf32>
    %14 = arith.addf %12, %13 : vector<8x128xf32>
    %15 = math.tanh %14 : vector<8x128xf32>
    %16 = vector.extract_strided_slice %5 {offsets = [16, 0], sizes = [8, 128], strides = [1, 1]} : vector<64x128xf32> to vector<8x128xf32>
    %cst_8 = arith.constant dense<0.000000e+00> : vector<8x128xf32>
    %17 = tpu.matmul %15, %6, %cst_8 {dimension_numbers = #tpu.dot_dimension_numbers<[1], [0], [0], [1], [0, 0, 1, 1], [], []>, precision = #tpu.contract_precision<fp32>} : vector<8x128xf32>, vector<128x128xf32>, vector<8x128xf32> -> vector<8x128xf32>
    %18 = arith.addf %16, %17 : vector<8x128xf32>
    %19 = math.tanh %18 : vector<8x128xf32>
    %20 = vector.extract_strided_slice %5 {offsets = [24, 0], sizes = [8, 128], strides = [1, 1]} : vector<64x128xf32> to vector<8x128xf32>
    %cst_9 = arith.constant dense<0.000000e+00> : vector<8x128xf32>
    %21 = tpu.matmul %19, %6, %cst_9 {dimension_numbers = #tpu.dot_dimension_numbers<[1], [0], [0], [1], [0, 0, 1, 1], [], []>, precision = #tpu.contract_precision<fp32>} : vector<8x128xf32>, vector<128x128xf32>, vector<8x128xf32> -> vector<8x128xf32>
    %22 = arith.addf %20, %21 : vector<8x128xf32>
    %23 = math.tanh %22 : vector<8x128xf32>
    %24 = vector.extract_strided_slice %5 {offsets = [32, 0], sizes = [8, 128], strides = [1, 1]} : vector<64x128xf32> to vector<8x128xf32>
    %cst_10 = arith.constant dense<0.000000e+00> : vector<8x128xf32>
    %25 = tpu.matmul %23, %6, %cst_10 {dimension_numbers = #tpu.dot_dimension_numbers<[1], [0], [0], [1], [0, 0, 1, 1], [], []>, precision = #tpu.contract_precision<fp32>} : vector<8x128xf32>, vector<128x128xf32>, vector<8x128xf32> -> vector<8x128xf32>
    %26 = arith.addf %24, %25 : vector<8x128xf32>
    %27 = math.tanh %26 : vector<8x128xf32>
    %28 = vector.extract_strided_slice %5 {offsets = [40, 0], sizes = [8, 128], strides = [1, 1]} : vector<64x128xf32> to vector<8x128xf32>
    %cst_11 = arith.constant dense<0.000000e+00> : vector<8x128xf32>
    %29 = tpu.matmul %27, %6, %cst_11 {dimension_numbers = #tpu.dot_dimension_numbers<[1], [0], [0], [1], [0, 0, 1, 1], [], []>, precision = #tpu.contract_precision<fp32>} : vector<8x128xf32>, vector<128x128xf32>, vector<8x128xf32> -> vector<8x128xf32>
    %30 = arith.addf %28, %29 : vector<8x128xf32>
    %31 = math.tanh %30 : vector<8x128xf32>
    %32 = vector.extract_strided_slice %5 {offsets = [48, 0], sizes = [8, 128], strides = [1, 1]} : vector<64x128xf32> to vector<8x128xf32>
    %cst_12 = arith.constant dense<0.000000e+00> : vector<8x128xf32>
    %33 = tpu.matmul %31, %6, %cst_12 {dimension_numbers = #tpu.dot_dimension_numbers<[1], [0], [0], [1], [0, 0, 1, 1], [], []>, precision = #tpu.contract_precision<fp32>} : vector<8x128xf32>, vector<128x128xf32>, vector<8x128xf32> -> vector<8x128xf32>
    %34 = arith.addf %32, %33 : vector<8x128xf32>
    %35 = math.tanh %34 : vector<8x128xf32>
    %36 = vector.extract_strided_slice %5 {offsets = [56, 0], sizes = [8, 128], strides = [1, 1]} : vector<64x128xf32> to vector<8x128xf32>
    %cst_13 = arith.constant dense<0.000000e+00> : vector<8x128xf32>
    %37 = tpu.matmul %35, %6, %cst_13 {dimension_numbers = #tpu.dot_dimension_numbers<[1], [0], [0], [1], [0, 0, 1, 1], [], []>, precision = #tpu.contract_precision<fp32>} : vector<8x128xf32>, vector<128x128xf32>, vector<8x128xf32> -> vector<8x128xf32>
    %38 = arith.addf %36, %37 : vector<8x128xf32>
    %39 = math.tanh %38 : vector<8x128xf32>
    %c168 = arith.constant 168 : index
    %c0_14 = arith.constant 0 : index
    %40 = vector.load %arg2[%c168, %c0_14] : memref<304x128xf32, #tpu.memory_space<vmem>>, vector<128x128xf32>
    %c296 = arith.constant 296 : index
    %c0_15 = arith.constant 0 : index
    %41 = vector.load %arg2[%c296, %c0_15] : memref<304x128xf32, #tpu.memory_space<vmem>>, vector<1x128xf32>
    %cst_16 = arith.constant dense<0.000000e+00> : vector<8x128xf32>
    %42 = tpu.matmul %39, %40, %cst_16 {dimension_numbers = #tpu.dot_dimension_numbers<[1], [0], [0], [1], [0, 0, 1, 1], [], []>, precision = #tpu.contract_precision<fp32>} : vector<8x128xf32>, vector<128x128xf32>, vector<8x128xf32> -> vector<8x128xf32>
    %43 = vector.broadcast %41 : vector<1x128xf32> to vector<8x128xf32>
    %44 = arith.addf %42, %43 : vector<8x128xf32>
    %c0_17 = arith.constant 0 : index
    %c0_18 = arith.constant 0 : index
    %45 = vector.load %arg3[%c0_17, %c0_18] : memref<8x128xf32, #tpu.memory_space<vmem>>, vector<8x128xf32>
    tpu.vector_store %arg3[%c0_17, %c0_18], %44 {strides = array<i32>} : memref<8x128xf32, #tpu.memory_space<vmem>>, vector<8x128xf32>,
    return
  }
  func.func @transform_0(%arg0: i32) -> (i32, i32) {
    %c0_i32 = arith.constant 0 : i32
    %c0_i32_0 = arith.constant 0 : i32
    %c0_i32_1 = arith.constant 0 : i32
    return %c0_i32, %c0_i32_0 : i32, i32
  }
  func.func @transform_1(%arg0: i32) -> (i32, i32) {
    %c0_i32 = arith.constant 0 : i32
    %c0_i32_0 = arith.constant 0 : i32
    %c0_i32_1 = arith.constant 0 : i32
    return %c0_i32, %c0_i32_0 : i32, i32
  }
  func.func @transform_2(%arg0: i32) -> (i32, i32) {
    %c0_i32 = arith.constant 0 : i32
    %c0_i32_0 = arith.constant 0 : i32
    %c0_i32_1 = arith.constant 0 : i32
    return %c0_i32, %c0_i32_0 : i32, i32
  }
}

</mosaic_0001>

<llo_original>
// kernel: tpu_custom_call.1
$region0: #{tpu_custom_call.1}
  #allocation0 [shape = 'u32[]', space=smem, size = 0x4, offset = 0x4, fixed_abs, tag = 'smem constant byte address 0x4 - core index']
  #allocation1 [shape = 'u32[144,128]{1,0:T(1,128)}', space=vmem, size = 0x12000, scoped, tag = 'internal scratch']
  %s0 = inlined_call_operand.vmem [shape: f32[64,28], index: 0, kind: input, shape index: {}]
  %s1 = inlined_call_operand.hbm [shape: f32[304,128], index: 1, kind: input, shape index: {}]
  %s2 = inlined_call_operand.hbm [shape: f32[8,128], index: 2, kind: output, shape index: {}]
  %s3 = sld [smem:[#allocation0]]
  $region22: #{tpu_custom_call.1} parent=0
    _
  %s5 = ssub.s32 1, %s3
  %s6 = scalar_select 0, %s5, %s3
  $region1: #{tpu_custom_call.1} parent=0
    #allocation2 [shape = 'u8[155648]{0}', space=vmem, size = 0x26000, scoped, tag = 'input window, operand 1, single buffered']
    #allocation3 [shape = 's32[1]{0}', space=sflag, size = 0x4, scoped, tag = 'scoped memory for tpu_custom_call.1']
    #allocation4 [shape = 's32[1]{0}', space=sflag, size = 0x4, scoped, tag = 'scoped memory for tpu_custom_call.1']
    #allocation5 [shape = 'u8[4096]{0}', space=vmem, size = 0x1000, scoped, tag = 'output window, operand 0, single buffered']
    %7 = vsyncpa [#allocation3], 0
    %8 = vsyncpa [#allocation4], 0
    // Predicated region
    $region2: #{tpu_custom_call.1} parent=1 // pred_check
      _
    $region3: #{tpu_custom_call.1} parent=1 // pred_check_branch
      %10 = sbr.rel (0) target = $region5
    $region4: #{tpu_custom_call.1} parent=1 // pred_region
      _
    $region5: #{tpu_custom_call.1} parent=1 // pred_fallthru
      _
    // Predicated region
    $region6: #{tpu_custom_call.1} parent=1 // pred_check
      _
    $region7: #{tpu_custom_call.1} parent=1 // pred_check_branch
      %12 = sbr.rel (0) target = $region9
    $region8: #{tpu_custom_call.1} parent=1 // pred_region
      %s14 = ssub.s32 4864, 4864
      %15 = vsyncadd [#allocation3], %s14
      %s16 = sshll.u32 [#allocation2], 4
      %s17 = int_to_ptr.vmem [resolvable:$true] %s16
      %22 = dma.hbm_to_vmem [thread:$0]  %s1, 4864, %s17, [#allocation3], 128, 128, 8
    $region9: #{tpu_custom_call.1} parent=1 // pred_fallthru
      _
    // Predicated region
    $region10: #{tpu_custom_call.1} parent=1 // pred_check
      _
    $region11: #{tpu_custom_call.1} parent=1 // pred_check_branch
      %24 = sbr.rel (0) target = $region13
    $region12: #{tpu_custom_call.1} parent=1 // pred_region
      %25 = dma.done [#allocation3], 4864
    $region13: #{tpu_custom_call.1} parent=1 // pred_fallthru
      _
    %v26 = vld [vmem:[#allocation2] sm:$0xff]
    %v27 = vld [vmem:[#allocation2 + $0x8] sm:$0xff]
    %v28 = vld [vmem:[#allocation2 + $0x10] sm:$0xff]
    %v29 = vld [vmem:[#allocation2 + $0x18] sm:$0xf]
    %v30 = vld [vmem:[#allocation2 + $0x20] sm:$0x1]
    %v31 = vld [vmem:[%s0] sm:$0xff]
    %v32 = vld [vmem:[%s0 + $0x8] sm:$0xff]
    %v33 = vld [vmem:[%s0 + $0x10] sm:$0xff]
    %v34 = vld [vmem:[%s0 + $0x18] sm:$0xff]
    %v35 = vld [vmem:[%s0 + $0x20] sm:$0xff]
    %v36 = vld [vmem:[%s0 + $0x28] sm:$0xff]
    %v37 = vld [vmem:[%s0 + $0x30] sm:$0xff]
    %v38 = vld [vmem:[%s0 + $0x38] sm:$0xff]
    %v39 = vlaneseq
    %v40 = vshrl.u32 %v39, 7
    %v41 = vsub.s32 0, %v40
    %v42 = vrot.slane %v30, %v41
    %vm43 = vcmask 228352
    %v45 = vsel %vm43, %v31, 0
    %v48 = vsel %vm43, %v32, 0
    %v51 = vsel %vm43, %v33, 0
    %v54 = vsel %vm43, %v34, 0
    %v57 = vsel %vm43, %v35, 0
    %v60 = vsel %vm43, %v36, 0
    %v63 = vsel %vm43, %v37, 0
    %v66 = vsel %vm43, %v38, 0
    %vm68 = vcmask 1043456
    %v70 = vsel %vm68, %v29, 0
    %72 = vmatprep.subr.mxu0 0.0
    %73 = vmatpush1.msra.mxu0 0.0
    %74 = vmatprep.subr.mxu0 0.0
    %75 = vmatpush1.msra.mxu0 0.0
    %76 = vmatprep.subr.mxu0 0.0
    %77 = vmatpush1.msra.mxu0 0.0
    %78 = vmatprep.subr.mxu0 0.0
    %79 = vmatpush1.msra.mxu0 0.0
    %80 = vmatprep.subr.mxu0 0.0
    %81 = vmatpush1.msra.mxu0 0.0
    %82 = vmatprep.subr.mxu0 0.0
    %83 = vmatpush1.msra.mxu0 0.0
    %84 = vmatprep.subr.mxu0 0.0
    %85 = vmatpush1.msra.mxu0 0.0
    %86 = vmatprep.subr.mxu0 0.0
    %87 = vmatpush1.msra.mxu0 0.0
    %88 = vmatprep.subr.mxu0 0.0
    %89 = vmatpush1.msra.mxu0 0.0
    %90 = vmatprep.subr.mxu0 0.0
    %91 = vmatpush1.msra.mxu0 0.0
    %92 = vmatprep.subr.mxu0 0.0
    %93 = vmatpush1.msra.mxu0 0.0
    %94 = vmatprep.subr.mxu0 0.0
    %95 = vmatpush1.msra.mxu0 0.0
    %96 = vmatprep.subr.mxu0 0.0
    %v97 = vand.u32 %v70, 4294901760
    %98 = vmatpush1.msra.mxu0 %v97
    %99 = vmatprep.subr.mxu0 0.0
    %v100 = vand.u32 %v28, 4294901760
    %101 = vmatpush1.msra.mxu0 %v100
    %102 = vmatprep.subr.mxu0 0.0
    %v103 = vand.u32 %v27, 4294901760
    %104 = vmatpush1.msra.mxu0 %v103
    %105 = vmatprep.subr.mxu0 0.0
    %v106 = vand.u32 %v26, 4294901760
    %107 = vmatpush1.msra.mxu0 %v106
    %108 = vmatprep.subr.mxu0 0.0
    %109 = vmatpush2.msra.mxu0 0.0
    %110 = vmatprep.subr.mxu0 0.0
    %111 = vmatpush2.msra.mxu0 0.0
    %112 = vmatprep.subr.mxu0 0.0
    %113 = vmatpush2.msra.mxu0 0.0
    %114 = vmatprep.subr.mxu0 0.0
    %115 = vmatpush2.msra.mxu0 0.0
    %116 = vmatprep.subr.mxu0 0.0
    %117 = vmatpush2.msra.mxu0 0.0
    %118 = vmatprep.subr.mxu0 0.0
    %119 = vmatpush2.msra.mxu0 0.0
    %120 = vmatprep.subr.mxu0 0.0
    %121 = vmatpush2.msra.mxu0 0.0
    %122 = vmatprep.subr.mxu0 0.0
    %123 = vmatpush2.msra.mxu0 0.0
    %124 = vmatprep.subr.mxu0 0.0
    %125 = vmatpush2.msra.mxu0 0.0
    %126 = vmatprep.subr.mxu0 0.0
    %127 = vmatpush2.msra.mxu0 0.0
    %128 = vmatprep.subr.mxu0 0.0
    %129 = vmatpush2.msra.mxu0 0.0
    %130 = vmatprep.subr.mxu0 0.0
    %131 = vmatpush2.msra.mxu0 0.0
    %132 = vmatprep.subr.mxu0 0.0
    %133 = vmatpush2.msra.mxu0 0.0
    %134 = vmatprep.subr.mxu0 0.0
    %135 = vmatpush2.msra.mxu0 0.0
    %136 = vmatprep.subr.mxu0 0.0
    %137 = vmatpush2.msra.mxu0 0.0
    %138 = vmatprep.subr.mxu0 0.0
    %139 = vmatpush2.msra.mxu0 0.0
    %140 = vmatprep.mubr.f32.mxu0 0.0
    %v141 = vand.u32 %v45, 4294901760
    %v142 = vsub.f32 %v45, %v141
    %v143 = vand.u32 %v142, 4294901760
    %v144 = vsub.f32 %v142, %v143
    %v145 = vand.u32 %v144, 4294901760
    %146 = vmatmul.mubr.f32.gmra.mxu0 %v145
    %v147 = vpop.f32.mrf.mxu0
    %v148 = vadd.f32 %v42, %v147
    %v149 = vpop.f32.mrf.mxu0
    %150 = vmatprep.mubr.f32.mxu0 0.0
    %v151 = vand.u32 %v48, 4294901760
    %v152 = vsub.f32 %v48, %v151
    %v153 = vand.u32 %v152, 4294901760
    %v154 = vsub.f32 %v152, %v153
    %v155 = vand.u32 %v154, 4294901760
    %156 = vmatmul.mubr.f32.gmra.mxu0 %v155
    %v157 = vpop.f32.mrf.mxu0
    %v158 = vadd.f32 %v42, %v157
    %v159 = vpop.f32.mrf.mxu0
    %160 = vmatprep.mubr.f32.mxu0 0.0
    %v161 = vand.u32 %v51, 4294901760
    %v162 = vsub.f32 %v51, %v161
    %v163 = vand.u32 %v162, 4294901760
    %v164 = vsub.f32 %v162, %v163
    %v165 = vand.u32 %v164, 4294901760
    %166 = vmatmul.mubr.f32.gmra.mxu0 %v165
    %v167 = vpop.f32.mrf.mxu0
    %v168 = vadd.f32 %v42, %v167
    %v169 = vpop.f32.mrf.mxu0
    %170 = vmatprep.mubr.f32.mxu0 0.0
    %v171 = vand.u32 %v54, 4294901760
    %v172 = vsub.f32 %v54, %v171
    %v173 = vand.u32 %v172, 4294901760
    %v174 = vsub.f32 %v172, %v173
    %v175 = vand.u32 %v174, 4294901760
    %176 = vmatmul.mubr.f32.gmra.mxu0 %v175
    %v177 = vpop.f32.mrf.mxu0
    %v178 = vadd.f32 %v42, %v177
    %v179 = vpop.f32.mrf.mxu0
    %180 = vmatprep.mubr.f32.mxu0 0.0
    %v181 = vand.u32 %v57, 4294901760
    %v182 = vsub.f32 %v57, %v181
    %v183 = vand.u32 %v182, 4294901760
    %v184 = vsub.f32 %v182, %v183
    %v185 = vand.u32 %v184, 4294901760
    %186 = vmatmul.mubr.f32.gmra.mxu0 %v185
    %v187 = vpop.f32.mrf.mxu0
    %v188 = vadd.f32 %v42, %v187
    %v189 = vpop.f32.mrf.mxu0
    %190 = vmatprep.mubr.f32.mxu0 0.0
    %v191 = vand.u32 %v60, 4294901760
    %v192 = vsub.f32 %v60, %v191
    %v193 = vand.u32 %v192, 4294901760
    %v194 = vsub.f32 %v192, %v193
    %v195 = vand.u32 %v194, 4294901760
    %196 = vmatmul.mubr.f32.gmra.mxu0 %v195
    %v197 = vpop.f32.mrf.mxu0
    %v198 = vadd.f32 %v42, %v197
    %v199 = vpop.f32.mrf.mxu0
    %200 = vmatprep.mubr.f32.mxu0 0.0
    %v201 = vand.u32 %v63, 4294901760
    %v202 = vsub.f32 %v63, %v201
    %v203 = vand.u32 %v202, 4294901760
    %v204 = vsub.f32 %v202, %v203
    %v205 = vand.u32 %v204, 4294901760
    %206 = vmatmul.mubr.f32.gmra.mxu0 %v205
    %v207 = vpop.f32.mrf.mxu0
    %v208 = vadd.f32 %v42, %v207
    %v209 = vpop.f32.mrf.mxu0
    %210 = vmatprep.mubr.f32.mxu0 0.0
    %v211 = vand.u32 %v66, 4294901760
    %v212 = vsub.f32 %v66, %v211
    %v213 = vand.u32 %v212, 4294901760
    %v214 = vsub.f32 %v212, %v213
    %v215 = vand.u32 %v214, 4294901760
    %216 = vmatmul.mubr.f32.gmra.mxu0 %v215
    %v217 = vpop.f32.mrf.mxu0
    %v218 = vadd.f32 %v42, %v217
    %v219 = vpop.f32.mrf.mxu0
    %220 = vdwg.mxu0
    %221 = vmatprep.subr.mxu0 0.0
    %222 = vmatpush1.msra.mxu0 0.0
    %223 = vmatprep.subr.mxu0 0.0
    %224 = vmatpush1.msra.mxu0 0.0
    %225 = vmatprep.subr.mxu0 0.0
    %226 = vmatpush1.msra.mxu0 0.0
    %227 = vmatprep.subr.mxu0 0.0
    %228 = vmatpush1.msra.mxu0 0.0
    %229 = vmatprep.subr.mxu0 0.0
    %230 = vmatpush1.msra.mxu0 0.0
    %231 = vmatprep.subr.mxu0 0.0
    %232 = vmatpush1.msra.mxu0 0.0
    %233 = vmatprep.subr.mxu0 0.0
    %234 = vmatpush1.msra.mxu0 0.0
    %235 = vmatprep.subr.mxu0 0.0
    %236 = vmatpush1.msra.mxu0 0.0
    %237 = vmatprep.subr.mxu0 0.0
    %238 = vmatpush1.msra.mxu0 0.0
    %239 = vmatprep.subr.mxu0 0.0
    %240 = vmatpush1.msra.mxu0 0.0
    %241 = vmatprep.subr.mxu0 0.0
    %242 = vmatpush1.msra.mxu0 0.0
    %243 = vmatprep.subr.mxu0 0.0
    %244 = vmatpush1.msra.mxu0 0.0
    %245 = vmatprep.subr.mxu0 0.0
    %v246 = vand.u32 %v70, 4294901760
    %v247 = vsub.f32 %v70, %v246
    %v248 = vand.u32 %v247, 4294901760
    %v249 = vsub.f32 %v247, %v248
    %v250 = vand.u32 %v249, 4294901760
    %251 = vmatpush1.msra.mxu0 %v250
    %252 = vmatprep.subr.mxu0 0.0
    %v253 = vand.u32 %v28, 4294901760
    %v254 = vsub.f32 %v28, %v253
    %v255 = vand.u32 %v254, 4294901760
    %v256 = vsub.f32 %v254, %v255
    %v257 = vand.u32 %v256, 4294901760
    %258 = vmatpush1.msra.mxu0 %v257
    %259 = vmatprep.subr.mxu0 0.0
    %v260 = vand.u32 %v27, 4294901760
    %v261 = vsub.f32 %v27, %v260
    %v262 = vand.u32 %v261, 4294901760
    %v263 = vsub.f32 %v261, %v262
    %v264 = vand.u32 %v263, 4294901760
    %265 = vmatpush1.msra.mxu0 %v264
    %266 = vmatprep.subr.mxu0 0.0
    %v267 = vand.u32 %v26, 4294901760
    %v268 = vsub.f32 %v26, %v267
    %v269 = vand.u32 %v268, 4294901760
    %v270 = vsub.f32 %v268, %v269
    %v271 = vand.u32 %v270, 4294901760
    %272 = vmatpush1.msra.mxu0 %v271
    %273 = vmatprep.subr.mxu0 0.0
    %274 = vmatpush2.msra.mxu0 0.0
    %275 = vmatprep.subr.mxu0 0.0
    %276 = vmatpush2.msra.mxu0 0.0
    %277 = vmatprep.subr.mxu0 0.0
    %278 = vmatpush2.msra.mxu0 0.0
    %279 = vmatprep.subr.mxu0 0.0
    %280 = vmatpush2.msra.mxu0 0.0
    %281 = vmatprep.subr.mxu0 0.0
    %282 = vmatpush2.msra.mxu0 0.0
    %283 = vmatprep.subr.mxu0 0.0
    %284 = vmatpush2.msra.mxu0 0.0
    %285 = vmatprep.subr.mxu0 0.0
    %286 = vmatpush2.msra.mxu0 0.0
    %287 = vmatprep.subr.mxu0 0.0
    %288 = vmatpush2.msra.mxu0 0.0
    %289 = vmatprep.subr.mxu0 0.0
    %290 = vmatpush2.msra.mxu0 0.0
    %291 = vmatprep.subr.mxu0 0.0
    %292 = vmatpush2.msra.mxu0 0.0
    %293 = vmatprep.subr.mxu0 0.0
    %294 = vmatpush2.msra.mxu0 0.0
    %295 = vmatprep.subr.mxu0 0.0
    %296 = vmatpush2.msra.mxu0 0.0
    %297 = vmatprep.subr.mxu0 0.0
    %298 = vmatpush2.msra.mxu0 0.0
    %299 = vmatprep.subr.mxu0 0.0
    %300 = vmatpush2.msra.mxu0 0.0
    %301 = vmatprep.subr.mxu0 0.0
    %302 = vmatpush2.msra.mxu0 0.0
    %303 = vmatprep.subr.mxu0 0.0
    %304 = vmatpush2.msra.mxu0 0.0
    %305 = vmatprep.mubr.f32.mxu0 0.0
    %v306 = vand.u32 %v45, 4294901760
    %307 = vmatmul.mubr.f32.gmra.mxu0 %v306
    %v308 = vpop.f32.mrf.mxu0
    %v309 = vadd.f32 %v148, %v308
    %v310 = vpop.f32.mrf.mxu0
    %311 = vmatprep.mubr.f32.mxu0 0.0
    %v312 = vand.u32 %v48, 4294901760
    %313 = vmatmul.mubr.f32.gmra.mxu0 %v312
    %v314 = vpop.f32.mrf.mxu0
    %v315 = vadd.f32 %v158, %v314
    %v316 = vpop.f32.mrf.mxu0
    %317 = vmatprep.mubr.f32.mxu0 0.0
    %v318 = vand.u32 %v51, 4294901760
    %319 = vmatmul.mubr.f32.gmra.mxu0 %v318
    %v320 = vpop.f32.mrf.mxu0
    %v321 = vadd.f32 %v168, %v320
    %v322 = vpop.f32.mrf.mxu0
    %323 = vmatprep.mubr.f32.mxu0 0.0
    %v324 = vand.u32 %v54, 4294901760
    %325 = vmatmul.mubr.f32.gmra.mxu0 %v324
    %v326 = vpop.f32.mrf.mxu0
    %v327 = vadd.f32 %v178, %v326
    %v328 = vpop.f32.mrf.mxu0
    %329 = vmatprep.mubr.f32.mxu0 0.0
    %v330 = vand.u32 %v57, 4294901760
    %331 = vmatmul.mubr.f32.gmra.mxu0 %v330
    %v332 = vpop.f32.mrf.mxu0
    %v333 = vadd.f32 %v188, %v332
    %v334 = vpop.f32.mrf.mxu0
    %335 = vmatprep.mubr.f32.mxu0 0.0
    %v336 = vand.u32 %v60, 4294901760
    %337 = vmatmul.mubr.f32.gmra.mxu0 %v336
    %v338 = vpop.f32.mrf.mxu0
    %v339 = vadd.f32 %v198, %v338
    %v340 = vpop.f32.mrf.mxu0
    %341 = vmatprep.mubr.f32.mxu0 0.0
    %v342 = vand.u32 %v63, 4294901760
    %343 = vmatmul.mubr.f32.gmra.mxu0 %v342
    %v344 = vpop.f32.mrf.mxu0
    %v345 = vadd.f32 %v208, %v344
    %v346 = vpop.f32.mrf.mxu0
    %347 = vmatprep.mubr.f32.mxu0 0.0
    %v348 = vand.u32 %v66, 4294901760
    %349 = vmatmul.mubr.f32.gmra.mxu0 %v348
    %v350 = vpop.f32.mrf.mxu0
    %v351 = vadd.f32 %v218, %v350
    %v352 = vpop.f32.mrf.mxu0
    %353 = vdwg.mxu0
    %354 = vmatprep.subr.mxu0 0.0
    %355 = vmatpush1.msra.mxu0 0.0
    %356 = vmatprep.subr.mxu0 0.0
    %357 = vmatpush1.msra.mxu0 0.0
    %358 = vmatprep.subr.mxu0 0.0
    %359 = vmatpush1.msra.mxu0 0.0
    %360 = vmatprep.subr.mxu0 0.0
    %361 = vmatpush1.msra.mxu0 0.0
    %362 = vmatprep.subr.mxu0 0.0
    %363 = vmatpush1.msra.mxu0 0.0
    %364 = vmatprep.subr.mxu0 0.0
    %365 = vmatpush1.msra.mxu0 0.0
    %366 = vmatprep.subr.mxu0 0.0
    %367 = vmatpush1.msra.mxu0 0.0
    %368 = vmatprep.subr.mxu0 0.0
    %369 = vmatpush1.msra.mxu0 0.0
    %370 = vmatprep.subr.mxu0 0.0
    %371 = vmatpush1.msra.mxu0 0.0
    %372 = vmatprep.subr.mxu0 0.0
    %373 = vmatpush1.msra.mxu0 0.0
    %374 = vmatprep.subr.mxu0 0.0
    %375 = vmatpush1.msra.mxu0 0.0
    %376 = vmatprep.subr.mxu0 0.0
    %377 = vmatpush1.msra.mxu0 0.0
    %378 = vmatprep.subr.mxu0 0.0
    %v379 = vand.u32 %v70, 4294901760
    %v380 = vsub.f32 %v70, %v379
    %381 = vmatpush1.msra.mxu0 %v380
    %382 = vmatprep.subr.mxu0 0.0
    %v383 = vand.u32 %v28, 4294901760
    %v384 = vsub.f32 %v28, %v383
    %385 = vmatpush1.msra.mxu0 %v384
    %386 = vmatprep.subr.mxu0 0.0
    %v387 = vand.u32 %v27, 4294901760
    %v388 = vsub.f32 %v27, %v387
    %389 = vmatpush1.msra.mxu0 %v388
    %390 = vmatprep.subr.mxu0 0.0
    %v391 = vand.u32 %v26, 4294901760
    %v392 = vsub.f32 %v26, %v391
    %393 = vmatpush1.msra.mxu0 %v392
    %394 = vmatprep.subr.mxu0 0.0
    %395 = vmatpush2.msra.mxu0 0.0
    %396 = vmatprep.subr.mxu0 0.0
    %397 = vmatpush2.msra.mxu0 0.0
    %398 = vmatprep.subr.mxu0 0.0
    %399 = vmatpush2.msra.mxu0 0.0
    %400 = vmatprep.subr.mxu0 0.0
    %401 = vmatpush2.msra.mxu0 0.0
    %402 = vmatprep.subr.mxu0 0.0
    %403 = vmatpush2.msra.mxu0 0.0
    %404 = vmatprep.subr.mxu0 0.0
    %405 = vmatpush2.msra.mxu0 0.0
    %406 = vmatprep.subr.mxu0 0.0
    %407 = vmatpush2.msra.mxu0 0.0
    %408 = vmatprep.subr.mxu0 0.0
    %409 = vmatpush2.msra.mxu0 0.0
    %410 = vmatprep.subr.mxu0 0.0
    %411 = vmatpush2.msra.mxu0 0.0
    %412 = vmatprep.subr.mxu0 0.0
    %413 = vmatpush2.msra.mxu0 0.0
    %414 = vmatprep.subr.mxu0 0.0
    %415 = vmatpush2.msra.mxu0 0.0
    %416 = vmatprep.subr.mxu0 0.0
    %417 = vmatpush2.msra.mxu0 0.0
    %418 = vmatprep.subr.mxu0 0.0
    %419 = vmatpush2.msra.mxu0 0.0
    %420 = vmatprep.subr.mxu0 0.0
    %421 = vmatpush2.msra.mxu0 0.0
    %422 = vmatprep.subr.mxu0 0.0
    %423 = vmatpush2.msra.mxu0 0.0
    %424 = vmatprep.subr.mxu0 0.0
    %425 = vmatpush2.msra.mxu0 0.0
    %426 = vmatprep.mubr.f32.mxu0 0.0
    %v427 = vand.u32 %v45, 4294901760
    %v428 = vsub.f32 %v45, %v427
    %429 = vmatmul.mubr.f32.gmra.mxu0 %v428
    %v430 = vpop.f32.mrf.mxu0
    %v431 = vadd.f32 %v309, %v430
    %v432 = vpop.f32.mrf.mxu0
    %433 = vmatprep.mubr.f32.mxu0 0.0
    %v434 = vand.u32 %v48, 4294901760
    %v435 = vsub.f32 %v48, %v434
    %436 = vmatmul.mubr.f32.gmra.mxu0 %v435
    %v437 = vpop.f32.mrf.mxu0
    %v438 = vadd.f32 %v315, %v437
    %v439 = vpop.f32.mrf.mxu0
    %440 = vmatprep.mubr.f32.mxu0 0.0
    %v441 = vand.u32 %v51, 4294901760
    %v442 = vsub.f32 %v51, %v441
    %443 = vmatmul.mubr.f32.gmra.mxu0 %v442
    %v444 = vpop.f32.mrf.mxu0
    %v445 = vadd.f32 %v321, %v444
    %v446 = vpop.f32.mrf.mxu0
    %447 = vmatprep.mubr.f32.mxu0 0.0
    %v448 = vand.u32 %v54, 4294901760
    %v449 = vsub.f32 %v54, %v448
    %450 = vmatmul.mubr.f32.gmra.mxu0 %v449
    %v451 = vpop.f32.mrf.mxu0
    %v452 = vadd.f32 %v327, %v451
    %v453 = vpop.f32.mrf.mxu0
    %454 = vmatprep.mubr.f32.mxu0 0.0
    %v455 = vand.u32 %v57, 4294901760
    %v456 = vsub.f32 %v57, %v455
    %457 = vmatmul.mubr.f32.gmra.mxu0 %v456
    %v458 = vpop.f32.mrf.mxu0
    %v459 = vadd.f32 %v333, %v458
    %v460 = vpop.f32.mrf.mxu0
    %461 = vmatprep.mubr.f32.mxu0 0.0
    %v462 = vand.u32 %v60, 4294901760
    %v463 = vsub.f32 %v60, %v462
    %464 = vmatmul.mubr.f32.gmra.mxu0 %v463
    %v465 = vpop.f32.mrf.mxu0
    %v466 = vadd.f32 %v339, %v465
    %v467 = vpop.f32.mrf.mxu0
    %468 = vmatprep.mubr.f32.mxu0 0.0
    %v469 = vand.u32 %v63, 4294901760
    %v470 = vsub.f32 %v63, %v469
    %471 = vmatmul.mubr.f32.gmra.mxu0 %v470
    %v472 = vpop.f32.mrf.mxu0
    %v473 = vadd.f32 %v345, %v472
    %v474 = vpop.f32.mrf.mxu0
    %475 = vmatprep.mubr.f32.mxu0 0.0
    %v476 = vand.u32 %v66, 4294901760
    %v477 = vsub.f32 %v66, %v476
    %478 = vmatmul.mubr.f32.gmra.mxu0 %v477
    %v479 = vpop.f32.mrf.mxu0
    %v480 = vadd.f32 %v351, %v479
    %v481 = vpop.f32.mrf.mxu0
    %482 = vdwg.mxu0
    %483 = vmatprep.subr.mxu0 0.0
    %484 = vmatpush1.msra.mxu0 0.0
    %485 = vmatprep.subr.mxu0 0.0
    %486 = vmatpush1.msra.mxu0 0.0
    %487 = vmatprep.subr.mxu0 0.0
    %488 = vmatpush1.msra.mxu0 0.0
    %489 = vmatprep.subr.mxu0 0.0
    %490 = vmatpush1.msra.mxu0 0.0
    %491 = vmatprep.subr.mxu0 0.0
    %492 = vmatpush1.msra.mxu0 0.0
    %493 = vmatprep.subr.mxu0 0.0
    %494 = vmatpush1.msra.mxu0 0.0
    %495 = vmatprep.subr.mxu0 0.0
    %496 = vmatpush1.msra.mxu0 0.0
    %497 = vmatprep.subr.mxu0 0.0
    %498 = vmatpush1.msra.mxu0 0.0
    %499 = vmatprep.subr.mxu0 0.0
    %500 = vmatpush1.msra.mxu0 0.0
    %501 = vmatprep.subr.mxu0 0.0
    %502 = vmatpush1.msra.mxu0 0.0
    %503 = vmatprep.subr.mxu0 0.0
    %504 = vmatpush1.msra.mxu0 0.0
    %505 = vmatprep.subr.mxu0 0.0
    %506 = vmatpush1.msra.mxu0 0.0
    %507 = vmatprep.subr.mxu0 0.0
    %v508 = vand.u32 %v70, 4294901760
    %509 = vmatpush1.msra.mxu0 %v508
    %510 = vmatprep.subr.mxu0 0.0
    %v511 = vand.u32 %v28, 4294901760
    %512 = vmatpush1.msra.mxu0 %v511
    %513 = vmatprep.subr.mxu0 0.0
    %v514 = vand.u32 %v27, 4294901760
    %515 = vmatpush1.msra.mxu0 %v514
    %516 = vmatprep.subr.mxu0 0.0
    %v517 = vand.u32 %v26, 4294901760
    %518 = vmatpush1.msra.mxu0 %v517
    %519 = vmatprep.subr.mxu0 0.0
    %520 = vmatpush2.msra.mxu0 0.0
    %521 = vmatprep.subr.mxu0 0.0
    %522 = vmatpush2.msra.mxu0 0.0
    %523 = vmatprep.subr.mxu0 0.0
    %524 = vmatpush2.msra.mxu0 0.0
    %525 = vmatprep.subr.mxu0 0.0
    %526 = vmatpush2.msra.mxu0 0.0
    %527 = vmatprep.subr.mxu0 0.0
    %528 = vmatpush2.msra.mxu0 0.0
    %529 = vmatprep.subr.mxu0 0.0
    %530 = vmatpush2.msra.mxu0 0.0
    %531 = vmatprep.subr.mxu0 0.0
    %532 = vmatpush2.msra.mxu0 0.0
    %533 = vmatprep.subr.mxu0 0.0
    %534 = vmatpush2.msra.mxu0 0.0
    %535 = vmatprep.subr.mxu0 0.0
    %536 = vmatpush2.msra.mxu0 0.0
    %537 = vmatprep.subr.mxu0 0.0
    %538 = vmatpush2.msra.mxu0 0.0
    %539 = vmatprep.subr.mxu0 0.0
    %540 = vmatpush2.msra.mxu0 0.0
    %541 = vmatprep.subr.mxu0 0.0
    %542 = vmatpush2.msra.mxu0 0.0
    %543 = vmatprep.subr.mxu0 0.0
    %544 = vmatpush2.msra.mxu0 0.0
    %545 = vmatprep.subr.mxu0 0.0
    %546 = vmatpush2.msra.mxu0 0.0
    %547 = vmatprep.subr.mxu0 0.0
    %548 = vmatpush2.msra.mxu0 0.0
    %549 = vmatprep.subr.mxu0 0.0
    %550 = vmatpush2.msra.mxu0 0.0
    %551 = vmatprep.mubr.f32.mxu0 0.0
    %v552 = vand.u32 %v45, 4294901760
    %v553 = vsub.f32 %v45, %v552
    %v554 = vand.u32 %v553, 4294901760
    %555 = vmatmul.mubr.f32.gmra.mxu0 %v554
    %v556 = vpop.f32.mrf.mxu0
    %v557 = vadd.f32 %v431, %v556
    %v558 = vpop.f32.mrf.mxu0
    %559 = vmatprep.mubr.f32.mxu0 0.0
    %v560 = vand.u32 %v48, 4294901760
    %v561 = vsub.f32 %v48, %v560
    %v562 = vand.u32 %v561, 4294901760
    %563 = vmatmul.mubr.f32.gmra.mxu0 %v562
    %v564 = vpop.f32.mrf.mxu0
    %v565 = vadd.f32 %v438, %v564
    %v566 = vpop.f32.mrf.mxu0
    %567 = vmatprep.mubr.f32.mxu0 0.0
    %v568 = vand.u32 %v51, 4294901760
    %v569 = vsub.f32 %v51, %v568
    %v570 = vand.u32 %v569, 4294901760
    %571 = vmatmul.mubr.f32.gmra.mxu0 %v570
    %v572 = vpop.f32.mrf.mxu0
    %v573 = vadd.f32 %v445, %v572
    %v574 = vpop.f32.mrf.mxu0
    %575 = vmatprep.mubr.f32.mxu0 0.0
    %v576 = vand.u32 %v54, 4294901760
    %v577 = vsub.f32 %v54, %v576
    %v578 = vand.u32 %v577, 4294901760
    %579 = vmatmul.mubr.f32.gmra.mxu0 %v578
    %v580 = vpop.f32.mrf.mxu0
    %v581 = vadd.f32 %v452, %v580
    %v582 = vpop.f32.mrf.mxu0
    %583 = vmatprep.mubr.f32.mxu0 0.0
    %v584 = vand.u32 %v57, 4294901760
    %v585 = vsub.f32 %v57, %v584
    %v586 = vand.u32 %v585, 4294901760
    %587 = vmatmul.mubr.f32.gmra.mxu0 %v586
    %v588 = vpop.f32.mrf.mxu0
    %v589 = vadd.f32 %v459, %v588
    %v590 = vpop.f32.mrf.mxu0
    %591 = vmatprep.mubr.f32.mxu0 0.0
    %v592 = vand.u32 %v60, 4294901760
    %v593 = vsub.f32 %v60, %v592
    %v594 = vand.u32 %v593, 4294901760
    %595 = vmatmul.mubr.f32.gmra.mxu0 %v594
    %v596 = vpop.f32.mrf.mxu0
    %v597 = vadd.f32 %v466, %v596
    %v598 = vpop.f32.mrf.mxu0
    %599 = vmatprep.mubr.f32.mxu0 0.0
    %v600 = vand.u32 %v63, 4294901760
    %v601 = vsub.f32 %v63, %v600
    %v602 = vand.u32 %v601, 4294901760
    %603 = vmatmul.mubr.f32.gmra.mxu0 %v602
    %v604 = vpop.f32.mrf.mxu0
    %v605 = vadd.f32 %v473, %v604
    %v606 = vpop.f32.mrf.mxu0
    %607 = vmatprep.mubr.f32.mxu0 0.0
    %v608 = vand.u32 %v66, 4294901760
    %v609 = vsub.f32 %v66, %v608
    %v610 = vand.u32 %v609, 4294901760
    %611 = vmatmul.mubr.f32.gmra.mxu0 %v610
    %v612 = vpop.f32.mrf.mxu0
    %v613 = vadd.f32 %v480, %v612
    %v614 = vpop.f32.mrf.mxu0
    %615 = vdwg.mxu0
    %616 = vmatprep.subr.mxu0 0.0
    %617 = vmatpush1.msra.mxu0 0.0
    %618 = vmatprep.subr.mxu0 0.0
    %619 = vmatpush1.msra.mxu0 0.0
    %620 = vmatprep.subr.mxu0 0.0
    %621 = vmatpush1.msra.mxu0 0.0
    %622 = vmatprep.subr.mxu0 0.0
    %623 = vmatpush1.msra.mxu0 0.0
    %624 = vmatprep.subr.mxu0 0.0
    %625 = vmatpush1.msra.mxu0 0.0
    %626 = vmatprep.subr.mxu0 0.0
    %627 = vmatpush1.msra.mxu0 0.0
    %628 = vmatprep.subr.mxu0 0.0
    %629 = vmatpush1.msra.mxu0 0.0
    %630 = vmatprep.subr.mxu0 0.0
    %631 = vmatpush1.msra.mxu0 0.0
    %632 = vmatprep.subr.mxu0 0.0
    %633 = vmatpush1.msra.mxu0 0.0
    %634 = vmatprep.subr.mxu0 0.0
    %635 = vmatpush1.msra.mxu0 0.0
    %636 = vmatprep.subr.mxu0 0.0
    %637 = vmatpush1.msra.mxu0 0.0
    %638 = vmatprep.subr.mxu0 0.0
    %639 = vmatpush1.msra.mxu0 0.0
    %640 = vmatprep.subr.mxu0 0.0
    %v641 = vand.u32 %v70, 4294901760
    %v642 = vsub.f32 %v70, %v641
    %v643 = vand.u32 %v642, 4294901760
    %644 = vmatpush1.msra.mxu0 %v643
    %645 = vmatprep.subr.mxu0 0.0
    %v646 = vand.u32 %v28, 4294901760
    %v647 = vsub.f32 %v28, %v646
    %v648 = vand.u32 %v647, 4294901760
    %649 = vmatpush1.msra.mxu0 %v648
    %650 = vmatprep.subr.mxu0 0.0
    %v651 = vand.u32 %v27, 4294901760
    %v652 = vsub.f32 %v27, %v651
    %v653 = vand.u32 %v652, 4294901760
    %654 = vmatpush1.msra.mxu0 %v653
    %655 = vmatprep.subr.mxu0 0.0
    %v656 = vand.u32 %v26, 4294901760
    %v657 = vsub.f32 %v26, %v656
    %v658 = vand.u32 %v657, 4294901760
    %659 = vmatpush1.msra.mxu0 %v658
    %660 = vmatprep.subr.mxu0 0.0
    %661 = vmatpush2.msra.mxu0 0.0
    %662 = vmatprep.subr.mxu0 0.0
    %663 = vmatpush2.msra.mxu0 0.0
    %664 = vmatprep.subr.mxu0 0.0
    %665 = vmatpush2.msra.mxu0 0.0
    %666 = vmatprep.subr.mxu0 0.0
    %667 = vmatpush2.msra.mxu0 0.0
    %668 = vmatprep.subr.mxu0 0.0
    %669 = vmatpush2.msra.mxu0 0.0
    %670 = vmatprep.subr.mxu0 0.0
    %671 = vmatpush2.msra.mxu0 0.0
    %672 = vmatprep.subr.mxu0 0.0
    %673 = vmatpush2.msra.mxu0 0.0
    %674 = vmatprep.subr.mxu0 0.0
    %675 = vmatpush2.msra.mxu0 0.0
    %676 = vmatprep.subr.mxu0 0.0
    %677 = vmatpush2.msra.mxu0 0.0
    %678 = vmatprep.subr.mxu0 0.0
    %679 = vmatpush2.msra.mxu0 0.0
    %680 = vmatprep.subr.mxu0 0.0
    %681 = vmatpush2.msra.mxu0 0.0
    %682 = vmatprep.subr.mxu0 0.0
    %683 = vmatpush2.msra.mxu0 0.0
    %684 = vmatprep.subr.mxu0 0.0
    %685 = vmatpush2.msra.mxu0 0.0
    %686 = vmatprep.subr.mxu0 0.0
    %687 = vmatpush2.msra.mxu0 0.0
    %688 = vmatprep.subr.mxu0 0.0
    %689 = vmatpush2.msra.mxu0 0.0
    %690 = vmatprep.subr.mxu0 0.0
    %691 = vmatpush2.msra.mxu0 0.0
    %692 = vmatprep.mubr.f32.mxu0 0.0
    %v693 = vand.u32 %v45, 4294901760
    %694 = vmatmul.mubr.f32.gmra.mxu0 %v693
    %v695 = vpop.f32.mrf.mxu0
    %v696 = vadd.f32 %v557, %v695
    %v697 = vpop.f32.mrf.mxu0
    %698 = vmatprep.mubr.f32.mxu0 0.0
    %v699 = vand.u32 %v48, 4294901760
    %700 = vmatmul.mubr.f32.gmra.mxu0 %v699
    %v701 = vpop.f32.mrf.mxu0
    %v702 = vadd.f32 %v565, %v701
    %v703 = vpop.f32.mrf.mxu0
    %704 = vmatprep.mubr.f32.mxu0 0.0
    %v705 = vand.u32 %v51, 4294901760
    %706 = vmatmul.mubr.f32.gmra.mxu0 %v705
    %v707 = vpop.f32.mrf.mxu0
    %v708 = vadd.f32 %v573, %v707
    %v709 = vpop.f32.mrf.mxu0
    %710 = vmatprep.mubr.f32.mxu0 0.0
    %v711 = vand.u32 %v54, 4294901760
    %712 = vmatmul.mubr.f32.gmra.mxu0 %v711
    %v713 = vpop.f32.mrf.mxu0
    %v714 = vadd.f32 %v581, %v713
    %v715 = vpop.f32.mrf.mxu0
    %716 = vmatprep.mubr.f32.mxu0 0.0
    %v717 = vand.u32 %v57, 4294901760
    %718 = vmatmul.mubr.f32.gmra.mxu0 %v717
    %v719 = vpop.f32.mrf.mxu0
    %v720 = vadd.f32 %v589, %v719
    %v721 = vpop.f32.mrf.mxu0
    %722 = vmatprep.mubr.f32.mxu0 0.0
    %v723 = vand.u32 %v60, 4294901760
    %724 = vmatmul.mubr.f32.gmra.mxu0 %v723
    %v725 = vpop.f32.mrf.mxu0
    %v726 = vadd.f32 %v597, %v725
    %v727 = vpop.f32.mrf.mxu0
    %728 = vmatprep.mubr.f32.mxu0 0.0
    %v729 = vand.u32 %v63, 4294901760
    %730 = vmatmul.mubr.f32.gmra.mxu0 %v729
    %v731 = vpop.f32.mrf.mxu0
    %v732 = vadd.f32 %v605, %v731
    %v733 = vpop.f32.mrf.mxu0
    %734 = vmatprep.mubr.f32.mxu0 0.0
    %v735 = vand.u32 %v66, 4294901760
    %736 = vmatmul.mubr.f32.gmra.mxu0 %v735
    %v737 = vpop.f32.mrf.mxu0
    %v738 = vadd.f32 %v613, %v737
    %v739 = vpop.f32.mrf.mxu0
    %740 = vdwg.mxu0
    %741 = vmatprep.subr.mxu0 0.0
    %742 = vmatpush1.msra.mxu0 0.0
    %743 = vmatprep.subr.mxu0 0.0
    %744 = vmatpush1.msra.mxu0 0.0
    %745 = vmatprep.subr.mxu0 0.0
    %746 = vmatpush1.msra.mxu0 0.0
    %747 = vmatprep.subr.mxu0 0.0
    %748 = vmatpush1.msra.mxu0 0.0
    %749 = vmatprep.subr.mxu0 0.0
    %750 = vmatpush1.msra.mxu0 0.0
    %751 = vmatprep.subr.mxu0 0.0
    %752 = vmatpush1.msra.mxu0 0.0
    %753 = vmatprep.subr.mxu0 0.0
    %754 = vmatpush1.msra.mxu0 0.0
    %755 = vmatprep.subr.mxu0 0.0
    %756 = vmatpush1.msra.mxu0 0.0
    %757 = vmatprep.subr.mxu0 0.0
    %758 = vmatpush1.msra.mxu0 0.0
    %759 = vmatprep.subr.mxu0 0.0
    %760 = vmatpush1.msra.mxu0 0.0
    %761 = vmatprep.subr.mxu0 0.0
    %762 = vmatpush1.msra.mxu0 0.0
    %763 = vmatprep.subr.mxu0 0.0
    %764 = vmatpush1.msra.mxu0 0.0
    %765 = vmatprep.subr.mxu0 0.0
    %v766 = vand.u32 %v70, 4294901760
    %767 = vmatpush1.msra.mxu0 %v766
    %768 = vmatprep.subr.mxu0 0.0
    %v769 = vand.u32 %v28, 4294901760
    %770 = vmatpush1.msra.mxu0 %v769
    %771 = vmatprep.subr.mxu0 0.0
    %v772 = vand.u32 %v27, 4294901760
    %773 = vmatpush1.msra.mxu0 %v772
    %774 = vmatprep.subr.mxu0 0.0
    %v775 = vand.u32 %v26, 4294901760
    %776 = vmatpush1.msra.mxu0 %v775
    %777 = vmatprep.subr.mxu0 0.0
    %778 = vmatpush2.msra.mxu0 0.0
    %779 = vmatprep.subr.mxu0 0.0
    %780 = vmatpush2.msra.mxu0 0.0
    %781 = vmatprep.subr.mxu0 0.0
    %782 = vmatpush2.msra.mxu0 0.0
    %783 = vmatprep.subr.mxu0 0.0
    %784 = vmatpush2.msra.mxu0 0.0
    %785 = vmatprep.subr.mxu0 0.0
    %786 = vmatpush2.msra.mxu0 0.0
    %787 = vmatprep.subr.mxu0 0.0
    %788 = vmatpush2.msra.mxu0 0.0
    %789 = vmatprep.subr.mxu0 0.0
    %790 = vmatpush2.msra.mxu0 0.0
    %791 = vmatprep.subr.mxu0 0.0
    %792 = vmatpush2.msra.mxu0 0.0
    %793 = vmatprep.subr.mxu0 0.0
    %794 = vmatpush2.msra.mxu0 0.0
    %795 = vmatprep.subr.mxu0 0.0
    %796 = vmatpush2.msra.mxu0 0.0
    %797 = vmatprep.subr.mxu0 0.0
    %798 = vmatpush2.msra.mxu0 0.0
    %799 = vmatprep.subr.mxu0 0.0
    %800 = vmatpush2.msra.mxu0 0.0
    %801 = vmatprep.subr.mxu0 0.0
    %802 = vmatpush2.msra.mxu0 0.0
    %803 = vmatprep.subr.mxu0 0.0
    %804 = vmatpush2.msra.mxu0 0.0
    %805 = vmatprep.subr.mxu0 0.0
    %806 = vmatpush2.msra.mxu0 0.0
    %807 = vmatprep.subr.mxu0 0.0
    %808 = vmatpush2.msra.mxu0 0.0
    %809 = vmatprep.mubr.f32.mxu0 0.0
    %v810 = vand.u32 %v45, 4294901760
    %811 = vmatmul.mubr.f32.gmra.mxu0 %v810
    %v812 = vpop.f32.mrf.mxu0
    %v813 = vadd.f32 %v696, %v812
    %v814 = vpop.f32.mrf.mxu0
    %815 = vmatprep.mubr.f32.mxu0 0.0
    %v816 = vand.u32 %v48, 4294901760
    %817 = vmatmul.mubr.f32.gmra.mxu0 %v816
    %v818 = vpop.f32.mrf.mxu0
    %v819 = vadd.f32 %v702, %v818
    %v820 = vpop.f32.mrf.mxu0
    %821 = vmatprep.mubr.f32.mxu0 0.0
    %v822 = vand.u32 %v51, 4294901760
    %823 = vmatmul.mubr.f32.gmra.mxu0 %v822
    %v824 = vpop.f32.mrf.mxu0
    %v825 = vadd.f32 %v708, %v824
    %v826 = vpop.f32.mrf.mxu0
    %827 = vmatprep.mubr.f32.mxu0 0.0
    %v828 = vand.u32 %v54, 4294901760
    %829 = vmatmul.mubr.f32.gmra.mxu0 %v828
    %v830 = vpop.f32.mrf.mxu0
    %v831 = vadd.f32 %v714, %v830
    %v832 = vpop.f32.mrf.mxu0
    %833 = vmatprep.mubr.f32.mxu0 0.0
    %v834 = vand.u32 %v57, 4294901760
    %835 = vmatmul.mubr.f32.gmra.mxu0 %v834
    %v836 = vpop.f32.mrf.mxu0
    %v837 = vadd.f32 %v720, %v836
    %v838 = vpop.f32.mrf.mxu0
    %839 = vmatprep.mubr.f32.mxu0 0.0
    %v840 = vand.u32 %v60, 4294901760
    %841 = vmatmul.mubr.f32.gmra.mxu0 %v840
    %v842 = vpop.f32.mrf.mxu0
    %v843 = vadd.f32 %v726, %v842
    %v844 = vpop.f32.mrf.mxu0
    %845 = vmatprep.mubr.f32.mxu0 0.0
    %v846 = vand.u32 %v63, 4294901760
    %847 = vmatmul.mubr.f32.gmra.mxu0 %v846
    %v848 = vpop.f32.mrf.mxu0
    %v849 = vadd.f32 %v732, %v848
    %v850 = vpop.f32.mrf.mxu0
    %851 = vmatprep.mubr.f32.mxu0 0.0
    %v852 = vand.u32 %v66, 4294901760
    %853 = vmatmul.mubr.f32.gmra.mxu0 %v852
    %v854 = vpop.f32.mrf.mxu0
    %v855 = vadd.f32 %v738, %v854
    %v856 = vpop.f32.mrf.mxu0
    %857 = vdwg.mxu0
    %v858 = vld [vmem:[#allocation2 + $0x28] sm:$0xff]
    %v859 = vld [vmem:[#allocation2 + $0x30] sm:$0xff]
    %v860 = vld [vmem:[#allocation2 + $0x38] sm:$0xff]
    %v861 = vld [vmem:[#allocation2 + $0x40] sm:$0xff]
    %v862 = vld [vmem:[#allocation2 + $0x48] sm:$0xff]
    %v863 = vld [vmem:[#allocation2 + $0x50] sm:$0xff]
    %v864 = vld [vmem:[#allocation2 + $0x58] sm:$0xff]
    %v865 = vld [vmem:[#allocation2 + $0x60] sm:$0xff]
    %v866 = vld [vmem:[#allocation2 + $0x68] sm:$0xff]
    %v867 = vld [vmem:[#allocation2 + $0x70] sm:$0xff]
    %v868 = vld [vmem:[#allocation2 + $0x78] sm:$0xff]
    %v869 = vld [vmem:[#allocation2 + $0x80] sm:$0xff]
    %v870 = vld [vmem:[#allocation2 + $0x88] sm:$0xff]
    %v871 = vld [vmem:[#allocation2 + $0x90] sm:$0xff]
    %v872 = vld [vmem:[#allocation2 + $0x98] sm:$0xff]
    %v873 = vld [vmem:[#allocation2 + $0xa0] sm:$0xff]
    %874 = vmatprep.subr.mxu0 0.0
    %v875 = vand.u32 %v873, 4294901760
    %876 = vmatpush1.msra.mxu0 %v875
    %877 = vmatprep.subr.mxu0 0.0
    %v878 = vand.u32 %v872, 4294901760
    %879 = vmatpush1.msra.mxu0 %v878
    %880 = vmatprep.subr.mxu0 0.0
    %v881 = vand.u32 %v871, 4294901760
    %882 = vmatpush1.msra.mxu0 %v881
    %883 = vmatprep.subr.mxu0 0.0
    %v884 = vand.u32 %v870, 4294901760
    %885 = vmatpush1.msra.mxu0 %v884
    %886 = vmatprep.subr.mxu0 0.0
    %v887 = vand.u32 %v869, 4294901760
    %888 = vmatpush1.msra.mxu0 %v887
    %889 = vmatprep.subr.mxu0 0.0
    %v890 = vand.u32 %v868, 4294901760
    %891 = vmatpush1.msra.mxu0 %v890
    %892 = vmatprep.subr.mxu0 0.0
    %v893 = vand.u32 %v867, 4294901760
    %894 = vmatpush1.msra.mxu0 %v893
    %895 = vmatprep.subr.mxu0 0.0
    %v896 = vand.u32 %v866, 4294901760
    %897 = vmatpush1.msra.mxu0 %v896
    %898 = vmatprep.subr.mxu0 0.0
    %v899 = vand.u32 %v865, 4294901760
    %900 = vmatpush1.msra.mxu0 %v899
    %901 = vmatprep.subr.mxu0 0.0
    %v902 = vand.u32 %v864, 4294901760
    %903 = vmatpush1.msra.mxu0 %v902
    %904 = vmatprep.subr.mxu0 0.0
    %v905 = vand.u32 %v863, 4294901760
    %906 = vmatpush1.msra.mxu0 %v905
    %907 = vmatprep.subr.mxu0 0.0
    %v908 = vand.u32 %v862, 4294901760
    %909 = vmatpush1.msra.mxu0 %v908
    %910 = vmatprep.subr.mxu0 0.0
    %v911 = vand.u32 %v861, 4294901760
    %912 = vmatpush1.msra.mxu0 %v911
    %913 = vmatprep.subr.mxu0 0.0
    %v914 = vand.u32 %v860, 4294901760
    %915 = vmatpush1.msra.mxu0 %v914
    %916 = vmatprep.subr.mxu0 0.0
    %v917 = vand.u32 %v859, 4294901760
    %918 = vmatpush1.msra.mxu0 %v917
    %919 = vmatprep.subr.mxu0 0.0
    %v920 = vand.u32 %v858, 4294901760
    %921 = vmatpush1.msra.mxu0 %v920
    %922 = vmatprep.subr.mxu0 0.0
    %923 = vmatpush2.msra.mxu0 0.0
    %924 = vmatprep.subr.mxu0 0.0
    %925 = vmatpush2.msra.mxu0 0.0
    %926 = vmatprep.subr.mxu0 0.0
    %927 = vmatpush2.msra.mxu0 0.0
    %928 = vmatprep.subr.mxu0 0.0
    %929 = vmatpush2.msra.mxu0 0.0
    %930 = vmatprep.subr.mxu0 0.0
    %931 = vmatpush2.msra.mxu0 0.0
    %932 = vmatprep.subr.mxu0 0.0
    %933 = vmatpush2.msra.mxu0 0.0
    %934 = vmatprep.subr.mxu0 0.0
    %935 = vmatpush2.msra.mxu0 0.0
    %936 = vmatprep.subr.mxu0 0.0
    %937 = vmatpush2.msra.mxu0 0.0
    %938 = vmatprep.subr.mxu0 0.0
    %939 = vmatpush2.msra.mxu0 0.0
    %940 = vmatprep.subr.mxu0 0.0
    %941 = vmatpush2.msra.mxu0 0.0
    %942 = vmatprep.subr.mxu0 0.0
    %943 = vmatpush2.msra.mxu0 0.0
    %944 = vmatprep.subr.mxu0 0.0
    %945 = vmatpush2.msra.mxu0 0.0
    %946 = vmatprep.subr.mxu0 0.0
    %947 = vmatpush2.msra.mxu0 0.0
    %948 = vmatprep.subr.mxu0 0.0
    %949 = vmatpush2.msra.mxu0 0.0
    %950 = vmatprep.subr.mxu0 0.0
    %951 = vmatpush2.msra.mxu0 0.0
    %952 = vmatprep.subr.mxu0 0.0
    %953 = vmatpush2.msra.mxu0 0.0
    %954 = vmatprep.mubr.f32.mxu0 0.0
    %955 = vmatmul.mubr.f32.gmra.mxu0 0.0
    %v956 = vpop.f32.mrf.mxu0
    %v957 = vadd.f32 0.0, %v956
    %v958 = vpop.f32.mrf.mxu0
    %959 = vdwg.mxu0
    %960 = vmatprep.subr.mxu0 0.0
    %v961 = vand.u32 %v873, 4294901760
    %v962 = vsub.f32 %v873, %v961
    %v963 = vand.u32 %v962, 4294901760
    %v964 = vsub.f32 %v962, %v963
    %v965 = vand.u32 %v964, 4294901760
    %966 = vmatpush1.msra.mxu0 %v965
    %967 = vmatprep.subr.mxu0 0.0
    %v968 = vand.u32 %v872, 4294901760
    %v969 = vsub.f32 %v872, %v968
    %v970 = vand.u32 %v969, 4294901760
    %v971 = vsub.f32 %v969, %v970
    %v972 = vand.u32 %v971, 4294901760
    %973 = vmatpush1.msra.mxu0 %v972
    %974 = vmatprep.subr.mxu0 0.0
    %v975 = vand.u32 %v871, 4294901760
    %v976 = vsub.f32 %v871, %v975
    %v977 = vand.u32 %v976, 4294901760
    %v978 = vsub.f32 %v976, %v977
    %v979 = vand.u32 %v978, 4294901760
    %980 = vmatpush1.msra.mxu0 %v979
    %981 = vmatprep.subr.mxu0 0.0
    %v982 = vand.u32 %v870, 4294901760
    %v983 = vsub.f32 %v870, %v982
    %v984 = vand.u32 %v983, 4294901760
    %v985 = vsub.f32 %v983, %v984
    %v986 = vand.u32 %v985, 4294901760
    %987 = vmatpush1.msra.mxu0 %v986
    %988 = vmatprep.subr.mxu0 0.0
    %v989 = vand.u32 %v869, 4294901760
    %v990 = vsub.f32 %v869, %v989
    %v991 = vand.u32 %v990, 4294901760
    %v992 = vsub.f32 %v990, %v991
    %v993 = vand.u32 %v992, 4294901760
    %994 = vmatpush1.msra.mxu0 %v993
    %995 = vmatprep.subr.mxu0 0.0
    %v996 = vand.u32 %v868, 4294901760
    %v997 = vsub.f32 %v868, %v996
    %v998 = vand.u32 %v997, 4294901760
    %v999 = vsub.f32 %v997, %v998
    %v1000 = vand.u32 %v999, 4294901760
    %1001 = vmatpush1.msra.mxu0 %v1000
    %1002 = vmatprep.subr.mxu0 0.0
    %v1003 = vand.u32 %v867, 4294901760
    %v1004 = vsub.f32 %v867, %v1003
    %v1005 = vand.u32 %v1004, 4294901760
    %v1006 = vsub.f32 %v1004, %v1005
    %v1007 = vand.u32 %v1006, 4294901760
    %1008 = vmatpush1.msra.mxu0 %v1007
    %1009 = vmatprep.subr.mxu0 0.0
    %v1010 = vand.u32 %v866, 4294901760
    %v1011 = vsub.f32 %v866, %v1010
    %v1012 = vand.u32 %v1011, 4294901760
    %v1013 = vsub.f32 %v1011, %v1012
    %v1014 = vand.u32 %v1013, 4294901760
    %1015 = vmatpush1.msra.mxu0 %v1014
    %1016 = vmatprep.subr.mxu0 0.0
    %v1017 = vand.u32 %v865, 4294901760
    %v1018 = vsub.f32 %v865, %v1017
    %v1019 = vand.u32 %v1018, 4294901760
    %v1020 = vsub.f32 %v1018, %v1019
    %v1021 = vand.u32 %v1020, 4294901760
    %1022 = vmatpush1.msra.mxu0 %v1021
    %1023 = vmatprep.subr.mxu0 0.0
    %v1024 = vand.u32 %v864, 4294901760
    %v1025 = vsub.f32 %v864, %v1024
    %v1026 = vand.u32 %v1025, 4294901760
    %v1027 = vsub.f32 %v1025, %v1026
    %v1028 = vand.u32 %v1027, 4294901760
    %1029 = vmatpush1.msra.mxu0 %v1028
    %1030 = vmatprep.subr.mxu0 0.0
    %v1031 = vand.u32 %v863, 4294901760
    %v1032 = vsub.f32 %v863, %v1031
    %v1033 = vand.u32 %v1032, 4294901760
    %v1034 = vsub.f32 %v1032, %v1033
    %v1035 = vand.u32 %v1034, 4294901760
    %1036 = vmatpush1.msra.mxu0 %v1035
    %1037 = vmatprep.subr.mxu0 0.0
    %v1038 = vand.u32 %v862, 4294901760
    %v1039 = vsub.f32 %v862, %v1038
    %v1040 = vand.u32 %v1039, 4294901760
    %v1041 = vsub.f32 %v1039, %v1040
    %v1042 = vand.u32 %v1041, 4294901760
    %1043 = vmatpush1.msra.mxu0 %v1042
    %1044 = vmatprep.subr.mxu0 0.0
    %v1045 = vand.u32 %v861, 4294901760
    %v1046 = vsub.f32 %v861, %v1045
    %v1047 = vand.u32 %v1046, 4294901760
    %v1048 = vsub.f32 %v1046, %v1047
    %v1049 = vand.u32 %v1048, 4294901760
    %1050 = vmatpush1.msra.mxu0 %v1049
    %1051 = vmatprep.subr.mxu0 0.0
    %v1052 = vand.u32 %v860, 4294901760
    %v1053 = vsub.f32 %v860, %v1052
    %v1054 = vand.u32 %v1053, 4294901760
    %v1055 = vsub.f32 %v1053, %v1054
    %v1056 = vand.u32 %v1055, 4294901760
    %1057 = vmatpush1.msra.mxu0 %v1056
    %1058 = vmatprep.subr.mxu0 0.0
    %v1059 = vand.u32 %v859, 4294901760
    %v1060 = vsub.f32 %v859, %v1059
    %v1061 = vand.u32 %v1060, 4294901760
    %v1062 = vsub.f32 %v1060, %v1061
    %v1063 = vand.u32 %v1062, 4294901760
    %1064 = vmatpush1.msra.mxu0 %v1063
    %1065 = vmatprep.subr.mxu0 0.0
    %v1066 = vand.u32 %v858, 4294901760
    %v1067 = vsub.f32 %v858, %v1066
    %v1068 = vand.u32 %v1067, 4294901760
    %v1069 = vsub.f32 %v1067, %v1068
    %v1070 = vand.u32 %v1069, 4294901760
    %1071 = vmatpush1.msra.mxu0 %v1070
    %1072 = vmatprep.subr.mxu0 0.0
    %1073 = vmatpush2.msra.mxu0 0.0
    %1074 = vmatprep.subr.mxu0 0.0
    %1075 = vmatpush2.msra.mxu0 0.0
    %1076 = vmatprep.subr.mxu0 0.0
    %1077 = vmatpush2.msra.mxu0 0.0
    %1078 = vmatprep.subr.mxu0 0.0
    %1079 = vmatpush2.msra.mxu0 0.0
    %1080 = vmatprep.subr.mxu0 0.0
    %1081 = vmatpush2.msra.mxu0 0.0
    %1082 = vmatprep.subr.mxu0 0.0
    %1083 = vmatpush2.msra.mxu0 0.0
    %1084 = vmatprep.subr.mxu0 0.0
    %1085 = vmatpush2.msra.mxu0 0.0
    %1086 = vmatprep.subr.mxu0 0.0
    %1087 = vmatpush2.msra.mxu0 0.0
    %1088 = vmatprep.subr.mxu0 0.0
    %1089 = vmatpush2.msra.mxu0 0.0
    %1090 = vmatprep.subr.mxu0 0.0
    %1091 = vmatpush2.msra.mxu0 0.0
    %1092 = vmatprep.subr.mxu0 0.0
    %1093 = vmatpush2.msra.mxu0 0.0
    %1094 = vmatprep.subr.mxu0 0.0
    %1095 = vmatpush2.msra.mxu0 0.0
    %1096 = vmatprep.subr.mxu0 0.0
    %1097 = vmatpush2.msra.mxu0 0.0
    %1098 = vmatprep.subr.mxu0 0.0
    %1099 = vmatpush2.msra.mxu0 0.0
    %1100 = vmatprep.subr.mxu0 0.0
    %1101 = vmatpush2.msra.mxu0 0.0
    %1102 = vmatprep.subr.mxu0 0.0
    %1103 = vmatpush2.msra.mxu0 0.0
    %1104 = vmatprep.mubr.f32.mxu0 0.0
    %1105 = vmatmul.mubr.f32.gmra.mxu0 0.0
    %v1106 = vpop.f32.mrf.mxu0
    %v1107 = vadd.f32 %v957, %v1106
    %v1108 = vpop.f32.mrf.mxu0
    %1109 = vdwg.mxu0
    %1110 = vmatprep.subr.mxu0 0.0
    %v1111 = vand.u32 %v873, 4294901760
    %v1112 = vsub.f32 %v873, %v1111
    %1113 = vmatpush1.msra.mxu0 %v1112
    %1114 = vmatprep.subr.mxu0 0.0
    %v1115 = vand.u32 %v872, 4294901760
    %v1116 = vsub.f32 %v872, %v1115
    %1117 = vmatpush1.msra.mxu0 %v1116
    %1118 = vmatprep.subr.mxu0 0.0
    %v1119 = vand.u32 %v871, 4294901760
    %v1120 = vsub.f32 %v871, %v1119
    %1121 = vmatpush1.msra.mxu0 %v1120
    %1122 = vmatprep.subr.mxu0 0.0
    %v1123 = vand.u32 %v870, 4294901760
    %v1124 = vsub.f32 %v870, %v1123
    %1125 = vmatpush1.msra.mxu0 %v1124
    %1126 = vmatprep.subr.mxu0 0.0
    %v1127 = vand.u32 %v869, 4294901760
    %v1128 = vsub.f32 %v869, %v1127
    %1129 = vmatpush1.msra.mxu0 %v1128
    %1130 = vmatprep.subr.mxu0 0.0
    %v1131 = vand.u32 %v868, 4294901760
    %v1132 = vsub.f32 %v868, %v1131
    %1133 = vmatpush1.msra.mxu0 %v1132
    %1134 = vmatprep.subr.mxu0 0.0
    %v1135 = vand.u32 %v867, 4294901760
    %v1136 = vsub.f32 %v867, %v1135
    %1137 = vmatpush1.msra.mxu0 %v1136
    %1138 = vmatprep.subr.mxu0 0.0
    %v1139 = vand.u32 %v866, 4294901760
    %v1140 = vsub.f32 %v866, %v1139
    %1141 = vmatpush1.msra.mxu0 %v1140
    %1142 = vmatprep.subr.mxu0 0.0
    %v1143 = vand.u32 %v865, 4294901760
    %v1144 = vsub.f32 %v865, %v1143
    %1145 = vmatpush1.msra.mxu0 %v1144
    %1146 = vmatprep.subr.mxu0 0.0
    %v1147 = vand.u32 %v864, 4294901760
    %v1148 = vsub.f32 %v864, %v1147
    %1149 = vmatpush1.msra.mxu0 %v1148
    %1150 = vmatprep.subr.mxu0 0.0
    %v1151 = vand.u32 %v863, 4294901760
    %v1152 = vsub.f32 %v863, %v1151
    %1153 = vmatpush1.msra.mxu0 %v1152
    %1154 = vmatprep.subr.mxu0 0.0
    %v1155 = vand.u32 %v862, 4294901760
    %v1156 = vsub.f32 %v862, %v1155
    %1157 = vmatpush1.msra.mxu0 %v1156
    %1158 = vmatprep.subr.mxu0 0.0
    %v1159 = vand.u32 %v861, 4294901760
    %v1160 = vsub.f32 %v861, %v1159
    %1161 = vmatpush1.msra.mxu0 %v1160
    %1162 = vmatprep.subr.mxu0 0.0
    %v1163 = vand.u32 %v860, 4294901760
    %v1164 = vsub.f32 %v860, %v1163
    %1165 = vmatpush1.msra.mxu0 %v1164
    %1166 = vmatprep.subr.mxu0 0.0
    %v1167 = vand.u32 %v859, 4294901760
    %v1168 = vsub.f32 %v859, %v1167
    %1169 = vmatpush1.msra.mxu0 %v1168
    %1170 = vmatprep.subr.mxu0 0.0
    %v1171 = vand.u32 %v858, 4294901760
    %v1172 = vsub.f32 %v858, %v1171
    %1173 = vmatpush1.msra.mxu0 %v1172
    %1174 = vmatprep.subr.mxu0 0.0
    %1175 = vmatpush2.msra.mxu0 0.0
    %1176 = vmatprep.subr.mxu0 0.0
    %1177 = vmatpush2.msra.mxu0 0.0
    %1178 = vmatprep.subr.mxu0 0.0
    %1179 = vmatpush2.msra.mxu0 0.0
    %1180 = vmatprep.subr.mxu0 0.0
    %1181 = vmatpush2.msra.mxu0 0.0
    %1182 = vmatprep.subr.mxu0 0.0
    %1183 = vmatpush2.msra.mxu0 0.0
    %1184 = vmatprep.subr.mxu0 0.0
    %1185 = vmatpush2.msra.mxu0 0.0
    %1186 = vmatprep.subr.mxu0 0.0
    %1187 = vmatpush2.msra.mxu0 0.0
    %1188 = vmatprep.subr.mxu0 0.0
    %1189 = vmatpush2.msra.mxu0 0.0
    %1190 = vmatprep.subr.mxu0 0.0
    %1191 = vmatpush2.msra.mxu0 0.0
    %1192 = vmatprep.subr.mxu0 0.0
    %1193 = vmatpush2.msra.mxu0 0.0
    %1194 = vmatprep.subr.mxu0 0.0
    %1195 = vmatpush2.msra.mxu0 0.0
    %1196 = vmatprep.subr.mxu0 0.0
    %1197 = vmatpush2.msra.mxu0 0.0
    %1198 = vmatprep.subr.mxu0 0.0
    %1199 = vmatpush2.msra.mxu0 0.0
    %1200 = vmatprep.subr.mxu0 0.0
    %1201 = vmatpush2.msra.mxu0 0.0
    %1202 = vmatprep.subr.mxu0 0.0
    %1203 = vmatpush2.msra.mxu0 0.0
    %1204 = vmatprep.subr.mxu0 0.0
    %1205 = vmatpush2.msra.mxu0 0.0
    %1206 = vmatprep.mubr.f32.mxu0 0.0
    %1207 = vmatmul.mubr.f32.gmra.mxu0 0.0
    %v1208 = vpop.f32.mrf.mxu0
    %v1209 = vadd.f32 %v1107, %v1208
    %v1210 = vpop.f32.mrf.mxu0
    %1211 = vdwg.mxu0
    %1212 = vmatprep.subr.mxu0 0.0
    %v1213 = vand.u32 %v873, 4294901760
    %1214 = vmatpush1.msra.mxu0 %v1213
    %1215 = vmatprep.subr.mxu0 0.0
    %v1216 = vand.u32 %v872, 4294901760
    %1217 = vmatpush1.msra.mxu0 %v1216
    %1218 = vmatprep.subr.mxu0 0.0
    %v1219 = vand.u32 %v871, 4294901760
    %1220 = vmatpush1.msra.mxu0 %v1219
    %1221 = vmatprep.subr.mxu0 0.0
    %v1222 = vand.u32 %v870, 4294901760
    %1223 = vmatpush1.msra.mxu0 %v1222
    %1224 = vmatprep.subr.mxu0 0.0
    %v1225 = vand.u32 %v869, 4294901760
    %1226 = vmatpush1.msra.mxu0 %v1225
    %1227 = vmatprep.subr.mxu0 0.0
    %v1228 = vand.u32 %v868, 4294901760
    %1229 = vmatpush1.msra.mxu0 %v1228
    %1230 = vmatprep.subr.mxu0 0.0
    %v1231 = vand.u32 %v867, 4294901760
    %1232 = vmatpush1.msra.mxu0 %v1231
    %1233 = vmatprep.subr.mxu0 0.0
    %v1234 = vand.u32 %v866, 4294901760
    %1235 = vmatpush1.msra.mxu0 %v1234
    %1236 = vmatprep.subr.mxu0 0.0
    %v1237 = vand.u32 %v865, 4294901760
    %1238 = vmatpush1.msra.mxu0 %v1237
    %1239 = vmatprep.subr.mxu0 0.0
    %v1240 = vand.u32 %v864, 4294901760
    %1241 = vmatpush1.msra.mxu0 %v1240
    %1242 = vmatprep.subr.mxu0 0.0
    %v1243 = vand.u32 %v863, 4294901760
    %1244 = vmatpush1.msra.mxu0 %v1243
    %1245 = vmatprep.subr.mxu0 0.0
    %v1246 = vand.u32 %v862, 4294901760
    %1247 = vmatpush1.msra.mxu0 %v1246
    %1248 = vmatprep.subr.mxu0 0.0
    %v1249 = vand.u32 %v861, 4294901760
    %1250 = vmatpush1.msra.mxu0 %v1249
    %1251 = vmatprep.subr.mxu0 0.0
    %v1252 = vand.u32 %v860, 4294901760
    %1253 = vmatpush1.msra.mxu0 %v1252
    %1254 = vmatprep.subr.mxu0 0.0
    %v1255 = vand.u32 %v859, 4294901760
    %1256 = vmatpush1.msra.mxu0 %v1255
    %1257 = vmatprep.subr.mxu0 0.0
    %v1258 = vand.u32 %v858, 4294901760
    %1259 = vmatpush1.msra.mxu0 %v1258
    %1260 = vmatprep.subr.mxu0 0.0
    %1261 = vmatpush2.msra.mxu0 0.0
    %1262 = vmatprep.subr.mxu0 0.0
    %1263 = vmatpush2.msra.mxu0 0.0
    %1264 = vmatprep.subr.mxu0 0.0
    %1265 = vmatpush2.msra.mxu0 0.0
    %1266 = vmatprep.subr.mxu0 0.0
    %1267 = vmatpush2.msra.mxu0 0.0
    %1268 = vmatprep.subr.mxu0 0.0
    %1269 = vmatpush2.msra.mxu0 0.0
    %1270 = vmatprep.subr.mxu0 0.0
    %1271 = vmatpush2.msra.mxu0 0.0
    %1272 = vmatprep.subr.mxu0 0.0
    %1273 = vmatpush2.msra.mxu0 0.0
    %1274 = vmatprep.subr.mxu0 0.0
    %1275 = vmatpush2.msra.mxu0 0.0
    %1276 = vmatprep.subr.mxu0 0.0
    %1277 = vmatpush2.msra.mxu0 0.0
    %1278 = vmatprep.subr.mxu0 0.0
    %1279 = vmatpush2.msra.mxu0 0.0
    %1280 = vmatprep.subr.mxu0 0.0
    %1281 = vmatpush2.msra.mxu0 0.0
    %1282 = vmatprep.subr.mxu0 0.0
    %1283 = vmatpush2.msra.mxu0 0.0
    %1284 = vmatprep.subr.mxu0 0.0
    %1285 = vmatpush2.msra.mxu0 0.0
    %1286 = vmatprep.subr.mxu0 0.0
    %1287 = vmatpush2.msra.mxu0 0.0
    %1288 = vmatprep.subr.mxu0 0.0
    %1289 = vmatpush2.msra.mxu0 0.0
    %1290 = vmatprep.subr.mxu0 0.0
    %1291 = vmatpush2.msra.mxu0 0.0
    %1292 = vmatprep.mubr.f32.mxu0 0.0
    %1293 = vmatmul.mubr.f32.gmra.mxu0 0.0
    %v1294 = vpop.f32.mrf.mxu0
    %v1295 = vadd.f32 %v1209, %v1294
    %v1296 = vpop.f32.mrf.mxu0
    %1297 = vdwg.mxu0
    %1298 = vmatprep.subr.mxu0 0.0
    %v1299 = vand.u32 %v873, 4294901760
    %v1300 = vsub.f32 %v873, %v1299
    %v1301 = vand.u32 %v1300, 4294901760
    %1302 = vmatpush1.msra.mxu0 %v1301
    %1303 = vmatprep.subr.mxu0 0.0
    %v1304 = vand.u32 %v872, 4294901760
    %v1305 = vsub.f32 %v872, %v1304
    %v1306 = vand.u32 %v1305, 4294901760
    %1307 = vmatpush1.msra.mxu0 %v1306
    %1308 = vmatprep.subr.mxu0 0.0
    %v1309 = vand.u32 %v871, 4294901760
    %v1310 = vsub.f32 %v871, %v1309
    %v1311 = vand.u32 %v1310, 4294901760
    %1312 = vmatpush1.msra.mxu0 %v1311
    %1313 = vmatprep.subr.mxu0 0.0
    %v1314 = vand.u32 %v870, 4294901760
    %v1315 = vsub.f32 %v870, %v1314
    %v1316 = vand.u32 %v1315, 4294901760
    %1317 = vmatpush1.msra.mxu0 %v1316
    %1318 = vmatprep.subr.mxu0 0.0
    %v1319 = vand.u32 %v869, 4294901760
    %v1320 = vsub.f32 %v869, %v1319
    %v1321 = vand.u32 %v1320, 4294901760
    %1322 = vmatpush1.msra.mxu0 %v1321
    %1323 = vmatprep.subr.mxu0 0.0
    %v1324 = vand.u32 %v868, 4294901760
    %v1325 = vsub.f32 %v868, %v1324
    %v1326 = vand.u32 %v1325, 4294901760
    %1327 = vmatpush1.msra.mxu0 %v1326
    %1328 = vmatprep.subr.mxu0 0.0
    %v1329 = vand.u32 %v867, 4294901760
    %v1330 = vsub.f32 %v867, %v1329
    %v1331 = vand.u32 %v1330, 4294901760
    %1332 = vmatpush1.msra.mxu0 %v1331
    %1333 = vmatprep.subr.mxu0 0.0
    %v1334 = vand.u32 %v866, 4294901760
    %v1335 = vsub.f32 %v866, %v1334
    %v1336 = vand.u32 %v1335, 4294901760
    %1337 = vmatpush1.msra.mxu0 %v1336
    %1338 = vmatprep.subr.mxu0 0.0
    %v1339 = vand.u32 %v865, 4294901760
    %v1340 = vsub.f32 %v865, %v1339
    %v1341 = vand.u32 %v1340, 4294901760
    %1342 = vmatpush1.msra.mxu0 %v1341
    %1343 = vmatprep.subr.mxu0 0.0
    %v1344 = vand.u32 %v864, 4294901760
    %v1345 = vsub.f32 %v864, %v1344
    %v1346 = vand.u32 %v1345, 4294901760
    %1347 = vmatpush1.msra.mxu0 %v1346
    %1348 = vmatprep.subr.mxu0 0.0
    %v1349 = vand.u32 %v863, 4294901760
    %v1350 = vsub.f32 %v863, %v1349
    %v1351 = vand.u32 %v1350, 4294901760
    %1352 = vmatpush1.msra.mxu0 %v1351
    %1353 = vmatprep.subr.mxu0 0.0
    %v1354 = vand.u32 %v862, 4294901760
    %v1355 = vsub.f32 %v862, %v1354
    %v1356 = vand.u32 %v1355, 4294901760
    %1357 = vmatpush1.msra.mxu0 %v1356
    %1358 = vmatprep.subr.mxu0 0.0
    %v1359 = vand.u32 %v861, 4294901760
    %v1360 = vsub.f32 %v861, %v1359
    %v1361 = vand.u32 %v1360, 4294901760
    %1362 = vmatpush1.msra.mxu0 %v1361
    %1363 = vmatprep.subr.mxu0 0.0
    %v1364 = vand.u32 %v860, 4294901760
    %v1365 = vsub.f32 %v860, %v1364
    %v1366 = vand.u32 %v1365, 4294901760
    %1367 = vmatpush1.msra.mxu0 %v1366
    %1368 = vmatprep.subr.mxu0 0.0
    %v1369 = vand.u32 %v859, 4294901760
    %v1370 = vsub.f32 %v859, %v1369
    %v1371 = vand.u32 %v1370, 4294901760
    %1372 = vmatpush1.msra.mxu0 %v1371
    %1373 = vmatprep.subr.mxu0 0.0
    %v1374 = vand.u32 %v858, 4294901760
    %v1375 = vsub.f32 %v858, %v1374
    %v1376 = vand.u32 %v1375, 4294901760
    %1377 = vmatpush1.msra.mxu0 %v1376
    %1378 = vmatprep.subr.mxu0 0.0
    %1379 = vmatpush2.msra.mxu0 0.0
    %1380 = vmatprep.subr.mxu0 0.0
    %1381 = vmatpush2.msra.mxu0 0.0
    %1382 = vmatprep.subr.mxu0 0.0
    %1383 = vmatpush2.msra.mxu0 0.0
    %1384 = vmatprep.subr.mxu0 0.0
    %1385 = vmatpush2.msra.mxu0 0.0
    %1386 = vmatprep.subr.mxu0 0.0
    %1387 = vmatpush2.msra.mxu0 0.0
    %1388 = vmatprep.subr.mxu0 0.0
    %1389 = vmatpush2.msra.mxu0 0.0
    %1390 = vmatprep.subr.mxu0 0.0
    %1391 = vmatpush2.msra.mxu0 0.0
    %1392 = vmatprep.subr.mxu0 0.0
    %1393 = vmatpush2.msra.mxu0 0.0
    %1394 = vmatprep.subr.mxu0 0.0
    %1395 = vmatpush2.msra.mxu0 0.0
    %1396 = vmatprep.subr.mxu0 0.0
    %1397 = vmatpush2.msra.mxu0 0.0
    %1398 = vmatprep.subr.mxu0 0.0
    %1399 = vmatpush2.msra.mxu0 0.0
    %1400 = vmatprep.subr.mxu0 0.0
    %1401 = vmatpush2.msra.mxu0 0.0
    %1402 = vmatprep.subr.mxu0 0.0
    %1403 = vmatpush2.msra.mxu0 0.0
    %1404 = vmatprep.subr.mxu0 0.0
    %1405 = vmatpush2.msra.mxu0 0.0
    %1406 = vmatprep.subr.mxu0 0.0
    %1407 = vmatpush2.msra.mxu0 0.0
    %1408 = vmatprep.subr.mxu0 0.0
    %1409 = vmatpush2.msra.mxu0 0.0
    %1410 = vmatprep.mubr.f32.mxu0 0.0
    %1411 = vmatmul.mubr.f32.gmra.mxu0 0.0
    %v1412 = vpop.f32.mrf.mxu0
    %v1413 = vadd.f32 %v1295, %v1412
    %v1414 = vpop.f32.mrf.mxu0
    %1415 = vdwg.mxu0
    %1416 = vmatprep.subr.mxu0 0.0
    %v1417 = vand.u32 %v873, 4294901760
    %1418 = vmatpush1.msra.mxu0 %v1417
    %1419 = vmatprep.subr.mxu0 0.0
    %v1420 = vand.u32 %v872, 4294901760
    %1421 = vmatpush1.msra.mxu0 %v1420
    %1422 = vmatprep.subr.mxu0 0.0
    %v1423 = vand.u32 %v871, 4294901760
    %1424 = vmatpush1.msra.mxu0 %v1423
    %1425 = vmatprep.subr.mxu0 0.0
    %v1426 = vand.u32 %v870, 4294901760
    %1427 = vmatpush1.msra.mxu0 %v1426
    %1428 = vmatprep.subr.mxu0 0.0
    %v1429 = vand.u32 %v869, 4294901760
    %1430 = vmatpush1.msra.mxu0 %v1429
    %1431 = vmatprep.subr.mxu0 0.0
    %v1432 = vand.u32 %v868, 4294901760
    %1433 = vmatpush1.msra.mxu0 %v1432
    %1434 = vmatprep.subr.mxu0 0.0
    %v1435 = vand.u32 %v867, 4294901760
    %1436 = vmatpush1.msra.mxu0 %v1435
    %1437 = vmatprep.subr.mxu0 0.0
    %v1438 = vand.u32 %v866, 4294901760
    %1439 = vmatpush1.msra.mxu0 %v1438
    %1440 = vmatprep.subr.mxu0 0.0
    %v1441 = vand.u32 %v865, 4294901760
    %1442 = vmatpush1.msra.mxu0 %v1441
    %1443 = vmatprep.subr.mxu0 0.0
    %v1444 = vand.u32 %v864, 4294901760
    %1445 = vmatpush1.msra.mxu0 %v1444
    %1446 = vmatprep.subr.mxu0 0.0
    %v1447 = vand.u32 %v863, 4294901760
    %1448 = vmatpush1.msra.mxu0 %v1447
    %1449 = vmatprep.subr.mxu0 0.0
    %v1450 = vand.u32 %v862, 4294901760
    %1451 = vmatpush1.msra.mxu0 %v1450
    %1452 = vmatprep.subr.mxu0 0.0
    %v1453 = vand.u32 %v861, 4294901760
    %1454 = vmatpush1.msra.mxu0 %v1453
    %1455 = vmatprep.subr.mxu0 0.0
    %v1456 = vand.u32 %v860, 4294901760
    %1457 = vmatpush1.msra.mxu0 %v1456
    %1458 = vmatprep.subr.mxu0 0.0
    %v1459 = vand.u32 %v859, 4294901760
    %1460 = vmatpush1.msra.mxu0 %v1459
    %1461 = vmatprep.subr.mxu0 0.0
    %v1462 = vand.u32 %v858, 4294901760
    %1463 = vmatpush1.msra.mxu0 %v1462
    %1464 = vmatprep.subr.mxu0 0.0
    %1465 = vmatpush2.msra.mxu0 0.0
    %1466 = vmatprep.subr.mxu0 0.0
    %1467 = vmatpush2.msra.mxu0 0.0
    %1468 = vmatprep.subr.mxu0 0.0
    %1469 = vmatpush2.msra.mxu0 0.0
    %1470 = vmatprep.subr.mxu0 0.0
    %1471 = vmatpush2.msra.mxu0 0.0
    %1472 = vmatprep.subr.mxu0 0.0
    %1473 = vmatpush2.msra.mxu0 0.0
    %1474 = vmatprep.subr.mxu0 0.0
    %1475 = vmatpush2.msra.mxu0 0.0
    %1476 = vmatprep.subr.mxu0 0.0
    %1477 = vmatpush2.msra.mxu0 0.0
    %1478 = vmatprep.subr.mxu0 0.0
    %1479 = vmatpush2.msra.mxu0 0.0
    %1480 = vmatprep.subr.mxu0 0.0
    %1481 = vmatpush2.msra.mxu0 0.0
    %1482 = vmatprep.subr.mxu0 0.0
    %1483 = vmatpush2.msra.mxu0 0.0
    %1484 = vmatprep.subr.mxu0 0.0
    %1485 = vmatpush2.msra.mxu0 0.0
    %1486 = vmatprep.subr.mxu0 0.0
    %1487 = vmatpush2.msra.mxu0 0.0
    %1488 = vmatprep.subr.mxu0 0.0
    %1489 = vmatpush2.msra.mxu0 0.0
    %1490 = vmatprep.subr.mxu0 0.0
    %1491 = vmatpush2.msra.mxu0 0.0
    %1492 = vmatprep.subr.mxu0 0.0
    %1493 = vmatpush2.msra.mxu0 0.0
    %1494 = vmatprep.subr.mxu0 0.0
    %1495 = vmatpush2.msra.mxu0 0.0
    %1496 = vmatprep.mubr.f32.mxu0 0.0
    %1497 = vmatmul.mubr.f32.gmra.mxu0 0.0
    %v1498 = vpop.f32.mrf.mxu0
    %v1499 = vadd.f32 %v1413, %v1498
    %v1500 = vpop.f32.mrf.mxu0
    %1501 = vdwg.mxu0
    %v1502 = vadd.f32 %v813, %v1499
    %v1503 = vtanh.pop %v1502
    %1504 = vmatprep.subr.mxu0 0.0
    %v1505 = vand.u32 %v873, 4294901760
    %1506 = vmatpush1.msra.mxu0 %v1505
    %1507 = vmatprep.subr.mxu0 0.0
    %v1508 = vand.u32 %v872, 4294901760
    %1509 = vmatpush1.msra.mxu0 %v1508
    %1510 = vmatprep.subr.mxu0 0.0
    %v1511 = vand.u32 %v871, 4294901760
    %1512 = vmatpush1.msra.mxu0 %v1511
    %1513 = vmatprep.subr.mxu0 0.0
    %v1514 = vand.u32 %v870, 4294901760
    %1515 = vmatpush1.msra.mxu0 %v1514
    %1516 = vmatprep.subr.mxu0 0.0
    %v1517 = vand.u32 %v869, 4294901760
    %1518 = vmatpush1.msra.mxu0 %v1517
    %1519 = vmatprep.subr.mxu0 0.0
    %v1520 = vand.u32 %v868, 4294901760
    %1521 = vmatpush1.msra.mxu0 %v1520
    %1522 = vmatprep.subr.mxu0 0.0
    %v1523 = vand.u32 %v867, 4294901760
    %1524 = vmatpush1.msra.mxu0 %v1523
    %1525 = vmatprep.subr.mxu0 0.0
    %v1526 = vand.u32 %v866, 4294901760
    %1527 = vmatpush1.msra.mxu0 %v1526
    %1528 = vmatprep.subr.mxu0 0.0
    %v1529 = vand.u32 %v865, 4294901760
    %1530 = vmatpush1.msra.mxu0 %v1529
    %1531 = vmatprep.subr.mxu0 0.0
    %v1532 = vand.u32 %v864, 4294901760
    %1533 = vmatpush1.msra.mxu0 %v1532
    %1534 = vmatprep.subr.mxu0 0.0
    %v1535 = vand.u32 %v863, 4294901760
    %1536 = vmatpush1.msra.mxu0 %v1535
    %1537 = vmatprep.subr.mxu0 0.0
    %v1538 = vand.u32 %v862, 4294901760
    %1539 = vmatpush1.msra.mxu0 %v1538
    %1540 = vmatprep.subr.mxu0 0.0
    %v1541 = vand.u32 %v861, 4294901760
    %1542 = vmatpush1.msra.mxu0 %v1541
    %1543 = vmatprep.subr.mxu0 0.0
    %v1544 = vand.u32 %v860, 4294901760
    %1545 = vmatpush1.msra.mxu0 %v1544
    %1546 = vmatprep.subr.mxu0 0.0
    %v1547 = vand.u32 %v859, 4294901760
    %1548 = vmatpush1.msra.mxu0 %v1547
    %1549 = vmatprep.subr.mxu0 0.0
    %v1550 = vand.u32 %v858, 4294901760
    %1551 = vmatpush1.msra.mxu0 %v1550
    %1552 = vmatprep.subr.mxu0 0.0
    %1553 = vmatpush2.msra.mxu0 0.0
    %1554 = vmatprep.subr.mxu0 0.0
    %1555 = vmatpush2.msra.mxu0 0.0
    %1556 = vmatprep.subr.mxu0 0.0
    %1557 = vmatpush2.msra.mxu0 0.0
    %1558 = vmatprep.subr.mxu0 0.0
    %1559 = vmatpush2.msra.mxu0 0.0
    %1560 = vmatprep.subr.mxu0 0.0
    %1561 = vmatpush2.msra.mxu0 0.0
    %1562 = vmatprep.subr.mxu0 0.0
    %1563 = vmatpush2.msra.mxu0 0.0
    %1564 = vmatprep.subr.mxu0 0.0
    %1565 = vmatpush2.msra.mxu0 0.0
    %1566 = vmatprep.subr.mxu0 0.0
    %1567 = vmatpush2.msra.mxu0 0.0
    %1568 = vmatprep.subr.mxu0 0.0
    %1569 = vmatpush2.msra.mxu0 0.0
    %1570 = vmatprep.subr.mxu0 0.0
    %1571 = vmatpush2.msra.mxu0 0.0
    %1572 = vmatprep.subr.mxu0 0.0
    %1573 = vmatpush2.msra.mxu0 0.0
    %1574 = vmatprep.subr.mxu0 0.0
    %1575 = vmatpush2.msra.mxu0 0.0
    %1576 = vmatprep.subr.mxu0 0.0
    %1577 = vmatpush2.msra.mxu0 0.0
    %1578 = vmatprep.subr.mxu0 0.0
    %1579 = vmatpush2.msra.mxu0 0.0
    %1580 = vmatprep.subr.mxu0 0.0
    %1581 = vmatpush2.msra.mxu0 0.0
    %1582 = vmatprep.subr.mxu0 0.0
    %1583 = vmatpush2.msra.mxu0 0.0
    %1584 = vmatprep.mubr.f32.mxu0 0.0
    %v1585 = vand.u32 %v1503, 4294901760
    %v1586 = vsub.f32 %v1503, %v1585
    %v1587 = vand.u32 %v1586, 4294901760
    %v1588 = vsub.f32 %v1586, %v1587
    %v1589 = vand.u32 %v1588, 4294901760
    %1590 = vmatmul.mubr.f32.gmra.mxu0 %v1589
    %v1591 = vpop.f32.mrf.mxu0
    %v1592 = vadd.f32 0.0, %v1591
    %v1593 = vpop.f32.mrf.mxu0
    %1594 = vdwg.mxu0
    %1595 = vmatprep.subr.mxu0 0.0
    %v1596 = vand.u32 %v873, 4294901760
    %v1597 = vsub.f32 %v873, %v1596
    %v1598 = vand.u32 %v1597, 4294901760
    %v1599 = vsub.f32 %v1597, %v1598
    %v1600 = vand.u32 %v1599, 4294901760
    %1601 = vmatpush1.msra.mxu0 %v1600
    %1602 = vmatprep.subr.mxu0 0.0
    %v1603 = vand.u32 %v872, 4294901760
    %v1604 = vsub.f32 %v872, %v1603
    %v1605 = vand.u32 %v1604, 4294901760
    %v1606 = vsub.f32 %v1604, %v1605
    %v1607 = vand.u32 %v1606, 4294901760
    %1608 = vmatpush1.msra.mxu0 %v1607
    %1609 = vmatprep.subr.mxu0 0.0
    %v1610 = vand.u32 %v871, 4294901760
    %v1611 = vsub.f32 %v871, %v1610
    %v1612 = vand.u32 %v1611, 4294901760
    %v1613 = vsub.f32 %v1611, %v1612
    %v1614 = vand.u32 %v1613, 4294901760
    %1615 = vmatpush1.msra.mxu0 %v1614
    %1616 = vmatprep.subr.mxu0 0.0
    %v1617 = vand.u32 %v870, 4294901760
    %v1618 = vsub.f32 %v870, %v1617
    %v1619 = vand.u32 %v1618, 4294901760
    %v1620 = vsub.f32 %v1618, %v1619
    %v1621 = vand.u32 %v1620, 4294901760
    %1622 = vmatpush1.msra.mxu0 %v1621
    %1623 = vmatprep.subr.mxu0 0.0
    %v1624 = vand.u32 %v869, 4294901760
    %v1625 = vsub.f32 %v869, %v1624
    %v1626 = vand.u32 %v1625, 4294901760
    %v1627 = vsub.f32 %v1625, %v1626
    %v1628 = vand.u32 %v1627, 4294901760
    %1629 = vmatpush1.msra.mxu0 %v1628
    %1630 = vmatprep.subr.mxu0 0.0
    %v1631 = vand.u32 %v868, 4294901760
    %v1632 = vsub.f32 %v868, %v1631
    %v1633 = vand.u32 %v1632, 4294901760
    %v1634 = vsub.f32 %v1632, %v1633
    %v1635 = vand.u32 %v1634, 4294901760
    %1636 = vmatpush1.msra.mxu0 %v1635
    %1637 = vmatprep.subr.mxu0 0.0
    %v1638 = vand.u32 %v867, 4294901760
    %v1639 = vsub.f32 %v867, %v1638
    %v1640 = vand.u32 %v1639, 4294901760
    %v1641 = vsub.f32 %v1639, %v1640
    %v1642 = vand.u32 %v1641, 4294901760
    %1643 = vmatpush1.msra.mxu0 %v1642
    %1644 = vmatprep.subr.mxu0 0.0
    %v1645 = vand.u32 %v866, 4294901760
    %v1646 = vsub.f32 %v866, %v1645
    %v1647 = vand.u32 %v1646, 4294901760
    %v1648 = vsub.f32 %v1646, %v1647
    %v1649 = vand.u32 %v1648, 4294901760
    %1650 = vmatpush1.msra.mxu0 %v1649
    %1651 = vmatprep.subr.mxu0 0.0
    %v1652 = vand.u32 %v865, 4294901760
    %v1653 = vsub.f32 %v865, %v1652
    %v1654 = vand.u32 %v1653, 4294901760
    %v1655 = vsub.f32 %v1653, %v1654
    %v1656 = vand.u32 %v1655, 4294901760
    %1657 = vmatpush1.msra.mxu0 %v1656
    %1658 = vmatprep.subr.mxu0 0.0
    %v1659 = vand.u32 %v864, 4294901760
    %v1660 = vsub.f32 %v864, %v1659
    %v1661 = vand.u32 %v1660, 4294901760
    %v1662 = vsub.f32 %v1660, %v1661
    %v1663 = vand.u32 %v1662, 4294901760
    %1664 = vmatpush1.msra.mxu0 %v1663
    %1665 = vmatprep.subr.mxu0 0.0
    %v1666 = vand.u32 %v863, 4294901760
    %v1667 = vsub.f32 %v863, %v1666
    %v1668 = vand.u32 %v1667, 4294901760
    %v1669 = vsub.f32 %v1667, %v1668
    %v1670 = vand.u32 %v1669, 4294901760
    %1671 = vmatpush1.msra.mxu0 %v1670
    %1672 = vmatprep.subr.mxu0 0.0
    %v1673 = vand.u32 %v862, 4294901760
    %v1674 = vsub.f32 %v862, %v1673
    %v1675 = vand.u32 %v1674, 4294901760
    %v1676 = vsub.f32 %v1674, %v1675
    %v1677 = vand.u32 %v1676, 4294901760
    %1678 = vmatpush1.msra.mxu0 %v1677
    %1679 = vmatprep.subr.mxu0 0.0
    %v1680 = vand.u32 %v861, 4294901760
    %v1681 = vsub.f32 %v861, %v1680
    %v1682 = vand.u32 %v1681, 4294901760
    %v1683 = vsub.f32 %v1681, %v1682
    %v1684 = vand.u32 %v1683, 4294901760
    %1685 = vmatpush1.msra.mxu0 %v1684
    %1686 = vmatprep.subr.mxu0 0.0
    %v1687 = vand.u32 %v860, 4294901760
    %v1688 = vsub.f32 %v860, %v1687
    %v1689 = vand.u32 %v1688, 4294901760
    %v1690 = vsub.f32 %v1688, %v1689
    %v1691 = vand.u32 %v1690, 4294901760
    %1692 = vmatpush1.msra.mxu0 %v1691
    %1693 = vmatprep.subr.mxu0 0.0
    %v1694 = vand.u32 %v859, 4294901760
    %v1695 = vsub.f32 %v859, %v1694
    %v1696 = vand.u32 %v1695, 4294901760
    %v1697 = vsub.f32 %v1695, %v1696
    %v1698 = vand.u32 %v1697, 4294901760
    %1699 = vmatpush1.msra.mxu0 %v1698
    %1700 = vmatprep.subr.mxu0 0.0
    %v1701 = vand.u32 %v858, 4294901760
    %v1702 = vsub.f32 %v858, %v1701
    %v1703 = vand.u32 %v1702, 4294901760
    %v1704 = vsub.f32 %v1702, %v1703
    %v1705 = vand.u32 %v1704, 4294901760
    %1706 = vmatpush1.msra.mxu0 %v1705
    %1707 = vmatprep.subr.mxu0 0.0
    %1708 = vmatpush2.msra.mxu0 0.0
    %1709 = vmatprep.subr.mxu0 0.0
    %1710 = vmatpush2.msra.mxu0 0.0
    %1711 = vmatprep.subr.mxu0 0.0
    %1712 = vmatpush2.msra.mxu0 0.0
    %1713 = vmatprep.subr.mxu0 0.0
    %1714 = vmatpush2.msra.mxu0 0.0
    %1715 = vmatprep.subr.mxu0 0.0
    %1716 = vmatpush2.msra.mxu0 0.0
    %1717 = vmatprep.subr.mxu0 0.0
    %1718 = vmatpush2.msra.mxu0 0.0
    %1719 = vmatprep.subr.mxu0 0.0
    %1720 = vmatpush2.msra.mxu0 0.0
    %1721 = vmatprep.subr.mxu0 0.0
    %1722 = vmatpush2.msra.mxu0 0.0
    %1723 = vmatprep.subr.mxu0 0.0
    %1724 = vmatpush2.msra.mxu0 0.0
    %1725 = vmatprep.subr.mxu0 0.0
    %1726 = vmatpush2.msra.mxu0 0.0
    %1727 = vmatprep.subr.mxu0 0.0
    %1728 = vmatpush2.msra.mxu0 0.0
    %1729 = vmatprep.subr.mxu0 0.0
    %1730 = vmatpush2.msra.mxu0 0.0
    %1731 = vmatprep.subr.mxu0 0.0
    %1732 = vmatpush2.msra.mxu0 0.0
    %1733 = vmatprep.subr.mxu0 0.0
    %1734 = vmatpush2.msra.mxu0 0.0
    %1735 = vmatprep.subr.mxu0 0.0
    %1736 = vmatpush2.msra.mxu0 0.0
    %1737 = vmatprep.subr.mxu0 0.0
    %1738 = vmatpush2.msra.mxu0 0.0
    %1739 = vmatprep.mubr.f32.mxu0 0.0
    %v1740 = vand.u32 %v1503, 4294901760
    %1741 = vmatmul.mubr.f32.gmra.mxu0 %v1740
    %v1742 = vpop.f32.mrf.mxu0
    %v1743 = vadd.f32 %v1592, %v1742
    %v1744 = vpop.f32.mrf.mxu0
    %1745 = vdwg.mxu0
    %1746 = vmatprep.subr.mxu0 0.0
    %v1747 = vand.u32 %v873, 4294901760
    %v1748 = vsub.f32 %v873, %v1747
    %1749 = vmatpush1.msra.mxu0 %v1748
    %1750 = vmatprep.subr.mxu0 0.0
    %v1751 = vand.u32 %v872, 4294901760
    %v1752 = vsub.f32 %v872, %v1751
    %1753 = vmatpush1.msra.mxu0 %v1752
    %1754 = vmatprep.subr.mxu0 0.0
    %v1755 = vand.u32 %v871, 4294901760
    %v1756 = vsub.f32 %v871, %v1755
    %1757 = vmatpush1.msra.mxu0 %v1756
    %1758 = vmatprep.subr.mxu0 0.0
    %v1759 = vand.u32 %v870, 4294901760
    %v1760 = vsub.f32 %v870, %v1759
    %1761 = vmatpush1.msra.mxu0 %v1760
    %1762 = vmatprep.subr.mxu0 0.0
    %v1763 = vand.u32 %v869, 4294901760
    %v1764 = vsub.f32 %v869, %v1763
    %1765 = vmatpush1.msra.mxu0 %v1764
    %1766 = vmatprep.subr.mxu0 0.0
    %v1767 = vand.u32 %v868, 4294901760
    %v1768 = vsub.f32 %v868, %v1767
    %1769 = vmatpush1.msra.mxu0 %v1768
    %1770 = vmatprep.subr.mxu0 0.0
    %v1771 = vand.u32 %v867, 4294901760
    %v1772 = vsub.f32 %v867, %v1771
    %1773 = vmatpush1.msra.mxu0 %v1772
    %1774 = vmatprep.subr.mxu0 0.0
    %v1775 = vand.u32 %v866, 4294901760
    %v1776 = vsub.f32 %v866, %v1775
    %1777 = vmatpush1.msra.mxu0 %v1776
    %1778 = vmatprep.subr.mxu0 0.0
    %v1779 = vand.u32 %v865, 4294901760
    %v1780 = vsub.f32 %v865, %v1779
    %1781 = vmatpush1.msra.mxu0 %v1780
    %1782 = vmatprep.subr.mxu0 0.0
    %v1783 = vand.u32 %v864, 4294901760
    %v1784 = vsub.f32 %v864, %v1783
    %1785 = vmatpush1.msra.mxu0 %v1784
    %1786 = vmatprep.subr.mxu0 0.0
    %v1787 = vand.u32 %v863, 4294901760
    %v1788 = vsub.f32 %v863, %v1787
    %1789 = vmatpush1.msra.mxu0 %v1788
    %1790 = vmatprep.subr.mxu0 0.0
    %v1791 = vand.u32 %v862, 4294901760
    %v1792 = vsub.f32 %v862, %v1791
    %1793 = vmatpush1.msra.mxu0 %v1792
    %1794 = vmatprep.subr.mxu0 0.0
    %v1795 = vand.u32 %v861, 4294901760
    %v1796 = vsub.f32 %v861, %v1795
    %1797 = vmatpush1.msra.mxu0 %v1796
    %1798 = vmatprep.subr.mxu0 0.0
    %v1799 = vand.u32 %v860, 4294901760
    %v1800 = vsub.f32 %v860, %v1799
    %1801 = vmatpush1.msra.mxu0 %v1800
    %1802 = vmatprep.subr.mxu0 0.0
    %v1803 = vand.u32 %v859, 4294901760
    %v1804 = vsub.f32 %v859, %v1803
    %1805 = vmatpush1.msra.mxu0 %v1804
    %1806 = vmatprep.subr.mxu0 0.0
    %v1807 = vand.u32 %v858, 4294901760
    %v1808 = vsub.f32 %v858, %v1807
    %1809 = vmatpush1.msra.mxu0 %v1808
    %1810 = vmatprep.subr.mxu0 0.0
    %1811 = vmatpush2.msra.mxu0 0.0
    %1812 = vmatprep.subr.mxu0 0.0
    %1813 = vmatpush2.msra.mxu0 0.0
    %1814 = vmatprep.subr.mxu0 0.0
    %1815 = vmatpush2.msra.mxu0 0.0
    %1816 = vmatprep.subr.mxu0 0.0
    %1817 = vmatpush2.msra.mxu0 0.0
    %1818 = vmatprep.subr.mxu0 0.0
    %1819 = vmatpush2.msra.mxu0 0.0
    %1820 = vmatprep.subr.mxu0 0.0
    %1821 = vmatpush2.msra.mxu0 0.0
    %1822 = vmatprep.subr.mxu0 0.0
    %1823 = vmatpush2.msra.mxu0 0.0
    %1824 = vmatprep.subr.mxu0 0.0
    %1825 = vmatpush2.msra.mxu0 0.0
    %1826 = vmatprep.subr.mxu0 0.0
    %1827 = vmatpush2.msra.mxu0 0.0
    %1828 = vmatprep.subr.mxu0 0.0
    %1829 = vmatpush2.msra.mxu0 0.0
    %1830 = vmatprep.subr.mxu0 0.0
    %1831 = vmatpush2.msra.mxu0 0.0
    %1832 = vmatprep.subr.mxu0 0.0
    %1833 = vmatpush2.msra.mxu0 0.0
    %1834 = vmatprep.subr.mxu0 0.0
    %1835 = vmatpush2.msra.mxu0 0.0
    %1836 = vmatprep.subr.mxu0 0.0
    %1837 = vmatpush2.msra.mxu0 0.0
    %1838 = vmatprep.subr.mxu0 0.0
    %1839 = vmatpush2.msra.mxu0 0.0
    %1840 = vmatprep.subr.mxu0 0.0
    %1841 = vmatpush2.msra.mxu0 0.0
    %1842 = vmatprep.mubr.f32.mxu0 0.0
    %v1843 = vand.u32 %v1503, 4294901760
    %v1844 = vsub.f32 %v1503, %v1843
    %1845 = vmatmul.mubr.f32.gmra.mxu0 %v1844
    %v1846 = vpop.f32.mrf.mxu0
    %v1847 = vadd.f32 %v1743, %v1846
    %v1848 = vpop.f32.mrf.mxu0
    %1849 = vdwg.mxu0
    %1850 = vmatprep.subr.mxu0 0.0
    %v1851 = vand.u32 %v873, 4294901760
    %1852 = vmatpush1.msra.mxu0 %v1851
    %1853 = vmatprep.subr.mxu0 0.0
    %v1854 = vand.u32 %v872, 4294901760
    %1855 = vmatpush1.msra.mxu0 %v1854
    %1856 = vmatprep.subr.mxu0 0.0
    %v1857 = vand.u32 %v871, 4294901760
    %1858 = vmatpush1.msra.mxu0 %v1857
    %1859 = vmatprep.subr.mxu0 0.0
    %v1860 = vand.u32 %v870, 4294901760
    %1861 = vmatpush1.msra.mxu0 %v1860
    %1862 = vmatprep.subr.mxu0 0.0
    %v1863 = vand.u32 %v869, 4294901760
    %1864 = vmatpush1.msra.mxu0 %v1863
    %1865 = vmatprep.subr.mxu0 0.0
    %v1866 = vand.u32 %v868, 4294901760
    %1867 = vmatpush1.msra.mxu0 %v1866
    %1868 = vmatprep.subr.mxu0 0.0
    %v1869 = vand.u32 %v867, 4294901760
    %1870 = vmatpush1.msra.mxu0 %v1869
    %1871 = vmatprep.subr.mxu0 0.0
    %v1872 = vand.u32 %v866, 4294901760
    %1873 = vmatpush1.msra.mxu0 %v1872
    %1874 = vmatprep.subr.mxu0 0.0
    %v1875 = vand.u32 %v865, 4294901760
    %1876 = vmatpush1.msra.mxu0 %v1875
    %1877 = vmatprep.subr.mxu0 0.0
    %v1878 = vand.u32 %v864, 4294901760
    %1879 = vmatpush1.msra.mxu0 %v1878
    %1880 = vmatprep.subr.mxu0 0.0
    %v1881 = vand.u32 %v863, 4294901760
    %1882 = vmatpush1.msra.mxu0 %v1881
    %1883 = vmatprep.subr.mxu0 0.0
    %v1884 = vand.u32 %v862, 4294901760
    %1885 = vmatpush1.msra.mxu0 %v1884
    %1886 = vmatprep.subr.mxu0 0.0
    %v1887 = vand.u32 %v861, 4294901760
    %1888 = vmatpush1.msra.mxu0 %v1887
    %1889 = vmatprep.subr.mxu0 0.0
    %v1890 = vand.u32 %v860, 4294901760
    %1891 = vmatpush1.msra.mxu0 %v1890
    %1892 = vmatprep.subr.mxu0 0.0
    %v1893 = vand.u32 %v859, 4294901760
    %1894 = vmatpush1.msra.mxu0 %v1893
    %1895 = vmatprep.subr.mxu0 0.0
    %v1896 = vand.u32 %v858, 4294901760
    %1897 = vmatpush1.msra.mxu0 %v1896
    %1898 = vmatprep.subr.mxu0 0.0
    %1899 = vmatpush2.msra.mxu0 0.0
    %1900 = vmatprep.subr.mxu0 0.0
    %1901 = vmatpush2.msra.mxu0 0.0
    %1902 = vmatprep.subr.mxu0 0.0
    %1903 = vmatpush2.msra.mxu0 0.0
    %1904 = vmatprep.subr.mxu0 0.0
    %1905 = vmatpush2.msra.mxu0 0.0
    %1906 = vmatprep.subr.mxu0 0.0
    %1907 = vmatpush2.msra.mxu0 0.0
    %1908 = vmatprep.subr.mxu0 0.0
    %1909 = vmatpush2.msra.mxu0 0.0
    %1910 = vmatprep.subr.mxu0 0.0
    %1911 = vmatpush2.msra.mxu0 0.0
    %1912 = vmatprep.subr.mxu0 0.0
    %1913 = vmatpush2.msra.mxu0 0.0
    %1914 = vmatprep.subr.mxu0 0.0
    %1915 = vmatpush2.msra.mxu0 0.0
    %1916 = vmatprep.subr.mxu0 0.0
    %1917 = vmatpush2.msra.mxu0 0.0
    %1918 = vmatprep.subr.mxu0 0.0
    %1919 = vmatpush2.msra.mxu0 0.0
    %1920 = vmatprep.subr.mxu0 0.0
    %1921 = vmatpush2.msra.mxu0 0.0
    %1922 = vmatprep.subr.mxu0 0.0
    %1923 = vmatpush2.msra.mxu0 0.0
    %1924 = vmatprep.subr.mxu0 0.0
    %1925 = vmatpush2.msra.mxu0 0.0
    %1926 = vmatprep.subr.mxu0 0.0
    %1927 = vmatpush2.msra.mxu0 0.0
    %1928 = vmatprep.subr.mxu0 0.0
    %1929 = vmatpush2.msra.mxu0 0.0
    %1930 = vmatprep.mubr.f32.mxu0 0.0
    %v1931 = vand.u32 %v1503, 4294901760
    %v1932 = vsub.f32 %v1503, %v1931
    %v1933 = vand.u32 %v1932, 4294901760
    %1934 = vmatmul.mubr.f32.gmra.mxu0 %v1933
    %v1935 = vpop.f32.mrf.mxu0
    %v1936 = vadd.f32 %v1847, %v1935
    %v1937 = vpop.f32.mrf.mxu0
    %1938 = vdwg.mxu0
    %1939 = vmatprep.subr.mxu0 0.0
    %v1940 = vand.u32 %v873, 4294901760
    %v1941 = vsub.f32 %v873, %v1940
    %v1942 = vand.u32 %v1941, 4294901760
    %1943 = vmatpush1.msra.mxu0 %v1942
    %1944 = vmatprep.subr.mxu0 0.0
    %v1945 = vand.u32 %v872, 4294901760
    %v1946 = vsub.f32 %v872, %v1945
    %v1947 = vand.u32 %v1946, 4294901760
    %1948 = vmatpush1.msra.mxu0 %v1947
    %1949 = vmatprep.subr.mxu0 0.0
    %v1950 = vand.u32 %v871, 4294901760
    %v1951 = vsub.f32 %v871, %v1950
    %v1952 = vand.u32 %v1951, 4294901760
    %1953 = vmatpush1.msra.mxu0 %v1952
    %1954 = vmatprep.subr.mxu0 0.0
    %v1955 = vand.u32 %v870, 4294901760
    %v1956 = vsub.f32 %v870, %v1955
    %v1957 = vand.u32 %v1956, 4294901760
    %1958 = vmatpush1.msra.mxu0 %v1957
    %1959 = vmatprep.subr.mxu0 0.0
    %v1960 = vand.u32 %v869, 4294901760
    %v1961 = vsub.f32 %v869, %v1960
    %v1962 = vand.u32 %v1961, 4294901760
    %1963 = vmatpush1.msra.mxu0 %v1962
    %1964 = vmatprep.subr.mxu0 0.0
    %v1965 = vand.u32 %v868, 4294901760
    %v1966 = vsub.f32 %v868, %v1965
    %v1967 = vand.u32 %v1966, 4294901760
    %1968 = vmatpush1.msra.mxu0 %v1967
    %1969 = vmatprep.subr.mxu0 0.0
    %v1970 = vand.u32 %v867, 4294901760
    %v1971 = vsub.f32 %v867, %v1970
    %v1972 = vand.u32 %v1971, 4294901760
    %1973 = vmatpush1.msra.mxu0 %v1972
    %1974 = vmatprep.subr.mxu0 0.0
    %v1975 = vand.u32 %v866, 4294901760
    %v1976 = vsub.f32 %v866, %v1975
    %v1977 = vand.u32 %v1976, 4294901760
    %1978 = vmatpush1.msra.mxu0 %v1977
    %1979 = vmatprep.subr.mxu0 0.0
    %v1980 = vand.u32 %v865, 4294901760
    %v1981 = vsub.f32 %v865, %v1980
    %v1982 = vand.u32 %v1981, 4294901760
    %1983 = vmatpush1.msra.mxu0 %v1982
    %1984 = vmatprep.subr.mxu0 0.0
    %v1985 = vand.u32 %v864, 4294901760
    %v1986 = vsub.f32 %v864, %v1985
    %v1987 = vand.u32 %v1986, 4294901760
    %1988 = vmatpush1.msra.mxu0 %v1987
    %1989 = vmatprep.subr.mxu0 0.0
    %v1990 = vand.u32 %v863, 4294901760
    %v1991 = vsub.f32 %v863, %v1990
    %v1992 = vand.u32 %v1991, 4294901760
    %1993 = vmatpush1.msra.mxu0 %v1992
    %1994 = vmatprep.subr.mxu0 0.0
    %v1995 = vand.u32 %v862, 4294901760
    %v1996 = vsub.f32 %v862, %v1995
    %v1997 = vand.u32 %v1996, 4294901760
    %1998 = vmatpush1.msra.mxu0 %v1997
    %1999 = vmatprep.subr.mxu0 0.0
    %v2000 = vand.u32 %v861, 4294901760
    %v2001 = vsub.f32 %v861, %v2000
    %v2002 = vand.u32 %v2001, 4294901760
    %2003 = vmatpush1.msra.mxu0 %v2002
    %2004 = vmatprep.subr.mxu0 0.0
    %v2005 = vand.u32 %v860, 4294901760
    %v2006 = vsub.f32 %v860, %v2005
    %v2007 = vand.u32 %v2006, 4294901760
    %2008 = vmatpush1.msra.mxu0 %v2007
    %2009 = vmatprep.subr.mxu0 0.0
    %v2010 = vand.u32 %v859, 4294901760
    %v2011 = vsub.f32 %v859, %v2010
    %v2012 = vand.u32 %v2011, 4294901760
    %2013 = vmatpush1.msra.mxu0 %v2012
    %2014 = vmatprep.subr.mxu0 0.0
    %v2015 = vand.u32 %v858, 4294901760
    %v2016 = vsub.f32 %v858, %v2015
    %v2017 = vand.u32 %v2016, 4294901760
    %2018 = vmatpush1.msra.mxu0 %v2017
    %2019 = vmatprep.subr.mxu0 0.0
    %2020 = vmatpush2.msra.mxu0 0.0
    %2021 = vmatprep.subr.mxu0 0.0
    %2022 = vmatpush2.msra.mxu0 0.0
    %2023 = vmatprep.subr.mxu0 0.0
    %2024 = vmatpush2.msra.mxu0 0.0
    %2025 = vmatprep.subr.mxu0 0.0
    %2026 = vmatpush2.msra.mxu0 0.0
    %2027 = vmatprep.subr.mxu0 0.0
    %2028 = vmatpush2.msra.mxu0 0.0
    %2029 = vmatprep.subr.mxu0 0.0
    %2030 = vmatpush2.msra.mxu0 0.0
    %2031 = vmatprep.subr.mxu0 0.0
    %2032 = vmatpush2.msra.mxu0 0.0
    %2033 = vmatprep.subr.mxu0 0.0
    %2034 = vmatpush2.msra.mxu0 0.0
    %2035 = vmatprep.subr.mxu0 0.0
    %2036 = vmatpush2.msra.mxu0 0.0
    %2037 = vmatprep.subr.mxu0 0.0
    %2038 = vmatpush2.msra.mxu0 0.0
    %2039 = vmatprep.subr.mxu0 0.0
    %2040 = vmatpush2.msra.mxu0 0.0
    %2041 = vmatprep.subr.mxu0 0.0
    %2042 = vmatpush2.msra.mxu0 0.0
    %2043 = vmatprep.subr.mxu0 0.0
    %2044 = vmatpush2.msra.mxu0 0.0
    %2045 = vmatprep.subr.mxu0 0.0
    %2046 = vmatpush2.msra.mxu0 0.0
    %2047 = vmatprep.subr.mxu0 0.0
    %2048 = vmatpush2.msra.mxu0 0.0
    %2049 = vmatprep.subr.mxu0 0.0
    %2050 = vmatpush2.msra.mxu0 0.0
    %2051 = vmatprep.mubr.f32.mxu0 0.0
    %v2052 = vand.u32 %v1503, 4294901760
    %2053 = vmatmul.mubr.f32.gmra.mxu0 %v2052
    %v2054 = vpop.f32.mrf.mxu0
    %v2055 = vadd.f32 %v1936, %v2054
    %v2056 = vpop.f32.mrf.mxu0
    %2057 = vdwg.mxu0
    %2058 = vmatprep.subr.mxu0 0.0
    %v2059 = vand.u32 %v873, 4294901760
    %2060 = vmatpush1.msra.mxu0 %v2059
    %2061 = vmatprep.subr.mxu0 0.0
    %v2062 = vand.u32 %v872, 4294901760
    %2063 = vmatpush1.msra.mxu0 %v2062
    %2064 = vmatprep.subr.mxu0 0.0
    %v2065 = vand.u32 %v871, 4294901760
    %2066 = vmatpush1.msra.mxu0 %v2065
    %2067 = vmatprep.subr.mxu0 0.0
    %v2068 = vand.u32 %v870, 4294901760
    %2069 = vmatpush1.msra.mxu0 %v2068
    %2070 = vmatprep.subr.mxu0 0.0
    %v2071 = vand.u32 %v869, 4294901760
    %2072 = vmatpush1.msra.mxu0 %v2071
    %2073 = vmatprep.subr.mxu0 0.0
    %v2074 = vand.u32 %v868, 4294901760
    %2075 = vmatpush1.msra.mxu0 %v2074
    %2076 = vmatprep.subr.mxu0 0.0
    %v2077 = vand.u32 %v867, 4294901760
    %2078 = vmatpush1.msra.mxu0 %v2077
    %2079 = vmatprep.subr.mxu0 0.0
    %v2080 = vand.u32 %v866, 4294901760
    %2081 = vmatpush1.msra.mxu0 %v2080
    %2082 = vmatprep.subr.mxu0 0.0
    %v2083 = vand.u32 %v865, 4294901760
    %2084 = vmatpush1.msra.mxu0 %v2083
    %2085 = vmatprep.subr.mxu0 0.0
    %v2086 = vand.u32 %v864, 4294901760
    %2087 = vmatpush1.msra.mxu0 %v2086
    %2088 = vmatprep.subr.mxu0 0.0
    %v2089 = vand.u32 %v863, 4294901760
    %2090 = vmatpush1.msra.mxu0 %v2089
    %2091 = vmatprep.subr.mxu0 0.0
    %v2092 = vand.u32 %v862, 4294901760
    %2093 = vmatpush1.msra.mxu0 %v2092
    %2094 = vmatprep.subr.mxu0 0.0
    %v2095 = vand.u32 %v861, 4294901760
    %2096 = vmatpush1.msra.mxu0 %v2095
    %2097 = vmatprep.subr.mxu0 0.0
    %v2098 = vand.u32 %v860, 4294901760
    %2099 = vmatpush1.msra.mxu0 %v2098
    %2100 = vmatprep.subr.mxu0 0.0
    %v2101 = vand.u32 %v859, 4294901760
    %2102 = vmatpush1.msra.mxu0 %v2101
    %2103 = vmatprep.subr.mxu0 0.0
    %v2104 = vand.u32 %v858, 4294901760
    %2105 = vmatpush1.msra.mxu0 %v2104
    %2106 = vmatprep.subr.mxu0 0.0
    %2107 = vmatpush2.msra.mxu0 0.0
    %2108 = vmatprep.subr.mxu0 0.0
    %2109 = vmatpush2.msra.mxu0 0.0
    %2110 = vmatprep.subr.mxu0 0.0
    %2111 = vmatpush2.msra.mxu0 0.0
    %2112 = vmatprep.subr.mxu0 0.0
    %2113 = vmatpush2.msra.mxu0 0.0
    %2114 = vmatprep.subr.mxu0 0.0
    %2115 = vmatpush2.msra.mxu0 0.0
    %2116 = vmatprep.subr.mxu0 0.0
    %2117 = vmatpush2.msra.mxu0 0.0
    %2118 = vmatprep.subr.mxu0 0.0
    %2119 = vmatpush2.msra.mxu0 0.0
    %2120 = vmatprep.subr.mxu0 0.0
    %2121 = vmatpush2.msra.mxu0 0.0
    %2122 = vmatprep.subr.mxu0 0.0
    %2123 = vmatpush2.msra.mxu0 0.0
    %2124 = vmatprep.subr.mxu0 0.0
    %2125 = vmatpush2.msra.mxu0 0.0
    %2126 = vmatprep.subr.mxu0 0.0
    %2127 = vmatpush2.msra.mxu0 0.0
    %2128 = vmatprep.subr.mxu0 0.0
    %2129 = vmatpush2.msra.mxu0 0.0
    %2130 = vmatprep.subr.mxu0 0.0
    %2131 = vmatpush2.msra.mxu0 0.0
    %2132 = vmatprep.subr.mxu0 0.0
    %2133 = vmatpush2.msra.mxu0 0.0
    %2134 = vmatprep.subr.mxu0 0.0
    %2135 = vmatpush2.msra.mxu0 0.0
    %2136 = vmatprep.subr.mxu0 0.0
    %2137 = vmatpush2.msra.mxu0 0.0
    %2138 = vmatprep.mubr.f32.mxu0 0.0
    %v2139 = vand.u32 %v1503, 4294901760
    %2140 = vmatmul.mubr.f32.gmra.mxu0 %v2139
    %v2141 = vpop.f32.mrf.mxu0
    %v2142 = vadd.f32 %v2055, %v2141
    %v2143 = vpop.f32.mrf.mxu0
    %2144 = vdwg.mxu0
    %v2145 = vadd.f32 %v819, %v2142
    %v2146 = vtanh.pop %v2145
    %2147 = vmatprep.subr.mxu0 0.0
    %v2148 = vand.u32 %v873, 4294901760
    %2149 = vmatpush1.msra.mxu0 %v2148
    %2150 = vmatprep.subr.mxu0 0.0
    %v2151 = vand.u32 %v872, 4294901760
    %2152 = vmatpush1.msra.mxu0 %v2151
    %2153 = vmatprep.subr.mxu0 0.0
    %v2154 = vand.u32 %v871, 4294901760
    %2155 = vmatpush1.msra.mxu0 %v2154
    %2156 = vmatprep.subr.mxu0 0.0
    %v2157 = vand.u32 %v870, 4294901760
    %2158 = vmatpush1.msra.mxu0 %v2157
    %2159 = vmatprep.subr.mxu0 0.0
    %v2160 = vand.u32 %v869, 4294901760
    %2161 = vmatpush1.msra.mxu0 %v2160
    %2162 = vmatprep.subr.mxu0 0.0
    %v2163 = vand.u32 %v868, 4294901760
    %2164 = vmatpush1.msra.mxu0 %v2163
    %2165 = vmatprep.subr.mxu0 0.0
    %v2166 = vand.u32 %v867, 4294901760
    %2167 = vmatpush1.msra.mxu0 %v2166
    %2168 = vmatprep.subr.mxu0 0.0
    %v2169 = vand.u32 %v866, 4294901760
    %2170 = vmatpush1.msra.mxu0 %v2169
    %2171 = vmatprep.subr.mxu0 0.0
    %v2172 = vand.u32 %v865, 4294901760
    %2173 = vmatpush1.msra.mxu0 %v2172
    %2174 = vmatprep.subr.mxu0 0.0
    %v2175 = vand.u32 %v864, 4294901760
    %2176 = vmatpush1.msra.mxu0 %v2175
    %2177 = vmatprep.subr.mxu0 0.0
    %v2178 = vand.u32 %v863, 4294901760
    %2179 = vmatpush1.msra.mxu0 %v2178
    %2180 = vmatprep.subr.mxu0 0.0
    %v2181 = vand.u32 %v862, 4294901760
    %2182 = vmatpush1.msra.mxu0 %v2181
    %2183 = vmatprep.subr.mxu0 0.0
    %v2184 = vand.u32 %v861, 4294901760
    %2185 = vmatpush1.msra.mxu0 %v2184
    %2186 = vmatprep.subr.mxu0 0.0
    %v2187 = vand.u32 %v860, 4294901760
    %2188 = vmatpush1.msra.mxu0 %v2187
    %2189 = vmatprep.subr.mxu0 0.0
    %v2190 = vand.u32 %v859, 4294901760
    %2191 = vmatpush1.msra.mxu0 %v2190
    %2192 = vmatprep.subr.mxu0 0.0
    %v2193 = vand.u32 %v858, 4294901760
    %2194 = vmatpush1.msra.mxu0 %v2193
    %2195 = vmatprep.subr.mxu0 0.0
    %2196 = vmatpush2.msra.mxu0 0.0
    %2197 = vmatprep.subr.mxu0 0.0
    %2198 = vmatpush2.msra.mxu0 0.0
    %2199 = vmatprep.subr.mxu0 0.0
    %2200 = vmatpush2.msra.mxu0 0.0
    %2201 = vmatprep.subr.mxu0 0.0
    %2202 = vmatpush2.msra.mxu0 0.0
    %2203 = vmatprep.subr.mxu0 0.0
    %2204 = vmatpush2.msra.mxu0 0.0
    %2205 = vmatprep.subr.mxu0 0.0
    %2206 = vmatpush2.msra.mxu0 0.0
    %2207 = vmatprep.subr.mxu0 0.0
    %2208 = vmatpush2.msra.mxu0 0.0
    %2209 = vmatprep.subr.mxu0 0.0
    %2210 = vmatpush2.msra.mxu0 0.0
    %2211 = vmatprep.subr.mxu0 0.0
    %2212 = vmatpush2.msra.mxu0 0.0
    %2213 = vmatprep.subr.mxu0 0.0
    %2214 = vmatpush2.msra.mxu0 0.0
    %2215 = vmatprep.subr.mxu0 0.0
    %2216 = vmatpush2.msra.mxu0 0.0
    %2217 = vmatprep.subr.mxu0 0.0
    %2218 = vmatpush2.msra.mxu0 0.0
    %2219 = vmatprep.subr.mxu0 0.0
    %2220 = vmatpush2.msra.mxu0 0.0
    %2221 = vmatprep.subr.mxu0 0.0
    %2222 = vmatpush2.msra.mxu0 0.0
    %2223 = vmatprep.subr.mxu0 0.0
    %2224 = vmatpush2.msra.mxu0 0.0
    %2225 = vmatprep.subr.mxu0 0.0
    %2226 = vmatpush2.msra.mxu0 0.0
    %2227 = vmatprep.mubr.f32.mxu0 0.0
    %v2228 = vand.u32 %v2146, 4294901760
    %v2229 = vsub.f32 %v2146, %v2228
    %v2230 = vand.u32 %v2229, 4294901760
    %v2231 = vsub.f32 %v2229, %v2230
    %v2232 = vand.u32 %v2231, 4294901760
    %2233 = vmatmul.mubr.f32.gmra.mxu0 %v2232
    %v2234 = vpop.f32.mrf.mxu0
    %v2235 = vadd.f32 0.0, %v2234
    %v2236 = vpop.f32.mrf.mxu0
    %2237 = vdwg.mxu0
    %2238 = vmatprep.subr.mxu0 0.0
    %v2239 = vand.u32 %v873, 4294901760
    %v2240 = vsub.f32 %v873, %v2239
    %v2241 = vand.u32 %v2240, 4294901760
    %v2242 = vsub.f32 %v2240, %v2241
    %v2243 = vand.u32 %v2242, 4294901760
    %2244 = vmatpush1.msra.mxu0 %v2243
    %2245 = vmatprep.subr.mxu0 0.0
    %v2246 = vand.u32 %v872, 4294901760
    %v2247 = vsub.f32 %v872, %v2246
    %v2248 = vand.u32 %v2247, 4294901760
    %v2249 = vsub.f32 %v2247, %v2248
    %v2250 = vand.u32 %v2249, 4294901760
    %2251 = vmatpush1.msra.mxu0 %v2250
    %2252 = vmatprep.subr.mxu0 0.0
    %v2253 = vand.u32 %v871, 4294901760
    %v2254 = vsub.f32 %v871, %v2253
    %v2255 = vand.u32 %v2254, 4294901760
    %v2256 = vsub.f32 %v2254, %v2255
    %v2257 = vand.u32 %v2256, 4294901760
    %2258 = vmatpush1.msra.mxu0 %v2257
    %2259 = vmatprep.subr.mxu0 0.0
    %v2260 = vand.u32 %v870, 4294901760
    %v2261 = vsub.f32 %v870, %v2260
    %v2262 = vand.u32 %v2261, 4294901760
    %v2263 = vsub.f32 %v2261, %v2262
    %v2264 = vand.u32 %v2263, 4294901760
    %2265 = vmatpush1.msra.mxu0 %v2264
    %2266 = vmatprep.subr.mxu0 0.0
    %v2267 = vand.u32 %v869, 4294901760
    %v2268 = vsub.f32 %v869, %v2267
    %v2269 = vand.u32 %v2268, 4294901760
    %v2270 = vsub.f32 %v2268, %v2269
    %v2271 = vand.u32 %v2270, 4294901760
    %2272 = vmatpush1.msra.mxu0 %v2271
    %2273 = vmatprep.subr.mxu0 0.0
    %v2274 = vand.u32 %v868, 4294901760
    %v2275 = vsub.f32 %v868, %v2274
    %v2276 = vand.u32 %v2275, 4294901760
    %v2277 = vsub.f32 %v2275, %v2276
    %v2278 = vand.u32 %v2277, 4294901760
    %2279 = vmatpush1.msra.mxu0 %v2278
    %2280 = vmatprep.subr.mxu0 0.0
    %v2281 = vand.u32 %v867, 4294901760
    %v2282 = vsub.f32 %v867, %v2281
    %v2283 = vand.u32 %v2282, 4294901760
    %v2284 = vsub.f32 %v2282, %v2283
    %v2285 = vand.u32 %v2284, 4294901760
    %2286 = vmatpush1.msra.mxu0 %v2285
    %2287 = vmatprep.subr.mxu0 0.0
    %v2288 = vand.u32 %v866, 4294901760
    %v2289 = vsub.f32 %v866, %v2288
    %v2290 = vand.u32 %v2289, 4294901760
    %v2291 = vsub.f32 %v2289, %v2290
    %v2292 = vand.u32 %v2291, 4294901760
    %2293 = vmatpush1.msra.mxu0 %v2292
    %2294 = vmatprep.subr.mxu0 0.0
    %v2295 = vand.u32 %v865, 4294901760
    %v2296 = vsub.f32 %v865, %v2295
    %v2297 = vand.u32 %v2296, 4294901760
    %v2298 = vsub.f32 %v2296, %v2297
    %v2299 = vand.u32 %v2298, 4294901760
    %2300 = vmatpush1.msra.mxu0 %v2299
    %2301 = vmatprep.subr.mxu0 0.0
    %v2302 = vand.u32 %v864, 4294901760
    %v2303 = vsub.f32 %v864, %v2302
    %v2304 = vand.u32 %v2303, 4294901760
    %v2305 = vsub.f32 %v2303, %v2304
    %v2306 = vand.u32 %v2305, 4294901760
    %2307 = vmatpush1.msra.mxu0 %v2306
    %2308 = vmatprep.subr.mxu0 0.0
    %v2309 = vand.u32 %v863, 4294901760
    %v2310 = vsub.f32 %v863, %v2309
    %v2311 = vand.u32 %v2310, 4294901760
    %v2312 = vsub.f32 %v2310, %v2311
    %v2313 = vand.u32 %v2312, 4294901760
    %2314 = vmatpush1.msra.mxu0 %v2313
    %2315 = vmatprep.subr.mxu0 0.0
    %v2316 = vand.u32 %v862, 4294901760
    %v2317 = vsub.f32 %v862, %v2316
    %v2318 = vand.u32 %v2317, 4294901760
    %v2319 = vsub.f32 %v2317, %v2318
    %v2320 = vand.u32 %v2319, 4294901760
    %2321 = vmatpush1.msra.mxu0 %v2320
    %2322 = vmatprep.subr.mxu0 0.0
    %v2323 = vand.u32 %v861, 4294901760
    %v2324 = vsub.f32 %v861, %v2323
    %v2325 = vand.u32 %v2324, 4294901760
    %v2326 = vsub.f32 %v2324, %v2325
    %v2327 = vand.u32 %v2326, 4294901760
    %2328 = vmatpush1.msra.mxu0 %v2327
    %2329 = vmatprep.subr.mxu0 0.0
    %v2330 = vand.u32 %v860, 4294901760
    %v2331 = vsub.f32 %v860, %v2330
    %v2332 = vand.u32 %v2331, 4294901760
    %v2333 = vsub.f32 %v2331, %v2332
    %v2334 = vand.u32 %v2333, 4294901760
    %2335 = vmatpush1.msra.mxu0 %v2334
    %2336 = vmatprep.subr.mxu0 0.0
    %v2337 = vand.u32 %v859, 4294901760
    %v2338 = vsub.f32 %v859, %v2337
    %v2339 = vand.u32 %v2338, 4294901760
    %v2340 = vsub.f32 %v2338, %v2339
    %v2341 = vand.u32 %v2340, 4294901760
    %2342 = vmatpush1.msra.mxu0 %v2341
    %2343 = vmatprep.subr.mxu0 0.0
    %v2344 = vand.u32 %v858, 4294901760
    %v2345 = vsub.f32 %v858, %v2344
    %v2346 = vand.u32 %v2345, 4294901760
    %v2347 = vsub.f32 %v2345, %v2346
    %v2348 = vand.u32 %v2347, 4294901760
    %2349 = vmatpush1.msra.mxu0 %v2348
    %2350 = vmatprep.subr.mxu0 0.0
    %2351 = vmatpush2.msra.mxu0 0.0
    %2352 = vmatprep.subr.mxu0 0.0
    %2353 = vmatpush2.msra.mxu0 0.0
    %2354 = vmatprep.subr.mxu0 0.0
    %2355 = vmatpush2.msra.mxu0 0.0
    %2356 = vmatprep.subr.mxu0 0.0
    %2357 = vmatpush2.msra.mxu0 0.0
    %2358 = vmatprep.subr.mxu0 0.0
    %2359 = vmatpush2.msra.mxu0 0.0
    %2360 = vmatprep.subr.mxu0 0.0
    %2361 = vmatpush2.msra.mxu0 0.0
    %2362 = vmatprep.subr.mxu0 0.0
    %2363 = vmatpush2.msra.mxu0 0.0
    %2364 = vmatprep.subr.mxu0 0.0
    %2365 = vmatpush2.msra.mxu0 0.0
    %2366 = vmatprep.subr.mxu0 0.0
    %2367 = vmatpush2.msra.mxu0 0.0
    %2368 = vmatprep.subr.mxu0 0.0
    %2369 = vmatpush2.msra.mxu0 0.0
    %2370 = vmatprep.subr.mxu0 0.0
    %2371 = vmatpush2.msra.mxu0 0.0
    %2372 = vmatprep.subr.mxu0 0.0
    %2373 = vmatpush2.msra.mxu0 0.0
    %2374 = vmatprep.subr.mxu0 0.0
    %2375 = vmatpush2.msra.mxu0 0.0
    %2376 = vmatprep.subr.mxu0 0.0
    %2377 = vmatpush2.msra.mxu0 0.0
    %2378 = vmatprep.subr.mxu0 0.0
    %2379 = vmatpush2.msra.mxu0 0.0
    %2380 = vmatprep.subr.mxu0 0.0
    %2381 = vmatpush2.msra.mxu0 0.0
    %2382 = vmatprep.mubr.f32.mxu0 0.0
    %v2383 = vand.u32 %v2146, 4294901760
    %2384 = vmatmul.mubr.f32.gmra.mxu0 %v2383
    %v2385 = vpop.f32.mrf.mxu0
    %v2386 = vadd.f32 %v2235, %v2385
    %v2387 = vpop.f32.mrf.mxu0
    %2388 = vdwg.mxu0
    %2389 = vmatprep.subr.mxu0 0.0
    %v2390 = vand.u32 %v873, 4294901760
    %v2391 = vsub.f32 %v873, %v2390
    %2392 = vmatpush1.msra.mxu0 %v2391
    %2393 = vmatprep.subr.mxu0 0.0
    %v2394 = vand.u32 %v872, 4294901760
    %v2395 = vsub.f32 %v872, %v2394
    %2396 = vmatpush1.msra.mxu0 %v2395
    %2397 = vmatprep.subr.mxu0 0.0
    %v2398 = vand.u32 %v871, 4294901760
    %v2399 = vsub.f32 %v871, %v2398
    %2400 = vmatpush1.msra.mxu0 %v2399
    %2401 = vmatprep.subr.mxu0 0.0
    %v2402 = vand.u32 %v870, 4294901760
    %v2403 = vsub.f32 %v870, %v2402
    %2404 = vmatpush1.msra.mxu0 %v2403
    %2405 = vmatprep.subr.mxu0 0.0
    %v2406 = vand.u32 %v869, 4294901760
    %v2407 = vsub.f32 %v869, %v2406
    %2408 = vmatpush1.msra.mxu0 %v2407
    %2409 = vmatprep.subr.mxu0 0.0
    %v2410 = vand.u32 %v868, 4294901760
    %v2411 = vsub.f32 %v868, %v2410
    %2412 = vmatpush1.msra.mxu0 %v2411
    %2413 = vmatprep.subr.mxu0 0.0
    %v2414 = vand.u32 %v867, 4294901760
    %v2415 = vsub.f32 %v867, %v2414
    %2416 = vmatpush1.msra.mxu0 %v2415
    %2417 = vmatprep.subr.mxu0 0.0
    %v2418 = vand.u32 %v866, 4294901760
    %v2419 = vsub.f32 %v866, %v2418
    %2420 = vmatpush1.msra.mxu0 %v2419
    %2421 = vmatprep.subr.mxu0 0.0
    %v2422 = vand.u32 %v865, 4294901760
    %v2423 = vsub.f32 %v865, %v2422
    %2424 = vmatpush1.msra.mxu0 %v2423
    %2425 = vmatprep.subr.mxu0 0.0
    %v2426 = vand.u32 %v864, 4294901760
    %v2427 = vsub.f32 %v864, %v2426
    %2428 = vmatpush1.msra.mxu0 %v2427
    %2429 = vmatprep.subr.mxu0 0.0
    %v2430 = vand.u32 %v863, 4294901760
    %v2431 = vsub.f32 %v863, %v2430
    %2432 = vmatpush1.msra.mxu0 %v2431
    %2433 = vmatprep.subr.mxu0 0.0
    %v2434 = vand.u32 %v862, 4294901760
    %v2435 = vsub.f32 %v862, %v2434
    %2436 = vmatpush1.msra.mxu0 %v2435
    %2437 = vmatprep.subr.mxu0 0.0
    %v2438 = vand.u32 %v861, 4294901760
    %v2439 = vsub.f32 %v861, %v2438
    %2440 = vmatpush1.msra.mxu0 %v2439
    %2441 = vmatprep.subr.mxu0 0.0
    %v2442 = vand.u32 %v860, 4294901760
    %v2443 = vsub.f32 %v860, %v2442
    %2444 = vmatpush1.msra.mxu0 %v2443
    %2445 = vmatprep.subr.mxu0 0.0
    %v2446 = vand.u32 %v859, 4294901760
    %v2447 = vsub.f32 %v859, %v2446
    %2448 = vmatpush1.msra.mxu0 %v2447
    %2449 = vmatprep.subr.mxu0 0.0
    %v2450 = vand.u32 %v858, 4294901760
    %v2451 = vsub.f32 %v858, %v2450
    %2452 = vmatpush1.msra.mxu0 %v2451
    %2453 = vmatprep.subr.mxu0 0.0
    %2454 = vmatpush2.msra.mxu0 0.0
    %2455 = vmatprep.subr.mxu0 0.0
    %2456 = vmatpush2.msra.mxu0 0.0
    %2457 = vmatprep.subr.mxu0 0.0
    %2458 = vmatpush2.msra.mxu0 0.0
    %2459 = vmatprep.subr.mxu0 0.0
    %2460 = vmatpush2.msra.mxu0 0.0
    %2461 = vmatprep.subr.mxu0 0.0
    %2462 = vmatpush2.msra.mxu0 0.0
    %2463 = vmatprep.subr.mxu0 0.0
    %2464 = vmatpush2.msra.mxu0 0.0
    %2465 = vmatprep.subr.mxu0 0.0
    %2466 = vmatpush2.msra.mxu0 0.0
    %2467 = vmatprep.subr.mxu0 0.0
    %2468 = vmatpush2.msra.mxu0 0.0
    %2469 = vmatprep.subr.mxu0 0.0
    %2470 = vmatpush2.msra.mxu0 0.0
    %2471 = vmatprep.subr.mxu0 0.0
    %2472 = vmatpush2.msra.mxu0 0.0
    %2473 = vmatprep.subr.mxu0 0.0
    %2474 = vmatpush2.msra.mxu0 0.0
    %2475 = vmatprep.subr.mxu0 0.0
    %2476 = vmatpush2.msra.mxu0 0.0
    %2477 = vmatprep.subr.mxu0 0.0
    %2478 = vmatpush2.msra.mxu0 0.0
    %2479 = vmatprep.subr.mxu0 0.0
    %2480 = vmatpush2.msra.mxu0 0.0
    %2481 = vmatprep.subr.mxu0 0.0
    %2482 = vmatpush2.msra.mxu0 0.0
    %2483 = vmatprep.subr.mxu0 0.0
    %2484 = vmatpush2.msra.mxu0 0.0
    %2485 = vmatprep.mubr.f32.mxu0 0.0
    %v2486 = vand.u32 %v2146, 4294901760
    %v2487 = vsub.f32 %v2146, %v2486
    %2488 = vmatmul.mubr.f32.gmra.mxu0 %v2487
    %v2489 = vpop.f32.mrf.mxu0
    %v2490 = vadd.f32 %v2386, %v2489
    %v2491 = vpop.f32.mrf.mxu0
    %2492 = vdwg.mxu0
    %2493 = vmatprep.subr.mxu0 0.0
    %v2494 = vand.u32 %v873, 4294901760
    %2495 = vmatpush1.msra.mxu0 %v2494
    %2496 = vmatprep.subr.mxu0 0.0
    %v2497 = vand.u32 %v872, 4294901760
    %2498 = vmatpush1.msra.mxu0 %v2497
    %2499 = vmatprep.subr.mxu0 0.0
    %v2500 = vand.u32 %v871, 4294901760
    %2501 = vmatpush1.msra.mxu0 %v2500
    %2502 = vmatprep.subr.mxu0 0.0
    %v2503 = vand.u32 %v870, 4294901760
    %2504 = vmatpush1.msra.mxu0 %v2503
    %2505 = vmatprep.subr.mxu0 0.0
    %v2506 = vand.u32 %v869, 4294901760
    %2507 = vmatpush1.msra.mxu0 %v2506
    %2508 = vmatprep.subr.mxu0 0.0
    %v2509 = vand.u32 %v868, 4294901760
    %2510 = vmatpush1.msra.mxu0 %v2509
    %2511 = vmatprep.subr.mxu0 0.0
    %v2512 = vand.u32 %v867, 4294901760
    %2513 = vmatpush1.msra.mxu0 %v2512
    %2514 = vmatprep.subr.mxu0 0.0
    %v2515 = vand.u32 %v866, 4294901760
    %2516 = vmatpush1.msra.mxu0 %v2515
    %2517 = vmatprep.subr.mxu0 0.0
    %v2518 = vand.u32 %v865, 4294901760
    %2519 = vmatpush1.msra.mxu0 %v2518
    %2520 = vmatprep.subr.mxu0 0.0
    %v2521 = vand.u32 %v864, 4294901760
    %2522 = vmatpush1.msra.mxu0 %v2521
    %2523 = vmatprep.subr.mxu0 0.0
    %v2524 = vand.u32 %v863, 4294901760
    %2525 = vmatpush1.msra.mxu0 %v2524
    %2526 = vmatprep.subr.mxu0 0.0
    %v2527 = vand.u32 %v862, 4294901760
    %2528 = vmatpush1.msra.mxu0 %v2527
    %2529 = vmatprep.subr.mxu0 0.0
    %v2530 = vand.u32 %v861, 4294901760
    %2531 = vmatpush1.msra.mxu0 %v2530
    %2532 = vmatprep.subr.mxu0 0.0
    %v2533 = vand.u32 %v860, 4294901760
    %2534 = vmatpush1.msra.mxu0 %v2533
    %2535 = vmatprep.subr.mxu0 0.0
    %v2536 = vand.u32 %v859, 4294901760
    %2537 = vmatpush1.msra.mxu0 %v2536
    %2538 = vmatprep.subr.mxu0 0.0
    %v2539 = vand.u32 %v858, 4294901760
    %2540 = vmatpush1.msra.mxu0 %v2539
    %2541 = vmatprep.subr.mxu0 0.0
    %2542 = vmatpush2.msra.mxu0 0.0
    %2543 = vmatprep.subr.mxu0 0.0
    %2544 = vmatpush2.msra.mxu0 0.0
    %2545 = vmatprep.subr.mxu0 0.0
    %2546 = vmatpush2.msra.mxu0 0.0
    %2547 = vmatprep.subr.mxu0 0.0
    %2548 = vmatpush2.msra.mxu0 0.0
    %2549 = vmatprep.subr.mxu0 0.0
    %2550 = vmatpush2.msra.mxu0 0.0
    %2551 = vmatprep.subr.mxu0 0.0
    %2552 = vmatpush2.msra.mxu0 0.0
    %2553 = vmatprep.subr.mxu0 0.0
    %2554 = vmatpush2.msra.mxu0 0.0
    %2555 = vmatprep.subr.mxu0 0.0
    %2556 = vmatpush2.msra.mxu0 0.0
    %2557 = vmatprep.subr.mxu0 0.0
    %2558 = vmatpush2.msra.mxu0 0.0
    %2559 = vmatprep.subr.mxu0 0.0
    %2560 = vmatpush2.msra.mxu0 0.0
    %2561 = vmatprep.subr.mxu0 0.0
    %2562 = vmatpush2.msra.mxu0 0.0
    %2563 = vmatprep.subr.mxu0 0.0
    %2564 = vmatpush2.msra.mxu0 0.0
    %2565 = vmatprep.subr.mxu0 0.0
    %2566 = vmatpush2.msra.mxu0 0.0
    %2567 = vmatprep.subr.mxu0 0.0
    %2568 = vmatpush2.msra.mxu0 0.0
    %2569 = vmatprep.subr.mxu0 0.0
    %2570 = vmatpush2.msra.mxu0 0.0
    %2571 = vmatprep.subr.mxu0 0.0
    %2572 = vmatpush2.msra.mxu0 0.0
    %2573 = vmatprep.mubr.f32.mxu0 0.0
    %v2574 = vand.u32 %v2146, 4294901760
    %v2575 = vsub.f32 %v2146, %v2574
    %v2576 = vand.u32 %v2575, 4294901760
    %2577 = vmatmul.mubr.f32.gmra.mxu0 %v2576
    %v2578 = vpop.f32.mrf.mxu0
    %v2579 = vadd.f32 %v2490, %v2578
    %v2580 = vpop.f32.mrf.mxu0
    %2581 = vdwg.mxu0
    %2582 = vmatprep.subr.mxu0 0.0
    %v2583 = vand.u32 %v873, 4294901760
    %v2584 = vsub.f32 %v873, %v2583
    %v2585 = vand.u32 %v2584, 4294901760
    %2586 = vmatpush1.msra.mxu0 %v2585
    %2587 = vmatprep.subr.mxu0 0.0
    %v2588 = vand.u32 %v872, 4294901760
    %v2589 = vsub.f32 %v872, %v2588
    %v2590 = vand.u32 %v2589, 4294901760
    %2591 = vmatpush1.msra.mxu0 %v2590
    %2592 = vmatprep.subr.mxu0 0.0
    %v2593 = vand.u32 %v871, 4294901760
    %v2594 = vsub.f32 %v871, %v2593
    %v2595 = vand.u32 %v2594, 4294901760
    %2596 = vmatpush1.msra.mxu0 %v2595
    %2597 = vmatprep.subr.mxu0 0.0
    %v2598 = vand.u32 %v870, 4294901760
    %v2599 = vsub.f32 %v870, %v2598
    %v2600 = vand.u32 %v2599, 4294901760
    %2601 = vmatpush1.msra.mxu0 %v2600
    %2602 = vmatprep.subr.mxu0 0.0
    %v2603 = vand.u32 %v869, 4294901760
    %v2604 = vsub.f32 %v869, %v2603
    %v2605 = vand.u32 %v2604, 4294901760
    %2606 = vmatpush1.msra.mxu0 %v2605
    %2607 = vmatprep.subr.mxu0 0.0
    %v2608 = vand.u32 %v868, 4294901760
    %v2609 = vsub.f32 %v868, %v2608
    %v2610 = vand.u32 %v2609, 4294901760
    %2611 = vmatpush1.msra.mxu0 %v2610
    %2612 = vmatprep.subr.mxu0 0.0
    %v2613 = vand.u32 %v867, 4294901760
    %v2614 = vsub.f32 %v867, %v2613
    %v2615 = vand.u32 %v2614, 4294901760
    %2616 = vmatpush1.msra.mxu0 %v2615
    %2617 = vmatprep.subr.mxu0 0.0
    %v2618 = vand.u32 %v866, 4294901760
    %v2619 = vsub.f32 %v866, %v2618
    %v2620 = vand.u32 %v2619, 4294901760
    %2621 = vmatpush1.msra.mxu0 %v2620
    %2622 = vmatprep.subr.mxu0 0.0
    %v2623 = vand.u32 %v865, 4294901760
    %v2624 = vsub.f32 %v865, %v2623
    %v2625 = vand.u32 %v2624, 4294901760
    %2626 = vmatpush1.msra.mxu0 %v2625
    %2627 = vmatprep.subr.mxu0 0.0
    %v2628 = vand.u32 %v864, 4294901760
    %v2629 = vsub.f32 %v864, %v2628
    %v2630 = vand.u32 %v2629, 4294901760
    %2631 = vmatpush1.msra.mxu0 %v2630
    %2632 = vmatprep.subr.mxu0 0.0
    %v2633 = vand.u32 %v863, 4294901760
    %v2634 = vsub.f32 %v863, %v2633
    %v2635 = vand.u32 %v2634, 4294901760
    %2636 = vmatpush1.msra.mxu0 %v2635
    %2637 = vmatprep.subr.mxu0 0.0
    %v2638 = vand.u32 %v862, 4294901760
    %v2639 = vsub.f32 %v862, %v2638
    %v2640 = vand.u32 %v2639, 4294901760
    %2641 = vmatpush1.msra.mxu0 %v2640
    %2642 = vmatprep.subr.mxu0 0.0
    %v2643 = vand.u32 %v861, 4294901760
    %v2644 = vsub.f32 %v861, %v2643
    %v2645 = vand.u32 %v2644, 4294901760
    %2646 = vmatpush1.msra.mxu0 %v2645
    %2647 = vmatprep.subr.mxu0 0.0
    %v2648 = vand.u32 %v860, 4294901760
    %v2649 = vsub.f32 %v860, %v2648
    %v2650 = vand.u32 %v2649, 4294901760
    %2651 = vmatpush1.msra.mxu0 %v2650
    %2652 = vmatprep.subr.mxu0 0.0
    %v2653 = vand.u32 %v859, 4294901760
    %v2654 = vsub.f32 %v859, %v2653
    %v2655 = vand.u32 %v2654, 4294901760
    %2656 = vmatpush1.msra.mxu0 %v2655
    %2657 = vmatprep.subr.mxu0 0.0
    %v2658 = vand.u32 %v858, 4294901760
    %v2659 = vsub.f32 %v858, %v2658
    %v2660 = vand.u32 %v2659, 4294901760
    %2661 = vmatpush1.msra.mxu0 %v2660
    %2662 = vmatprep.subr.mxu0 0.0
    %2663 = vmatpush2.msra.mxu0 0.0
    %2664 = vmatprep.subr.mxu0 0.0
    %2665 = vmatpush2.msra.mxu0 0.0
    %2666 = vmatprep.subr.mxu0 0.0
    %2667 = vmatpush2.msra.mxu0 0.0
    %2668 = vmatprep.subr.mxu0 0.0
    %2669 = vmatpush2.msra.mxu0 0.0
    %2670 = vmatprep.subr.mxu0 0.0
    %2671 = vmatpush2.msra.mxu0 0.0
    %2672 = vmatprep.subr.mxu0 0.0
    %2673 = vmatpush2.msra.mxu0 0.0
    %2674 = vmatprep.subr.mxu0 0.0
    %2675 = vmatpush2.msra.mxu0 0.0
    %2676 = vmatprep.subr.mxu0 0.0
    %2677 = vmatpush2.msra.mxu0 0.0
    %2678 = vmatprep.subr.mxu0 0.0
    %2679 = vmatpush2.msra.mxu0 0.0
    %2680 = vmatprep.subr.mxu0 0.0
    %2681 = vmatpush2.msra.mxu0 0.0
    %2682 = vmatprep.subr.mxu0 0.0
    %2683 = vmatpush2.msra.mxu0 0.0
    %2684 = vmatprep.subr.mxu0 0.0
    %2685 = vmatpush2.msra.mxu0 0.0
    %2686 = vmatprep.subr.mxu0 0.0
    %2687 = vmatpush2.msra.mxu0 0.0
    %2688 = vmatprep.subr.mxu0 0.0
    %2689 = vmatpush2.msra.mxu0 0.0
    %2690 = vmatprep.subr.mxu0 0.0
    %2691 = vmatpush2.msra.mxu0 0.0
    %2692 = vmatprep.subr.mxu0 0.0
    %2693 = vmatpush2.msra.mxu0 0.0
    %2694 = vmatprep.mubr.f32.mxu0 0.0
    %v2695 = vand.u32 %v2146, 4294901760
    %2696 = vmatmul.mubr.f32.gmra.mxu0 %v2695
    %v2697 = vpop.f32.mrf.mxu0
    %v2698 = vadd.f32 %v2579, %v2697
    %v2699 = vpop.f32.mrf.mxu0
    %2700 = vdwg.mxu0
    %2701 = vmatprep.subr.mxu0 0.0
    %v2702 = vand.u32 %v873, 4294901760
    %2703 = vmatpush1.msra.mxu0 %v2702
    %2704 = vmatprep.subr.mxu0 0.0
    %v2705 = vand.u32 %v872, 4294901760
    %2706 = vmatpush1.msra.mxu0 %v2705
    %2707 = vmatprep.subr.mxu0 0.0
    %v2708 = vand.u32 %v871, 4294901760
    %2709 = vmatpush1.msra.mxu0 %v2708
    %2710 = vmatprep.subr.mxu0 0.0
    %v2711 = vand.u32 %v870, 4294901760
    %2712 = vmatpush1.msra.mxu0 %v2711
    %2713 = vmatprep.subr.mxu0 0.0
    %v2714 = vand.u32 %v869, 4294901760
    %2715 = vmatpush1.msra.mxu0 %v2714
    %2716 = vmatprep.subr.mxu0 0.0
    %v2717 = vand.u32 %v868, 4294901760
    %2718 = vmatpush1.msra.mxu0 %v2717
    %2719 = vmatprep.subr.mxu0 0.0
    %v2720 = vand.u32 %v867, 4294901760
    %2721 = vmatpush1.msra.mxu0 %v2720
    %2722 = vmatprep.subr.mxu0 0.0
    %v2723 = vand.u32 %v866, 4294901760
    %2724 = vmatpush1.msra.mxu0 %v2723
    %2725 = vmatprep.subr.mxu0 0.0
    %v2726 = vand.u32 %v865, 4294901760
    %2727 = vmatpush1.msra.mxu0 %v2726
    %2728 = vmatprep.subr.mxu0 0.0
    %v2729 = vand.u32 %v864, 4294901760
    %2730 = vmatpush1.msra.mxu0 %v2729
    %2731 = vmatprep.subr.mxu0 0.0
    %v2732 = vand.u32 %v863, 4294901760
    %2733 = vmatpush1.msra.mxu0 %v2732
    %2734 = vmatprep.subr.mxu0 0.0
    %v2735 = vand.u32 %v862, 4294901760
    %2736 = vmatpush1.msra.mxu0 %v2735
    %2737 = vmatprep.subr.mxu0 0.0
    %v2738 = vand.u32 %v861, 4294901760
    %2739 = vmatpush1.msra.mxu0 %v2738
    %2740 = vmatprep.subr.mxu0 0.0
    %v2741 = vand.u32 %v860, 4294901760
    %2742 = vmatpush1.msra.mxu0 %v2741
    %2743 = vmatprep.subr.mxu0 0.0
    %v2744 = vand.u32 %v859, 4294901760
    %2745 = vmatpush1.msra.mxu0 %v2744
    %2746 = vmatprep.subr.mxu0 0.0
    %v2747 = vand.u32 %v858, 4294901760
    %2748 = vmatpush1.msra.mxu0 %v2747
    %2749 = vmatprep.subr.mxu0 0.0
    %2750 = vmatpush2.msra.mxu0 0.0
    %2751 = vmatprep.subr.mxu0 0.0
    %2752 = vmatpush2.msra.mxu0 0.0
    %2753 = vmatprep.subr.mxu0 0.0
    %2754 = vmatpush2.msra.mxu0 0.0
    %2755 = vmatprep.subr.mxu0 0.0
    %2756 = vmatpush2.msra.mxu0 0.0
    %2757 = vmatprep.subr.mxu0 0.0
    %2758 = vmatpush2.msra.mxu0 0.0
    %2759 = vmatprep.subr.mxu0 0.0
    %2760 = vmatpush2.msra.mxu0 0.0
    %2761 = vmatprep.subr.mxu0 0.0
    %2762 = vmatpush2.msra.mxu0 0.0
    %2763 = vmatprep.subr.mxu0 0.0
    %2764 = vmatpush2.msra.mxu0 0.0
    %2765 = vmatprep.subr.mxu0 0.0
    %2766 = vmatpush2.msra.mxu0 0.0
    %2767 = vmatprep.subr.mxu0 0.0
    %2768 = vmatpush2.msra.mxu0 0.0
    %2769 = vmatprep.subr.mxu0 0.0
    %2770 = vmatpush2.msra.mxu0 0.0
    %2771 = vmatprep.subr.mxu0 0.0
    %2772 = vmatpush2.msra.mxu0 0.0
    %2773 = vmatprep.subr.mxu0 0.0
    %2774 = vmatpush2.msra.mxu0 0.0
    %2775 = vmatprep.subr.mxu0 0.0
    %2776 = vmatpush2.msra.mxu0 0.0
    %2777 = vmatprep.subr.mxu0 0.0
    %2778 = vmatpush2.msra.mxu0 0.0
    %2779 = vmatprep.subr.mxu0 0.0
    %2780 = vmatpush2.msra.mxu0 0.0
    %2781 = vmatprep.mubr.f32.mxu0 0.0
    %v2782 = vand.u32 %v2146, 4294901760
    %2783 = vmatmul.mubr.f32.gmra.mxu0 %v2782
    %v2784 = vpop.f32.mrf.mxu0
    %v2785 = vadd.f32 %v2698, %v2784
    %v2786 = vpop.f32.mrf.mxu0
    %2787 = vdwg.mxu0
    %v2788 = vadd.f32 %v825, %v2785
    %v2789 = vtanh.pop %v2788
    %2790 = vmatprep.subr.mxu0 0.0
    %v2791 = vand.u32 %v873, 4294901760
    %2792 = vmatpush1.msra.mxu0 %v2791
    %2793 = vmatprep.subr.mxu0 0.0
    %v2794 = vand.u32 %v872, 4294901760
    %2795 = vmatpush1.msra.mxu0 %v2794
    %2796 = vmatprep.subr.mxu0 0.0
    %v2797 = vand.u32 %v871, 4294901760
    %2798 = vmatpush1.msra.mxu0 %v2797
    %2799 = vmatprep.subr.mxu0 0.0
    %v2800 = vand.u32 %v870, 4294901760
    %2801 = vmatpush1.msra.mxu0 %v2800
    %2802 = vmatprep.subr.mxu0 0.0
    %v2803 = vand.u32 %v869, 4294901760
    %2804 = vmatpush1.msra.mxu0 %v2803
    %2805 = vmatprep.subr.mxu0 0.0
    %v2806 = vand.u32 %v868, 4294901760
    %2807 = vmatpush1.msra.mxu0 %v2806
    %2808 = vmatprep.subr.mxu0 0.0
    %v2809 = vand.u32 %v867, 4294901760
    %2810 = vmatpush1.msra.mxu0 %v2809
    %2811 = vmatprep.subr.mxu0 0.0
    %v2812 = vand.u32 %v866, 4294901760
    %2813 = vmatpush1.msra.mxu0 %v2812
    %2814 = vmatprep.subr.mxu0 0.0
    %v2815 = vand.u32 %v865, 4294901760
    %2816 = vmatpush1.msra.mxu0 %v2815
    %2817 = vmatprep.subr.mxu0 0.0
    %v2818 = vand.u32 %v864, 4294901760
    %2819 = vmatpush1.msra.mxu0 %v2818
    %2820 = vmatprep.subr.mxu0 0.0
    %v2821 = vand.u32 %v863, 4294901760
    %2822 = vmatpush1.msra.mxu0 %v2821
    %2823 = vmatprep.subr.mxu0 0.0
    %v2824 = vand.u32 %v862, 4294901760
    %2825 = vmatpush1.msra.mxu0 %v2824
    %2826 = vmatprep.subr.mxu0 0.0
    %v2827 = vand.u32 %v861, 4294901760
    %2828 = vmatpush1.msra.mxu0 %v2827
    %2829 = vmatprep.subr.mxu0 0.0
    %v2830 = vand.u32 %v860, 4294901760
    %2831 = vmatpush1.msra.mxu0 %v2830
    %2832 = vmatprep.subr.mxu0 0.0
    %v2833 = vand.u32 %v859, 4294901760
    %2834 = vmatpush1.msra.mxu0 %v2833
    %2835 = vmatprep.subr.mxu0 0.0
    %v2836 = vand.u32 %v858, 4294901760
    %2837 = vmatpush1.msra.mxu0 %v2836
    %2838 = vmatprep.subr.mxu0 0.0
    %2839 = vmatpush2.msra.mxu0 0.0
    %2840 = vmatprep.subr.mxu0 0.0
    %2841 = vmatpush2.msra.mxu0 0.0
    %2842 = vmatprep.subr.mxu0 0.0
    %2843 = vmatpush2.msra.mxu0 0.0
    %2844 = vmatprep.subr.mxu0 0.0
    %2845 = vmatpush2.msra.mxu0 0.0
    %2846 = vmatprep.subr.mxu0 0.0
    %2847 = vmatpush2.msra.mxu0 0.0
    %2848 = vmatprep.subr.mxu0 0.0
    %2849 = vmatpush2.msra.mxu0 0.0
    %2850 = vmatprep.subr.mxu0 0.0
    %2851 = vmatpush2.msra.mxu0 0.0
    %2852 = vmatprep.subr.mxu0 0.0
    %2853 = vmatpush2.msra.mxu0 0.0
    %2854 = vmatprep.subr.mxu0 0.0
    %2855 = vmatpush2.msra.mxu0 0.0
    %2856 = vmatprep.subr.mxu0 0.0
    %2857 = vmatpush2.msra.mxu0 0.0
    %2858 = vmatprep.subr.mxu0 0.0
    %2859 = vmatpush2.msra.mxu0 0.0
    %2860 = vmatprep.subr.mxu0 0.0
    %2861 = vmatpush2.msra.mxu0 0.0
    %2862 = vmatprep.subr.mxu0 0.0
    %2863 = vmatpush2.msra.mxu0 0.0
    %2864 = vmatprep.subr.mxu0 0.0
    %2865 = vmatpush2.msra.mxu0 0.0
    %2866 = vmatprep.subr.mxu0 0.0
    %2867 = vmatpush2.msra.mxu0 0.0
    %2868 = vmatprep.subr.mxu0 0.0
    %2869 = vmatpush2.msra.mxu0 0.0
    %2870 = vmatprep.mubr.f32.mxu0 0.0
    %v2871 = vand.u32 %v2789, 4294901760
    %v2872 = vsub.f32 %v2789, %v2871
    %v2873 = vand.u32 %v2872, 4294901760
    %v2874 = vsub.f32 %v2872, %v2873
    %v2875 = vand.u32 %v2874, 4294901760
    %2876 = vmatmul.mubr.f32.gmra.mxu0 %v2875
    %v2877 = vpop.f32.mrf.mxu0
    %v2878 = vadd.f32 0.0, %v2877
    %v2879 = vpop.f32.mrf.mxu0
    %2880 = vdwg.mxu0
    %2881 = vmatprep.subr.mxu0 0.0
    %v2882 = vand.u32 %v873, 4294901760
    %v2883 = vsub.f32 %v873, %v2882
    %v2884 = vand.u32 %v2883, 4294901760
    %v2885 = vsub.f32 %v2883, %v2884
    %v2886 = vand.u32 %v2885, 4294901760
    %2887 = vmatpush1.msra.mxu0 %v2886
    %2888 = vmatprep.subr.mxu0 0.0
    %v2889 = vand.u32 %v872, 4294901760
    %v2890 = vsub.f32 %v872, %v2889
    %v2891 = vand.u32 %v2890, 4294901760
    %v2892 = vsub.f32 %v2890, %v2891
    %v2893 = vand.u32 %v2892, 4294901760
    %2894 = vmatpush1.msra.mxu0 %v2893
    %2895 = vmatprep.subr.mxu0 0.0
    %v2896 = vand.u32 %v871, 4294901760
    %v2897 = vsub.f32 %v871, %v2896
    %v2898 = vand.u32 %v2897, 4294901760
    %v2899 = vsub.f32 %v2897, %v2898
    %v2900 = vand.u32 %v2899, 4294901760
    %2901 = vmatpush1.msra.mxu0 %v2900
    %2902 = vmatprep.subr.mxu0 0.0
    %v2903 = vand.u32 %v870, 4294901760
    %v2904 = vsub.f32 %v870, %v2903
    %v2905 = vand.u32 %v2904, 4294901760
    %v2906 = vsub.f32 %v2904, %v2905
    %v2907 = vand.u32 %v2906, 4294901760
    %2908 = vmatpush1.msra.mxu0 %v2907
    %2909 = vmatprep.subr.mxu0 0.0
    %v2910 = vand.u32 %v869, 4294901760
    %v2911 = vsub.f32 %v869, %v2910
    %v2912 = vand.u32 %v2911, 4294901760
    %v2913 = vsub.f32 %v2911, %v2912
    %v2914 = vand.u32 %v2913, 4294901760
    %2915 = vmatpush1.msra.mxu0 %v2914
    %2916 = vmatprep.subr.mxu0 0.0
    %v2917 = vand.u32 %v868, 4294901760
    %v2918 = vsub.f32 %v868, %v2917
    %v2919 = vand.u32 %v2918, 4294901760
    %v2920 = vsub.f32 %v2918, %v2919
    %v2921 = vand.u32 %v2920, 4294901760
    %2922 = vmatpush1.msra.mxu0 %v2921
    %2923 = vmatprep.subr.mxu0 0.0
    %v2924 = vand.u32 %v867, 4294901760
    %v2925 = vsub.f32 %v867, %v2924
    %v2926 = vand.u32 %v2925, 4294901760
    %v2927 = vsub.f32 %v2925, %v2926
    %v2928 = vand.u32 %v2927, 4294901760
    %2929 = vmatpush1.msra.mxu0 %v2928
    %2930 = vmatprep.subr.mxu0 0.0
    %v2931 = vand.u32 %v866, 4294901760
    %v2932 = vsub.f32 %v866, %v2931
    %v2933 = vand.u32 %v2932, 4294901760
    %v2934 = vsub.f32 %v2932, %v2933
    %v2935 = vand.u32 %v2934, 4294901760
    %2936 = vmatpush1.msra.mxu0 %v2935
    %2937 = vmatprep.subr.mxu0 0.0
    %v2938 = vand.u32 %v865, 4294901760
    %v2939 = vsub.f32 %v865, %v2938
    %v2940 = vand.u32 %v2939, 4294901760
    %v2941 = vsub.f32 %v2939, %v2940
    %v2942 = vand.u32 %v2941, 4294901760
    %2943 = vmatpush1.msra.mxu0 %v2942
    %2944 = vmatprep.subr.mxu0 0.0
    %v2945 = vand.u32 %v864, 4294901760
    %v2946 = vsub.f32 %v864, %v2945
    %v2947 = vand.u32 %v2946, 4294901760
    %v2948 = vsub.f32 %v2946, %v2947
    %v2949 = vand.u32 %v2948, 4294901760
    %2950 = vmatpush1.msra.mxu0 %v2949
    %2951 = vmatprep.subr.mxu0 0.0
    %v2952 = vand.u32 %v863, 4294901760
    %v2953 = vsub.f32 %v863, %v2952
    %v2954 = vand.u32 %v2953, 4294901760
    %v2955 = vsub.f32 %v2953, %v2954
    %v2956 = vand.u32 %v2955, 4294901760
    %2957 = vmatpush1.msra.mxu0 %v2956
    %2958 = vmatprep.subr.mxu0 0.0
    %v2959 = vand.u32 %v862, 4294901760
    %v2960 = vsub.f32 %v862, %v2959
    %v2961 = vand.u32 %v2960, 4294901760
    %v2962 = vsub.f32 %v2960, %v2961
    %v2963 = vand.u32 %v2962, 4294901760
    %2964 = vmatpush1.msra.mxu0 %v2963
    %2965 = vmatprep.subr.mxu0 0.0
    %v2966 = vand.u32 %v861, 4294901760
    %v2967 = vsub.f32 %v861, %v2966
    %v2968 = vand.u32 %v2967, 4294901760
    %v2969 = vsub.f32 %v2967, %v2968
    %v2970 = vand.u32 %v2969, 4294901760
    %2971 = vmatpush1.msra.mxu0 %v2970
    %2972 = vmatprep.subr.mxu0 0.0
    %v2973 = vand.u32 %v860, 4294901760
    %v2974 = vsub.f32 %v860, %v2973
    %v2975 = vand.u32 %v2974, 4294901760
    %v2976 = vsub.f32 %v2974, %v2975
    %v2977 = vand.u32 %v2976, 4294901760
    %2978 = vmatpush1.msra.mxu0 %v2977
    %2979 = vmatprep.subr.mxu0 0.0
    %v2980 = vand.u32 %v859, 4294901760
    %v2981 = vsub.f32 %v859, %v2980
    %v2982 = vand.u32 %v2981, 4294901760
    %v2983 = vsub.f32 %v2981, %v2982
    %v2984 = vand.u32 %v2983, 4294901760
    %2985 = vmatpush1.msra.mxu0 %v2984
    %2986 = vmatprep.subr.mxu0 0.0
    %v2987 = vand.u32 %v858, 4294901760
    %v2988 = vsub.f32 %v858, %v2987
    %v2989 = vand.u32 %v2988, 4294901760
    %v2990 = vsub.f32 %v2988, %v2989
    %v2991 = vand.u32 %v2990, 4294901760
    %2992 = vmatpush1.msra.mxu0 %v2991
    %2993 = vmatprep.subr.mxu0 0.0
    %2994 = vmatpush2.msra.mxu0 0.0
    %2995 = vmatprep.subr.mxu0 0.0
    %2996 = vmatpush2.msra.mxu0 0.0
    %2997 = vmatprep.subr.mxu0 0.0
    %2998 = vmatpush2.msra.mxu0 0.0
    %2999 = vmatprep.subr.mxu0 0.0
    %3000 = vmatpush2.msra.mxu0 0.0
    %3001 = vmatprep.subr.mxu0 0.0
    %3002 = vmatpush2.msra.mxu0 0.0
    %3003 = vmatprep.subr.mxu0 0.0
    %3004 = vmatpush2.msra.mxu0 0.0
    %3005 = vmatprep.subr.mxu0 0.0
    %3006 = vmatpush2.msra.mxu0 0.0
    %3007 = vmatprep.subr.mxu0 0.0
    %3008 = vmatpush2.msra.mxu0 0.0
    %3009 = vmatprep.subr.mxu0 0.0
    %3010 = vmatpush2.msra.mxu0 0.0
    %3011 = vmatprep.subr.mxu0 0.0
    %3012 = vmatpush2.msra.mxu0 0.0
    %3013 = vmatprep.subr.mxu0 0.0
    %3014 = vmatpush2.msra.mxu0 0.0
    %3015 = vmatprep.subr.mxu0 0.0
    %3016 = vmatpush2.msra.mxu0 0.0
    %3017 = vmatprep.subr.mxu0 0.0
    %3018 = vmatpush2.msra.mxu0 0.0
    %3019 = vmatprep.subr.mxu0 0.0
    %3020 = vmatpush2.msra.mxu0 0.0
    %3021 = vmatprep.subr.mxu0 0.0
    %3022 = vmatpush2.msra.mxu0 0.0
    %3023 = vmatprep.subr.mxu0 0.0
    %3024 = vmatpush2.msra.mxu0 0.0
    %3025 = vmatprep.mubr.f32.mxu0 0.0
    %v3026 = vand.u32 %v2789, 4294901760
    %3027 = vmatmul.mubr.f32.gmra.mxu0 %v3026
    %v3028 = vpop.f32.mrf.mxu0
    %v3029 = vadd.f32 %v2878, %v3028
    %v3030 = vpop.f32.mrf.mxu0
    %3031 = vdwg.mxu0
    %3032 = vmatprep.subr.mxu0 0.0
    %v3033 = vand.u32 %v873, 4294901760
    %v3034 = vsub.f32 %v873, %v3033
    %3035 = vmatpush1.msra.mxu0 %v3034
    %3036 = vmatprep.subr.mxu0 0.0
    %v3037 = vand.u32 %v872, 4294901760
    %v3038 = vsub.f32 %v872, %v3037
    %3039 = vmatpush1.msra.mxu0 %v3038
    %3040 = vmatprep.subr.mxu0 0.0
    %v3041 = vand.u32 %v871, 4294901760
    %v3042 = vsub.f32 %v871, %v3041
    %3043 = vmatpush1.msra.mxu0 %v3042
    %3044 = vmatprep.subr.mxu0 0.0
    %v3045 = vand.u32 %v870, 4294901760
    %v3046 = vsub.f32 %v870, %v3045
    %3047 = vmatpush1.msra.mxu0 %v3046
    %3048 = vmatprep.subr.mxu0 0.0
    %v3049 = vand.u32 %v869, 4294901760
    %v3050 = vsub.f32 %v869, %v3049
    %3051 = vmatpush1.msra.mxu0 %v3050
    %3052 = vmatprep.subr.mxu0 0.0
    %v3053 = vand.u32 %v868, 4294901760
    %v3054 = vsub.f32 %v868, %v3053
    %3055 = vmatpush1.msra.mxu0 %v3054
    %3056 = vmatprep.subr.mxu0 0.0
    %v3057 = vand.u32 %v867, 4294901760
    %v3058 = vsub.f32 %v867, %v3057
    %3059 = vmatpush1.msra.mxu0 %v3058
    %3060 = vmatprep.subr.mxu0 0.0
    %v3061 = vand.u32 %v866, 4294901760
    %v3062 = vsub.f32 %v866, %v3061
    %3063 = vmatpush1.msra.mxu0 %v3062
    %3064 = vmatprep.subr.mxu0 0.0
    %v3065 = vand.u32 %v865, 4294901760
    %v3066 = vsub.f32 %v865, %v3065
    %3067 = vmatpush1.msra.mxu0 %v3066
    %3068 = vmatprep.subr.mxu0 0.0
    %v3069 = vand.u32 %v864, 4294901760
    %v3070 = vsub.f32 %v864, %v3069
    %3071 = vmatpush1.msra.mxu0 %v3070
    %3072 = vmatprep.subr.mxu0 0.0
    %v3073 = vand.u32 %v863, 4294901760
    %v3074 = vsub.f32 %v863, %v3073
    %3075 = vmatpush1.msra.mxu0 %v3074
    %3076 = vmatprep.subr.mxu0 0.0
    %v3077 = vand.u32 %v862, 4294901760
    %v3078 = vsub.f32 %v862, %v3077
    %3079 = vmatpush1.msra.mxu0 %v3078
    %3080 = vmatprep.subr.mxu0 0.0
    %v3081 = vand.u32 %v861, 4294901760
    %v3082 = vsub.f32 %v861, %v3081
    %3083 = vmatpush1.msra.mxu0 %v3082
    %3084 = vmatprep.subr.mxu0 0.0
    %v3085 = vand.u32 %v860, 4294901760
    %v3086 = vsub.f32 %v860, %v3085
    %3087 = vmatpush1.msra.mxu0 %v3086
    %3088 = vmatprep.subr.mxu0 0.0
    %v3089 = vand.u32 %v859, 4294901760
    %v3090 = vsub.f32 %v859, %v3089
    %3091 = vmatpush1.msra.mxu0 %v3090
    %3092 = vmatprep.subr.mxu0 0.0
    %v3093 = vand.u32 %v858, 4294901760
    %v3094 = vsub.f32 %v858, %v3093
    %3095 = vmatpush1.msra.mxu0 %v3094
    %3096 = vmatprep.subr.mxu0 0.0
    %3097 = vmatpush2.msra.mxu0 0.0
    %3098 = vmatprep.subr.mxu0 0.0
    %3099 = vmatpush2.msra.mxu0 0.0
    %3100 = vmatprep.subr.mxu0 0.0
    %3101 = vmatpush2.msra.mxu0 0.0
    %3102 = vmatprep.subr.mxu0 0.0
    %3103 = vmatpush2.msra.mxu0 0.0
    %3104 = vmatprep.subr.mxu0 0.0
    %3105 = vmatpush2.msra.mxu0 0.0
    %3106 = vmatprep.subr.mxu0 0.0
    %3107 = vmatpush2.msra.mxu0 0.0
    %3108 = vmatprep.subr.mxu0 0.0
    %3109 = vmatpush2.msra.mxu0 0.0
    %3110 = vmatprep.subr.mxu0 0.0
    %3111 = vmatpush2.msra.mxu0 0.0
    %3112 = vmatprep.subr.mxu0 0.0
    %3113 = vmatpush2.msra.mxu0 0.0
    %3114 = vmatprep.subr.mxu0 0.0
    %3115 = vmatpush2.msra.mxu0 0.0
    %3116 = vmatprep.subr.mxu0 0.0
    %3117 = vmatpush2.msra.mxu0 0.0
    %3118 = vmatprep.subr.mxu0 0.0
    %3119 = vmatpush2.msra.mxu0 0.0
    %3120 = vmatprep.subr.mxu0 0.0
    %3121 = vmatpush2.msra.mxu0 0.0
    %3122 = vmatprep.subr.mxu0 0.0
    %3123 = vmatpush2.msra.mxu0 0.0
    %3124 = vmatprep.subr.mxu0 0.0
    %3125 = vmatpush2.msra.mxu0 0.0
    %3126 = vmatprep.subr.mxu0 0.0
    %3127 = vmatpush2.msra.mxu0 0.0
    %3128 = vmatprep.mubr.f32.mxu0 0.0
    %v3129 = vand.u32 %v2789, 4294901760
    %v3130 = vsub.f32 %v2789, %v3129
    %3131 = vmatmul.mubr.f32.gmra.mxu0 %v3130
    %v3132 = vpop.f32.mrf.mxu0
    %v3133 = vadd.f32 %v3029, %v3132
    %v3134 = vpop.f32.mrf.mxu0
    %3135 = vdwg.mxu0
    %3136 = vmatprep.subr.mxu0 0.0
    %v3137 = vand.u32 %v873, 4294901760
    %3138 = vmatpush1.msra.mxu0 %v3137
    %3139 = vmatprep.subr.mxu0 0.0
    %v3140 = vand.u32 %v872, 4294901760
    %3141 = vmatpush1.msra.mxu0 %v3140
    %3142 = vmatprep.subr.mxu0 0.0
    %v3143 = vand.u32 %v871, 4294901760
    %3144 = vmatpush1.msra.mxu0 %v3143
    %3145 = vmatprep.subr.mxu0 0.0
    %v3146 = vand.u32 %v870, 4294901760
    %3147 = vmatpush1.msra.mxu0 %v3146
    %3148 = vmatprep.subr.mxu0 0.0
    %v3149 = vand.u32 %v869, 4294901760
    %3150 = vmatpush1.msra.mxu0 %v3149
    %3151 = vmatprep.subr.mxu0 0.0
    %v3152 = vand.u32 %v868, 4294901760
    %3153 = vmatpush1.msra.mxu0 %v3152
    %3154 = vmatprep.subr.mxu0 0.0
    %v3155 = vand.u32 %v867, 4294901760
    %3156 = vmatpush1.msra.mxu0 %v3155
    %3157 = vmatprep.subr.mxu0 0.0
    %v3158 = vand.u32 %v866, 4294901760
    %3159 = vmatpush1.msra.mxu0 %v3158
    %3160 = vmatprep.subr.mxu0 0.0
    %v3161 = vand.u32 %v865, 4294901760
    %3162 = vmatpush1.msra.mxu0 %v3161
    %3163 = vmatprep.subr.mxu0 0.0
    %v3164 = vand.u32 %v864, 4294901760
    %3165 = vmatpush1.msra.mxu0 %v3164
    %3166 = vmatprep.subr.mxu0 0.0
    %v3167 = vand.u32 %v863, 4294901760
    %3168 = vmatpush1.msra.mxu0 %v3167
    %3169 = vmatprep.subr.mxu0 0.0
    %v3170 = vand.u32 %v862, 4294901760
    %3171 = vmatpush1.msra.mxu0 %v3170
    %3172 = vmatprep.subr.mxu0 0.0
    %v3173 = vand.u32 %v861, 4294901760
    %3174 = vmatpush1.msra.mxu0 %v3173
    %3175 = vmatprep.subr.mxu0 0.0
    %v3176 = vand.u32 %v860, 4294901760
    %3177 = vmatpush1.msra.mxu0 %v3176
    %3178 = vmatprep.subr.mxu0 0.0
    %v3179 = vand.u32 %v859, 4294901760
    %3180 = vmatpush1.msra.mxu0 %v3179
    %3181 = vmatprep.subr.mxu0 0.0
    %v3182 = vand.u32 %v858, 4294901760
    %3183 = vmatpush1.msra.mxu0 %v3182
    %3184 = vmatprep.subr.mxu0 0.0
    %3185 = vmatpush2.msra.mxu0 0.0
    %3186 = vmatprep.subr.mxu0 0.0
    %3187 = vmatpush2.msra.mxu0 0.0
    %3188 = vmatprep.subr.mxu0 0.0
    %3189 = vmatpush2.msra.mxu0 0.0
    %3190 = vmatprep.subr.mxu0 0.0
    %3191 = vmatpush2.msra.mxu0 0.0
    %3192 = vmatprep.subr.mxu0 0.0
    %3193 = vmatpush2.msra.mxu0 0.0
    %3194 = vmatprep.subr.mxu0 0.0
    %3195 = vmatpush2.msra.mxu0 0.0
    %3196 = vmatprep.subr.mxu0 0.0
    %3197 = vmatpush2.msra.mxu0 0.0
    %3198 = vmatprep.subr.mxu0 0.0
    %3199 = vmatpush2.msra.mxu0 0.0
    %3200 = vmatprep.subr.mxu0 0.0
    %3201 = vmatpush2.msra.mxu0 0.0
    %3202 = vmatprep.subr.mxu0 0.0
    %3203 = vmatpush2.msra.mxu0 0.0
    %3204 = vmatprep.subr.mxu0 0.0
    %3205 = vmatpush2.msra.mxu0 0.0
    %3206 = vmatprep.subr.mxu0 0.0
    %3207 = vmatpush2.msra.mxu0 0.0
    %3208 = vmatprep.subr.mxu0 0.0
    %3209 = vmatpush2.msra.mxu0 0.0
    %3210 = vmatprep.subr.mxu0 0.0
    %3211 = vmatpush2.msra.mxu0 0.0
    %3212 = vmatprep.subr.mxu0 0.0
    %3213 = vmatpush2.msra.mxu0 0.0
    %3214 = vmatprep.subr.mxu0 0.0
    %3215 = vmatpush2.msra.mxu0 0.0
    %3216 = vmatprep.mubr.f32.mxu0 0.0
    %v3217 = vand.u32 %v2789, 4294901760
    %v3218 = vsub.f32 %v2789, %v3217
    %v3219 = vand.u32 %v3218, 4294901760
    %3220 = vmatmul.mubr.f32.gmra.mxu0 %v3219
    %v3221 = vpop.f32.mrf.mxu0
    %v3222 = vadd.f32 %v3133, %v3221
    %v3223 = vpop.f32.mrf.mxu0
    %3224 = vdwg.mxu0
    %3225 = vmatprep.subr.mxu0 0.0
    %v3226 = vand.u32 %v873, 4294901760
    %v3227 = vsub.f32 %v873, %v3226
    %v3228 = vand.u32 %v3227, 4294901760
    %3229 = vmatpush1.msra.mxu0 %v3228
    %3230 = vmatprep.subr.mxu0 0.0
    %v3231 = vand.u32 %v872, 4294901760
    %v3232 = vsub.f32 %v872, %v3231
    %v3233 = vand.u32 %v3232, 4294901760
    %3234 = vmatpush1.msra.mxu0 %v3233
    %3235 = vmatprep.subr.mxu0 0.0
    %v3236 = vand.u32 %v871, 4294901760
    %v3237 = vsub.f32 %v871, %v3236
    %v3238 = vand.u32 %v3237, 4294901760
    %3239 = vmatpush1.msra.mxu0 %v3238
    %3240 = vmatprep.subr.mxu0 0.0
    %v3241 = vand.u32 %v870, 4294901760
    %v3242 = vsub.f32 %v870, %v3241
    %v3243 = vand.u32 %v3242, 4294901760
    %3244 = vmatpush1.msra.mxu0 %v3243
    %3245 = vmatprep.subr.mxu0 0.0
    %v3246 = vand.u32 %v869, 4294901760
    %v3247 = vsub.f32 %v869, %v3246
    %v3248 = vand.u32 %v3247, 4294901760
    %3249 = vmatpush1.msra.mxu0 %v3248
    %3250 = vmatprep.subr.mxu0 0.0
    %v3251 = vand.u32 %v868, 4294901760
    %v3252 = vsub.f32 %v868, %v3251
    %v3253 = vand.u32 %v3252, 4294901760
    %3254 = vmatpush1.msra.mxu0 %v3253
    %3255 = vmatprep.subr.mxu0 0.0
    %v3256 = vand.u32 %v867, 4294901760
    %v3257 = vsub.f32 %v867, %v3256
    %v3258 = vand.u32 %v3257, 4294901760
    %3259 = vmatpush1.msra.mxu0 %v3258
    %3260 = vmatprep.subr.mxu0 0.0
    %v3261 = vand.u32 %v866, 4294901760
    %v3262 = vsub.f32 %v866, %v3261
    %v3263 = vand.u32 %v3262, 4294901760
    %3264 = vmatpush1.msra.mxu0 %v3263
    %3265 = vmatprep.subr.mxu0 0.0
    %v3266 = vand.u32 %v865, 4294901760
    %v3267 = vsub.f32 %v865, %v3266
    %v3268 = vand.u32 %v3267, 4294901760
    %3269 = vmatpush1.msra.mxu0 %v3268
    %3270 = vmatprep.subr.mxu0 0.0
    %v3271 = vand.u32 %v864, 4294901760
    %v3272 = vsub.f32 %v864, %v3271
    %v3273 = vand.u32 %v3272, 4294901760
    %3274 = vmatpush1.msra.mxu0 %v3273
    %3275 = vmatprep.subr.mxu0 0.0
    %v3276 = vand.u32 %v863, 4294901760
    %v3277 = vsub.f32 %v863, %v3276
    %v3278 = vand.u32 %v3277, 4294901760
    %3279 = vmatpush1.msra.mxu0 %v3278
    %3280 = vmatprep.subr.mxu0 0.0
    %v3281 = vand.u32 %v862, 4294901760
    %v3282 = vsub.f32 %v862, %v3281
    %v3283 = vand.u32 %v3282, 4294901760
    %3284 = vmatpush1.msra.mxu0 %v3283
    %3285 = vmatprep.subr.mxu0 0.0
    %v3286 = vand.u32 %v861, 4294901760
    %v3287 = vsub.f32 %v861, %v3286
    %v3288 = vand.u32 %v3287, 4294901760
    %3289 = vmatpush1.msra.mxu0 %v3288
    %3290 = vmatprep.subr.mxu0 0.0
    %v3291 = vand.u32 %v860, 4294901760
    %v3292 = vsub.f32 %v860, %v3291
    %v3293 = vand.u32 %v3292, 4294901760
    %3294 = vmatpush1.msra.mxu0 %v3293
    %3295 = vmatprep.subr.mxu0 0.0
    %v3296 = vand.u32 %v859, 4294901760
    %v3297 = vsub.f32 %v859, %v3296
    %v3298 = vand.u32 %v3297, 4294901760
    %3299 = vmatpush1.msra.mxu0 %v3298
    %3300 = vmatprep.subr.mxu0 0.0
    %v3301 = vand.u32 %v858, 4294901760
    %v3302 = vsub.f32 %v858, %v3301
    %v3303 = vand.u32 %v3302, 4294901760
    %3304 = vmatpush1.msra.mxu0 %v3303
    %3305 = vmatprep.subr.mxu0 0.0
    %3306 = vmatpush2.msra.mxu0 0.0
    %3307 = vmatprep.subr.mxu0 0.0
    %3308 = vmatpush2.msra.mxu0 0.0
    %3309 = vmatprep.subr.mxu0 0.0
    %3310 = vmatpush2.msra.mxu0 0.0
    %3311 = vmatprep.subr.mxu0 0.0
    %3312 = vmatpush2.msra.mxu0 0.0
    %3313 = vmatprep.subr.mxu0 0.0
    %3314 = vmatpush2.msra.mxu0 0.0
    %3315 = vmatprep.subr.mxu0 0.0
    %3316 = vmatpush2.msra.mxu0 0.0
    %3317 = vmatprep.subr.mxu0 0.0
    %3318 = vmatpush2.msra.mxu0 0.0
    %3319 = vmatprep.subr.mxu0 0.0
    %3320 = vmatpush2.msra.mxu0 0.0
    %3321 = vmatprep.subr.mxu0 0.0
    %3322 = vmatpush2.msra.mxu0 0.0
    %3323 = vmatprep.subr.mxu0 0.0
    %3324 = vmatpush2.msra.mxu0 0.0
    %3325 = vmatprep.subr.mxu0 0.0
    %3326 = vmatpush2.msra.mxu0 0.0
    %3327 = vmatprep.subr.mxu0 0.0
    %3328 = vmatpush2.msra.mxu0 0.0
    %3329 = vmatprep.subr.mxu0 0.0
    %3330 = vmatpush2.msra.mxu0 0.0
    %3331 = vmatprep.subr.mxu0 0.0
    %3332 = vmatpush2.msra.mxu0 0.0
    %3333 = vmatprep.subr.mxu0 0.0
    %3334 = vmatpush2.msra.mxu0 0.0
    %3335 = vmatprep.subr.mxu0 0.0
    %3336 = vmatpush2.msra.mxu0 0.0
    %3337 = vmatprep.mubr.f32.mxu0 0.0
    %v3338 = vand.u32 %v2789, 4294901760
    %3339 = vmatmul.mubr.f32.gmra.mxu0 %v3338
    %v3340 = vpop.f32.mrf.mxu0
    %v3341 = vadd.f32 %v3222, %v3340
    %v3342 = vpop.f32.mrf.mxu0
    %3343 = vdwg.mxu0
    %3344 = vmatprep.subr.mxu0 0.0
    %v3345 = vand.u32 %v873, 4294901760
    %3346 = vmatpush1.msra.mxu0 %v3345
    %3347 = vmatprep.subr.mxu0 0.0
    %v3348 = vand.u32 %v872, 4294901760
    %3349 = vmatpush1.msra.mxu0 %v3348
    %3350 = vmatprep.subr.mxu0 0.0
    %v3351 = vand.u32 %v871, 4294901760
    %3352 = vmatpush1.msra.mxu0 %v3351
    %3353 = vmatprep.subr.mxu0 0.0
    %v3354 = vand.u32 %v870, 4294901760
    %3355 = vmatpush1.msra.mxu0 %v3354
    %3356 = vmatprep.subr.mxu0 0.0
    %v3357 = vand.u32 %v869, 4294901760
    %3358 = vmatpush1.msra.mxu0 %v3357
    %3359 = vmatprep.subr.mxu0 0.0
    %v3360 = vand.u32 %v868, 4294901760
    %3361 = vmatpush1.msra.mxu0 %v3360
    %3362 = vmatprep.subr.mxu0 0.0
    %v3363 = vand.u32 %v867, 4294901760
    %3364 = vmatpush1.msra.mxu0 %v3363
    %3365 = vmatprep.subr.mxu0 0.0
    %v3366 = vand.u32 %v866, 4294901760
    %3367 = vmatpush1.msra.mxu0 %v3366
    %3368 = vmatprep.subr.mxu0 0.0
    %v3369 = vand.u32 %v865, 4294901760
    %3370 = vmatpush1.msra.mxu0 %v3369
    %3371 = vmatprep.subr.mxu0 0.0
    %v3372 = vand.u32 %v864, 4294901760
    %3373 = vmatpush1.msra.mxu0 %v3372
    %3374 = vmatprep.subr.mxu0 0.0
    %v3375 = vand.u32 %v863, 4294901760
    %3376 = vmatpush1.msra.mxu0 %v3375
    %3377 = vmatprep.subr.mxu0 0.0
    %v3378 = vand.u32 %v862, 4294901760
    %3379 = vmatpush1.msra.mxu0 %v3378
    %3380 = vmatprep.subr.mxu0 0.0
    %v3381 = vand.u32 %v861, 4294901760
    %3382 = vmatpush1.msra.mxu0 %v3381
    %3383 = vmatprep.subr.mxu0 0.0
    %v3384 = vand.u32 %v860, 4294901760
    %3385 = vmatpush1.msra.mxu0 %v3384
    %3386 = vmatprep.subr.mxu0 0.0
    %v3387 = vand.u32 %v859, 4294901760
    %3388 = vmatpush1.msra.mxu0 %v3387
    %3389 = vmatprep.subr.mxu0 0.0
    %v3390 = vand.u32 %v858, 4294901760
    %3391 = vmatpush1.msra.mxu0 %v3390
    %3392 = vmatprep.subr.mxu0 0.0
    %3393 = vmatpush2.msra.mxu0 0.0
    %3394 = vmatprep.subr.mxu0 0.0
    %3395 = vmatpush2.msra.mxu0 0.0
    %3396 = vmatprep.subr.mxu0 0.0
    %3397 = vmatpush2.msra.mxu0 0.0
    %3398 = vmatprep.subr.mxu0 0.0
    %3399 = vmatpush2.msra.mxu0 0.0
    %3400 = vmatprep.subr.mxu0 0.0
    %3401 = vmatpush2.msra.mxu0 0.0
    %3402 = vmatprep.subr.mxu0 0.0
    %3403 = vmatpush2.msra.mxu0 0.0
    %3404 = vmatprep.subr.mxu0 0.0
    %3405 = vmatpush2.msra.mxu0 0.0
    %3406 = vmatprep.subr.mxu0 0.0
    %3407 = vmatpush2.msra.mxu0 0.0
    %3408 = vmatprep.subr.mxu0 0.0
    %3409 = vmatpush2.msra.mxu0 0.0
    %3410 = vmatprep.subr.mxu0 0.0
    %3411 = vmatpush2.msra.mxu0 0.0
    %3412 = vmatprep.subr.mxu0 0.0
    %3413 = vmatpush2.msra.mxu0 0.0
    %3414 = vmatprep.subr.mxu0 0.0
    %3415 = vmatpush2.msra.mxu0 0.0
    %3416 = vmatprep.subr.mxu0 0.0
    %3417 = vmatpush2.msra.mxu0 0.0
    %3418 = vmatprep.subr.mxu0 0.0
    %3419 = vmatpush2.msra.mxu0 0.0
    %3420 = vmatprep.subr.mxu0 0.0
    %3421 = vmatpush2.msra.mxu0 0.0
    %3422 = vmatprep.subr.mxu0 0.0
    %3423 = vmatpush2.msra.mxu0 0.0
    %3424 = vmatprep.mubr.f32.mxu0 0.0
    %v3425 = vand.u32 %v2789, 4294901760
    %3426 = vmatmul.mubr.f32.gmra.mxu0 %v3425
    %v3427 = vpop.f32.mrf.mxu0
    %v3428 = vadd.f32 %v3341, %v3427
    %v3429 = vpop.f32.mrf.mxu0
    %3430 = vdwg.mxu0
    %v3431 = vadd.f32 %v831, %v3428
    %v3432 = vtanh.pop %v3431
    %3433 = vmatprep.subr.mxu0 0.0
    %v3434 = vand.u32 %v873, 4294901760
    %3435 = vmatpush1.msra.mxu0 %v3434
    %3436 = vmatprep.subr.mxu0 0.0
    %v3437 = vand.u32 %v872, 4294901760
    %3438 = vmatpush1.msra.mxu0 %v3437
    %3439 = vmatprep.subr.mxu0 0.0
    %v3440 = vand.u32 %v871, 4294901760
    %3441 = vmatpush1.msra.mxu0 %v3440
    %3442 = vmatprep.subr.mxu0 0.0
    %v3443 = vand.u32 %v870, 4294901760
    %3444 = vmatpush1.msra.mxu0 %v3443
    %3445 = vmatprep.subr.mxu0 0.0
    %v3446 = vand.u32 %v869, 4294901760
    %3447 = vmatpush1.msra.mxu0 %v3446
    %3448 = vmatprep.subr.mxu0 0.0
    %v3449 = vand.u32 %v868, 4294901760
    %3450 = vmatpush1.msra.mxu0 %v3449
    %3451 = vmatprep.subr.mxu0 0.0
    %v3452 = vand.u32 %v867, 4294901760
    %3453 = vmatpush1.msra.mxu0 %v3452
    %3454 = vmatprep.subr.mxu0 0.0
    %v3455 = vand.u32 %v866, 4294901760
    %3456 = vmatpush1.msra.mxu0 %v3455
    %3457 = vmatprep.subr.mxu0 0.0
    %v3458 = vand.u32 %v865, 4294901760
    %3459 = vmatpush1.msra.mxu0 %v3458
    %3460 = vmatprep.subr.mxu0 0.0
    %v3461 = vand.u32 %v864, 4294901760
    %3462 = vmatpush1.msra.mxu0 %v3461
    %3463 = vmatprep.subr.mxu0 0.0
    %v3464 = vand.u32 %v863, 4294901760
    %3465 = vmatpush1.msra.mxu0 %v3464
    %3466 = vmatprep.subr.mxu0 0.0
    %v3467 = vand.u32 %v862, 4294901760
    %3468 = vmatpush1.msra.mxu0 %v3467
    %3469 = vmatprep.subr.mxu0 0.0
    %v3470 = vand.u32 %v861, 4294901760
    %3471 = vmatpush1.msra.mxu0 %v3470
    %3472 = vmatprep.subr.mxu0 0.0
    %v3473 = vand.u32 %v860, 4294901760
    %3474 = vmatpush1.msra.mxu0 %v3473
    %3475 = vmatprep.subr.mxu0 0.0
    %v3476 = vand.u32 %v859, 4294901760
    %3477 = vmatpush1.msra.mxu0 %v3476
    %3478 = vmatprep.subr.mxu0 0.0
    %v3479 = vand.u32 %v858, 4294901760
    %3480 = vmatpush1.msra.mxu0 %v3479
    %3481 = vmatprep.subr.mxu0 0.0
    %3482 = vmatpush2.msra.mxu0 0.0
    %3483 = vmatprep.subr.mxu0 0.0
    %3484 = vmatpush2.msra.mxu0 0.0
    %3485 = vmatprep.subr.mxu0 0.0
    %3486 = vmatpush2.msra.mxu0 0.0
    %3487 = vmatprep.subr.mxu0 0.0
    %3488 = vmatpush2.msra.mxu0 0.0
    %3489 = vmatprep.subr.mxu0 0.0
    %3490 = vmatpush2.msra.mxu0 0.0
    %3491 = vmatprep.subr.mxu0 0.0
    %3492 = vmatpush2.msra.mxu0 0.0
    %3493 = vmatprep.subr.mxu0 0.0
    %3494 = vmatpush2.msra.mxu0 0.0
    %3495 = vmatprep.subr.mxu0 0.0
    %3496 = vmatpush2.msra.mxu0 0.0
    %3497 = vmatprep.subr.mxu0 0.0
    %3498 = vmatpush2.msra.mxu0 0.0
    %3499 = vmatprep.subr.mxu0 0.0
    %3500 = vmatpush2.msra.mxu0 0.0
    %3501 = vmatprep.subr.mxu0 0.0
    %3502 = vmatpush2.msra.mxu0 0.0
    %3503 = vmatprep.subr.mxu0 0.0
    %3504 = vmatpush2.msra.mxu0 0.0
    %3505 = vmatprep.subr.mxu0 0.0
    %3506 = vmatpush2.msra.mxu0 0.0
    %3507 = vmatprep.subr.mxu0 0.0
    %3508 = vmatpush2.msra.mxu0 0.0
    %3509 = vmatprep.subr.mxu0 0.0
    %3510 = vmatpush2.msra.mxu0 0.0
    %3511 = vmatprep.subr.mxu0 0.0
    %3512 = vmatpush2.msra.mxu0 0.0
    %3513 = vmatprep.mubr.f32.mxu0 0.0
    %v3514 = vand.u32 %v3432, 4294901760
    %v3515 = vsub.f32 %v3432, %v3514
    %v3516 = vand.u32 %v3515, 4294901760
    %v3517 = vsub.f32 %v3515, %v3516
    %v3518 = vand.u32 %v3517, 4294901760
    %3519 = vmatmul.mubr.f32.gmra.mxu0 %v3518
    %v3520 = vpop.f32.mrf.mxu0
    %v3521 = vadd.f32 0.0, %v3520
    %v3522 = vpop.f32.mrf.mxu0
    %3523 = vdwg.mxu0
    %3524 = vmatprep.subr.mxu0 0.0
    %v3525 = vand.u32 %v873, 4294901760
    %v3526 = vsub.f32 %v873, %v3525
    %v3527 = vand.u32 %v3526, 4294901760
    %v3528 = vsub.f32 %v3526, %v3527
    %v3529 = vand.u32 %v3528, 4294901760
    %3530 = vmatpush1.msra.mxu0 %v3529
    %3531 = vmatprep.subr.mxu0 0.0
    %v3532 = vand.u32 %v872, 4294901760
    %v3533 = vsub.f32 %v872, %v3532
    %v3534 = vand.u32 %v3533, 4294901760
    %v3535 = vsub.f32 %v3533, %v3534
    %v3536 = vand.u32 %v3535, 4294901760
    %3537 = vmatpush1.msra.mxu0 %v3536
    %3538 = vmatprep.subr.mxu0 0.0
    %v3539 = vand.u32 %v871, 4294901760
    %v3540 = vsub.f32 %v871, %v3539
    %v3541 = vand.u32 %v3540, 4294901760
    %v3542 = vsub.f32 %v3540, %v3541
    %v3543 = vand.u32 %v3542, 4294901760
    %3544 = vmatpush1.msra.mxu0 %v3543
    %3545 = vmatprep.subr.mxu0 0.0
    %v3546 = vand.u32 %v870, 4294901760
    %v3547 = vsub.f32 %v870, %v3546
    %v3548 = vand.u32 %v3547, 4294901760
    %v3549 = vsub.f32 %v3547, %v3548
    %v3550 = vand.u32 %v3549, 4294901760
    %3551 = vmatpush1.msra.mxu0 %v3550
    %3552 = vmatprep.subr.mxu0 0.0
    %v3553 = vand.u32 %v869, 4294901760
    %v3554 = vsub.f32 %v869, %v3553
    %v3555 = vand.u32 %v3554, 4294901760
    %v3556 = vsub.f32 %v3554, %v3555
    %v3557 = vand.u32 %v3556, 4294901760
    %3558 = vmatpush1.msra.mxu0 %v3557
    %3559 = vmatprep.subr.mxu0 0.0
    %v3560 = vand.u32 %v868, 4294901760
    %v3561 = vsub.f32 %v868, %v3560
    %v3562 = vand.u32 %v3561, 4294901760
    %v3563 = vsub.f32 %v3561, %v3562
    %v3564 = vand.u32 %v3563, 4294901760
    %3565 = vmatpush1.msra.mxu0 %v3564
    %3566 = vmatprep.subr.mxu0 0.0
    %v3567 = vand.u32 %v867, 4294901760
    %v3568 = vsub.f32 %v867, %v3567
    %v3569 = vand.u32 %v3568, 4294901760
    %v3570 = vsub.f32 %v3568, %v3569
    %v3571 = vand.u32 %v3570, 4294901760
    %3572 = vmatpush1.msra.mxu0 %v3571
    %3573 = vmatprep.subr.mxu0 0.0
    %v3574 = vand.u32 %v866, 4294901760
    %v3575 = vsub.f32 %v866, %v3574
    %v3576 = vand.u32 %v3575, 4294901760
    %v3577 = vsub.f32 %v3575, %v3576
    %v3578 = vand.u32 %v3577, 4294901760
    %3579 = vmatpush1.msra.mxu0 %v3578
    %3580 = vmatprep.subr.mxu0 0.0
    %v3581 = vand.u32 %v865, 4294901760
    %v3582 = vsub.f32 %v865, %v3581
    %v3583 = vand.u32 %v3582, 4294901760
    %v3584 = vsub.f32 %v3582, %v3583
    %v3585 = vand.u32 %v3584, 4294901760
    %3586 = vmatpush1.msra.mxu0 %v3585
    %3587 = vmatprep.subr.mxu0 0.0
    %v3588 = vand.u32 %v864, 4294901760
    %v3589 = vsub.f32 %v864, %v3588
    %v3590 = vand.u32 %v3589, 4294901760
    %v3591 = vsub.f32 %v3589, %v3590
    %v3592 = vand.u32 %v3591, 4294901760
    %3593 = vmatpush1.msra.mxu0 %v3592
    %3594 = vmatprep.subr.mxu0 0.0
    %v3595 = vand.u32 %v863, 4294901760
    %v3596 = vsub.f32 %v863, %v3595
    %v3597 = vand.u32 %v3596, 4294901760
    %v3598 = vsub.f32 %v3596, %v3597
    %v3599 = vand.u32 %v3598, 4294901760
    %3600 = vmatpush1.msra.mxu0 %v3599
    %3601 = vmatprep.subr.mxu0 0.0
    %v3602 = vand.u32 %v862, 4294901760
    %v3603 = vsub.f32 %v862, %v3602
    %v3604 = vand.u32 %v3603, 4294901760
    %v3605 = vsub.f32 %v3603, %v3604
    %v3606 = vand.u32 %v3605, 4294901760
    %3607 = vmatpush1.msra.mxu0 %v3606
    %3608 = vmatprep.subr.mxu0 0.0
    %v3609 = vand.u32 %v861, 4294901760
    %v3610 = vsub.f32 %v861, %v3609
    %v3611 = vand.u32 %v3610, 4294901760
    %v3612 = vsub.f32 %v3610, %v3611
    %v3613 = vand.u32 %v3612, 4294901760
    %3614 = vmatpush1.msra.mxu0 %v3613
    %3615 = vmatprep.subr.mxu0 0.0
    %v3616 = vand.u32 %v860, 4294901760
    %v3617 = vsub.f32 %v860, %v3616
    %v3618 = vand.u32 %v3617, 4294901760
    %v3619 = vsub.f32 %v3617, %v3618
    %v3620 = vand.u32 %v3619, 4294901760
    %3621 = vmatpush1.msra.mxu0 %v3620
    %3622 = vmatprep.subr.mxu0 0.0
    %v3623 = vand.u32 %v859, 4294901760
    %v3624 = vsub.f32 %v859, %v3623
    %v3625 = vand.u32 %v3624, 4294901760
    %v3626 = vsub.f32 %v3624, %v3625
    %v3627 = vand.u32 %v3626, 4294901760
    %3628 = vmatpush1.msra.mxu0 %v3627
    %3629 = vmatprep.subr.mxu0 0.0
    %v3630 = vand.u32 %v858, 4294901760
    %v3631 = vsub.f32 %v858, %v3630
    %v3632 = vand.u32 %v3631, 4294901760
    %v3633 = vsub.f32 %v3631, %v3632
    %v3634 = vand.u32 %v3633, 4294901760
    %3635 = vmatpush1.msra.mxu0 %v3634
    %3636 = vmatprep.subr.mxu0 0.0
    %3637 = vmatpush2.msra.mxu0 0.0
    %3638 = vmatprep.subr.mxu0 0.0
    %3639 = vmatpush2.msra.mxu0 0.0
    %3640 = vmatprep.subr.mxu0 0.0
    %3641 = vmatpush2.msra.mxu0 0.0
    %3642 = vmatprep.subr.mxu0 0.0
    %3643 = vmatpush2.msra.mxu0 0.0
    %3644 = vmatprep.subr.mxu0 0.0
    %3645 = vmatpush2.msra.mxu0 0.0
    %3646 = vmatprep.subr.mxu0 0.0
    %3647 = vmatpush2.msra.mxu0 0.0
    %3648 = vmatprep.subr.mxu0 0.0
    %3649 = vmatpush2.msra.mxu0 0.0
    %3650 = vmatprep.subr.mxu0 0.0
    %3651 = vmatpush2.msra.mxu0 0.0
    %3652 = vmatprep.subr.mxu0 0.0
    %3653 = vmatpush2.msra.mxu0 0.0
    %3654 = vmatprep.subr.mxu0 0.0
    %3655 = vmatpush2.msra.mxu0 0.0
    %3656 = vmatprep.subr.mxu0 0.0
    %3657 = vmatpush2.msra.mxu0 0.0
    %3658 = vmatprep.subr.mxu0 0.0
    %3659 = vmatpush2.msra.mxu0 0.0
    %3660 = vmatprep.subr.mxu0 0.0
    %3661 = vmatpush2.msra.mxu0 0.0
    %3662 = vmatprep.subr.mxu0 0.0
    %3663 = vmatpush2.msra.mxu0 0.0
    %3664 = vmatprep.subr.mxu0 0.0
    %3665 = vmatpush2.msra.mxu0 0.0
    %3666 = vmatprep.subr.mxu0 0.0
    %3667 = vmatpush2.msra.mxu0 0.0
    %3668 = vmatprep.mubr.f32.mxu0 0.0
    %v3669 = vand.u32 %v3432, 4294901760
    %3670 = vmatmul.mubr.f32.gmra.mxu0 %v3669
    %v3671 = vpop.f32.mrf.mxu0
    %v3672 = vadd.f32 %v3521, %v3671
    %v3673 = vpop.f32.mrf.mxu0
    %3674 = vdwg.mxu0
    %3675 = vmatprep.subr.mxu0 0.0
    %v3676 = vand.u32 %v873, 4294901760
    %v3677 = vsub.f32 %v873, %v3676
    %3678 = vmatpush1.msra.mxu0 %v3677
    %3679 = vmatprep.subr.mxu0 0.0
    %v3680 = vand.u32 %v872, 4294901760
    %v3681 = vsub.f32 %v872, %v3680
    %3682 = vmatpush1.msra.mxu0 %v3681
    %3683 = vmatprep.subr.mxu0 0.0
    %v3684 = vand.u32 %v871, 4294901760
    %v3685 = vsub.f32 %v871, %v3684
    %3686 = vmatpush1.msra.mxu0 %v3685
    %3687 = vmatprep.subr.mxu0 0.0
    %v3688 = vand.u32 %v870, 4294901760
    %v3689 = vsub.f32 %v870, %v3688
    %3690 = vmatpush1.msra.mxu0 %v3689
    %3691 = vmatprep.subr.mxu0 0.0
    %v3692 = vand.u32 %v869, 4294901760
    %v3693 = vsub.f32 %v869, %v3692
    %3694 = vmatpush1.msra.mxu0 %v3693
    %3695 = vmatprep.subr.mxu0 0.0
    %v3696 = vand.u32 %v868, 4294901760
    %v3697 = vsub.f32 %v868, %v3696
    %3698 = vmatpush1.msra.mxu0 %v3697
    %3699 = vmatprep.subr.mxu0 0.0
    %v3700 = vand.u32 %v867, 4294901760
    %v3701 = vsub.f32 %v867, %v3700
    %3702 = vmatpush1.msra.mxu0 %v3701
    %3703 = vmatprep.subr.mxu0 0.0
    %v3704 = vand.u32 %v866, 4294901760
    %v3705 = vsub.f32 %v866, %v3704
    %3706 = vmatpush1.msra.mxu0 %v3705
    %3707 = vmatprep.subr.mxu0 0.0
    %v3708 = vand.u32 %v865, 4294901760
    %v3709 = vsub.f32 %v865, %v3708
    %3710 = vmatpush1.msra.mxu0 %v3709
    %3711 = vmatprep.subr.mxu0 0.0
    %v3712 = vand.u32 %v864, 4294901760
    %v3713 = vsub.f32 %v864, %v3712
    %3714 = vmatpush1.msra.mxu0 %v3713
    %3715 = vmatprep.subr.mxu0 0.0
    %v3716 = vand.u32 %v863, 4294901760
    %v3717 = vsub.f32 %v863, %v3716
    %3718 = vmatpush1.msra.mxu0 %v3717
    %3719 = vmatprep.subr.mxu0 0.0
    %v3720 = vand.u32 %v862, 4294901760
    %v3721 = vsub.f32 %v862, %v3720
    %3722 = vmatpush1.msra.mxu0 %v3721
    %3723 = vmatprep.subr.mxu0 0.0
    %v3724 = vand.u32 %v861, 4294901760
    %v3725 = vsub.f32 %v861, %v3724
    %3726 = vmatpush1.msra.mxu0 %v3725
    %3727 = vmatprep.subr.mxu0 0.0
    %v3728 = vand.u32 %v860, 4294901760
    %v3729 = vsub.f32 %v860, %v3728
    %3730 = vmatpush1.msra.mxu0 %v3729
    %3731 = vmatprep.subr.mxu0 0.0
    %v3732 = vand.u32 %v859, 4294901760
    %v3733 = vsub.f32 %v859, %v3732
    %3734 = vmatpush1.msra.mxu0 %v3733
    %3735 = vmatprep.subr.mxu0 0.0
    %v3736 = vand.u32 %v858, 4294901760
    %v3737 = vsub.f32 %v858, %v3736
    %3738 = vmatpush1.msra.mxu0 %v3737
    %3739 = vmatprep.subr.mxu0 0.0
    %3740 = vmatpush2.msra.mxu0 0.0
    %3741 = vmatprep.subr.mxu0 0.0
    %3742 = vmatpush2.msra.mxu0 0.0
    %3743 = vmatprep.subr.mxu0 0.0
    %3744 = vmatpush2.msra.mxu0 0.0
    %3745 = vmatprep.subr.mxu0 0.0
    %3746 = vmatpush2.msra.mxu0 0.0
    %3747 = vmatprep.subr.mxu0 0.0
    %3748 = vmatpush2.msra.mxu0 0.0
    %3749 = vmatprep.subr.mxu0 0.0
    %3750 = vmatpush2.msra.mxu0 0.0
    %3751 = vmatprep.subr.mxu0 0.0
    %3752 = vmatpush2.msra.mxu0 0.0
    %3753 = vmatprep.subr.mxu0 0.0
    %3754 = vmatpush2.msra.mxu0 0.0
    %3755 = vmatprep.subr.mxu0 0.0
    %3756 = vmatpush2.msra.mxu0 0.0
    %3757 = vmatprep.subr.mxu0 0.0
    %3758 = vmatpush2.msra.mxu0 0.0
    %3759 = vmatprep.subr.mxu0 0.0
    %3760 = vmatpush2.msra.mxu0 0.0
    %3761 = vmatprep.subr.mxu0 0.0
    %3762 = vmatpush2.msra.mxu0 0.0
    %3763 = vmatprep.subr.mxu0 0.0
    %3764 = vmatpush2.msra.mxu0 0.0
    %3765 = vmatprep.subr.mxu0 0.0
    %3766 = vmatpush2.msra.mxu0 0.0
    %3767 = vmatprep.subr.mxu0 0.0
    %3768 = vmatpush2.msra.mxu0 0.0
    %3769 = vmatprep.subr.mxu0 0.0
    %3770 = vmatpush2.msra.mxu0 0.0
    %3771 = vmatprep.mubr.f32.mxu0 0.0
    %v3772 = vand.u32 %v3432, 4294901760
    %v3773 = vsub.f32 %v3432, %v3772
    %3774 = vmatmul.mubr.f32.gmra.mxu0 %v3773
    %v3775 = vpop.f32.mrf.mxu0
    %v3776 = vadd.f32 %v3672, %v3775
    %v3777 = vpop.f32.mrf.mxu0
    %3778 = vdwg.mxu0
    %3779 = vmatprep.subr.mxu0 0.0
    %v3780 = vand.u32 %v873, 4294901760
    %3781 = vmatpush1.msra.mxu0 %v3780
    %3782 = vmatprep.subr.mxu0 0.0
    %v3783 = vand.u32 %v872, 4294901760
    %3784 = vmatpush1.msra.mxu0 %v3783
    %3785 = vmatprep.subr.mxu0 0.0
    %v3786 = vand.u32 %v871, 4294901760
    %3787 = vmatpush1.msra.mxu0 %v3786
    %3788 = vmatprep.subr.mxu0 0.0
    %v3789 = vand.u32 %v870, 4294901760
    %3790 = vmatpush1.msra.mxu0 %v3789
    %3791 = vmatprep.subr.mxu0 0.0
    %v3792 = vand.u32 %v869, 4294901760
    %3793 = vmatpush1.msra.mxu0 %v3792
    %3794 = vmatprep.subr.mxu0 0.0
    %v3795 = vand.u32 %v868, 4294901760
    %3796 = vmatpush1.msra.mxu0 %v3795
    %3797 = vmatprep.subr.mxu0 0.0
    %v3798 = vand.u32 %v867, 4294901760
    %3799 = vmatpush1.msra.mxu0 %v3798
    %3800 = vmatprep.subr.mxu0 0.0
    %v3801 = vand.u32 %v866, 4294901760
    %3802 = vmatpush1.msra.mxu0 %v3801
    %3803 = vmatprep.subr.mxu0 0.0
    %v3804 = vand.u32 %v865, 4294901760
    %3805 = vmatpush1.msra.mxu0 %v3804
    %3806 = vmatprep.subr.mxu0 0.0
    %v3807 = vand.u32 %v864, 4294901760
    %3808 = vmatpush1.msra.mxu0 %v3807
    %3809 = vmatprep.subr.mxu0 0.0
    %v3810 = vand.u32 %v863, 4294901760
    %3811 = vmatpush1.msra.mxu0 %v3810
    %3812 = vmatprep.subr.mxu0 0.0
    %v3813 = vand.u32 %v862, 4294901760
    %3814 = vmatpush1.msra.mxu0 %v3813
    %3815 = vmatprep.subr.mxu0 0.0
    %v3816 = vand.u32 %v861, 4294901760
    %3817 = vmatpush1.msra.mxu0 %v3816
    %3818 = vmatprep.subr.mxu0 0.0
    %v3819 = vand.u32 %v860, 4294901760
    %3820 = vmatpush1.msra.mxu0 %v3819
    %3821 = vmatprep.subr.mxu0 0.0
    %v3822 = vand.u32 %v859, 4294901760
    %3823 = vmatpush1.msra.mxu0 %v3822
    %3824 = vmatprep.subr.mxu0 0.0
    %v3825 = vand.u32 %v858, 4294901760
    %3826 = vmatpush1.msra.mxu0 %v3825
    %3827 = vmatprep.subr.mxu0 0.0
    %3828 = vmatpush2.msra.mxu0 0.0
    %3829 = vmatprep.subr.mxu0 0.0
    %3830 = vmatpush2.msra.mxu0 0.0
    %3831 = vmatprep.subr.mxu0 0.0
    %3832 = vmatpush2.msra.mxu0 0.0
    %3833 = vmatprep.subr.mxu0 0.0
    %3834 = vmatpush2.msra.mxu0 0.0
    %3835 = vmatprep.subr.mxu0 0.0
    %3836 = vmatpush2.msra.mxu0 0.0
    %3837 = vmatprep.subr.mxu0 0.0
    %3838 = vmatpush2.msra.mxu0 0.0
    %3839 = vmatprep.subr.mxu0 0.0
    %3840 = vmatpush2.msra.mxu0 0.0
    %3841 = vmatprep.subr.mxu0 0.0
    %3842 = vmatpush2.msra.mxu0 0.0
    %3843 = vmatprep.subr.mxu0 0.0
    %3844 = vmatpush2.msra.mxu0 0.0
    %3845 = vmatprep.subr.mxu0 0.0
    %3846 = vmatpush2.msra.mxu0 0.0
    %3847 = vmatprep.subr.mxu0 0.0
    %3848 = vmatpush2.msra.mxu0 0.0
    %3849 = vmatprep.subr.mxu0 0.0
    %3850 = vmatpush2.msra.mxu0 0.0
    %3851 = vmatprep.subr.mxu0 0.0
    %3852 = vmatpush2.msra.mxu0 0.0
    %3853 = vmatprep.subr.mxu0 0.0
    %3854 = vmatpush2.msra.mxu0 0.0
    %3855 = vmatprep.subr.mxu0 0.0
    %3856 = vmatpush2.msra.mxu0 0.0
    %3857 = vmatprep.subr.mxu0 0.0
    %3858 = vmatpush2.msra.mxu0 0.0
    %3859 = vmatprep.mubr.f32.mxu0 0.0
    %v3860 = vand.u32 %v3432, 4294901760
    %v3861 = vsub.f32 %v3432, %v3860
    %v3862 = vand.u32 %v3861, 4294901760
    %3863 = vmatmul.mubr.f32.gmra.mxu0 %v3862
    %v3864 = vpop.f32.mrf.mxu0
    %v3865 = vadd.f32 %v3776, %v3864
    %v3866 = vpop.f32.mrf.mxu0
    %3867 = vdwg.mxu0
    %3868 = vmatprep.subr.mxu0 0.0
    %v3869 = vand.u32 %v873, 4294901760
    %v3870 = vsub.f32 %v873, %v3869
    %v3871 = vand.u32 %v3870, 4294901760
    %3872 = vmatpush1.msra.mxu0 %v3871
    %3873 = vmatprep.subr.mxu0 0.0
    %v3874 = vand.u32 %v872, 4294901760
    %v3875 = vsub.f32 %v872, %v3874
    %v3876 = vand.u32 %v3875, 4294901760
    %3877 = vmatpush1.msra.mxu0 %v3876
    %3878 = vmatprep.subr.mxu0 0.0
    %v3879 = vand.u32 %v871, 4294901760
    %v3880 = vsub.f32 %v871, %v3879
    %v3881 = vand.u32 %v3880, 4294901760
    %3882 = vmatpush1.msra.mxu0 %v3881
    %3883 = vmatprep.subr.mxu0 0.0
    %v3884 = vand.u32 %v870, 4294901760
    %v3885 = vsub.f32 %v870, %v3884
    %v3886 = vand.u32 %v3885, 4294901760
    %3887 = vmatpush1.msra.mxu0 %v3886
    %3888 = vmatprep.subr.mxu0 0.0
    %v3889 = vand.u32 %v869, 4294901760
    %v3890 = vsub.f32 %v869, %v3889
    %v3891 = vand.u32 %v3890, 4294901760
    %3892 = vmatpush1.msra.mxu0 %v3891
    %3893 = vmatprep.subr.mxu0 0.0
    %v3894 = vand.u32 %v868, 4294901760
    %v3895 = vsub.f32 %v868, %v3894
    %v3896 = vand.u32 %v3895, 4294901760
    %3897 = vmatpush1.msra.mxu0 %v3896
    %3898 = vmatprep.subr.mxu0 0.0
    %v3899 = vand.u32 %v867, 4294901760
    %v3900 = vsub.f32 %v867, %v3899
    %v3901 = vand.u32 %v3900, 4294901760
    %3902 = vmatpush1.msra.mxu0 %v3901
    %3903 = vmatprep.subr.mxu0 0.0
    %v3904 = vand.u32 %v866, 4294901760
    %v3905 = vsub.f32 %v866, %v3904
    %v3906 = vand.u32 %v3905, 4294901760
    %3907 = vmatpush1.msra.mxu0 %v3906
    %3908 = vmatprep.subr.mxu0 0.0
    %v3909 = vand.u32 %v865, 4294901760
    %v3910 = vsub.f32 %v865, %v3909
    %v3911 = vand.u32 %v3910, 4294901760
    %3912 = vmatpush1.msra.mxu0 %v3911
    %3913 = vmatprep.subr.mxu0 0.0
    %v3914 = vand.u32 %v864, 4294901760
    %v3915 = vsub.f32 %v864, %v3914
    %v3916 = vand.u32 %v3915, 4294901760
    %3917 = vmatpush1.msra.mxu0 %v3916
    %3918 = vmatprep.subr.mxu0 0.0
    %v3919 = vand.u32 %v863, 4294901760
    %v3920 = vsub.f32 %v863, %v3919
    %v3921 = vand.u32 %v3920, 4294901760
    %3922 = vmatpush1.msra.mxu0 %v3921
    %3923 = vmatprep.subr.mxu0 0.0
    %v3924 = vand.u32 %v862, 4294901760
    %v3925 = vsub.f32 %v862, %v3924
    %v3926 = vand.u32 %v3925, 4294901760
    %3927 = vmatpush1.msra.mxu0 %v3926
    %3928 = vmatprep.subr.mxu0 0.0
    %v3929 = vand.u32 %v861, 4294901760
    %v3930 = vsub.f32 %v861, %v3929
    %v3931 = vand.u32 %v3930, 4294901760
    %3932 = vmatpush1.msra.mxu0 %v3931
    %3933 = vmatprep.subr.mxu0 0.0
    %v3934 = vand.u32 %v860, 4294901760
    %v3935 = vsub.f32 %v860, %v3934
    %v3936 = vand.u32 %v3935, 4294901760
    %3937 = vmatpush1.msra.mxu0 %v3936
    %3938 = vmatprep.subr.mxu0 0.0
    %v3939 = vand.u32 %v859, 4294901760
    %v3940 = vsub.f32 %v859, %v3939
    %v3941 = vand.u32 %v3940, 4294901760
    %3942 = vmatpush1.msra.mxu0 %v3941
    %3943 = vmatprep.subr.mxu0 0.0
    %v3944 = vand.u32 %v858, 4294901760
    %v3945 = vsub.f32 %v858, %v3944
    %v3946 = vand.u32 %v3945, 4294901760
    %3947 = vmatpush1.msra.mxu0 %v3946
    %3948 = vmatprep.subr.mxu0 0.0
    %3949 = vmatpush2.msra.mxu0 0.0
    %3950 = vmatprep.subr.mxu0 0.0
    %3951 = vmatpush2.msra.mxu0 0.0
    %3952 = vmatprep.subr.mxu0 0.0
    %3953 = vmatpush2.msra.mxu0 0.0
    %3954 = vmatprep.subr.mxu0 0.0
    %3955 = vmatpush2.msra.mxu0 0.0
    %3956 = vmatprep.subr.mxu0 0.0
    %3957 = vmatpush2.msra.mxu0 0.0
    %3958 = vmatprep.subr.mxu0 0.0
    %3959 = vmatpush2.msra.mxu0 0.0
    %3960 = vmatprep.subr.mxu0 0.0
    %3961 = vmatpush2.msra.mxu0 0.0
    %3962 = vmatprep.subr.mxu0 0.0
    %3963 = vmatpush2.msra.mxu0 0.0
    %3964 = vmatprep.subr.mxu0 0.0
    %3965 = vmatpush2.msra.mxu0 0.0
    %3966 = vmatprep.subr.mxu0 0.0
    %3967 = vmatpush2.msra.mxu0 0.0
    %3968 = vmatprep.subr.mxu0 0.0
    %3969 = vmatpush2.msra.mxu0 0.0
    %3970 = vmatprep.subr.mxu0 0.0
    %3971 = vmatpush2.msra.mxu0 0.0
    %3972 = vmatprep.subr.mxu0 0.0
    %3973 = vmatpush2.msra.mxu0 0.0
    %3974 = vmatprep.subr.mxu0 0.0
    %3975 = vmatpush2.msra.mxu0 0.0
    %3976 = vmatprep.subr.mxu0 0.0
    %3977 = vmatpush2.msra.mxu0 0.0
    %3978 = vmatprep.subr.mxu0 0.0
    %3979 = vmatpush2.msra.mxu0 0.0
    %3980 = vmatprep.mubr.f32.mxu0 0.0
    %v3981 = vand.u32 %v3432, 4294901760
    %3982 = vmatmul.mubr.f32.gmra.mxu0 %v3981
    %v3983 = vpop.f32.mrf.mxu0
    %v3984 = vadd.f32 %v3865, %v3983
    %v3985 = vpop.f32.mrf.mxu0
    %3986 = vdwg.mxu0
    %3987 = vmatprep.subr.mxu0 0.0
    %v3988 = vand.u32 %v873, 4294901760
    %3989 = vmatpush1.msra.mxu0 %v3988
    %3990 = vmatprep.subr.mxu0 0.0
    %v3991 = vand.u32 %v872, 4294901760
    %3992 = vmatpush1.msra.mxu0 %v3991
    %3993 = vmatprep.subr.mxu0 0.0
    %v3994 = vand.u32 %v871, 4294901760
    %3995 = vmatpush1.msra.mxu0 %v3994
    %3996 = vmatprep.subr.mxu0 0.0
    %v3997 = vand.u32 %v870, 4294901760
    %3998 = vmatpush1.msra.mxu0 %v3997
    %3999 = vmatprep.subr.mxu0 0.0
    %v4000 = vand.u32 %v869, 4294901760
    %4001 = vmatpush1.msra.mxu0 %v4000
    %4002 = vmatprep.subr.mxu0 0.0
    %v4003 = vand.u32 %v868, 4294901760
    %4004 = vmatpush1.msra.mxu0 %v4003
    %4005 = vmatprep.subr.mxu0 0.0
    %v4006 = vand.u32 %v867, 4294901760
    %4007 = vmatpush1.msra.mxu0 %v4006
    %4008 = vmatprep.subr.mxu0 0.0
    %v4009 = vand.u32 %v866, 4294901760
    %4010 = vmatpush1.msra.mxu0 %v4009
    %4011 = vmatprep.subr.mxu0 0.0
    %v4012 = vand.u32 %v865, 4294901760
    %4013 = vmatpush1.msra.mxu0 %v4012
    %4014 = vmatprep.subr.mxu0 0.0
    %v4015 = vand.u32 %v864, 4294901760
    %4016 = vmatpush1.msra.mxu0 %v4015
    %4017 = vmatprep.subr.mxu0 0.0
    %v4018 = vand.u32 %v863, 4294901760
    %4019 = vmatpush1.msra.mxu0 %v4018
    %4020 = vmatprep.subr.mxu0 0.0
    %v4021 = vand.u32 %v862, 4294901760
    %4022 = vmatpush1.msra.mxu0 %v4021
    %4023 = vmatprep.subr.mxu0 0.0
    %v4024 = vand.u32 %v861, 4294901760
    %4025 = vmatpush1.msra.mxu0 %v4024
    %4026 = vmatprep.subr.mxu0 0.0
    %v4027 = vand.u32 %v860, 4294901760
    %4028 = vmatpush1.msra.mxu0 %v4027
    %4029 = vmatprep.subr.mxu0 0.0
    %v4030 = vand.u32 %v859, 4294901760
    %4031 = vmatpush1.msra.mxu0 %v4030
    %4032 = vmatprep.subr.mxu0 0.0
    %v4033 = vand.u32 %v858, 4294901760
    %4034 = vmatpush1.msra.mxu0 %v4033
    %4035 = vmatprep.subr.mxu0 0.0
    %4036 = vmatpush2.msra.mxu0 0.0
    %4037 = vmatprep.subr.mxu0 0.0
    %4038 = vmatpush2.msra.mxu0 0.0
    %4039 = vmatprep.subr.mxu0 0.0
    %4040 = vmatpush2.msra.mxu0 0.0
    %4041 = vmatprep.subr.mxu0 0.0
    %4042 = vmatpush2.msra.mxu0 0.0
    %4043 = vmatprep.subr.mxu0 0.0
    %4044 = vmatpush2.msra.mxu0 0.0
    %4045 = vmatprep.subr.mxu0 0.0
    %4046 = vmatpush2.msra.mxu0 0.0
    %4047 = vmatprep.subr.mxu0 0.0
    %4048 = vmatpush2.msra.mxu0 0.0
    %4049 = vmatprep.subr.mxu0 0.0
    %4050 = vmatpush2.msra.mxu0 0.0
    %4051 = vmatprep.subr.mxu0 0.0
    %4052 = vmatpush2.msra.mxu0 0.0
    %4053 = vmatprep.subr.mxu0 0.0
    %4054 = vmatpush2.msra.mxu0 0.0
    %4055 = vmatprep.subr.mxu0 0.0
    %4056 = vmatpush2.msra.mxu0 0.0
    %4057 = vmatprep.subr.mxu0 0.0
    %4058 = vmatpush2.msra.mxu0 0.0
    %4059 = vmatprep.subr.mxu0 0.0
    %4060 = vmatpush2.msra.mxu0 0.0
    %4061 = vmatprep.subr.mxu0 0.0
    %4062 = vmatpush2.msra.mxu0 0.0
    %4063 = vmatprep.subr.mxu0 0.0
    %4064 = vmatpush2.msra.mxu0 0.0
    %4065 = vmatprep.subr.mxu0 0.0
    %4066 = vmatpush2.msra.mxu0 0.0
    %4067 = vmatprep.mubr.f32.mxu0 0.0
    %v4068 = vand.u32 %v3432, 4294901760
    %4069 = vmatmul.mubr.f32.gmra.mxu0 %v4068
    %v4070 = vpop.f32.mrf.mxu0
    %v4071 = vadd.f32 %v3984, %v4070
    %v4072 = vpop.f32.mrf.mxu0
    %4073 = vdwg.mxu0
    %v4074 = vadd.f32 %v837, %v4071
    %v4075 = vtanh.pop %v4074
    %4076 = vmatprep.subr.mxu0 0.0
    %v4077 = vand.u32 %v873, 4294901760
    %4078 = vmatpush1.msra.mxu0 %v4077
    %4079 = vmatprep.subr.mxu0 0.0
    %v4080 = vand.u32 %v872, 4294901760
    %4081 = vmatpush1.msra.mxu0 %v4080
    %4082 = vmatprep.subr.mxu0 0.0
    %v4083 = vand.u32 %v871, 4294901760
    %4084 = vmatpush1.msra.mxu0 %v4083
    %4085 = vmatprep.subr.mxu0 0.0
    %v4086 = vand.u32 %v870, 4294901760
    %4087 = vmatpush1.msra.mxu0 %v4086
    %4088 = vmatprep.subr.mxu0 0.0
    %v4089 = vand.u32 %v869, 4294901760
    %4090 = vmatpush1.msra.mxu0 %v4089
    %4091 = vmatprep.subr.mxu0 0.0
    %v4092 = vand.u32 %v868, 4294901760
    %4093 = vmatpush1.msra.mxu0 %v4092
    %4094 = vmatprep.subr.mxu0 0.0
    %v4095 = vand.u32 %v867, 4294901760
    %4096 = vmatpush1.msra.mxu0 %v4095
    %4097 = vmatprep.subr.mxu0 0.0
    %v4098 = vand.u32 %v866, 4294901760
    %4099 = vmatpush1.msra.mxu0 %v4098
    %4100 = vmatprep.subr.mxu0 0.0
    %v4101 = vand.u32 %v865, 4294901760
    %4102 = vmatpush1.msra.mxu0 %v4101
    %4103 = vmatprep.subr.mxu0 0.0
    %v4104 = vand.u32 %v864, 4294901760
    %4105 = vmatpush1.msra.mxu0 %v4104
    %4106 = vmatprep.subr.mxu0 0.0
    %v4107 = vand.u32 %v863, 4294901760
    %4108 = vmatpush1.msra.mxu0 %v4107
    %4109 = vmatprep.subr.mxu0 0.0
    %v4110 = vand.u32 %v862, 4294901760
    %4111 = vmatpush1.msra.mxu0 %v4110
    %4112 = vmatprep.subr.mxu0 0.0
    %v4113 = vand.u32 %v861, 4294901760
    %4114 = vmatpush1.msra.mxu0 %v4113
    %4115 = vmatprep.subr.mxu0 0.0
    %v4116 = vand.u32 %v860, 4294901760
    %4117 = vmatpush1.msra.mxu0 %v4116
    %4118 = vmatprep.subr.mxu0 0.0
    %v4119 = vand.u32 %v859, 4294901760
    %4120 = vmatpush1.msra.mxu0 %v4119
    %4121 = vmatprep.subr.mxu0 0.0
    %v4122 = vand.u32 %v858, 4294901760
    %4123 = vmatpush1.msra.mxu0 %v4122
    %4124 = vmatprep.subr.mxu0 0.0
    %4125 = vmatpush2.msra.mxu0 0.0
    %4126 = vmatprep.subr.mxu0 0.0
    %4127 = vmatpush2.msra.mxu0 0.0
    %4128 = vmatprep.subr.mxu0 0.0
    %4129 = vmatpush2.msra.mxu0 0.0
    %4130 = vmatprep.subr.mxu0 0.0
    %4131 = vmatpush2.msra.mxu0 0.0
    %4132 = vmatprep.subr.mxu0 0.0
    %4133 = vmatpush2.msra.mxu0 0.0
    %4134 = vmatprep.subr.mxu0 0.0
    %4135 = vmatpush2.msra.mxu0 0.0
    %4136 = vmatprep.subr.mxu0 0.0
    %4137 = vmatpush2.msra.mxu0 0.0
    %4138 = vmatprep.subr.mxu0 0.0
    %4139 = vmatpush2.msra.mxu0 0.0
    %4140 = vmatprep.subr.mxu0 0.0
    %4141 = vmatpush2.msra.mxu0 0.0
    %4142 = vmatprep.subr.mxu0 0.0
    %4143 = vmatpush2.msra.mxu0 0.0
    %4144 = vmatprep.subr.mxu0 0.0
    %4145 = vmatpush2.msra.mxu0 0.0
    %4146 = vmatprep.subr.mxu0 0.0
    %4147 = vmatpush2.msra.mxu0 0.0
    %4148 = vmatprep.subr.mxu0 0.0
    %4149 = vmatpush2.msra.mxu0 0.0
    %4150 = vmatprep.subr.mxu0 0.0
    %4151 = vmatpush2.msra.mxu0 0.0
    %4152 = vmatprep.subr.mxu0 0.0
    %4153 = vmatpush2.msra.mxu0 0.0
    %4154 = vmatprep.subr.mxu0 0.0
    %4155 = vmatpush2.msra.mxu0 0.0
    %4156 = vmatprep.mubr.f32.mxu0 0.0
    %v4157 = vand.u32 %v4075, 4294901760
    %v4158 = vsub.f32 %v4075, %v4157
    %v4159 = vand.u32 %v4158, 4294901760
    %v4160 = vsub.f32 %v4158, %v4159
    %v4161 = vand.u32 %v4160, 4294901760
    %4162 = vmatmul.mubr.f32.gmra.mxu0 %v4161
    %v4163 = vpop.f32.mrf.mxu0
    %v4164 = vadd.f32 0.0, %v4163
    %v4165 = vpop.f32.mrf.mxu0
    %4166 = vdwg.mxu0
    %4167 = vmatprep.subr.mxu0 0.0
    %v4168 = vand.u32 %v873, 4294901760
    %v4169 = vsub.f32 %v873, %v4168
    %v4170 = vand.u32 %v4169, 4294901760
    %v4171 = vsub.f32 %v4169, %v4170
    %v4172 = vand.u32 %v4171, 4294901760
    %4173 = vmatpush1.msra.mxu0 %v4172
    %4174 = vmatprep.subr.mxu0 0.0
    %v4175 = vand.u32 %v872, 4294901760
    %v4176 = vsub.f32 %v872, %v4175
    %v4177 = vand.u32 %v4176, 4294901760
    %v4178 = vsub.f32 %v4176, %v4177
    %v4179 = vand.u32 %v4178, 4294901760
    %4180 = vmatpush1.msra.mxu0 %v4179
    %4181 = vmatprep.subr.mxu0 0.0
    %v4182 = vand.u32 %v871, 4294901760
    %v4183 = vsub.f32 %v871, %v4182
    %v4184 = vand.u32 %v4183, 4294901760
    %v4185 = vsub.f32 %v4183, %v4184
    %v4186 = vand.u32 %v4185, 4294901760
    %4187 = vmatpush1.msra.mxu0 %v4186
    %4188 = vmatprep.subr.mxu0 0.0
    %v4189 = vand.u32 %v870, 4294901760
    %v4190 = vsub.f32 %v870, %v4189
    %v4191 = vand.u32 %v4190, 4294901760
    %v4192 = vsub.f32 %v4190, %v4191
    %v4193 = vand.u32 %v4192, 4294901760
    %4194 = vmatpush1.msra.mxu0 %v4193
    %4195 = vmatprep.subr.mxu0 0.0
    %v4196 = vand.u32 %v869, 4294901760
    %v4197 = vsub.f32 %v869, %v4196
    %v4198 = vand.u32 %v4197, 4294901760
    %v4199 = vsub.f32 %v4197, %v4198
    %v4200 = vand.u32 %v4199, 4294901760
    %4201 = vmatpush1.msra.mxu0 %v4200
    %4202 = vmatprep.subr.mxu0 0.0
    %v4203 = vand.u32 %v868, 4294901760
    %v4204 = vsub.f32 %v868, %v4203
    %v4205 = vand.u32 %v4204, 4294901760
    %v4206 = vsub.f32 %v4204, %v4205
    %v4207 = vand.u32 %v4206, 4294901760
    %4208 = vmatpush1.msra.mxu0 %v4207
    %4209 = vmatprep.subr.mxu0 0.0
    %v4210 = vand.u32 %v867, 4294901760
    %v4211 = vsub.f32 %v867, %v4210
    %v4212 = vand.u32 %v4211, 4294901760
    %v4213 = vsub.f32 %v4211, %v4212
    %v4214 = vand.u32 %v4213, 4294901760
    %4215 = vmatpush1.msra.mxu0 %v4214
    %4216 = vmatprep.subr.mxu0 0.0
    %v4217 = vand.u32 %v866, 4294901760
    %v4218 = vsub.f32 %v866, %v4217
    %v4219 = vand.u32 %v4218, 4294901760
    %v4220 = vsub.f32 %v4218, %v4219
    %v4221 = vand.u32 %v4220, 4294901760
    %4222 = vmatpush1.msra.mxu0 %v4221
    %4223 = vmatprep.subr.mxu0 0.0
    %v4224 = vand.u32 %v865, 4294901760
    %v4225 = vsub.f32 %v865, %v4224
    %v4226 = vand.u32 %v4225, 4294901760
    %v4227 = vsub.f32 %v4225, %v4226
    %v4228 = vand.u32 %v4227, 4294901760
    %4229 = vmatpush1.msra.mxu0 %v4228
    %4230 = vmatprep.subr.mxu0 0.0
    %v4231 = vand.u32 %v864, 4294901760
    %v4232 = vsub.f32 %v864, %v4231
    %v4233 = vand.u32 %v4232, 4294901760
    %v4234 = vsub.f32 %v4232, %v4233
    %v4235 = vand.u32 %v4234, 4294901760
    %4236 = vmatpush1.msra.mxu0 %v4235
    %4237 = vmatprep.subr.mxu0 0.0
    %v4238 = vand.u32 %v863, 4294901760
    %v4239 = vsub.f32 %v863, %v4238
    %v4240 = vand.u32 %v4239, 4294901760
    %v4241 = vsub.f32 %v4239, %v4240
    %v4242 = vand.u32 %v4241, 4294901760
    %4243 = vmatpush1.msra.mxu0 %v4242
    %4244 = vmatprep.subr.mxu0 0.0
    %v4245 = vand.u32 %v862, 4294901760
    %v4246 = vsub.f32 %v862, %v4245
    %v4247 = vand.u32 %v4246, 4294901760
    %v4248 = vsub.f32 %v4246, %v4247
    %v4249 = vand.u32 %v4248, 4294901760
    %4250 = vmatpush1.msra.mxu0 %v4249
    %4251 = vmatprep.subr.mxu0 0.0
    %v4252 = vand.u32 %v861, 4294901760
    %v4253 = vsub.f32 %v861, %v4252
    %v4254 = vand.u32 %v4253, 4294901760
    %v4255 = vsub.f32 %v4253, %v4254
    %v4256 = vand.u32 %v4255, 4294901760
    %4257 = vmatpush1.msra.mxu0 %v4256
    %4258 = vmatprep.subr.mxu0 0.0
    %v4259 = vand.u32 %v860, 4294901760
    %v4260 = vsub.f32 %v860, %v4259
    %v4261 = vand.u32 %v4260, 4294901760
    %v4262 = vsub.f32 %v4260, %v4261
    %v4263 = vand.u32 %v4262, 4294901760
    %4264 = vmatpush1.msra.mxu0 %v4263
    %4265 = vmatprep.subr.mxu0 0.0
    %v4266 = vand.u32 %v859, 4294901760
    %v4267 = vsub.f32 %v859, %v4266
    %v4268 = vand.u32 %v4267, 4294901760
    %v4269 = vsub.f32 %v4267, %v4268
    %v4270 = vand.u32 %v4269, 4294901760
    %4271 = vmatpush1.msra.mxu0 %v4270
    %4272 = vmatprep.subr.mxu0 0.0
    %v4273 = vand.u32 %v858, 4294901760
    %v4274 = vsub.f32 %v858, %v4273
    %v4275 = vand.u32 %v4274, 4294901760
    %v4276 = vsub.f32 %v4274, %v4275
    %v4277 = vand.u32 %v4276, 4294901760
    %4278 = vmatpush1.msra.mxu0 %v4277
    %4279 = vmatprep.subr.mxu0 0.0
    %4280 = vmatpush2.msra.mxu0 0.0
    %4281 = vmatprep.subr.mxu0 0.0
    %4282 = vmatpush2.msra.mxu0 0.0
    %4283 = vmatprep.subr.mxu0 0.0
    %4284 = vmatpush2.msra.mxu0 0.0
    %4285 = vmatprep.subr.mxu0 0.0
    %4286 = vmatpush2.msra.mxu0 0.0
    %4287 = vmatprep.subr.mxu0 0.0
    %4288 = vmatpush2.msra.mxu0 0.0
    %4289 = vmatprep.subr.mxu0 0.0
    %4290 = vmatpush2.msra.mxu0 0.0
    %4291 = vmatprep.subr.mxu0 0.0
    %4292 = vmatpush2.msra.mxu0 0.0
    %4293 = vmatprep.subr.mxu0 0.0
    %4294 = vmatpush2.msra.mxu0 0.0
    %4295 = vmatprep.subr.mxu0 0.0
    %4296 = vmatpush2.msra.mxu0 0.0
    %4297 = vmatprep.subr.mxu0 0.0
    %4298 = vmatpush2.msra.mxu0 0.0
    %4299 = vmatprep.subr.mxu0 0.0
    %4300 = vmatpush2.msra.mxu0 0.0
    %4301 = vmatprep.subr.mxu0 0.0
    %4302 = vmatpush2.msra.mxu0 0.0
    %4303 = vmatprep.subr.mxu0 0.0
    %4304 = vmatpush2.msra.mxu0 0.0
    %4305 = vmatprep.subr.mxu0 0.0
    %4306 = vmatpush2.msra.mxu0 0.0
    %4307 = vmatprep.subr.mxu0 0.0
    %4308 = vmatpush2.msra.mxu0 0.0
    %4309 = vmatprep.subr.mxu0 0.0
    %4310 = vmatpush2.msra.mxu0 0.0
    %4311 = vmatprep.mubr.f32.mxu0 0.0
    %v4312 = vand.u32 %v4075, 4294901760
    %4313 = vmatmul.mubr.f32.gmra.mxu0 %v4312
    %v4314 = vpop.f32.mrf.mxu0
    %v4315 = vadd.f32 %v4164, %v4314
    %v4316 = vpop.f32.mrf.mxu0
    %4317 = vdwg.mxu0
    %4318 = vmatprep.subr.mxu0 0.0
    %v4319 = vand.u32 %v873, 4294901760
    %v4320 = vsub.f32 %v873, %v4319
    %4321 = vmatpush1.msra.mxu0 %v4320
    %4322 = vmatprep.subr.mxu0 0.0
    %v4323 = vand.u32 %v872, 4294901760
    %v4324 = vsub.f32 %v872, %v4323
    %4325 = vmatpush1.msra.mxu0 %v4324
    %4326 = vmatprep.subr.mxu0 0.0
    %v4327 = vand.u32 %v871, 4294901760
    %v4328 = vsub.f32 %v871, %v4327
    %4329 = vmatpush1.msra.mxu0 %v4328
    %4330 = vmatprep.subr.mxu0 0.0
    %v4331 = vand.u32 %v870, 4294901760
    %v4332 = vsub.f32 %v870, %v4331
    %4333 = vmatpush1.msra.mxu0 %v4332
    %4334 = vmatprep.subr.mxu0 0.0
    %v4335 = vand.u32 %v869, 4294901760
    %v4336 = vsub.f32 %v869, %v4335
    %4337 = vmatpush1.msra.mxu0 %v4336
    %4338 = vmatprep.subr.mxu0 0.0
    %v4339 = vand.u32 %v868, 4294901760
    %v4340 = vsub.f32 %v868, %v4339
    %4341 = vmatpush1.msra.mxu0 %v4340
    %4342 = vmatprep.subr.mxu0 0.0
    %v4343 = vand.u32 %v867, 4294901760
    %v4344 = vsub.f32 %v867, %v4343
    %4345 = vmatpush1.msra.mxu0 %v4344
    %4346 = vmatprep.subr.mxu0 0.0
    %v4347 = vand.u32 %v866, 4294901760
    %v4348 = vsub.f32 %v866, %v4347
    %4349 = vmatpush1.msra.mxu0 %v4348
    %4350 = vmatprep.subr.mxu0 0.0
    %v4351 = vand.u32 %v865, 4294901760
    %v4352 = vsub.f32 %v865, %v4351
    %4353 = vmatpush1.msra.mxu0 %v4352
    %4354 = vmatprep.subr.mxu0 0.0
    %v4355 = vand.u32 %v864, 4294901760
    %v4356 = vsub.f32 %v864, %v4355
    %4357 = vmatpush1.msra.mxu0 %v4356
    %4358 = vmatprep.subr.mxu0 0.0
    %v4359 = vand.u32 %v863, 4294901760
    %v4360 = vsub.f32 %v863, %v4359
    %4361 = vmatpush1.msra.mxu0 %v4360
    %4362 = vmatprep.subr.mxu0 0.0
    %v4363 = vand.u32 %v862, 4294901760
    %v4364 = vsub.f32 %v862, %v4363
    %4365 = vmatpush1.msra.mxu0 %v4364
    %4366 = vmatprep.subr.mxu0 0.0
    %v4367 = vand.u32 %v861, 4294901760
    %v4368 = vsub.f32 %v861, %v4367
    %4369 = vmatpush1.msra.mxu0 %v4368
    %4370 = vmatprep.subr.mxu0 0.0
    %v4371 = vand.u32 %v860, 4294901760
    %v4372 = vsub.f32 %v860, %v4371
    %4373 = vmatpush1.msra.mxu0 %v4372
    %4374 = vmatprep.subr.mxu0 0.0
    %v4375 = vand.u32 %v859, 4294901760
    %v4376 = vsub.f32 %v859, %v4375
    %4377 = vmatpush1.msra.mxu0 %v4376
    %4378 = vmatprep.subr.mxu0 0.0
    %v4379 = vand.u32 %v858, 4294901760
    %v4380 = vsub.f32 %v858, %v4379
    %4381 = vmatpush1.msra.mxu0 %v4380
    %4382 = vmatprep.subr.mxu0 0.0
    %4383 = vmatpush2.msra.mxu0 0.0
    %4384 = vmatprep.subr.mxu0 0.0
    %4385 = vmatpush2.msra.mxu0 0.0
    %4386 = vmatprep.subr.mxu0 0.0
    %4387 = vmatpush2.msra.mxu0 0.0
    %4388 = vmatprep.subr.mxu0 0.0
    %4389 = vmatpush2.msra.mxu0 0.0
    %4390 = vmatprep.subr.mxu0 0.0
    %4391 = vmatpush2.msra.mxu0 0.0
    %4392 = vmatprep.subr.mxu0 0.0
    %4393 = vmatpush2.msra.mxu0 0.0
    %4394 = vmatprep.subr.mxu0 0.0
    %4395 = vmatpush2.msra.mxu0 0.0
    %4396 = vmatprep.subr.mxu0 0.0
    %4397 = vmatpush2.msra.mxu0 0.0
    %4398 = vmatprep.subr.mxu0 0.0
    %4399 = vmatpush2.msra.mxu0 0.0
    %4400 = vmatprep.subr.mxu0 0.0
    %4401 = vmatpush2.msra.mxu0 0.0
    %4402 = vmatprep.subr.mxu0 0.0
    %4403 = vmatpush2.msra.mxu0 0.0
    %4404 = vmatprep.subr.mxu0 0.0
    %4405 = vmatpush2.msra.mxu0 0.0
    %4406 = vmatprep.subr.mxu0 0.0
    %4407 = vmatpush2.msra.mxu0 0.0
    %4408 = vmatprep.subr.mxu0 0.0
    %4409 = vmatpush2.msra.mxu0 0.0
    %4410 = vmatprep.subr.mxu0 0.0
    %4411 = vmatpush2.msra.mxu0 0.0
    %4412 = vmatprep.subr.mxu0 0.0
    %4413 = vmatpush2.msra.mxu0 0.0
    %4414 = vmatprep.mubr.f32.mxu0 0.0
    %v4415 = vand.u32 %v4075, 4294901760
    %v4416 = vsub.f32 %v4075, %v4415
    %4417 = vmatmul.mubr.f32.gmra.mxu0 %v4416
    %v4418 = vpop.f32.mrf.mxu0
    %v4419 = vadd.f32 %v4315, %v4418
    %v4420 = vpop.f32.mrf.mxu0
    %4421 = vdwg.mxu0
    %4422 = vmatprep.subr.mxu0 0.0
    %v4423 = vand.u32 %v873, 4294901760
    %4424 = vmatpush1.msra.mxu0 %v4423
    %4425 = vmatprep.subr.mxu0 0.0
    %v4426 = vand.u32 %v872, 4294901760
    %4427 = vmatpush1.msra.mxu0 %v4426
    %4428 = vmatprep.subr.mxu0 0.0
    %v4429 = vand.u32 %v871, 4294901760
    %4430 = vmatpush1.msra.mxu0 %v4429
    %4431 = vmatprep.subr.mxu0 0.0
    %v4432 = vand.u32 %v870, 4294901760
    %4433 = vmatpush1.msra.mxu0 %v4432
    %4434 = vmatprep.subr.mxu0 0.0
    %v4435 = vand.u32 %v869, 4294901760
    %4436 = vmatpush1.msra.mxu0 %v4435
    %4437 = vmatprep.subr.mxu0 0.0
    %v4438 = vand.u32 %v868, 4294901760
    %4439 = vmatpush1.msra.mxu0 %v4438
    %4440 = vmatprep.subr.mxu0 0.0
    %v4441 = vand.u32 %v867, 4294901760
    %4442 = vmatpush1.msra.mxu0 %v4441
    %4443 = vmatprep.subr.mxu0 0.0
    %v4444 = vand.u32 %v866, 4294901760
    %4445 = vmatpush1.msra.mxu0 %v4444
    %4446 = vmatprep.subr.mxu0 0.0
    %v4447 = vand.u32 %v865, 4294901760
    %4448 = vmatpush1.msra.mxu0 %v4447
    %4449 = vmatprep.subr.mxu0 0.0
    %v4450 = vand.u32 %v864, 4294901760
    %4451 = vmatpush1.msra.mxu0 %v4450
    %4452 = vmatprep.subr.mxu0 0.0
    %v4453 = vand.u32 %v863, 4294901760
    %4454 = vmatpush1.msra.mxu0 %v4453
    %4455 = vmatprep.subr.mxu0 0.0
    %v4456 = vand.u32 %v862, 4294901760
    %4457 = vmatpush1.msra.mxu0 %v4456
    %4458 = vmatprep.subr.mxu0 0.0
    %v4459 = vand.u32 %v861, 4294901760
    %4460 = vmatpush1.msra.mxu0 %v4459
    %4461 = vmatprep.subr.mxu0 0.0
    %v4462 = vand.u32 %v860, 4294901760
    %4463 = vmatpush1.msra.mxu0 %v4462
    %4464 = vmatprep.subr.mxu0 0.0
    %v4465 = vand.u32 %v859, 4294901760
    %4466 = vmatpush1.msra.mxu0 %v4465
    %4467 = vmatprep.subr.mxu0 0.0
    %v4468 = vand.u32 %v858, 4294901760
    %4469 = vmatpush1.msra.mxu0 %v4468
    %4470 = vmatprep.subr.mxu0 0.0
    %4471 = vmatpush2.msra.mxu0 0.0
    %4472 = vmatprep.subr.mxu0 0.0
    %4473 = vmatpush2.msra.mxu0 0.0
    %4474 = vmatprep.subr.mxu0 0.0
    %4475 = vmatpush2.msra.mxu0 0.0
    %4476 = vmatprep.subr.mxu0 0.0
    %4477 = vmatpush2.msra.mxu0 0.0
    %4478 = vmatprep.subr.mxu0 0.0
    %4479 = vmatpush2.msra.mxu0 0.0
    %4480 = vmatprep.subr.mxu0 0.0
    %4481 = vmatpush2.msra.mxu0 0.0
    %4482 = vmatprep.subr.mxu0 0.0
    %4483 = vmatpush2.msra.mxu0 0.0
    %4484 = vmatprep.subr.mxu0 0.0
    %4485 = vmatpush2.msra.mxu0 0.0
    %4486 = vmatprep.subr.mxu0 0.0
    %4487 = vmatpush2.msra.mxu0 0.0
    %4488 = vmatprep.subr.mxu0 0.0
    %4489 = vmatpush2.msra.mxu0 0.0
    %4490 = vmatprep.subr.mxu0 0.0
    %4491 = vmatpush2.msra.mxu0 0.0
    %4492 = vmatprep.subr.mxu0 0.0
    %4493 = vmatpush2.msra.mxu0 0.0
    %4494 = vmatprep.subr.mxu0 0.0
    %4495 = vmatpush2.msra.mxu0 0.0
    %4496 = vmatprep.subr.mxu0 0.0
    %4497 = vmatpush2.msra.mxu0 0.0
    %4498 = vmatprep.subr.mxu0 0.0
    %4499 = vmatpush2.msra.mxu0 0.0
    %4500 = vmatprep.subr.mxu0 0.0
    %4501 = vmatpush2.msra.mxu0 0.0
    %4502 = vmatprep.mubr.f32.mxu0 0.0
    %v4503 = vand.u32 %v4075, 4294901760
    %v4504 = vsub.f32 %v4075, %v4503
    %v4505 = vand.u32 %v4504, 4294901760
    %4506 = vmatmul.mubr.f32.gmra.mxu0 %v4505
    %v4507 = vpop.f32.mrf.mxu0
    %v4508 = vadd.f32 %v4419, %v4507
    %v4509 = vpop.f32.mrf.mxu0
    %4510 = vdwg.mxu0
    %4511 = vmatprep.subr.mxu0 0.0
    %v4512 = vand.u32 %v873, 4294901760
    %v4513 = vsub.f32 %v873, %v4512
    %v4514 = vand.u32 %v4513, 4294901760
    %4515 = vmatpush1.msra.mxu0 %v4514
    %4516 = vmatprep.subr.mxu0 0.0
    %v4517 = vand.u32 %v872, 4294901760
    %v4518 = vsub.f32 %v872, %v4517
    %v4519 = vand.u32 %v4518, 4294901760
    %4520 = vmatpush1.msra.mxu0 %v4519
    %4521 = vmatprep.subr.mxu0 0.0
    %v4522 = vand.u32 %v871, 4294901760
    %v4523 = vsub.f32 %v871, %v4522
    %v4524 = vand.u32 %v4523, 4294901760
    %4525 = vmatpush1.msra.mxu0 %v4524
    %4526 = vmatprep.subr.mxu0 0.0
    %v4527 = vand.u32 %v870, 4294901760
    %v4528 = vsub.f32 %v870, %v4527
    %v4529 = vand.u32 %v4528, 4294901760
    %4530 = vmatpush1.msra.mxu0 %v4529
    %4531 = vmatprep.subr.mxu0 0.0
    %v4532 = vand.u32 %v869, 4294901760
    %v4533 = vsub.f32 %v869, %v4532
    %v4534 = vand.u32 %v4533, 4294901760
    %4535 = vmatpush1.msra.mxu0 %v4534
    %4536 = vmatprep.subr.mxu0 0.0
    %v4537 = vand.u32 %v868, 4294901760
    %v4538 = vsub.f32 %v868, %v4537
    %v4539 = vand.u32 %v4538, 4294901760
    %4540 = vmatpush1.msra.mxu0 %v4539
    %4541 = vmatprep.subr.mxu0 0.0
    %v4542 = vand.u32 %v867, 4294901760
    %v4543 = vsub.f32 %v867, %v4542
    %v4544 = vand.u32 %v4543, 4294901760
    %4545 = vmatpush1.msra.mxu0 %v4544
    %4546 = vmatprep.subr.mxu0 0.0
    %v4547 = vand.u32 %v866, 4294901760
    %v4548 = vsub.f32 %v866, %v4547
    %v4549 = vand.u32 %v4548, 4294901760
    %4550 = vmatpush1.msra.mxu0 %v4549
    %4551 = vmatprep.subr.mxu0 0.0
    %v4552 = vand.u32 %v865, 4294901760
    %v4553 = vsub.f32 %v865, %v4552
    %v4554 = vand.u32 %v4553, 4294901760
    %4555 = vmatpush1.msra.mxu0 %v4554
    %4556 = vmatprep.subr.mxu0 0.0
    %v4557 = vand.u32 %v864, 4294901760
    %v4558 = vsub.f32 %v864, %v4557
    %v4559 = vand.u32 %v4558, 4294901760
    %4560 = vmatpush1.msra.mxu0 %v4559
    %4561 = vmatprep.subr.mxu0 0.0
    %v4562 = vand.u32 %v863, 4294901760
    %v4563 = vsub.f32 %v863, %v4562
    %v4564 = vand.u32 %v4563, 4294901760
    %4565 = vmatpush1.msra.mxu0 %v4564
    %4566 = vmatprep.subr.mxu0 0.0
    %v4567 = vand.u32 %v862, 4294901760
    %v4568 = vsub.f32 %v862, %v4567
    %v4569 = vand.u32 %v4568, 4294901760
    %4570 = vmatpush1.msra.mxu0 %v4569
    %4571 = vmatprep.subr.mxu0 0.0
    %v4572 = vand.u32 %v861, 4294901760
    %v4573 = vsub.f32 %v861, %v4572
    %v4574 = vand.u32 %v4573, 4294901760
    %4575 = vmatpush1.msra.mxu0 %v4574
    %4576 = vmatprep.subr.mxu0 0.0
    %v4577 = vand.u32 %v860, 4294901760
    %v4578 = vsub.f32 %v860, %v4577
    %v4579 = vand.u32 %v4578, 4294901760
    %4580 = vmatpush1.msra.mxu0 %v4579
    %4581 = vmatprep.subr.mxu0 0.0
    %v4582 = vand.u32 %v859, 4294901760
    %v4583 = vsub.f32 %v859, %v4582
    %v4584 = vand.u32 %v4583, 4294901760
    %4585 = vmatpush1.msra.mxu0 %v4584
    %4586 = vmatprep.subr.mxu0 0.0
    %v4587 = vand.u32 %v858, 4294901760
    %v4588 = vsub.f32 %v858, %v4587
    %v4589 = vand.u32 %v4588, 4294901760
    %4590 = vmatpush1.msra.mxu0 %v4589
    %4591 = vmatprep.subr.mxu0 0.0
    %4592 = vmatpush2.msra.mxu0 0.0
    %4593 = vmatprep.subr.mxu0 0.0
    %4594 = vmatpush2.msra.mxu0 0.0
    %4595 = vmatprep.subr.mxu0 0.0
    %4596 = vmatpush2.msra.mxu0 0.0
    %4597 = vmatprep.subr.mxu0 0.0
    %4598 = vmatpush2.msra.mxu0 0.0
    %4599 = vmatprep.subr.mxu0 0.0
    %4600 = vmatpush2.msra.mxu0 0.0
    %4601 = vmatprep.subr.mxu0 0.0
    %4602 = vmatpush2.msra.mxu0 0.0
    %4603 = vmatprep.subr.mxu0 0.0
    %4604 = vmatpush2.msra.mxu0 0.0
    %4605 = vmatprep.subr.mxu0 0.0
    %4606 = vmatpush2.msra.mxu0 0.0
    %4607 = vmatprep.subr.mxu0 0.0
    %4608 = vmatpush2.msra.mxu0 0.0
    %4609 = vmatprep.subr.mxu0 0.0
    %4610 = vmatpush2.msra.mxu0 0.0
    %4611 = vmatprep.subr.mxu0 0.0
    %4612 = vmatpush2.msra.mxu0 0.0
    %4613 = vmatprep.subr.mxu0 0.0
    %4614 = vmatpush2.msra.mxu0 0.0
    %4615 = vmatprep.subr.mxu0 0.0
    %4616 = vmatpush2.msra.mxu0 0.0
    %4617 = vmatprep.subr.mxu0 0.0
    %4618 = vmatpush2.msra.mxu0 0.0
    %4619 = vmatprep.subr.mxu0 0.0
    %4620 = vmatpush2.msra.mxu0 0.0
    %4621 = vmatprep.subr.mxu0 0.0
    %4622 = vmatpush2.msra.mxu0 0.0
    %4623 = vmatprep.mubr.f32.mxu0 0.0
    %v4624 = vand.u32 %v4075, 4294901760
    %4625 = vmatmul.mubr.f32.gmra.mxu0 %v4624
    %v4626 = vpop.f32.mrf.mxu0
    %v4627 = vadd.f32 %v4508, %v4626
    %v4628 = vpop.f32.mrf.mxu0
    %4629 = vdwg.mxu0
    %4630 = vmatprep.subr.mxu0 0.0
    %v4631 = vand.u32 %v873, 4294901760
    %4632 = vmatpush1.msra.mxu0 %v4631
    %4633 = vmatprep.subr.mxu0 0.0
    %v4634 = vand.u32 %v872, 4294901760
    %4635 = vmatpush1.msra.mxu0 %v4634
    %4636 = vmatprep.subr.mxu0 0.0
    %v4637 = vand.u32 %v871, 4294901760
    %4638 = vmatpush1.msra.mxu0 %v4637
    %4639 = vmatprep.subr.mxu0 0.0
    %v4640 = vand.u32 %v870, 4294901760
    %4641 = vmatpush1.msra.mxu0 %v4640
    %4642 = vmatprep.subr.mxu0 0.0
    %v4643 = vand.u32 %v869, 4294901760
    %4644 = vmatpush1.msra.mxu0 %v4643
    %4645 = vmatprep.subr.mxu0 0.0
    %v4646 = vand.u32 %v868, 4294901760
    %4647 = vmatpush1.msra.mxu0 %v4646
    %4648 = vmatprep.subr.mxu0 0.0
    %v4649 = vand.u32 %v867, 4294901760
    %4650 = vmatpush1.msra.mxu0 %v4649
    %4651 = vmatprep.subr.mxu0 0.0
    %v4652 = vand.u32 %v866, 4294901760
    %4653 = vmatpush1.msra.mxu0 %v4652
    %4654 = vmatprep.subr.mxu0 0.0
    %v4655 = vand.u32 %v865, 4294901760
    %4656 = vmatpush1.msra.mxu0 %v4655
    %4657 = vmatprep.subr.mxu0 0.0
    %v4658 = vand.u32 %v864, 4294901760
    %4659 = vmatpush1.msra.mxu0 %v4658
    %4660 = vmatprep.subr.mxu0 0.0
    %v4661 = vand.u32 %v863, 4294901760
    %4662 = vmatpush1.msra.mxu0 %v4661
    %4663 = vmatprep.subr.mxu0 0.0
    %v4664 = vand.u32 %v862, 4294901760
    %4665 = vmatpush1.msra.mxu0 %v4664
    %4666 = vmatprep.subr.mxu0 0.0
    %v4667 = vand.u32 %v861, 4294901760
    %4668 = vmatpush1.msra.mxu0 %v4667
    %4669 = vmatprep.subr.mxu0 0.0
    %v4670 = vand.u32 %v860, 4294901760
    %4671 = vmatpush1.msra.mxu0 %v4670
    %4672 = vmatprep.subr.mxu0 0.0
    %v4673 = vand.u32 %v859, 4294901760
    %4674 = vmatpush1.msra.mxu0 %v4673
    %4675 = vmatprep.subr.mxu0 0.0
    %v4676 = vand.u32 %v858, 4294901760
    %4677 = vmatpush1.msra.mxu0 %v4676
    %4678 = vmatprep.subr.mxu0 0.0
    %4679 = vmatpush2.msra.mxu0 0.0
    %4680 = vmatprep.subr.mxu0 0.0
    %4681 = vmatpush2.msra.mxu0 0.0
    %4682 = vmatprep.subr.mxu0 0.0
    %4683 = vmatpush2.msra.mxu0 0.0
    %4684 = vmatprep.subr.mxu0 0.0
    %4685 = vmatpush2.msra.mxu0 0.0
    %4686 = vmatprep.subr.mxu0 0.0
    %4687 = vmatpush2.msra.mxu0 0.0
    %4688 = vmatprep.subr.mxu0 0.0
    %4689 = vmatpush2.msra.mxu0 0.0
    %4690 = vmatprep.subr.mxu0 0.0
    %4691 = vmatpush2.msra.mxu0 0.0
    %4692 = vmatprep.subr.mxu0 0.0
    %4693 = vmatpush2.msra.mxu0 0.0
    %4694 = vmatprep.subr.mxu0 0.0
    %4695 = vmatpush2.msra.mxu0 0.0
    %4696 = vmatprep.subr.mxu0 0.0
    %4697 = vmatpush2.msra.mxu0 0.0
    %4698 = vmatprep.subr.mxu0 0.0
    %4699 = vmatpush2.msra.mxu0 0.0
    %4700 = vmatprep.subr.mxu0 0.0
    %4701 = vmatpush2.msra.mxu0 0.0
    %4702 = vmatprep.subr.mxu0 0.0
    %4703 = vmatpush2.msra.mxu0 0.0
    %4704 = vmatprep.subr.mxu0 0.0
    %4705 = vmatpush2.msra.mxu0 0.0
    %4706 = vmatprep.subr.mxu0 0.0
    %4707 = vmatpush2.msra.mxu0 0.0
    %4708 = vmatprep.subr.mxu0 0.0
    %4709 = vmatpush2.msra.mxu0 0.0
    %4710 = vmatprep.mubr.f32.mxu0 0.0
    %v4711 = vand.u32 %v4075, 4294901760
    %4712 = vmatmul.mubr.f32.gmra.mxu0 %v4711
    %v4713 = vpop.f32.mrf.mxu0
    %v4714 = vadd.f32 %v4627, %v4713
    %v4715 = vpop.f32.mrf.mxu0
    %4716 = vdwg.mxu0
    %v4717 = vadd.f32 %v843, %v4714
    %v4718 = vtanh.pop %v4717
    %4719 = vmatprep.subr.mxu0 0.0
    %v4720 = vand.u32 %v873, 4294901760
    %4721 = vmatpush1.msra.mxu0 %v4720
    %4722 = vmatprep.subr.mxu0 0.0
    %v4723 = vand.u32 %v872, 4294901760
    %4724 = vmatpush1.msra.mxu0 %v4723
    %4725 = vmatprep.subr.mxu0 0.0
    %v4726 = vand.u32 %v871, 4294901760
    %4727 = vmatpush1.msra.mxu0 %v4726
    %4728 = vmatprep.subr.mxu0 0.0
    %v4729 = vand.u32 %v870, 4294901760
    %4730 = vmatpush1.msra.mxu0 %v4729
    %4731 = vmatprep.subr.mxu0 0.0
    %v4732 = vand.u32 %v869, 4294901760
    %4733 = vmatpush1.msra.mxu0 %v4732
    %4734 = vmatprep.subr.mxu0 0.0
    %v4735 = vand.u32 %v868, 4294901760
    %4736 = vmatpush1.msra.mxu0 %v4735
    %4737 = vmatprep.subr.mxu0 0.0
    %v4738 = vand.u32 %v867, 4294901760
    %4739 = vmatpush1.msra.mxu0 %v4738
    %4740 = vmatprep.subr.mxu0 0.0
    %v4741 = vand.u32 %v866, 4294901760
    %4742 = vmatpush1.msra.mxu0 %v4741
    %4743 = vmatprep.subr.mxu0 0.0
    %v4744 = vand.u32 %v865, 4294901760
    %4745 = vmatpush1.msra.mxu0 %v4744
    %4746 = vmatprep.subr.mxu0 0.0
    %v4747 = vand.u32 %v864, 4294901760
    %4748 = vmatpush1.msra.mxu0 %v4747
    %4749 = vmatprep.subr.mxu0 0.0
    %v4750 = vand.u32 %v863, 4294901760
    %4751 = vmatpush1.msra.mxu0 %v4750
    %4752 = vmatprep.subr.mxu0 0.0
    %v4753 = vand.u32 %v862, 4294901760
    %4754 = vmatpush1.msra.mxu0 %v4753
    %4755 = vmatprep.subr.mxu0 0.0
    %v4756 = vand.u32 %v861, 4294901760
    %4757 = vmatpush1.msra.mxu0 %v4756
    %4758 = vmatprep.subr.mxu0 0.0
    %v4759 = vand.u32 %v860, 4294901760
    %4760 = vmatpush1.msra.mxu0 %v4759
    %4761 = vmatprep.subr.mxu0 0.0
    %v4762 = vand.u32 %v859, 4294901760
    %4763 = vmatpush1.msra.mxu0 %v4762
    %4764 = vmatprep.subr.mxu0 0.0
    %v4765 = vand.u32 %v858, 4294901760
    %4766 = vmatpush1.msra.mxu0 %v4765
    %4767 = vmatprep.subr.mxu0 0.0
    %4768 = vmatpush2.msra.mxu0 0.0
    %4769 = vmatprep.subr.mxu0 0.0
    %4770 = vmatpush2.msra.mxu0 0.0
    %4771 = vmatprep.subr.mxu0 0.0
    %4772 = vmatpush2.msra.mxu0 0.0
    %4773 = vmatprep.subr.mxu0 0.0
    %4774 = vmatpush2.msra.mxu0 0.0
    %4775 = vmatprep.subr.mxu0 0.0
    %4776 = vmatpush2.msra.mxu0 0.0
    %4777 = vmatprep.subr.mxu0 0.0
    %4778 = vmatpush2.msra.mxu0 0.0
    %4779 = vmatprep.subr.mxu0 0.0
    %4780 = vmatpush2.msra.mxu0 0.0
    %4781 = vmatprep.subr.mxu0 0.0
    %4782 = vmatpush2.msra.mxu0 0.0
    %4783 = vmatprep.subr.mxu0 0.0
    %4784 = vmatpush2.msra.mxu0 0.0
    %4785 = vmatprep.subr.mxu0 0.0
    %4786 = vmatpush2.msra.mxu0 0.0
    %4787 = vmatprep.subr.mxu0 0.0
    %4788 = vmatpush2.msra.mxu0 0.0
    %4789 = vmatprep.subr.mxu0 0.0
    %4790 = vmatpush2.msra.mxu0 0.0
    %4791 = vmatprep.subr.mxu0 0.0
    %4792 = vmatpush2.msra.mxu0 0.0
    %4793 = vmatprep.subr.mxu0 0.0
    %4794 = vmatpush2.msra.mxu0 0.0
    %4795 = vmatprep.subr.mxu0 0.0
    %4796 = vmatpush2.msra.mxu0 0.0
    %4797 = vmatprep.subr.mxu0 0.0
    %4798 = vmatpush2.msra.mxu0 0.0
    %4799 = vmatprep.mubr.f32.mxu0 0.0
    %v4800 = vand.u32 %v4718, 4294901760
    %v4801 = vsub.f32 %v4718, %v4800
    %v4802 = vand.u32 %v4801, 4294901760
    %v4803 = vsub.f32 %v4801, %v4802
    %v4804 = vand.u32 %v4803, 4294901760
    %4805 = vmatmul.mubr.f32.gmra.mxu0 %v4804
    %v4806 = vpop.f32.mrf.mxu0
    %v4807 = vadd.f32 0.0, %v4806
    %v4808 = vpop.f32.mrf.mxu0
    %4809 = vdwg.mxu0
    %4810 = vmatprep.subr.mxu0 0.0
    %v4811 = vand.u32 %v873, 4294901760
    %v4812 = vsub.f32 %v873, %v4811
    %v4813 = vand.u32 %v4812, 4294901760
    %v4814 = vsub.f32 %v4812, %v4813
    %v4815 = vand.u32 %v4814, 4294901760
    %4816 = vmatpush1.msra.mxu0 %v4815
    %4817 = vmatprep.subr.mxu0 0.0
    %v4818 = vand.u32 %v872, 4294901760
    %v4819 = vsub.f32 %v872, %v4818
    %v4820 = vand.u32 %v4819, 4294901760
    %v4821 = vsub.f32 %v4819, %v4820
    %v4822 = vand.u32 %v4821, 4294901760
    %4823 = vmatpush1.msra.mxu0 %v4822
    %4824 = vmatprep.subr.mxu0 0.0
    %v4825 = vand.u32 %v871, 4294901760
    %v4826 = vsub.f32 %v871, %v4825
    %v4827 = vand.u32 %v4826, 4294901760
    %v4828 = vsub.f32 %v4826, %v4827
    %v4829 = vand.u32 %v4828, 4294901760
    %4830 = vmatpush1.msra.mxu0 %v4829
    %4831 = vmatprep.subr.mxu0 0.0
    %v4832 = vand.u32 %v870, 4294901760
    %v4833 = vsub.f32 %v870, %v4832
    %v4834 = vand.u32 %v4833, 4294901760
    %v4835 = vsub.f32 %v4833, %v4834
    %v4836 = vand.u32 %v4835, 4294901760
    %4837 = vmatpush1.msra.mxu0 %v4836
    %4838 = vmatprep.subr.mxu0 0.0
    %v4839 = vand.u32 %v869, 4294901760
    %v4840 = vsub.f32 %v869, %v4839
    %v4841 = vand.u32 %v4840, 4294901760
    %v4842 = vsub.f32 %v4840, %v4841
    %v4843 = vand.u32 %v4842, 4294901760
    %4844 = vmatpush1.msra.mxu0 %v4843
    %4845 = vmatprep.subr.mxu0 0.0
    %v4846 = vand.u32 %v868, 4294901760
    %v4847 = vsub.f32 %v868, %v4846
    %v4848 = vand.u32 %v4847, 4294901760
    %v4849 = vsub.f32 %v4847, %v4848
    %v4850 = vand.u32 %v4849, 4294901760
    %4851 = vmatpush1.msra.mxu0 %v4850
    %4852 = vmatprep.subr.mxu0 0.0
    %v4853 = vand.u32 %v867, 4294901760
    %v4854 = vsub.f32 %v867, %v4853
    %v4855 = vand.u32 %v4854, 4294901760
    %v4856 = vsub.f32 %v4854, %v4855
    %v4857 = vand.u32 %v4856, 4294901760
    %4858 = vmatpush1.msra.mxu0 %v4857
    %4859 = vmatprep.subr.mxu0 0.0
    %v4860 = vand.u32 %v866, 4294901760
    %v4861 = vsub.f32 %v866, %v4860
    %v4862 = vand.u32 %v4861, 4294901760
    %v4863 = vsub.f32 %v4861, %v4862
    %v4864 = vand.u32 %v4863, 4294901760
    %4865 = vmatpush1.msra.mxu0 %v4864
    %4866 = vmatprep.subr.mxu0 0.0
    %v4867 = vand.u32 %v865, 4294901760
    %v4868 = vsub.f32 %v865, %v4867
    %v4869 = vand.u32 %v4868, 4294901760
    %v4870 = vsub.f32 %v4868, %v4869
    %v4871 = vand.u32 %v4870, 4294901760
    %4872 = vmatpush1.msra.mxu0 %v4871
    %4873 = vmatprep.subr.mxu0 0.0
    %v4874 = vand.u32 %v864, 4294901760
    %v4875 = vsub.f32 %v864, %v4874
    %v4876 = vand.u32 %v4875, 4294901760
    %v4877 = vsub.f32 %v4875, %v4876
    %v4878 = vand.u32 %v4877, 4294901760
    %4879 = vmatpush1.msra.mxu0 %v4878
    %4880 = vmatprep.subr.mxu0 0.0
    %v4881 = vand.u32 %v863, 4294901760
    %v4882 = vsub.f32 %v863, %v4881
    %v4883 = vand.u32 %v4882, 4294901760
    %v4884 = vsub.f32 %v4882, %v4883
    %v4885 = vand.u32 %v4884, 4294901760
    %4886 = vmatpush1.msra.mxu0 %v4885
    %4887 = vmatprep.subr.mxu0 0.0
    %v4888 = vand.u32 %v862, 4294901760
    %v4889 = vsub.f32 %v862, %v4888
    %v4890 = vand.u32 %v4889, 4294901760
    %v4891 = vsub.f32 %v4889, %v4890
    %v4892 = vand.u32 %v4891, 4294901760
    %4893 = vmatpush1.msra.mxu0 %v4892
    %4894 = vmatprep.subr.mxu0 0.0
    %v4895 = vand.u32 %v861, 4294901760
    %v4896 = vsub.f32 %v861, %v4895
    %v4897 = vand.u32 %v4896, 4294901760
    %v4898 = vsub.f32 %v4896, %v4897
    %v4899 = vand.u32 %v4898, 4294901760
    %4900 = vmatpush1.msra.mxu0 %v4899
    %4901 = vmatprep.subr.mxu0 0.0
    %v4902 = vand.u32 %v860, 4294901760
    %v4903 = vsub.f32 %v860, %v4902
    %v4904 = vand.u32 %v4903, 4294901760
    %v4905 = vsub.f32 %v4903, %v4904
    %v4906 = vand.u32 %v4905, 4294901760
    %4907 = vmatpush1.msra.mxu0 %v4906
    %4908 = vmatprep.subr.mxu0 0.0
    %v4909 = vand.u32 %v859, 4294901760
    %v4910 = vsub.f32 %v859, %v4909
    %v4911 = vand.u32 %v4910, 4294901760
    %v4912 = vsub.f32 %v4910, %v4911
    %v4913 = vand.u32 %v4912, 4294901760
    %4914 = vmatpush1.msra.mxu0 %v4913
    %4915 = vmatprep.subr.mxu0 0.0
    %v4916 = vand.u32 %v858, 4294901760
    %v4917 = vsub.f32 %v858, %v4916
    %v4918 = vand.u32 %v4917, 4294901760
    %v4919 = vsub.f32 %v4917, %v4918
    %v4920 = vand.u32 %v4919, 4294901760
    %4921 = vmatpush1.msra.mxu0 %v4920
    %4922 = vmatprep.subr.mxu0 0.0
    %4923 = vmatpush2.msra.mxu0 0.0
    %4924 = vmatprep.subr.mxu0 0.0
    %4925 = vmatpush2.msra.mxu0 0.0
    %4926 = vmatprep.subr.mxu0 0.0
    %4927 = vmatpush2.msra.mxu0 0.0
    %4928 = vmatprep.subr.mxu0 0.0
    %4929 = vmatpush2.msra.mxu0 0.0
    %4930 = vmatprep.subr.mxu0 0.0
    %4931 = vmatpush2.msra.mxu0 0.0
    %4932 = vmatprep.subr.mxu0 0.0
    %4933 = vmatpush2.msra.mxu0 0.0
    %4934 = vmatprep.subr.mxu0 0.0
    %4935 = vmatpush2.msra.mxu0 0.0
    %4936 = vmatprep.subr.mxu0 0.0
    %4937 = vmatpush2.msra.mxu0 0.0
    %4938 = vmatprep.subr.mxu0 0.0
    %4939 = vmatpush2.msra.mxu0 0.0
    %4940 = vmatprep.subr.mxu0 0.0
    %4941 = vmatpush2.msra.mxu0 0.0
    %4942 = vmatprep.subr.mxu0 0.0
    %4943 = vmatpush2.msra.mxu0 0.0
    %4944 = vmatprep.subr.mxu0 0.0
    %4945 = vmatpush2.msra.mxu0 0.0
    %4946 = vmatprep.subr.mxu0 0.0
    %4947 = vmatpush2.msra.mxu0 0.0
    %4948 = vmatprep.subr.mxu0 0.0
    %4949 = vmatpush2.msra.mxu0 0.0
    %4950 = vmatprep.subr.mxu0 0.0
    %4951 = vmatpush2.msra.mxu0 0.0
    %4952 = vmatprep.subr.mxu0 0.0
    %4953 = vmatpush2.msra.mxu0 0.0
    %4954 = vmatprep.mubr.f32.mxu0 0.0
    %v4955 = vand.u32 %v4718, 4294901760
    %4956 = vmatmul.mubr.f32.gmra.mxu0 %v4955
    %v4957 = vpop.f32.mrf.mxu0
    %v4958 = vadd.f32 %v4807, %v4957
    %v4959 = vpop.f32.mrf.mxu0
    %4960 = vdwg.mxu0
    %4961 = vmatprep.subr.mxu0 0.0
    %v4962 = vand.u32 %v873, 4294901760
    %v4963 = vsub.f32 %v873, %v4962
    %4964 = vmatpush1.msra.mxu0 %v4963
    %4965 = vmatprep.subr.mxu0 0.0
    %v4966 = vand.u32 %v872, 4294901760
    %v4967 = vsub.f32 %v872, %v4966
    %4968 = vmatpush1.msra.mxu0 %v4967
    %4969 = vmatprep.subr.mxu0 0.0
    %v4970 = vand.u32 %v871, 4294901760
    %v4971 = vsub.f32 %v871, %v4970
    %4972 = vmatpush1.msra.mxu0 %v4971
    %4973 = vmatprep.subr.mxu0 0.0
    %v4974 = vand.u32 %v870, 4294901760
    %v4975 = vsub.f32 %v870, %v4974
    %4976 = vmatpush1.msra.mxu0 %v4975
    %4977 = vmatprep.subr.mxu0 0.0
    %v4978 = vand.u32 %v869, 4294901760
    %v4979 = vsub.f32 %v869, %v4978
    %4980 = vmatpush1.msra.mxu0 %v4979
    %4981 = vmatprep.subr.mxu0 0.0
    %v4982 = vand.u32 %v868, 4294901760
    %v4983 = vsub.f32 %v868, %v4982
    %4984 = vmatpush1.msra.mxu0 %v4983
    %4985 = vmatprep.subr.mxu0 0.0
    %v4986 = vand.u32 %v867, 4294901760
    %v4987 = vsub.f32 %v867, %v4986
    %4988 = vmatpush1.msra.mxu0 %v4987
    %4989 = vmatprep.subr.mxu0 0.0
    %v4990 = vand.u32 %v866, 4294901760
    %v4991 = vsub.f32 %v866, %v4990
    %4992 = vmatpush1.msra.mxu0 %v4991
    %4993 = vmatprep.subr.mxu0 0.0
    %v4994 = vand.u32 %v865, 4294901760
    %v4995 = vsub.f32 %v865, %v4994
    %4996 = vmatpush1.msra.mxu0 %v4995
    %4997 = vmatprep.subr.mxu0 0.0
    %v4998 = vand.u32 %v864, 4294901760
    %v4999 = vsub.f32 %v864, %v4998
    %5000 = vmatpush1.msra.mxu0 %v4999
    %5001 = vmatprep.subr.mxu0 0.0
    %v5002 = vand.u32 %v863, 4294901760
    %v5003 = vsub.f32 %v863, %v5002
    %5004 = vmatpush1.msra.mxu0 %v5003
    %5005 = vmatprep.subr.mxu0 0.0
    %v5006 = vand.u32 %v862, 4294901760
    %v5007 = vsub.f32 %v862, %v5006
    %5008 = vmatpush1.msra.mxu0 %v5007
    %5009 = vmatprep.subr.mxu0 0.0
    %v5010 = vand.u32 %v861, 4294901760
    %v5011 = vsub.f32 %v861, %v5010
    %5012 = vmatpush1.msra.mxu0 %v5011
    %5013 = vmatprep.subr.mxu0 0.0
    %v5014 = vand.u32 %v860, 4294901760
    %v5015 = vsub.f32 %v860, %v5014
    %5016 = vmatpush1.msra.mxu0 %v5015
    %5017 = vmatprep.subr.mxu0 0.0
    %v5018 = vand.u32 %v859, 4294901760
    %v5019 = vsub.f32 %v859, %v5018
    %5020 = vmatpush1.msra.mxu0 %v5019
    %5021 = vmatprep.subr.mxu0 0.0
    %v5022 = vand.u32 %v858, 4294901760
    %v5023 = vsub.f32 %v858, %v5022
    %5024 = vmatpush1.msra.mxu0 %v5023
    %5025 = vmatprep.subr.mxu0 0.0
    %5026 = vmatpush2.msra.mxu0 0.0
    %5027 = vmatprep.subr.mxu0 0.0
    %5028 = vmatpush2.msra.mxu0 0.0
    %5029 = vmatprep.subr.mxu0 0.0
    %5030 = vmatpush2.msra.mxu0 0.0
    %5031 = vmatprep.subr.mxu0 0.0
    %5032 = vmatpush2.msra.mxu0 0.0
    %5033 = vmatprep.subr.mxu0 0.0
    %5034 = vmatpush2.msra.mxu0 0.0
    %5035 = vmatprep.subr.mxu0 0.0
    %5036 = vmatpush2.msra.mxu0 0.0
    %5037 = vmatprep.subr.mxu0 0.0
    %5038 = vmatpush2.msra.mxu0 0.0
    %5039 = vmatprep.subr.mxu0 0.0
    %5040 = vmatpush2.msra.mxu0 0.0
    %5041 = vmatprep.subr.mxu0 0.0
    %5042 = vmatpush2.msra.mxu0 0.0
    %5043 = vmatprep.subr.mxu0 0.0
    %5044 = vmatpush2.msra.mxu0 0.0
    %5045 = vmatprep.subr.mxu0 0.0
    %5046 = vmatpush2.msra.mxu0 0.0
    %5047 = vmatprep.subr.mxu0 0.0
    %5048 = vmatpush2.msra.mxu0 0.0
    %5049 = vmatprep.subr.mxu0 0.0
    %5050 = vmatpush2.msra.mxu0 0.0
    %5051 = vmatprep.subr.mxu0 0.0
    %5052 = vmatpush2.msra.mxu0 0.0
    %5053 = vmatprep.subr.mxu0 0.0
    %5054 = vmatpush2.msra.mxu0 0.0
    %5055 = vmatprep.subr.mxu0 0.0
    %5056 = vmatpush2.msra.mxu0 0.0
    %5057 = vmatprep.mubr.f32.mxu0 0.0
    %v5058 = vand.u32 %v4718, 4294901760
    %v5059 = vsub.f32 %v4718, %v5058
    %5060 = vmatmul.mubr.f32.gmra.mxu0 %v5059
    %v5061 = vpop.f32.mrf.mxu0
    %v5062 = vadd.f32 %v4958, %v5061
    %v5063 = vpop.f32.mrf.mxu0
    %5064 = vdwg.mxu0
    %5065 = vmatprep.subr.mxu0 0.0
    %v5066 = vand.u32 %v873, 4294901760
    %5067 = vmatpush1.msra.mxu0 %v5066
    %5068 = vmatprep.subr.mxu0 0.0
    %v5069 = vand.u32 %v872, 4294901760
    %5070 = vmatpush1.msra.mxu0 %v5069
    %5071 = vmatprep.subr.mxu0 0.0
    %v5072 = vand.u32 %v871, 4294901760
    %5073 = vmatpush1.msra.mxu0 %v5072
    %5074 = vmatprep.subr.mxu0 0.0
    %v5075 = vand.u32 %v870, 4294901760
    %5076 = vmatpush1.msra.mxu0 %v5075
    %5077 = vmatprep.subr.mxu0 0.0
    %v5078 = vand.u32 %v869, 4294901760
    %5079 = vmatpush1.msra.mxu0 %v5078
    %5080 = vmatprep.subr.mxu0 0.0
    %v5081 = vand.u32 %v868, 4294901760
    %5082 = vmatpush1.msra.mxu0 %v5081
    %5083 = vmatprep.subr.mxu0 0.0
    %v5084 = vand.u32 %v867, 4294901760
    %5085 = vmatpush1.msra.mxu0 %v5084
    %5086 = vmatprep.subr.mxu0 0.0
    %v5087 = vand.u32 %v866, 4294901760
    %5088 = vmatpush1.msra.mxu0 %v5087
    %5089 = vmatprep.subr.mxu0 0.0
    %v5090 = vand.u32 %v865, 4294901760
    %5091 = vmatpush1.msra.mxu0 %v5090
    %5092 = vmatprep.subr.mxu0 0.0
    %v5093 = vand.u32 %v864, 4294901760
    %5094 = vmatpush1.msra.mxu0 %v5093
    %5095 = vmatprep.subr.mxu0 0.0
    %v5096 = vand.u32 %v863, 4294901760
    %5097 = vmatpush1.msra.mxu0 %v5096
    %5098 = vmatprep.subr.mxu0 0.0
    %v5099 = vand.u32 %v862, 4294901760
    %5100 = vmatpush1.msra.mxu0 %v5099
    %5101 = vmatprep.subr.mxu0 0.0
    %v5102 = vand.u32 %v861, 4294901760
    %5103 = vmatpush1.msra.mxu0 %v5102
    %5104 = vmatprep.subr.mxu0 0.0
    %v5105 = vand.u32 %v860, 4294901760
    %5106 = vmatpush1.msra.mxu0 %v5105
    %5107 = vmatprep.subr.mxu0 0.0
    %v5108 = vand.u32 %v859, 4294901760
    %5109 = vmatpush1.msra.mxu0 %v5108
    %5110 = vmatprep.subr.mxu0 0.0
    %v5111 = vand.u32 %v858, 4294901760
    %5112 = vmatpush1.msra.mxu0 %v5111
    %5113 = vmatprep.subr.mxu0 0.0
    %5114 = vmatpush2.msra.mxu0 0.0
    %5115 = vmatprep.subr.mxu0 0.0
    %5116 = vmatpush2.msra.mxu0 0.0
    %5117 = vmatprep.subr.mxu0 0.0
    %5118 = vmatpush2.msra.mxu0 0.0
    %5119 = vmatprep.subr.mxu0 0.0
    %5120 = vmatpush2.msra.mxu0 0.0
    %5121 = vmatprep.subr.mxu0 0.0
    %5122 = vmatpush2.msra.mxu0 0.0
    %5123 = vmatprep.subr.mxu0 0.0
    %5124 = vmatpush2.msra.mxu0 0.0
    %5125 = vmatprep.subr.mxu0 0.0
    %5126 = vmatpush2.msra.mxu0 0.0
    %5127 = vmatprep.subr.mxu0 0.0
    %5128 = vmatpush2.msra.mxu0 0.0
    %5129 = vmatprep.subr.mxu0 0.0
    %5130 = vmatpush2.msra.mxu0 0.0
    %5131 = vmatprep.subr.mxu0 0.0
    %5132 = vmatpush2.msra.mxu0 0.0
    %5133 = vmatprep.subr.mxu0 0.0
    %5134 = vmatpush2.msra.mxu0 0.0
    %5135 = vmatprep.subr.mxu0 0.0
    %5136 = vmatpush2.msra.mxu0 0.0
    %5137 = vmatprep.subr.mxu0 0.0
    %5138 = vmatpush2.msra.mxu0 0.0
    %5139 = vmatprep.subr.mxu0 0.0
    %5140 = vmatpush2.msra.mxu0 0.0
    %5141 = vmatprep.subr.mxu0 0.0
    %5142 = vmatpush2.msra.mxu0 0.0
    %5143 = vmatprep.subr.mxu0 0.0
    %5144 = vmatpush2.msra.mxu0 0.0
    %5145 = vmatprep.mubr.f32.mxu0 0.0
    %v5146 = vand.u32 %v4718, 4294901760
    %v5147 = vsub.f32 %v4718, %v5146
    %v5148 = vand.u32 %v5147, 4294901760
    %5149 = vmatmul.mubr.f32.gmra.mxu0 %v5148
    %v5150 = vpop.f32.mrf.mxu0
    %v5151 = vadd.f32 %v5062, %v5150
    %v5152 = vpop.f32.mrf.mxu0
    %5153 = vdwg.mxu0
    %5154 = vmatprep.subr.mxu0 0.0
    %v5155 = vand.u32 %v873, 4294901760
    %v5156 = vsub.f32 %v873, %v5155
    %v5157 = vand.u32 %v5156, 4294901760
    %5158 = vmatpush1.msra.mxu0 %v5157
    %5159 = vmatprep.subr.mxu0 0.0
    %v5160 = vand.u32 %v872, 4294901760
    %v5161 = vsub.f32 %v872, %v5160
    %v5162 = vand.u32 %v5161, 4294901760
    %5163 = vmatpush1.msra.mxu0 %v5162
    %5164 = vmatprep.subr.mxu0 0.0
    %v5165 = vand.u32 %v871, 4294901760
    %v5166 = vsub.f32 %v871, %v5165
    %v5167 = vand.u32 %v5166, 4294901760
    %5168 = vmatpush1.msra.mxu0 %v5167
    %5169 = vmatprep.subr.mxu0 0.0
    %v5170 = vand.u32 %v870, 4294901760
    %v5171 = vsub.f32 %v870, %v5170
    %v5172 = vand.u32 %v5171, 4294901760
    %5173 = vmatpush1.msra.mxu0 %v5172
    %5174 = vmatprep.subr.mxu0 0.0
    %v5175 = vand.u32 %v869, 4294901760
    %v5176 = vsub.f32 %v869, %v5175
    %v5177 = vand.u32 %v5176, 4294901760
    %5178 = vmatpush1.msra.mxu0 %v5177
    %5179 = vmatprep.subr.mxu0 0.0
    %v5180 = vand.u32 %v868, 4294901760
    %v5181 = vsub.f32 %v868, %v5180
    %v5182 = vand.u32 %v5181, 4294901760
    %5183 = vmatpush1.msra.mxu0 %v5182
    %5184 = vmatprep.subr.mxu0 0.0
    %v5185 = vand.u32 %v867, 4294901760
    %v5186 = vsub.f32 %v867, %v5185
    %v5187 = vand.u32 %v5186, 4294901760
    %5188 = vmatpush1.msra.mxu0 %v5187
    %5189 = vmatprep.subr.mxu0 0.0
    %v5190 = vand.u32 %v866, 4294901760
    %v5191 = vsub.f32 %v866, %v5190
    %v5192 = vand.u32 %v5191, 4294901760
    %5193 = vmatpush1.msra.mxu0 %v5192
    %5194 = vmatprep.subr.mxu0 0.0
    %v5195 = vand.u32 %v865, 4294901760
    %v5196 = vsub.f32 %v865, %v5195
    %v5197 = vand.u32 %v5196, 4294901760
    %5198 = vmatpush1.msra.mxu0 %v5197
    %5199 = vmatprep.subr.mxu0 0.0
    %v5200 = vand.u32 %v864, 4294901760
    %v5201 = vsub.f32 %v864, %v5200
    %v5202 = vand.u32 %v5201, 4294901760
    %5203 = vmatpush1.msra.mxu0 %v5202
    %5204 = vmatprep.subr.mxu0 0.0
    %v5205 = vand.u32 %v863, 4294901760
    %v5206 = vsub.f32 %v863, %v5205
    %v5207 = vand.u32 %v5206, 4294901760
    %5208 = vmatpush1.msra.mxu0 %v5207
    %5209 = vmatprep.subr.mxu0 0.0
    %v5210 = vand.u32 %v862, 4294901760
    %v5211 = vsub.f32 %v862, %v5210
    %v5212 = vand.u32 %v5211, 4294901760
    %5213 = vmatpush1.msra.mxu0 %v5212
    %5214 = vmatprep.subr.mxu0 0.0
    %v5215 = vand.u32 %v861, 4294901760
    %v5216 = vsub.f32 %v861, %v5215
    %v5217 = vand.u32 %v5216, 4294901760
    %5218 = vmatpush1.msra.mxu0 %v5217
    %5219 = vmatprep.subr.mxu0 0.0
    %v5220 = vand.u32 %v860, 4294901760
    %v5221 = vsub.f32 %v860, %v5220
    %v5222 = vand.u32 %v5221, 4294901760
    %5223 = vmatpush1.msra.mxu0 %v5222
    %5224 = vmatprep.subr.mxu0 0.0
    %v5225 = vand.u32 %v859, 4294901760
    %v5226 = vsub.f32 %v859, %v5225
    %v5227 = vand.u32 %v5226, 4294901760
    %5228 = vmatpush1.msra.mxu0 %v5227
    %5229 = vmatprep.subr.mxu0 0.0
    %v5230 = vand.u32 %v858, 4294901760
    %v5231 = vsub.f32 %v858, %v5230
    %v5232 = vand.u32 %v5231, 4294901760
    %5233 = vmatpush1.msra.mxu0 %v5232
    %5234 = vmatprep.subr.mxu0 0.0
    %5235 = vmatpush2.msra.mxu0 0.0
    %5236 = vmatprep.subr.mxu0 0.0
    %5237 = vmatpush2.msra.mxu0 0.0
    %5238 = vmatprep.subr.mxu0 0.0
    %5239 = vmatpush2.msra.mxu0 0.0
    %5240 = vmatprep.subr.mxu0 0.0
    %5241 = vmatpush2.msra.mxu0 0.0
    %5242 = vmatprep.subr.mxu0 0.0
    %5243 = vmatpush2.msra.mxu0 0.0
    %5244 = vmatprep.subr.mxu0 0.0
    %5245 = vmatpush2.msra.mxu0 0.0
    %5246 = vmatprep.subr.mxu0 0.0
    %5247 = vmatpush2.msra.mxu0 0.0
    %5248 = vmatprep.subr.mxu0 0.0
    %5249 = vmatpush2.msra.mxu0 0.0
    %5250 = vmatprep.subr.mxu0 0.0
    %5251 = vmatpush2.msra.mxu0 0.0
    %5252 = vmatprep.subr.mxu0 0.0
    %5253 = vmatpush2.msra.mxu0 0.0
    %5254 = vmatprep.subr.mxu0 0.0
    %5255 = vmatpush2.msra.mxu0 0.0
    %5256 = vmatprep.subr.mxu0 0.0
    %5257 = vmatpush2.msra.mxu0 0.0
    %5258 = vmatprep.subr.mxu0 0.0
    %5259 = vmatpush2.msra.mxu0 0.0
    %5260 = vmatprep.subr.mxu0 0.0
    %5261 = vmatpush2.msra.mxu0 0.0
    %5262 = vmatprep.subr.mxu0 0.0
    %5263 = vmatpush2.msra.mxu0 0.0
    %5264 = vmatprep.subr.mxu0 0.0
    %5265 = vmatpush2.msra.mxu0 0.0
    %5266 = vmatprep.mubr.f32.mxu0 0.0
    %v5267 = vand.u32 %v4718, 4294901760
    %5268 = vmatmul.mubr.f32.gmra.mxu0 %v5267
    %v5269 = vpop.f32.mrf.mxu0
    %v5270 = vadd.f32 %v5151, %v5269
    %v5271 = vpop.f32.mrf.mxu0
    %5272 = vdwg.mxu0
    %5273 = vmatprep.subr.mxu0 0.0
    %v5274 = vand.u32 %v873, 4294901760
    %5275 = vmatpush1.msra.mxu0 %v5274
    %5276 = vmatprep.subr.mxu0 0.0
    %v5277 = vand.u32 %v872, 4294901760
    %5278 = vmatpush1.msra.mxu0 %v5277
    %5279 = vmatprep.subr.mxu0 0.0
    %v5280 = vand.u32 %v871, 4294901760
    %5281 = vmatpush1.msra.mxu0 %v5280
    %5282 = vmatprep.subr.mxu0 0.0
    %v5283 = vand.u32 %v870, 4294901760
    %5284 = vmatpush1.msra.mxu0 %v5283
    %5285 = vmatprep.subr.mxu0 0.0
    %v5286 = vand.u32 %v869, 4294901760
    %5287 = vmatpush1.msra.mxu0 %v5286
    %5288 = vmatprep.subr.mxu0 0.0
    %v5289 = vand.u32 %v868, 4294901760
    %5290 = vmatpush1.msra.mxu0 %v5289
    %5291 = vmatprep.subr.mxu0 0.0
    %v5292 = vand.u32 %v867, 4294901760
    %5293 = vmatpush1.msra.mxu0 %v5292
    %5294 = vmatprep.subr.mxu0 0.0
    %v5295 = vand.u32 %v866, 4294901760
    %5296 = vmatpush1.msra.mxu0 %v5295
    %5297 = vmatprep.subr.mxu0 0.0
    %v5298 = vand.u32 %v865, 4294901760
    %5299 = vmatpush1.msra.mxu0 %v5298
    %5300 = vmatprep.subr.mxu0 0.0
    %v5301 = vand.u32 %v864, 4294901760
    %5302 = vmatpush1.msra.mxu0 %v5301
    %5303 = vmatprep.subr.mxu0 0.0
    %v5304 = vand.u32 %v863, 4294901760
    %5305 = vmatpush1.msra.mxu0 %v5304
    %5306 = vmatprep.subr.mxu0 0.0
    %v5307 = vand.u32 %v862, 4294901760
    %5308 = vmatpush1.msra.mxu0 %v5307
    %5309 = vmatprep.subr.mxu0 0.0
    %v5310 = vand.u32 %v861, 4294901760
    %5311 = vmatpush1.msra.mxu0 %v5310
    %5312 = vmatprep.subr.mxu0 0.0
    %v5313 = vand.u32 %v860, 4294901760
    %5314 = vmatpush1.msra.mxu0 %v5313
    %5315 = vmatprep.subr.mxu0 0.0
    %v5316 = vand.u32 %v859, 4294901760
    %5317 = vmatpush1.msra.mxu0 %v5316
    %5318 = vmatprep.subr.mxu0 0.0
    %v5319 = vand.u32 %v858, 4294901760
    %5320 = vmatpush1.msra.mxu0 %v5319
    %5321 = vmatprep.subr.mxu0 0.0
    %5322 = vmatpush2.msra.mxu0 0.0
    %5323 = vmatprep.subr.mxu0 0.0
    %5324 = vmatpush2.msra.mxu0 0.0
    %5325 = vmatprep.subr.mxu0 0.0
    %5326 = vmatpush2.msra.mxu0 0.0
    %5327 = vmatprep.subr.mxu0 0.0
    %5328 = vmatpush2.msra.mxu0 0.0
    %5329 = vmatprep.subr.mxu0 0.0
    %5330 = vmatpush2.msra.mxu0 0.0
    %5331 = vmatprep.subr.mxu0 0.0
    %5332 = vmatpush2.msra.mxu0 0.0
    %5333 = vmatprep.subr.mxu0 0.0
    %5334 = vmatpush2.msra.mxu0 0.0
    %5335 = vmatprep.subr.mxu0 0.0
    %5336 = vmatpush2.msra.mxu0 0.0
    %5337 = vmatprep.subr.mxu0 0.0
    %5338 = vmatpush2.msra.mxu0 0.0
    %5339 = vmatprep.subr.mxu0 0.0
    %5340 = vmatpush2.msra.mxu0 0.0
    %5341 = vmatprep.subr.mxu0 0.0
    %5342 = vmatpush2.msra.mxu0 0.0
    %5343 = vmatprep.subr.mxu0 0.0
    %5344 = vmatpush2.msra.mxu0 0.0
    %5345 = vmatprep.subr.mxu0 0.0
    %5346 = vmatpush2.msra.mxu0 0.0
    %5347 = vmatprep.subr.mxu0 0.0
    %5348 = vmatpush2.msra.mxu0 0.0
    %5349 = vmatprep.subr.mxu0 0.0
    %5350 = vmatpush2.msra.mxu0 0.0
    %5351 = vmatprep.subr.mxu0 0.0
    %5352 = vmatpush2.msra.mxu0 0.0
    %5353 = vmatprep.mubr.f32.mxu0 0.0
    %v5354 = vand.u32 %v4718, 4294901760
    %5355 = vmatmul.mubr.f32.gmra.mxu0 %v5354
    %v5356 = vpop.f32.mrf.mxu0
    %v5357 = vadd.f32 %v5270, %v5356
    %v5358 = vpop.f32.mrf.mxu0
    %5359 = vdwg.mxu0
    %v5360 = vadd.f32 %v849, %v5357
    %v5361 = vtanh.pop %v5360
    %5362 = vmatprep.subr.mxu0 0.0
    %v5363 = vand.u32 %v873, 4294901760
    %5364 = vmatpush1.msra.mxu0 %v5363
    %5365 = vmatprep.subr.mxu0 0.0
    %v5366 = vand.u32 %v872, 4294901760
    %5367 = vmatpush1.msra.mxu0 %v5366
    %5368 = vmatprep.subr.mxu0 0.0
    %v5369 = vand.u32 %v871, 4294901760
    %5370 = vmatpush1.msra.mxu0 %v5369
    %5371 = vmatprep.subr.mxu0 0.0
    %v5372 = vand.u32 %v870, 4294901760
    %5373 = vmatpush1.msra.mxu0 %v5372
    %5374 = vmatprep.subr.mxu0 0.0
    %v5375 = vand.u32 %v869, 4294901760
    %5376 = vmatpush1.msra.mxu0 %v5375
    %5377 = vmatprep.subr.mxu0 0.0
    %v5378 = vand.u32 %v868, 4294901760
    %5379 = vmatpush1.msra.mxu0 %v5378
    %5380 = vmatprep.subr.mxu0 0.0
    %v5381 = vand.u32 %v867, 4294901760
    %5382 = vmatpush1.msra.mxu0 %v5381
    %5383 = vmatprep.subr.mxu0 0.0
    %v5384 = vand.u32 %v866, 4294901760
    %5385 = vmatpush1.msra.mxu0 %v5384
    %5386 = vmatprep.subr.mxu0 0.0
    %v5387 = vand.u32 %v865, 4294901760
    %5388 = vmatpush1.msra.mxu0 %v5387
    %5389 = vmatprep.subr.mxu0 0.0
    %v5390 = vand.u32 %v864, 4294901760
    %5391 = vmatpush1.msra.mxu0 %v5390
    %5392 = vmatprep.subr.mxu0 0.0
    %v5393 = vand.u32 %v863, 4294901760
    %5394 = vmatpush1.msra.mxu0 %v5393
    %5395 = vmatprep.subr.mxu0 0.0
    %v5396 = vand.u32 %v862, 4294901760
    %5397 = vmatpush1.msra.mxu0 %v5396
    %5398 = vmatprep.subr.mxu0 0.0
    %v5399 = vand.u32 %v861, 4294901760
    %5400 = vmatpush1.msra.mxu0 %v5399
    %5401 = vmatprep.subr.mxu0 0.0
    %v5402 = vand.u32 %v860, 4294901760
    %5403 = vmatpush1.msra.mxu0 %v5402
    %5404 = vmatprep.subr.mxu0 0.0
    %v5405 = vand.u32 %v859, 4294901760
    %5406 = vmatpush1.msra.mxu0 %v5405
    %5407 = vmatprep.subr.mxu0 0.0
    %v5408 = vand.u32 %v858, 4294901760
    %5409 = vmatpush1.msra.mxu0 %v5408
    %5410 = vmatprep.subr.mxu0 0.0
    %5411 = vmatpush2.msra.mxu0 0.0
    %5412 = vmatprep.subr.mxu0 0.0
    %5413 = vmatpush2.msra.mxu0 0.0
    %5414 = vmatprep.subr.mxu0 0.0
    %5415 = vmatpush2.msra.mxu0 0.0
    %5416 = vmatprep.subr.mxu0 0.0
    %5417 = vmatpush2.msra.mxu0 0.0
    %5418 = vmatprep.subr.mxu0 0.0
    %5419 = vmatpush2.msra.mxu0 0.0
    %5420 = vmatprep.subr.mxu0 0.0
    %5421 = vmatpush2.msra.mxu0 0.0
    %5422 = vmatprep.subr.mxu0 0.0
    %5423 = vmatpush2.msra.mxu0 0.0
    %5424 = vmatprep.subr.mxu0 0.0
    %5425 = vmatpush2.msra.mxu0 0.0
    %5426 = vmatprep.subr.mxu0 0.0
    %5427 = vmatpush2.msra.mxu0 0.0
    %5428 = vmatprep.subr.mxu0 0.0
    %5429 = vmatpush2.msra.mxu0 0.0
    %5430 = vmatprep.subr.mxu0 0.0
    %5431 = vmatpush2.msra.mxu0 0.0
    %5432 = vmatprep.subr.mxu0 0.0
    %5433 = vmatpush2.msra.mxu0 0.0
    %5434 = vmatprep.subr.mxu0 0.0
    %5435 = vmatpush2.msra.mxu0 0.0
    %5436 = vmatprep.subr.mxu0 0.0
    %5437 = vmatpush2.msra.mxu0 0.0
    %5438 = vmatprep.subr.mxu0 0.0
    %5439 = vmatpush2.msra.mxu0 0.0
    %5440 = vmatprep.subr.mxu0 0.0
    %5441 = vmatpush2.msra.mxu0 0.0
    %5442 = vmatprep.mubr.f32.mxu0 0.0
    %v5443 = vand.u32 %v5361, 4294901760
    %v5444 = vsub.f32 %v5361, %v5443
    %v5445 = vand.u32 %v5444, 4294901760
    %v5446 = vsub.f32 %v5444, %v5445
    %v5447 = vand.u32 %v5446, 4294901760
    %5448 = vmatmul.mubr.f32.gmra.mxu0 %v5447
    %v5449 = vpop.f32.mrf.mxu0
    %v5450 = vadd.f32 0.0, %v5449
    %v5451 = vpop.f32.mrf.mxu0
    %5452 = vdwg.mxu0
    %5453 = vmatprep.subr.mxu0 0.0
    %v5454 = vand.u32 %v873, 4294901760
    %v5455 = vsub.f32 %v873, %v5454
    %v5456 = vand.u32 %v5455, 4294901760
    %v5457 = vsub.f32 %v5455, %v5456
    %v5458 = vand.u32 %v5457, 4294901760
    %5459 = vmatpush1.msra.mxu0 %v5458
    %5460 = vmatprep.subr.mxu0 0.0
    %v5461 = vand.u32 %v872, 4294901760
    %v5462 = vsub.f32 %v872, %v5461
    %v5463 = vand.u32 %v5462, 4294901760
    %v5464 = vsub.f32 %v5462, %v5463
    %v5465 = vand.u32 %v5464, 4294901760
    %5466 = vmatpush1.msra.mxu0 %v5465
    %5467 = vmatprep.subr.mxu0 0.0
    %v5468 = vand.u32 %v871, 4294901760
    %v5469 = vsub.f32 %v871, %v5468
    %v5470 = vand.u32 %v5469, 4294901760
    %v5471 = vsub.f32 %v5469, %v5470
    %v5472 = vand.u32 %v5471, 4294901760
    %5473 = vmatpush1.msra.mxu0 %v5472
    %5474 = vmatprep.subr.mxu0 0.0
    %v5475 = vand.u32 %v870, 4294901760
    %v5476 = vsub.f32 %v870, %v5475
    %v5477 = vand.u32 %v5476, 4294901760
    %v5478 = vsub.f32 %v5476, %v5477
    %v5479 = vand.u32 %v5478, 4294901760
    %5480 = vmatpush1.msra.mxu0 %v5479
    %5481 = vmatprep.subr.mxu0 0.0
    %v5482 = vand.u32 %v869, 4294901760
    %v5483 = vsub.f32 %v869, %v5482
    %v5484 = vand.u32 %v5483, 4294901760
    %v5485 = vsub.f32 %v5483, %v5484
    %v5486 = vand.u32 %v5485, 4294901760
    %5487 = vmatpush1.msra.mxu0 %v5486
    %5488 = vmatprep.subr.mxu0 0.0
    %v5489 = vand.u32 %v868, 4294901760
    %v5490 = vsub.f32 %v868, %v5489
    %v5491 = vand.u32 %v5490, 4294901760
    %v5492 = vsub.f32 %v5490, %v5491
    %v5493 = vand.u32 %v5492, 4294901760
    %5494 = vmatpush1.msra.mxu0 %v5493
    %5495 = vmatprep.subr.mxu0 0.0
    %v5496 = vand.u32 %v867, 4294901760
    %v5497 = vsub.f32 %v867, %v5496
    %v5498 = vand.u32 %v5497, 4294901760
    %v5499 = vsub.f32 %v5497, %v5498
    %v5500 = vand.u32 %v5499, 4294901760
    %5501 = vmatpush1.msra.mxu0 %v5500
    %5502 = vmatprep.subr.mxu0 0.0
    %v5503 = vand.u32 %v866, 4294901760
    %v5504 = vsub.f32 %v866, %v5503
    %v5505 = vand.u32 %v5504, 4294901760
    %v5506 = vsub.f32 %v5504, %v5505
    %v5507 = vand.u32 %v5506, 4294901760
    %5508 = vmatpush1.msra.mxu0 %v5507
    %5509 = vmatprep.subr.mxu0 0.0
    %v5510 = vand.u32 %v865, 4294901760
    %v5511 = vsub.f32 %v865, %v5510
    %v5512 = vand.u32 %v5511, 4294901760
    %v5513 = vsub.f32 %v5511, %v5512
    %v5514 = vand.u32 %v5513, 4294901760
    %5515 = vmatpush1.msra.mxu0 %v5514
    %5516 = vmatprep.subr.mxu0 0.0
    %v5517 = vand.u32 %v864, 4294901760
    %v5518 = vsub.f32 %v864, %v5517
    %v5519 = vand.u32 %v5518, 4294901760
    %v5520 = vsub.f32 %v5518, %v5519
    %v5521 = vand.u32 %v5520, 4294901760
    %5522 = vmatpush1.msra.mxu0 %v5521
    %5523 = vmatprep.subr.mxu0 0.0
    %v5524 = vand.u32 %v863, 4294901760
    %v5525 = vsub.f32 %v863, %v5524
    %v5526 = vand.u32 %v5525, 4294901760
    %v5527 = vsub.f32 %v5525, %v5526
    %v5528 = vand.u32 %v5527, 4294901760
    %5529 = vmatpush1.msra.mxu0 %v5528
    %5530 = vmatprep.subr.mxu0 0.0
    %v5531 = vand.u32 %v862, 4294901760
    %v5532 = vsub.f32 %v862, %v5531
    %v5533 = vand.u32 %v5532, 4294901760
    %v5534 = vsub.f32 %v5532, %v5533
    %v5535 = vand.u32 %v5534, 4294901760
    %5536 = vmatpush1.msra.mxu0 %v5535
    %5537 = vmatprep.subr.mxu0 0.0
    %v5538 = vand.u32 %v861, 4294901760
    %v5539 = vsub.f32 %v861, %v5538
    %v5540 = vand.u32 %v5539, 4294901760
    %v5541 = vsub.f32 %v5539, %v5540
    %v5542 = vand.u32 %v5541, 4294901760
    %5543 = vmatpush1.msra.mxu0 %v5542
    %5544 = vmatprep.subr.mxu0 0.0
    %v5545 = vand.u32 %v860, 4294901760
    %v5546 = vsub.f32 %v860, %v5545
    %v5547 = vand.u32 %v5546, 4294901760
    %v5548 = vsub.f32 %v5546, %v5547
    %v5549 = vand.u32 %v5548, 4294901760
    %5550 = vmatpush1.msra.mxu0 %v5549
    %5551 = vmatprep.subr.mxu0 0.0
    %v5552 = vand.u32 %v859, 4294901760
    %v5553 = vsub.f32 %v859, %v5552
    %v5554 = vand.u32 %v5553, 4294901760
    %v5555 = vsub.f32 %v5553, %v5554
    %v5556 = vand.u32 %v5555, 4294901760
    %5557 = vmatpush1.msra.mxu0 %v5556
    %5558 = vmatprep.subr.mxu0 0.0
    %v5559 = vand.u32 %v858, 4294901760
    %v5560 = vsub.f32 %v858, %v5559
    %v5561 = vand.u32 %v5560, 4294901760
    %v5562 = vsub.f32 %v5560, %v5561
    %v5563 = vand.u32 %v5562, 4294901760
    %5564 = vmatpush1.msra.mxu0 %v5563
    %5565 = vmatprep.subr.mxu0 0.0
    %5566 = vmatpush2.msra.mxu0 0.0
    %5567 = vmatprep.subr.mxu0 0.0
    %5568 = vmatpush2.msra.mxu0 0.0
    %5569 = vmatprep.subr.mxu0 0.0
    %5570 = vmatpush2.msra.mxu0 0.0
    %5571 = vmatprep.subr.mxu0 0.0
    %5572 = vmatpush2.msra.mxu0 0.0
    %5573 = vmatprep.subr.mxu0 0.0
    %5574 = vmatpush2.msra.mxu0 0.0
    %5575 = vmatprep.subr.mxu0 0.0
    %5576 = vmatpush2.msra.mxu0 0.0
    %5577 = vmatprep.subr.mxu0 0.0
    %5578 = vmatpush2.msra.mxu0 0.0
    %5579 = vmatprep.subr.mxu0 0.0
    %5580 = vmatpush2.msra.mxu0 0.0
    %5581 = vmatprep.subr.mxu0 0.0
    %5582 = vmatpush2.msra.mxu0 0.0
    %5583 = vmatprep.subr.mxu0 0.0
    %5584 = vmatpush2.msra.mxu0 0.0
    %5585 = vmatprep.subr.mxu0 0.0
    %5586 = vmatpush2.msra.mxu0 0.0
    %5587 = vmatprep.subr.mxu0 0.0
    %5588 = vmatpush2.msra.mxu0 0.0
    %5589 = vmatprep.subr.mxu0 0.0
    %5590 = vmatpush2.msra.mxu0 0.0
    %5591 = vmatprep.subr.mxu0 0.0
    %5592 = vmatpush2.msra.mxu0 0.0
    %5593 = vmatprep.subr.mxu0 0.0
    %5594 = vmatpush2.msra.mxu0 0.0
    %5595 = vmatprep.subr.mxu0 0.0
    %5596 = vmatpush2.msra.mxu0 0.0
    %5597 = vmatprep.mubr.f32.mxu0 0.0
    %v5598 = vand.u32 %v5361, 4294901760
    %5599 = vmatmul.mubr.f32.gmra.mxu0 %v5598
    %v5600 = vpop.f32.mrf.mxu0
    %v5601 = vadd.f32 %v5450, %v5600
    %v5602 = vpop.f32.mrf.mxu0
    %5603 = vdwg.mxu0
    %5604 = vmatprep.subr.mxu0 0.0
    %v5605 = vand.u32 %v873, 4294901760
    %v5606 = vsub.f32 %v873, %v5605
    %5607 = vmatpush1.msra.mxu0 %v5606
    %5608 = vmatprep.subr.mxu0 0.0
    %v5609 = vand.u32 %v872, 4294901760
    %v5610 = vsub.f32 %v872, %v5609
    %5611 = vmatpush1.msra.mxu0 %v5610
    %5612 = vmatprep.subr.mxu0 0.0
    %v5613 = vand.u32 %v871, 4294901760
    %v5614 = vsub.f32 %v871, %v5613
    %5615 = vmatpush1.msra.mxu0 %v5614
    %5616 = vmatprep.subr.mxu0 0.0
    %v5617 = vand.u32 %v870, 4294901760
    %v5618 = vsub.f32 %v870, %v5617
    %5619 = vmatpush1.msra.mxu0 %v5618
    %5620 = vmatprep.subr.mxu0 0.0
    %v5621 = vand.u32 %v869, 4294901760
    %v5622 = vsub.f32 %v869, %v5621
    %5623 = vmatpush1.msra.mxu0 %v5622
    %5624 = vmatprep.subr.mxu0 0.0
    %v5625 = vand.u32 %v868, 4294901760
    %v5626 = vsub.f32 %v868, %v5625
    %5627 = vmatpush1.msra.mxu0 %v5626
    %5628 = vmatprep.subr.mxu0 0.0
    %v5629 = vand.u32 %v867, 4294901760
    %v5630 = vsub.f32 %v867, %v5629
    %5631 = vmatpush1.msra.mxu0 %v5630
    %5632 = vmatprep.subr.mxu0 0.0
    %v5633 = vand.u32 %v866, 4294901760
    %v5634 = vsub.f32 %v866, %v5633
    %5635 = vmatpush1.msra.mxu0 %v5634
    %5636 = vmatprep.subr.mxu0 0.0
    %v5637 = vand.u32 %v865, 4294901760
    %v5638 = vsub.f32 %v865, %v5637
    %5639 = vmatpush1.msra.mxu0 %v5638
    %5640 = vmatprep.subr.mxu0 0.0
    %v5641 = vand.u32 %v864, 4294901760
    %v5642 = vsub.f32 %v864, %v5641
    %5643 = vmatpush1.msra.mxu0 %v5642
    %5644 = vmatprep.subr.mxu0 0.0
    %v5645 = vand.u32 %v863, 4294901760
    %v5646 = vsub.f32 %v863, %v5645
    %5647 = vmatpush1.msra.mxu0 %v5646
    %5648 = vmatprep.subr.mxu0 0.0
    %v5649 = vand.u32 %v862, 4294901760
    %v5650 = vsub.f32 %v862, %v5649
    %5651 = vmatpush1.msra.mxu0 %v5650
    %5652 = vmatprep.subr.mxu0 0.0
    %v5653 = vand.u32 %v861, 4294901760
    %v5654 = vsub.f32 %v861, %v5653
    %5655 = vmatpush1.msra.mxu0 %v5654
    %5656 = vmatprep.subr.mxu0 0.0
    %v5657 = vand.u32 %v860, 4294901760
    %v5658 = vsub.f32 %v860, %v5657
    %5659 = vmatpush1.msra.mxu0 %v5658
    %5660 = vmatprep.subr.mxu0 0.0
    %v5661 = vand.u32 %v859, 4294901760
    %v5662 = vsub.f32 %v859, %v5661
    %5663 = vmatpush1.msra.mxu0 %v5662
    %5664 = vmatprep.subr.mxu0 0.0
    %v5665 = vand.u32 %v858, 4294901760
    %v5666 = vsub.f32 %v858, %v5665
    %5667 = vmatpush1.msra.mxu0 %v5666
    %5668 = vmatprep.subr.mxu0 0.0
    %5669 = vmatpush2.msra.mxu0 0.0
    %5670 = vmatprep.subr.mxu0 0.0
    %5671 = vmatpush2.msra.mxu0 0.0
    %5672 = vmatprep.subr.mxu0 0.0
    %5673 = vmatpush2.msra.mxu0 0.0
    %5674 = vmatprep.subr.mxu0 0.0
    %5675 = vmatpush2.msra.mxu0 0.0
    %5676 = vmatprep.subr.mxu0 0.0
    %5677 = vmatpush2.msra.mxu0 0.0
    %5678 = vmatprep.subr.mxu0 0.0
    %5679 = vmatpush2.msra.mxu0 0.0
    %5680 = vmatprep.subr.mxu0 0.0
    %5681 = vmatpush2.msra.mxu0 0.0
    %5682 = vmatprep.subr.mxu0 0.0
    %5683 = vmatpush2.msra.mxu0 0.0
    %5684 = vmatprep.subr.mxu0 0.0
    %5685 = vmatpush2.msra.mxu0 0.0
    %5686 = vmatprep.subr.mxu0 0.0
    %5687 = vmatpush2.msra.mxu0 0.0
    %5688 = vmatprep.subr.mxu0 0.0
    %5689 = vmatpush2.msra.mxu0 0.0
    %5690 = vmatprep.subr.mxu0 0.0
    %5691 = vmatpush2.msra.mxu0 0.0
    %5692 = vmatprep.subr.mxu0 0.0
    %5693 = vmatpush2.msra.mxu0 0.0
    %5694 = vmatprep.subr.mxu0 0.0
    %5695 = vmatpush2.msra.mxu0 0.0
    %5696 = vmatprep.subr.mxu0 0.0
    %5697 = vmatpush2.msra.mxu0 0.0
    %5698 = vmatprep.subr.mxu0 0.0
    %5699 = vmatpush2.msra.mxu0 0.0
    %5700 = vmatprep.mubr.f32.mxu0 0.0
    %v5701 = vand.u32 %v5361, 4294901760
    %v5702 = vsub.f32 %v5361, %v5701
    %5703 = vmatmul.mubr.f32.gmra.mxu0 %v5702
    %v5704 = vpop.f32.mrf.mxu0
    %v5705 = vadd.f32 %v5601, %v5704
    %v5706 = vpop.f32.mrf.mxu0
    %5707 = vdwg.mxu0
    %5708 = vmatprep.subr.mxu0 0.0
    %v5709 = vand.u32 %v873, 4294901760
    %5710 = vmatpush1.msra.mxu0 %v5709
    %5711 = vmatprep.subr.mxu0 0.0
    %v5712 = vand.u32 %v872, 4294901760
    %5713 = vmatpush1.msra.mxu0 %v5712
    %5714 = vmatprep.subr.mxu0 0.0
    %v5715 = vand.u32 %v871, 4294901760
    %5716 = vmatpush1.msra.mxu0 %v5715
    %5717 = vmatprep.subr.mxu0 0.0
    %v5718 = vand.u32 %v870, 4294901760
    %5719 = vmatpush1.msra.mxu0 %v5718
    %5720 = vmatprep.subr.mxu0 0.0
    %v5721 = vand.u32 %v869, 4294901760
    %5722 = vmatpush1.msra.mxu0 %v5721
    %5723 = vmatprep.subr.mxu0 0.0
    %v5724 = vand.u32 %v868, 4294901760
    %5725 = vmatpush1.msra.mxu0 %v5724
    %5726 = vmatprep.subr.mxu0 0.0
    %v5727 = vand.u32 %v867, 4294901760
    %5728 = vmatpush1.msra.mxu0 %v5727
    %5729 = vmatprep.subr.mxu0 0.0
    %v5730 = vand.u32 %v866, 4294901760
    %5731 = vmatpush1.msra.mxu0 %v5730
    %5732 = vmatprep.subr.mxu0 0.0
    %v5733 = vand.u32 %v865, 4294901760
    %5734 = vmatpush1.msra.mxu0 %v5733
    %5735 = vmatprep.subr.mxu0 0.0
    %v5736 = vand.u32 %v864, 4294901760
    %5737 = vmatpush1.msra.mxu0 %v5736
    %5738 = vmatprep.subr.mxu0 0.0
    %v5739 = vand.u32 %v863, 4294901760
    %5740 = vmatpush1.msra.mxu0 %v5739
    %5741 = vmatprep.subr.mxu0 0.0
    %v5742 = vand.u32 %v862, 4294901760
    %5743 = vmatpush1.msra.mxu0 %v5742
    %5744 = vmatprep.subr.mxu0 0.0
    %v5745 = vand.u32 %v861, 4294901760
    %5746 = vmatpush1.msra.mxu0 %v5745
    %5747 = vmatprep.subr.mxu0 0.0
    %v5748 = vand.u32 %v860, 4294901760
    %5749 = vmatpush1.msra.mxu0 %v5748
    %5750 = vmatprep.subr.mxu0 0.0
    %v5751 = vand.u32 %v859, 4294901760
    %5752 = vmatpush1.msra.mxu0 %v5751
    %5753 = vmatprep.subr.mxu0 0.0
    %v5754 = vand.u32 %v858, 4294901760
    %5755 = vmatpush1.msra.mxu0 %v5754
    %5756 = vmatprep.subr.mxu0 0.0
    %5757 = vmatpush2.msra.mxu0 0.0
    %5758 = vmatprep.subr.mxu0 0.0
    %5759 = vmatpush2.msra.mxu0 0.0
    %5760 = vmatprep.subr.mxu0 0.0
    %5761 = vmatpush2.msra.mxu0 0.0
    %5762 = vmatprep.subr.mxu0 0.0
    %5763 = vmatpush2.msra.mxu0 0.0
    %5764 = vmatprep.subr.mxu0 0.0
    %5765 = vmatpush2.msra.mxu0 0.0
    %5766 = vmatprep.subr.mxu0 0.0
    %5767 = vmatpush2.msra.mxu0 0.0
    %5768 = vmatprep.subr.mxu0 0.0
    %5769 = vmatpush2.msra.mxu0 0.0
    %5770 = vmatprep.subr.mxu0 0.0
    %5771 = vmatpush2.msra.mxu0 0.0
    %5772 = vmatprep.subr.mxu0 0.0
    %5773 = vmatpush2.msra.mxu0 0.0
    %5774 = vmatprep.subr.mxu0 0.0
    %5775 = vmatpush2.msra.mxu0 0.0
    %5776 = vmatprep.subr.mxu0 0.0
    %5777 = vmatpush2.msra.mxu0 0.0
    %5778 = vmatprep.subr.mxu0 0.0
    %5779 = vmatpush2.msra.mxu0 0.0
    %5780 = vmatprep.subr.mxu0 0.0
    %5781 = vmatpush2.msra.mxu0 0.0
    %5782 = vmatprep.subr.mxu0 0.0
    %5783 = vmatpush2.msra.mxu0 0.0
    %5784 = vmatprep.subr.mxu0 0.0
    %5785 = vmatpush2.msra.mxu0 0.0
    %5786 = vmatprep.subr.mxu0 0.0
    %5787 = vmatpush2.msra.mxu0 0.0
    %5788 = vmatprep.mubr.f32.mxu0 0.0
    %v5789 = vand.u32 %v5361, 4294901760
    %v5790 = vsub.f32 %v5361, %v5789
    %v5791 = vand.u32 %v5790, 4294901760
    %5792 = vmatmul.mubr.f32.gmra.mxu0 %v5791
    %v5793 = vpop.f32.mrf.mxu0
    %v5794 = vadd.f32 %v5705, %v5793
    %v5795 = vpop.f32.mrf.mxu0
    %5796 = vdwg.mxu0
    %5797 = vmatprep.subr.mxu0 0.0
    %v5798 = vand.u32 %v873, 4294901760
    %v5799 = vsub.f32 %v873, %v5798
    %v5800 = vand.u32 %v5799, 4294901760
    %5801 = vmatpush1.msra.mxu0 %v5800
    %5802 = vmatprep.subr.mxu0 0.0
    %v5803 = vand.u32 %v872, 4294901760
    %v5804 = vsub.f32 %v872, %v5803
    %v5805 = vand.u32 %v5804, 4294901760
    %5806 = vmatpush1.msra.mxu0 %v5805
    %5807 = vmatprep.subr.mxu0 0.0
    %v5808 = vand.u32 %v871, 4294901760
    %v5809 = vsub.f32 %v871, %v5808
    %v5810 = vand.u32 %v5809, 4294901760
    %5811 = vmatpush1.msra.mxu0 %v5810
    %5812 = vmatprep.subr.mxu0 0.0
    %v5813 = vand.u32 %v870, 4294901760
    %v5814 = vsub.f32 %v870, %v5813
    %v5815 = vand.u32 %v5814, 4294901760
    %5816 = vmatpush1.msra.mxu0 %v5815
    %5817 = vmatprep.subr.mxu0 0.0
    %v5818 = vand.u32 %v869, 4294901760
    %v5819 = vsub.f32 %v869, %v5818
    %v5820 = vand.u32 %v5819, 4294901760
    %5821 = vmatpush1.msra.mxu0 %v5820
    %5822 = vmatprep.subr.mxu0 0.0
    %v5823 = vand.u32 %v868, 4294901760
    %v5824 = vsub.f32 %v868, %v5823
    %v5825 = vand.u32 %v5824, 4294901760
    %5826 = vmatpush1.msra.mxu0 %v5825
    %5827 = vmatprep.subr.mxu0 0.0
    %v5828 = vand.u32 %v867, 4294901760
    %v5829 = vsub.f32 %v867, %v5828
    %v5830 = vand.u32 %v5829, 4294901760
    %5831 = vmatpush1.msra.mxu0 %v5830
    %5832 = vmatprep.subr.mxu0 0.0
    %v5833 = vand.u32 %v866, 4294901760
    %v5834 = vsub.f32 %v866, %v5833
    %v5835 = vand.u32 %v5834, 4294901760
    %5836 = vmatpush1.msra.mxu0 %v5835
    %5837 = vmatprep.subr.mxu0 0.0
    %v5838 = vand.u32 %v865, 4294901760
    %v5839 = vsub.f32 %v865, %v5838
    %v5840 = vand.u32 %v5839, 4294901760
    %5841 = vmatpush1.msra.mxu0 %v5840
    %5842 = vmatprep.subr.mxu0 0.0
    %v5843 = vand.u32 %v864, 4294901760
    %v5844 = vsub.f32 %v864, %v5843
    %v5845 = vand.u32 %v5844, 4294901760
    %5846 = vmatpush1.msra.mxu0 %v5845
    %5847 = vmatprep.subr.mxu0 0.0
    %v5848 = vand.u32 %v863, 4294901760
    %v5849 = vsub.f32 %v863, %v5848
    %v5850 = vand.u32 %v5849, 4294901760
    %5851 = vmatpush1.msra.mxu0 %v5850
    %5852 = vmatprep.subr.mxu0 0.0
    %v5853 = vand.u32 %v862, 4294901760
    %v5854 = vsub.f32 %v862, %v5853
    %v5855 = vand.u32 %v5854, 4294901760
    %5856 = vmatpush1.msra.mxu0 %v5855
    %5857 = vmatprep.subr.mxu0 0.0
    %v5858 = vand.u32 %v861, 4294901760
    %v5859 = vsub.f32 %v861, %v5858
    %v5860 = vand.u32 %v5859, 4294901760
    %5861 = vmatpush1.msra.mxu0 %v5860
    %5862 = vmatprep.subr.mxu0 0.0
    %v5863 = vand.u32 %v860, 4294901760
    %v5864 = vsub.f32 %v860, %v5863
    %v5865 = vand.u32 %v5864, 4294901760
    %5866 = vmatpush1.msra.mxu0 %v5865
    %5867 = vmatprep.subr.mxu0 0.0
    %v5868 = vand.u32 %v859, 4294901760
    %v5869 = vsub.f32 %v859, %v5868
    %v5870 = vand.u32 %v5869, 4294901760
    %5871 = vmatpush1.msra.mxu0 %v5870
    %5872 = vmatprep.subr.mxu0 0.0
    %v5873 = vand.u32 %v858, 4294901760
    %v5874 = vsub.f32 %v858, %v5873
    %v5875 = vand.u32 %v5874, 4294901760
    %5876 = vmatpush1.msra.mxu0 %v5875
    %5877 = vmatprep.subr.mxu0 0.0
    %5878 = vmatpush2.msra.mxu0 0.0
    %5879 = vmatprep.subr.mxu0 0.0
    %5880 = vmatpush2.msra.mxu0 0.0
    %5881 = vmatprep.subr.mxu0 0.0
    %5882 = vmatpush2.msra.mxu0 0.0
    %5883 = vmatprep.subr.mxu0 0.0
    %5884 = vmatpush2.msra.mxu0 0.0
    %5885 = vmatprep.subr.mxu0 0.0
    %5886 = vmatpush2.msra.mxu0 0.0
    %5887 = vmatprep.subr.mxu0 0.0
    %5888 = vmatpush2.msra.mxu0 0.0
    %5889 = vmatprep.subr.mxu0 0.0
    %5890 = vmatpush2.msra.mxu0 0.0
    %5891 = vmatprep.subr.mxu0 0.0
    %5892 = vmatpush2.msra.mxu0 0.0
    %5893 = vmatprep.subr.mxu0 0.0
    %5894 = vmatpush2.msra.mxu0 0.0
    %5895 = vmatprep.subr.mxu0 0.0
    %5896 = vmatpush2.msra.mxu0 0.0
    %5897 = vmatprep.subr.mxu0 0.0
    %5898 = vmatpush2.msra.mxu0 0.0
    %5899 = vmatprep.subr.mxu0 0.0
    %5900 = vmatpush2.msra.mxu0 0.0
    %5901 = vmatprep.subr.mxu0 0.0
    %5902 = vmatpush2.msra.mxu0 0.0
    %5903 = vmatprep.subr.mxu0 0.0
    %5904 = vmatpush2.msra.mxu0 0.0
    %5905 = vmatprep.subr.mxu0 0.0
    %5906 = vmatpush2.msra.mxu0 0.0
    %5907 = vmatprep.subr.mxu0 0.0
    %5908 = vmatpush2.msra.mxu0 0.0
    %5909 = vmatprep.mubr.f32.mxu0 0.0
    %v5910 = vand.u32 %v5361, 4294901760
    %5911 = vmatmul.mubr.f32.gmra.mxu0 %v5910
    %v5912 = vpop.f32.mrf.mxu0
    %v5913 = vadd.f32 %v5794, %v5912
    %v5914 = vpop.f32.mrf.mxu0
    %5915 = vdwg.mxu0
    %5916 = vmatprep.subr.mxu0 0.0
    %v5917 = vand.u32 %v873, 4294901760
    %5918 = vmatpush1.msra.mxu0 %v5917
    %5919 = vmatprep.subr.mxu0 0.0
    %v5920 = vand.u32 %v872, 4294901760
    %5921 = vmatpush1.msra.mxu0 %v5920
    %5922 = vmatprep.subr.mxu0 0.0
    %v5923 = vand.u32 %v871, 4294901760
    %5924 = vmatpush1.msra.mxu0 %v5923
    %5925 = vmatprep.subr.mxu0 0.0
    %v5926 = vand.u32 %v870, 4294901760
    %5927 = vmatpush1.msra.mxu0 %v5926
    %5928 = vmatprep.subr.mxu0 0.0
    %v5929 = vand.u32 %v869, 4294901760
    %5930 = vmatpush1.msra.mxu0 %v5929
    %5931 = vmatprep.subr.mxu0 0.0
    %v5932 = vand.u32 %v868, 4294901760
    %5933 = vmatpush1.msra.mxu0 %v5932
    %5934 = vmatprep.subr.mxu0 0.0
    %v5935 = vand.u32 %v867, 4294901760
    %5936 = vmatpush1.msra.mxu0 %v5935
    %5937 = vmatprep.subr.mxu0 0.0
    %v5938 = vand.u32 %v866, 4294901760
    %5939 = vmatpush1.msra.mxu0 %v5938
    %5940 = vmatprep.subr.mxu0 0.0
    %v5941 = vand.u32 %v865, 4294901760
    %5942 = vmatpush1.msra.mxu0 %v5941
    %5943 = vmatprep.subr.mxu0 0.0
    %v5944 = vand.u32 %v864, 4294901760
    %5945 = vmatpush1.msra.mxu0 %v5944
    %5946 = vmatprep.subr.mxu0 0.0
    %v5947 = vand.u32 %v863, 4294901760
    %5948 = vmatpush1.msra.mxu0 %v5947
    %5949 = vmatprep.subr.mxu0 0.0
    %v5950 = vand.u32 %v862, 4294901760
    %5951 = vmatpush1.msra.mxu0 %v5950
    %5952 = vmatprep.subr.mxu0 0.0
    %v5953 = vand.u32 %v861, 4294901760
    %5954 = vmatpush1.msra.mxu0 %v5953
    %5955 = vmatprep.subr.mxu0 0.0
    %v5956 = vand.u32 %v860, 4294901760
    %5957 = vmatpush1.msra.mxu0 %v5956
    %5958 = vmatprep.subr.mxu0 0.0
    %v5959 = vand.u32 %v859, 4294901760
    %5960 = vmatpush1.msra.mxu0 %v5959
    %5961 = vmatprep.subr.mxu0 0.0
    %v5962 = vand.u32 %v858, 4294901760
    %5963 = vmatpush1.msra.mxu0 %v5962
    %5964 = vmatprep.subr.mxu0 0.0
    %5965 = vmatpush2.msra.mxu0 0.0
    %5966 = vmatprep.subr.mxu0 0.0
    %5967 = vmatpush2.msra.mxu0 0.0
    %5968 = vmatprep.subr.mxu0 0.0
    %5969 = vmatpush2.msra.mxu0 0.0
    %5970 = vmatprep.subr.mxu0 0.0
    %5971 = vmatpush2.msra.mxu0 0.0
    %5972 = vmatprep.subr.mxu0 0.0
    %5973 = vmatpush2.msra.mxu0 0.0
    %5974 = vmatprep.subr.mxu0 0.0
    %5975 = vmatpush2.msra.mxu0 0.0
    %5976 = vmatprep.subr.mxu0 0.0
    %5977 = vmatpush2.msra.mxu0 0.0
    %5978 = vmatprep.subr.mxu0 0.0
    %5979 = vmatpush2.msra.mxu0 0.0
    %5980 = vmatprep.subr.mxu0 0.0
    %5981 = vmatpush2.msra.mxu0 0.0
    %5982 = vmatprep.subr.mxu0 0.0
    %5983 = vmatpush2.msra.mxu0 0.0
    %5984 = vmatprep.subr.mxu0 0.0
    %5985 = vmatpush2.msra.mxu0 0.0
    %5986 = vmatprep.subr.mxu0 0.0
    %5987 = vmatpush2.msra.mxu0 0.0
    %5988 = vmatprep.subr.mxu0 0.0
    %5989 = vmatpush2.msra.mxu0 0.0
    %5990 = vmatprep.subr.mxu0 0.0
    %5991 = vmatpush2.msra.mxu0 0.0
    %5992 = vmatprep.subr.mxu0 0.0
    %5993 = vmatpush2.msra.mxu0 0.0
    %5994 = vmatprep.subr.mxu0 0.0
    %5995 = vmatpush2.msra.mxu0 0.0
    %5996 = vmatprep.mubr.f32.mxu0 0.0
    %v5997 = vand.u32 %v5361, 4294901760
    %5998 = vmatmul.mubr.f32.gmra.mxu0 %v5997
    %v5999 = vpop.f32.mrf.mxu0
    %v6000 = vadd.f32 %v5913, %v5999
    %v6001 = vpop.f32.mrf.mxu0
    %6002 = vdwg.mxu0
    %v6003 = vadd.f32 %v855, %v6000
    %v6004 = vtanh.pop %v6003
    %v6005 = vld [vmem:[#allocation2 + $0xa8] sm:$0xff]
    %v6006 = vld [vmem:[#allocation2 + $0xb0] sm:$0xff]
    %v6007 = vld [vmem:[#allocation2 + $0xb8] sm:$0xff]
    %v6008 = vld [vmem:[#allocation2 + $0xc0] sm:$0xff]
    %v6009 = vld [vmem:[#allocation2 + $0xc8] sm:$0xff]
    %v6010 = vld [vmem:[#allocation2 + $0xd0] sm:$0xff]
    %v6011 = vld [vmem:[#allocation2 + $0xd8] sm:$0xff]
    %v6012 = vld [vmem:[#allocation2 + $0xe0] sm:$0xff]
    %v6013 = vld [vmem:[#allocation2 + $0xe8] sm:$0xff]
    %v6014 = vld [vmem:[#allocation2 + $0xf0] sm:$0xff]
    %v6015 = vld [vmem:[#allocation2 + $0xf8] sm:$0xff]
    %v6016 = vld [vmem:[#allocation2 + $0x100] sm:$0xff]
    %v6017 = vld [vmem:[#allocation2 + $0x108] sm:$0xff]
    %v6018 = vld [vmem:[#allocation2 + $0x110] sm:$0xff]
    %v6019 = vld [vmem:[#allocation2 + $0x118] sm:$0xff]
    %v6020 = vld [vmem:[#allocation2 + $0x120] sm:$0xff]
    %v6021 = vld [vmem:[#allocation2 + $0x128] sm:$0x1]
    %v6022 = vlaneseq
    %v6023 = vshrl.u32 %v6022, 7
    %v6024 = vsub.s32 0, %v6023
    %v6025 = vrot.slane %v6021, %v6024
    %6026 = vmatprep.subr.mxu0 0.0
    %v6027 = vand.u32 %v6020, 4294901760
    %6028 = vmatpush1.msra.mxu0 %v6027
    %6029 = vmatprep.subr.mxu0 0.0
    %v6030 = vand.u32 %v6019, 4294901760
    %6031 = vmatpush1.msra.mxu0 %v6030
    %6032 = vmatprep.subr.mxu0 0.0
    %v6033 = vand.u32 %v6018, 4294901760
    %6034 = vmatpush1.msra.mxu0 %v6033
    %6035 = vmatprep.subr.mxu0 0.0
    %v6036 = vand.u32 %v6017, 4294901760
    %6037 = vmatpush1.msra.mxu0 %v6036
    %6038 = vmatprep.subr.mxu0 0.0
    %v6039 = vand.u32 %v6016, 4294901760
    %6040 = vmatpush1.msra.mxu0 %v6039
    %6041 = vmatprep.subr.mxu0 0.0
    %v6042 = vand.u32 %v6015, 4294901760
    %6043 = vmatpush1.msra.mxu0 %v6042
    %6044 = vmatprep.subr.mxu0 0.0
    %v6045 = vand.u32 %v6014, 4294901760
    %6046 = vmatpush1.msra.mxu0 %v6045
    %6047 = vmatprep.subr.mxu0 0.0
    %v6048 = vand.u32 %v6013, 4294901760
    %6049 = vmatpush1.msra.mxu0 %v6048
    %6050 = vmatprep.subr.mxu0 0.0
    %v6051 = vand.u32 %v6012, 4294901760
    %6052 = vmatpush1.msra.mxu0 %v6051
    %6053 = vmatprep.subr.mxu0 0.0
    %v6054 = vand.u32 %v6011, 4294901760
    %6055 = vmatpush1.msra.mxu0 %v6054
    %6056 = vmatprep.subr.mxu0 0.0
    %v6057 = vand.u32 %v6010, 4294901760
    %6058 = vmatpush1.msra.mxu0 %v6057
    %6059 = vmatprep.subr.mxu0 0.0
    %v6060 = vand.u32 %v6009, 4294901760
    %6061 = vmatpush1.msra.mxu0 %v6060
    %6062 = vmatprep.subr.mxu0 0.0
    %v6063 = vand.u32 %v6008, 4294901760
    %6064 = vmatpush1.msra.mxu0 %v6063
    %6065 = vmatprep.subr.mxu0 0.0
    %v6066 = vand.u32 %v6007, 4294901760
    %6067 = vmatpush1.msra.mxu0 %v6066
    %6068 = vmatprep.subr.mxu0 0.0
    %v6069 = vand.u32 %v6006, 4294901760
    %6070 = vmatpush1.msra.mxu0 %v6069
    %6071 = vmatprep.subr.mxu0 0.0
    %v6072 = vand.u32 %v6005, 4294901760
    %6073 = vmatpush1.msra.mxu0 %v6072
    %6074 = vmatprep.subr.mxu0 0.0
    %6075 = vmatpush2.msra.mxu0 0.0
    %6076 = vmatprep.subr.mxu0 0.0
    %6077 = vmatpush2.msra.mxu0 0.0
    %6078 = vmatprep.subr.mxu0 0.0
    %6079 = vmatpush2.msra.mxu0 0.0
    %6080 = vmatprep.subr.mxu0 0.0
    %6081 = vmatpush2.msra.mxu0 0.0
    %6082 = vmatprep.subr.mxu0 0.0
    %6083 = vmatpush2.msra.mxu0 0.0
    %6084 = vmatprep.subr.mxu0 0.0
    %6085 = vmatpush2.msra.mxu0 0.0
    %6086 = vmatprep.subr.mxu0 0.0
    %6087 = vmatpush2.msra.mxu0 0.0
    %6088 = vmatprep.subr.mxu0 0.0
    %6089 = vmatpush2.msra.mxu0 0.0
    %6090 = vmatprep.subr.mxu0 0.0
    %6091 = vmatpush2.msra.mxu0 0.0
    %6092 = vmatprep.subr.mxu0 0.0
    %6093 = vmatpush2.msra.mxu0 0.0
    %6094 = vmatprep.subr.mxu0 0.0
    %6095 = vmatpush2.msra.mxu0 0.0
    %6096 = vmatprep.subr.mxu0 0.0
    %6097 = vmatpush2.msra.mxu0 0.0
    %6098 = vmatprep.subr.mxu0 0.0
    %6099 = vmatpush2.msra.mxu0 0.0
    %6100 = vmatprep.subr.mxu0 0.0
    %6101 = vmatpush2.msra.mxu0 0.0
    %6102 = vmatprep.subr.mxu0 0.0
    %6103 = vmatpush2.msra.mxu0 0.0
    %6104 = vmatprep.subr.mxu0 0.0
    %6105 = vmatpush2.msra.mxu0 0.0
    %6106 = vmatprep.mubr.f32.mxu0 0.0
    %v6107 = vand.u32 %v6004, 4294901760
    %v6108 = vsub.f32 %v6004, %v6107
    %v6109 = vand.u32 %v6108, 4294901760
    %v6110 = vsub.f32 %v6108, %v6109
    %v6111 = vand.u32 %v6110, 4294901760
    %6112 = vmatmul.mubr.f32.gmra.mxu0 %v6111
    %v6113 = vpop.f32.mrf.mxu0
    %v6114 = vadd.f32 %v6025, %v6113
    %v6115 = vpop.f32.mrf.mxu0
    %6116 = vdwg.mxu0
    %6117 = vmatprep.subr.mxu0 0.0
    %v6118 = vand.u32 %v6020, 4294901760
    %v6119 = vsub.f32 %v6020, %v6118
    %v6120 = vand.u32 %v6119, 4294901760
    %v6121 = vsub.f32 %v6119, %v6120
    %v6122 = vand.u32 %v6121, 4294901760
    %6123 = vmatpush1.msra.mxu0 %v6122
    %6124 = vmatprep.subr.mxu0 0.0
    %v6125 = vand.u32 %v6019, 4294901760
    %v6126 = vsub.f32 %v6019, %v6125
    %v6127 = vand.u32 %v6126, 4294901760
    %v6128 = vsub.f32 %v6126, %v6127
    %v6129 = vand.u32 %v6128, 4294901760
    %6130 = vmatpush1.msra.mxu0 %v6129
    %6131 = vmatprep.subr.mxu0 0.0
    %v6132 = vand.u32 %v6018, 4294901760
    %v6133 = vsub.f32 %v6018, %v6132
    %v6134 = vand.u32 %v6133, 4294901760
    %v6135 = vsub.f32 %v6133, %v6134
    %v6136 = vand.u32 %v6135, 4294901760
    %6137 = vmatpush1.msra.mxu0 %v6136
    %6138 = vmatprep.subr.mxu0 0.0
    %v6139 = vand.u32 %v6017, 4294901760
    %v6140 = vsub.f32 %v6017, %v6139
    %v6141 = vand.u32 %v6140, 4294901760
    %v6142 = vsub.f32 %v6140, %v6141
    %v6143 = vand.u32 %v6142, 4294901760
    %6144 = vmatpush1.msra.mxu0 %v6143
    %6145 = vmatprep.subr.mxu0 0.0
    %v6146 = vand.u32 %v6016, 4294901760
    %v6147 = vsub.f32 %v6016, %v6146
    %v6148 = vand.u32 %v6147, 4294901760
    %v6149 = vsub.f32 %v6147, %v6148
    %v6150 = vand.u32 %v6149, 4294901760
    %6151 = vmatpush1.msra.mxu0 %v6150
    %6152 = vmatprep.subr.mxu0 0.0
    %v6153 = vand.u32 %v6015, 4294901760
    %v6154 = vsub.f32 %v6015, %v6153
    %v6155 = vand.u32 %v6154, 4294901760
    %v6156 = vsub.f32 %v6154, %v6155
    %v6157 = vand.u32 %v6156, 4294901760
    %6158 = vmatpush1.msra.mxu0 %v6157
    %6159 = vmatprep.subr.mxu0 0.0
    %v6160 = vand.u32 %v6014, 4294901760
    %v6161 = vsub.f32 %v6014, %v6160
    %v6162 = vand.u32 %v6161, 4294901760
    %v6163 = vsub.f32 %v6161, %v6162
    %v6164 = vand.u32 %v6163, 4294901760
    %6165 = vmatpush1.msra.mxu0 %v6164
    %6166 = vmatprep.subr.mxu0 0.0
    %v6167 = vand.u32 %v6013, 4294901760
    %v6168 = vsub.f32 %v6013, %v6167
    %v6169 = vand.u32 %v6168, 4294901760
    %v6170 = vsub.f32 %v6168, %v6169
    %v6171 = vand.u32 %v6170, 4294901760
    %6172 = vmatpush1.msra.mxu0 %v6171
    %6173 = vmatprep.subr.mxu0 0.0
    %v6174 = vand.u32 %v6012, 4294901760
    %v6175 = vsub.f32 %v6012, %v6174
    %v6176 = vand.u32 %v6175, 4294901760
    %v6177 = vsub.f32 %v6175, %v6176
    %v6178 = vand.u32 %v6177, 4294901760
    %6179 = vmatpush1.msra.mxu0 %v6178
    %6180 = vmatprep.subr.mxu0 0.0
    %v6181 = vand.u32 %v6011, 4294901760
    %v6182 = vsub.f32 %v6011, %v6181
    %v6183 = vand.u32 %v6182, 4294901760
    %v6184 = vsub.f32 %v6182, %v6183
    %v6185 = vand.u32 %v6184, 4294901760
    %6186 = vmatpush1.msra.mxu0 %v6185
    %6187 = vmatprep.subr.mxu0 0.0
    %v6188 = vand.u32 %v6010, 4294901760
    %v6189 = vsub.f32 %v6010, %v6188
    %v6190 = vand.u32 %v6189, 4294901760
    %v6191 = vsub.f32 %v6189, %v6190
    %v6192 = vand.u32 %v6191, 4294901760
    %6193 = vmatpush1.msra.mxu0 %v6192
    %6194 = vmatprep.subr.mxu0 0.0
    %v6195 = vand.u32 %v6009, 4294901760
    %v6196 = vsub.f32 %v6009, %v6195
    %v6197 = vand.u32 %v6196, 4294901760
    %v6198 = vsub.f32 %v6196, %v6197
    %v6199 = vand.u32 %v6198, 4294901760
    %6200 = vmatpush1.msra.mxu0 %v6199
    %6201 = vmatprep.subr.mxu0 0.0
    %v6202 = vand.u32 %v6008, 4294901760
    %v6203 = vsub.f32 %v6008, %v6202
    %v6204 = vand.u32 %v6203, 4294901760
    %v6205 = vsub.f32 %v6203, %v6204
    %v6206 = vand.u32 %v6205, 4294901760
    %6207 = vmatpush1.msra.mxu0 %v6206
    %6208 = vmatprep.subr.mxu0 0.0
    %v6209 = vand.u32 %v6007, 4294901760
    %v6210 = vsub.f32 %v6007, %v6209
    %v6211 = vand.u32 %v6210, 4294901760
    %v6212 = vsub.f32 %v6210, %v6211
    %v6213 = vand.u32 %v6212, 4294901760
    %6214 = vmatpush1.msra.mxu0 %v6213
    %6215 = vmatprep.subr.mxu0 0.0
    %v6216 = vand.u32 %v6006, 4294901760
    %v6217 = vsub.f32 %v6006, %v6216
    %v6218 = vand.u32 %v6217, 4294901760
    %v6219 = vsub.f32 %v6217, %v6218
    %v6220 = vand.u32 %v6219, 4294901760
    %6221 = vmatpush1.msra.mxu0 %v6220
    %6222 = vmatprep.subr.mxu0 0.0
    %v6223 = vand.u32 %v6005, 4294901760
    %v6224 = vsub.f32 %v6005, %v6223
    %v6225 = vand.u32 %v6224, 4294901760
    %v6226 = vsub.f32 %v6224, %v6225
    %v6227 = vand.u32 %v6226, 4294901760
    %6228 = vmatpush1.msra.mxu0 %v6227
    %6229 = vmatprep.subr.mxu0 0.0
    %6230 = vmatpush2.msra.mxu0 0.0
    %6231 = vmatprep.subr.mxu0 0.0
    %6232 = vmatpush2.msra.mxu0 0.0
    %6233 = vmatprep.subr.mxu0 0.0
    %6234 = vmatpush2.msra.mxu0 0.0
    %6235 = vmatprep.subr.mxu0 0.0
    %6236 = vmatpush2.msra.mxu0 0.0
    %6237 = vmatprep.subr.mxu0 0.0
    %6238 = vmatpush2.msra.mxu0 0.0
    %6239 = vmatprep.subr.mxu0 0.0
    %6240 = vmatpush2.msra.mxu0 0.0
    %6241 = vmatprep.subr.mxu0 0.0
    %6242 = vmatpush2.msra.mxu0 0.0
    %6243 = vmatprep.subr.mxu0 0.0
    %6244 = vmatpush2.msra.mxu0 0.0
    %6245 = vmatprep.subr.mxu0 0.0
    %6246 = vmatpush2.msra.mxu0 0.0
    %6247 = vmatprep.subr.mxu0 0.0
    %6248 = vmatpush2.msra.mxu0 0.0
    %6249 = vmatprep.subr.mxu0 0.0
    %6250 = vmatpush2.msra.mxu0 0.0
    %6251 = vmatprep.subr.mxu0 0.0
    %6252 = vmatpush2.msra.mxu0 0.0
    %6253 = vmatprep.subr.mxu0 0.0
    %6254 = vmatpush2.msra.mxu0 0.0
    %6255 = vmatprep.subr.mxu0 0.0
    %6256 = vmatpush2.msra.mxu0 0.0
    %6257 = vmatprep.subr.mxu0 0.0
    %6258 = vmatpush2.msra.mxu0 0.0
    %6259 = vmatprep.subr.mxu0 0.0
    %6260 = vmatpush2.msra.mxu0 0.0
    %6261 = vmatprep.mubr.f32.mxu0 0.0
    %v6262 = vand.u32 %v6004, 4294901760
    %6263 = vmatmul.mubr.f32.gmra.mxu0 %v6262
    %v6264 = vpop.f32.mrf.mxu0
    %v6265 = vadd.f32 %v6114, %v6264
    %v6266 = vpop.f32.mrf.mxu0
    %6267 = vdwg.mxu0
    %6268 = vmatprep.subr.mxu0 0.0
    %v6269 = vand.u32 %v6020, 4294901760
    %v6270 = vsub.f32 %v6020, %v6269
    %6271 = vmatpush1.msra.mxu0 %v6270
    %6272 = vmatprep.subr.mxu0 0.0
    %v6273 = vand.u32 %v6019, 4294901760
    %v6274 = vsub.f32 %v6019, %v6273
    %6275 = vmatpush1.msra.mxu0 %v6274
    %6276 = vmatprep.subr.mxu0 0.0
    %v6277 = vand.u32 %v6018, 4294901760
    %v6278 = vsub.f32 %v6018, %v6277
    %6279 = vmatpush1.msra.mxu0 %v6278
    %6280 = vmatprep.subr.mxu0 0.0
    %v6281 = vand.u32 %v6017, 4294901760
    %v6282 = vsub.f32 %v6017, %v6281
    %6283 = vmatpush1.msra.mxu0 %v6282
    %6284 = vmatprep.subr.mxu0 0.0
    %v6285 = vand.u32 %v6016, 4294901760
    %v6286 = vsub.f32 %v6016, %v6285
    %6287 = vmatpush1.msra.mxu0 %v6286
    %6288 = vmatprep.subr.mxu0 0.0
    %v6289 = vand.u32 %v6015, 4294901760
    %v6290 = vsub.f32 %v6015, %v6289
    %6291 = vmatpush1.msra.mxu0 %v6290
    %6292 = vmatprep.subr.mxu0 0.0
    %v6293 = vand.u32 %v6014, 4294901760
    %v6294 = vsub.f32 %v6014, %v6293
    %6295 = vmatpush1.msra.mxu0 %v6294
    %6296 = vmatprep.subr.mxu0 0.0
    %v6297 = vand.u32 %v6013, 4294901760
    %v6298 = vsub.f32 %v6013, %v6297
    %6299 = vmatpush1.msra.mxu0 %v6298
    %6300 = vmatprep.subr.mxu0 0.0
    %v6301 = vand.u32 %v6012, 4294901760
    %v6302 = vsub.f32 %v6012, %v6301
    %6303 = vmatpush1.msra.mxu0 %v6302
    %6304 = vmatprep.subr.mxu0 0.0
    %v6305 = vand.u32 %v6011, 4294901760
    %v6306 = vsub.f32 %v6011, %v6305
    %6307 = vmatpush1.msra.mxu0 %v6306
    %6308 = vmatprep.subr.mxu0 0.0
    %v6309 = vand.u32 %v6010, 4294901760
    %v6310 = vsub.f32 %v6010, %v6309
    %6311 = vmatpush1.msra.mxu0 %v6310
    %6312 = vmatprep.subr.mxu0 0.0
    %v6313 = vand.u32 %v6009, 4294901760
    %v6314 = vsub.f32 %v6009, %v6313
    %6315 = vmatpush1.msra.mxu0 %v6314
    %6316 = vmatprep.subr.mxu0 0.0
    %v6317 = vand.u32 %v6008, 4294901760
    %v6318 = vsub.f32 %v6008, %v6317
    %6319 = vmatpush1.msra.mxu0 %v6318
    %6320 = vmatprep.subr.mxu0 0.0
    %v6321 = vand.u32 %v6007, 4294901760
    %v6322 = vsub.f32 %v6007, %v6321
    %6323 = vmatpush1.msra.mxu0 %v6322
    %6324 = vmatprep.subr.mxu0 0.0
    %v6325 = vand.u32 %v6006, 4294901760
    %v6326 = vsub.f32 %v6006, %v6325
    %6327 = vmatpush1.msra.mxu0 %v6326
    %6328 = vmatprep.subr.mxu0 0.0
    %v6329 = vand.u32 %v6005, 4294901760
    %v6330 = vsub.f32 %v6005, %v6329
    %6331 = vmatpush1.msra.mxu0 %v6330
    %6332 = vmatprep.subr.mxu0 0.0
    %6333 = vmatpush2.msra.mxu0 0.0
    %6334 = vmatprep.subr.mxu0 0.0
    %6335 = vmatpush2.msra.mxu0 0.0
    %6336 = vmatprep.subr.mxu0 0.0
    %6337 = vmatpush2.msra.mxu0 0.0
    %6338 = vmatprep.subr.mxu0 0.0
    %6339 = vmatpush2.msra.mxu0 0.0
    %6340 = vmatprep.subr.mxu0 0.0
    %6341 = vmatpush2.msra.mxu0 0.0
    %6342 = vmatprep.subr.mxu0 0.0
    %6343 = vmatpush2.msra.mxu0 0.0
    %6344 = vmatprep.subr.mxu0 0.0
    %6345 = vmatpush2.msra.mxu0 0.0
    %6346 = vmatprep.subr.mxu0 0.0
    %6347 = vmatpush2.msra.mxu0 0.0
    %6348 = vmatprep.subr.mxu0 0.0
    %6349 = vmatpush2.msra.mxu0 0.0
    %6350 = vmatprep.subr.mxu0 0.0
    %6351 = vmatpush2.msra.mxu0 0.0
    %6352 = vmatprep.subr.mxu0 0.0
    %6353 = vmatpush2.msra.mxu0 0.0
    %6354 = vmatprep.subr.mxu0 0.0
    %6355 = vmatpush2.msra.mxu0 0.0
    %6356 = vmatprep.subr.mxu0 0.0
    %6357 = vmatpush2.msra.mxu0 0.0
    %6358 = vmatprep.subr.mxu0 0.0
    %6359 = vmatpush2.msra.mxu0 0.0
    %6360 = vmatprep.subr.mxu0 0.0
    %6361 = vmatpush2.msra.mxu0 0.0
    %6362 = vmatprep.subr.mxu0 0.0
    %6363 = vmatpush2.msra.mxu0 0.0
    %6364 = vmatprep.mubr.f32.mxu0 0.0
    %v6365 = vand.u32 %v6004, 4294901760
    %v6366 = vsub.f32 %v6004, %v6365
    %6367 = vmatmul.mubr.f32.gmra.mxu0 %v6366
    %v6368 = vpop.f32.mrf.mxu0
    %v6369 = vadd.f32 %v6265, %v6368
    %v6370 = vpop.f32.mrf.mxu0
    %6371 = vdwg.mxu0
    %6372 = vmatprep.subr.mxu0 0.0
    %v6373 = vand.u32 %v6020, 4294901760
    %6374 = vmatpush1.msra.mxu0 %v6373
    %6375 = vmatprep.subr.mxu0 0.0
    %v6376 = vand.u32 %v6019, 4294901760
    %6377 = vmatpush1.msra.mxu0 %v6376
    %6378 = vmatprep.subr.mxu0 0.0
    %v6379 = vand.u32 %v6018, 4294901760
    %6380 = vmatpush1.msra.mxu0 %v6379
    %6381 = vmatprep.subr.mxu0 0.0
    %v6382 = vand.u32 %v6017, 4294901760
    %6383 = vmatpush1.msra.mxu0 %v6382
    %6384 = vmatprep.subr.mxu0 0.0
    %v6385 = vand.u32 %v6016, 4294901760
    %6386 = vmatpush1.msra.mxu0 %v6385
    %6387 = vmatprep.subr.mxu0 0.0
    %v6388 = vand.u32 %v6015, 4294901760
    %6389 = vmatpush1.msra.mxu0 %v6388
    %6390 = vmatprep.subr.mxu0 0.0
    %v6391 = vand.u32 %v6014, 4294901760
    %6392 = vmatpush1.msra.mxu0 %v6391
    %6393 = vmatprep.subr.mxu0 0.0
    %v6394 = vand.u32 %v6013, 4294901760
    %6395 = vmatpush1.msra.mxu0 %v6394
    %6396 = vmatprep.subr.mxu0 0.0
    %v6397 = vand.u32 %v6012, 4294901760
    %6398 = vmatpush1.msra.mxu0 %v6397
    %6399 = vmatprep.subr.mxu0 0.0
    %v6400 = vand.u32 %v6011, 4294901760
    %6401 = vmatpush1.msra.mxu0 %v6400
    %6402 = vmatprep.subr.mxu0 0.0
    %v6403 = vand.u32 %v6010, 4294901760
    %6404 = vmatpush1.msra.mxu0 %v6403
    %6405 = vmatprep.subr.mxu0 0.0
    %v6406 = vand.u32 %v6009, 4294901760
    %6407 = vmatpush1.msra.mxu0 %v6406
    %6408 = vmatprep.subr.mxu0 0.0
    %v6409 = vand.u32 %v6008, 4294901760
    %6410 = vmatpush1.msra.mxu0 %v6409
    %6411 = vmatprep.subr.mxu0 0.0
    %v6412 = vand.u32 %v6007, 4294901760
    %6413 = vmatpush1.msra.mxu0 %v6412
    %6414 = vmatprep.subr.mxu0 0.0
    %v6415 = vand.u32 %v6006, 4294901760
    %6416 = vmatpush1.msra.mxu0 %v6415
    %6417 = vmatprep.subr.mxu0 0.0
    %v6418 = vand.u32 %v6005, 4294901760
    %6419 = vmatpush1.msra.mxu0 %v6418
    %6420 = vmatprep.subr.mxu0 0.0
    %6421 = vmatpush2.msra.mxu0 0.0
    %6422 = vmatprep.subr.mxu0 0.0
    %6423 = vmatpush2.msra.mxu0 0.0
    %6424 = vmatprep.subr.mxu0 0.0
    %6425 = vmatpush2.msra.mxu0 0.0
    %6426 = vmatprep.subr.mxu0 0.0
    %6427 = vmatpush2.msra.mxu0 0.0
    %6428 = vmatprep.subr.mxu0 0.0
    %6429 = vmatpush2.msra.mxu0 0.0
    %6430 = vmatprep.subr.mxu0 0.0
    %6431 = vmatpush2.msra.mxu0 0.0
    %6432 = vmatprep.subr.mxu0 0.0
    %6433 = vmatpush2.msra.mxu0 0.0
    %6434 = vmatprep.subr.mxu0 0.0
    %6435 = vmatpush2.msra.mxu0 0.0
    %6436 = vmatprep.subr.mxu0 0.0
    %6437 = vmatpush2.msra.mxu0 0.0
    %6438 = vmatprep.subr.mxu0 0.0
    %6439 = vmatpush2.msra.mxu0 0.0
    %6440 = vmatprep.subr.mxu0 0.0
    %6441 = vmatpush2.msra.mxu0 0.0
    %6442 = vmatprep.subr.mxu0 0.0
    %6443 = vmatpush2.msra.mxu0 0.0
    %6444 = vmatprep.subr.mxu0 0.0
    %6445 = vmatpush2.msra.mxu0 0.0
    %6446 = vmatprep.subr.mxu0 0.0
    %6447 = vmatpush2.msra.mxu0 0.0
    %6448 = vmatprep.subr.mxu0 0.0
    %6449 = vmatpush2.msra.mxu0 0.0
    %6450 = vmatprep.subr.mxu0 0.0
    %6451 = vmatpush2.msra.mxu0 0.0
    %6452 = vmatprep.mubr.f32.mxu0 0.0
    %v6453 = vand.u32 %v6004, 4294901760
    %v6454 = vsub.f32 %v6004, %v6453
    %v6455 = vand.u32 %v6454, 4294901760
    %6456 = vmatmul.mubr.f32.gmra.mxu0 %v6455
    %v6457 = vpop.f32.mrf.mxu0
    %v6458 = vadd.f32 %v6369, %v6457
    %v6459 = vpop.f32.mrf.mxu0
    %6460 = vdwg.mxu0
    %6461 = vmatprep.subr.mxu0 0.0
    %v6462 = vand.u32 %v6020, 4294901760
    %v6463 = vsub.f32 %v6020, %v6462
    %v6464 = vand.u32 %v6463, 4294901760
    %6465 = vmatpush1.msra.mxu0 %v6464
    %6466 = vmatprep.subr.mxu0 0.0
    %v6467 = vand.u32 %v6019, 4294901760
    %v6468 = vsub.f32 %v6019, %v6467
    %v6469 = vand.u32 %v6468, 4294901760
    %6470 = vmatpush1.msra.mxu0 %v6469
    %6471 = vmatprep.subr.mxu0 0.0
    %v6472 = vand.u32 %v6018, 4294901760
    %v6473 = vsub.f32 %v6018, %v6472
    %v6474 = vand.u32 %v6473, 4294901760
    %6475 = vmatpush1.msra.mxu0 %v6474
    %6476 = vmatprep.subr.mxu0 0.0
    %v6477 = vand.u32 %v6017, 4294901760
    %v6478 = vsub.f32 %v6017, %v6477
    %v6479 = vand.u32 %v6478, 4294901760
    %6480 = vmatpush1.msra.mxu0 %v6479
    %6481 = vmatprep.subr.mxu0 0.0
    %v6482 = vand.u32 %v6016, 4294901760
    %v6483 = vsub.f32 %v6016, %v6482
    %v6484 = vand.u32 %v6483, 4294901760
    %6485 = vmatpush1.msra.mxu0 %v6484
    %6486 = vmatprep.subr.mxu0 0.0
    %v6487 = vand.u32 %v6015, 4294901760
    %v6488 = vsub.f32 %v6015, %v6487
    %v6489 = vand.u32 %v6488, 4294901760
    %6490 = vmatpush1.msra.mxu0 %v6489
    %6491 = vmatprep.subr.mxu0 0.0
    %v6492 = vand.u32 %v6014, 4294901760
    %v6493 = vsub.f32 %v6014, %v6492
    %v6494 = vand.u32 %v6493, 4294901760
    %6495 = vmatpush1.msra.mxu0 %v6494
    %6496 = vmatprep.subr.mxu0 0.0
    %v6497 = vand.u32 %v6013, 4294901760
    %v6498 = vsub.f32 %v6013, %v6497
    %v6499 = vand.u32 %v6498, 4294901760
    %6500 = vmatpush1.msra.mxu0 %v6499
    %6501 = vmatprep.subr.mxu0 0.0
    %v6502 = vand.u32 %v6012, 4294901760
    %v6503 = vsub.f32 %v6012, %v6502
    %v6504 = vand.u32 %v6503, 4294901760
    %6505 = vmatpush1.msra.mxu0 %v6504
    %6506 = vmatprep.subr.mxu0 0.0
    %v6507 = vand.u32 %v6011, 4294901760
    %v6508 = vsub.f32 %v6011, %v6507
    %v6509 = vand.u32 %v6508, 4294901760
    %6510 = vmatpush1.msra.mxu0 %v6509
    %6511 = vmatprep.subr.mxu0 0.0
    %v6512 = vand.u32 %v6010, 4294901760
    %v6513 = vsub.f32 %v6010, %v6512
    %v6514 = vand.u32 %v6513, 4294901760
    %6515 = vmatpush1.msra.mxu0 %v6514
    %6516 = vmatprep.subr.mxu0 0.0
    %v6517 = vand.u32 %v6009, 4294901760
    %v6518 = vsub.f32 %v6009, %v6517
    %v6519 = vand.u32 %v6518, 4294901760
    %6520 = vmatpush1.msra.mxu0 %v6519
    %6521 = vmatprep.subr.mxu0 0.0
    %v6522 = vand.u32 %v6008, 4294901760
    %v6523 = vsub.f32 %v6008, %v6522
    %v6524 = vand.u32 %v6523, 4294901760
    %6525 = vmatpush1.msra.mxu0 %v6524
    %6526 = vmatprep.subr.mxu0 0.0
    %v6527 = vand.u32 %v6007, 4294901760
    %v6528 = vsub.f32 %v6007, %v6527
    %v6529 = vand.u32 %v6528, 4294901760
    %6530 = vmatpush1.msra.mxu0 %v6529
    %6531 = vmatprep.subr.mxu0 0.0
    %v6532 = vand.u32 %v6006, 4294901760
    %v6533 = vsub.f32 %v6006, %v6532
    %v6534 = vand.u32 %v6533, 4294901760
    %6535 = vmatpush1.msra.mxu0 %v6534
    %6536 = vmatprep.subr.mxu0 0.0
    %v6537 = vand.u32 %v6005, 4294901760
    %v6538 = vsub.f32 %v6005, %v6537
    %v6539 = vand.u32 %v6538, 4294901760
    %6540 = vmatpush1.msra.mxu0 %v6539
    %6541 = vmatprep.subr.mxu0 0.0
    %6542 = vmatpush2.msra.mxu0 0.0
    %6543 = vmatprep.subr.mxu0 0.0
    %6544 = vmatpush2.msra.mxu0 0.0
    %6545 = vmatprep.subr.mxu0 0.0
    %6546 = vmatpush2.msra.mxu0 0.0
    %6547 = vmatprep.subr.mxu0 0.0
    %6548 = vmatpush2.msra.mxu0 0.0
    %6549 = vmatprep.subr.mxu0 0.0
    %6550 = vmatpush2.msra.mxu0 0.0
    %6551 = vmatprep.subr.mxu0 0.0
    %6552 = vmatpush2.msra.mxu0 0.0
    %6553 = vmatprep.subr.mxu0 0.0
    %6554 = vmatpush2.msra.mxu0 0.0
    %6555 = vmatprep.subr.mxu0 0.0
    %6556 = vmatpush2.msra.mxu0 0.0
    %6557 = vmatprep.subr.mxu0 0.0
    %6558 = vmatpush2.msra.mxu0 0.0
    %6559 = vmatprep.subr.mxu0 0.0
    %6560 = vmatpush2.msra.mxu0 0.0
    %6561 = vmatprep.subr.mxu0 0.0
    %6562 = vmatpush2.msra.mxu0 0.0
    %6563 = vmatprep.subr.mxu0 0.0
    %6564 = vmatpush2.msra.mxu0 0.0
    %6565 = vmatprep.subr.mxu0 0.0
    %6566 = vmatpush2.msra.mxu0 0.0
    %6567 = vmatprep.subr.mxu0 0.0
    %6568 = vmatpush2.msra.mxu0 0.0
    %6569 = vmatprep.subr.mxu0 0.0
    %6570 = vmatpush2.msra.mxu0 0.0
    %6571 = vmatprep.subr.mxu0 0.0
    %6572 = vmatpush2.msra.mxu0 0.0
    %6573 = vmatprep.mubr.f32.mxu0 0.0
    %v6574 = vand.u32 %v6004, 4294901760
    %6575 = vmatmul.mubr.f32.gmra.mxu0 %v6574
    %v6576 = vpop.f32.mrf.mxu0
    %v6577 = vadd.f32 %v6458, %v6576
    %v6578 = vpop.f32.mrf.mxu0
    %6579 = vdwg.mxu0
    %6580 = vmatprep.subr.mxu0 0.0
    %v6581 = vand.u32 %v6020, 4294901760
    %6582 = vmatpush1.msra.mxu0 %v6581
    %6583 = vmatprep.subr.mxu0 0.0
    %v6584 = vand.u32 %v6019, 4294901760
    %6585 = vmatpush1.msra.mxu0 %v6584
    %6586 = vmatprep.subr.mxu0 0.0
    %v6587 = vand.u32 %v6018, 4294901760
    %6588 = vmatpush1.msra.mxu0 %v6587
    %6589 = vmatprep.subr.mxu0 0.0
    %v6590 = vand.u32 %v6017, 4294901760
    %6591 = vmatpush1.msra.mxu0 %v6590
    %6592 = vmatprep.subr.mxu0 0.0
    %v6593 = vand.u32 %v6016, 4294901760
    %6594 = vmatpush1.msra.mxu0 %v6593
    %6595 = vmatprep.subr.mxu0 0.0
    %v6596 = vand.u32 %v6015, 4294901760
    %6597 = vmatpush1.msra.mxu0 %v6596
    %6598 = vmatprep.subr.mxu0 0.0
    %v6599 = vand.u32 %v6014, 4294901760
    %6600 = vmatpush1.msra.mxu0 %v6599
    %6601 = vmatprep.subr.mxu0 0.0
    %v6602 = vand.u32 %v6013, 4294901760
    %6603 = vmatpush1.msra.mxu0 %v6602
    %6604 = vmatprep.subr.mxu0 0.0
    %v6605 = vand.u32 %v6012, 4294901760
    %6606 = vmatpush1.msra.mxu0 %v6605
    %6607 = vmatprep.subr.mxu0 0.0
    %v6608 = vand.u32 %v6011, 4294901760
    %6609 = vmatpush1.msra.mxu0 %v6608
    %6610 = vmatprep.subr.mxu0 0.0
    %v6611 = vand.u32 %v6010, 4294901760
    %6612 = vmatpush1.msra.mxu0 %v6611
    %6613 = vmatprep.subr.mxu0 0.0
    %v6614 = vand.u32 %v6009, 4294901760
    %6615 = vmatpush1.msra.mxu0 %v6614
    %6616 = vmatprep.subr.mxu0 0.0
    %v6617 = vand.u32 %v6008, 4294901760
    %6618 = vmatpush1.msra.mxu0 %v6617
    %6619 = vmatprep.subr.mxu0 0.0
    %v6620 = vand.u32 %v6007, 4294901760
    %6621 = vmatpush1.msra.mxu0 %v6620
    %6622 = vmatprep.subr.mxu0 0.0
    %v6623 = vand.u32 %v6006, 4294901760
    %6624 = vmatpush1.msra.mxu0 %v6623
    %6625 = vmatprep.subr.mxu0 0.0
    %v6626 = vand.u32 %v6005, 4294901760
    %6627 = vmatpush1.msra.mxu0 %v6626
    %6628 = vmatprep.subr.mxu0 0.0
    %6629 = vmatpush2.msra.mxu0 0.0
    %6630 = vmatprep.subr.mxu0 0.0
    %6631 = vmatpush2.msra.mxu0 0.0
    %6632 = vmatprep.subr.mxu0 0.0
    %6633 = vmatpush2.msra.mxu0 0.0
    %6634 = vmatprep.subr.mxu0 0.0
    %6635 = vmatpush2.msra.mxu0 0.0
    %6636 = vmatprep.subr.mxu0 0.0
    %6637 = vmatpush2.msra.mxu0 0.0
    %6638 = vmatprep.subr.mxu0 0.0
    %6639 = vmatpush2.msra.mxu0 0.0
    %6640 = vmatprep.subr.mxu0 0.0
    %6641 = vmatpush2.msra.mxu0 0.0
    %6642 = vmatprep.subr.mxu0 0.0
    %6643 = vmatpush2.msra.mxu0 0.0
    %6644 = vmatprep.subr.mxu0 0.0
    %6645 = vmatpush2.msra.mxu0 0.0
    %6646 = vmatprep.subr.mxu0 0.0
    %6647 = vmatpush2.msra.mxu0 0.0
    %6648 = vmatprep.subr.mxu0 0.0
    %6649 = vmatpush2.msra.mxu0 0.0
    %6650 = vmatprep.subr.mxu0 0.0
    %6651 = vmatpush2.msra.mxu0 0.0
    %6652 = vmatprep.subr.mxu0 0.0
    %6653 = vmatpush2.msra.mxu0 0.0
    %6654 = vmatprep.subr.mxu0 0.0
    %6655 = vmatpush2.msra.mxu0 0.0
    %6656 = vmatprep.subr.mxu0 0.0
    %6657 = vmatpush2.msra.mxu0 0.0
    %6658 = vmatprep.subr.mxu0 0.0
    %6659 = vmatpush2.msra.mxu0 0.0
    %6660 = vmatprep.mubr.f32.mxu0 0.0
    %v6661 = vand.u32 %v6004, 4294901760
    %6662 = vmatmul.mubr.f32.gmra.mxu0 %v6661
    %v6663 = vpop.f32.mrf.mxu0
    %v6664 = vadd.f32 %v6577, %v6663
    %v6665 = vpop.f32.mrf.mxu0
    %6666 = vdwg.mxu0
    %6667 = vst [vmem:[#allocation5] sm:$0xff] %v6664
    // Predicated region
    $region14: #{tpu_custom_call.1} parent=1 // pred_check
      _
    $region15: #{tpu_custom_call.1} parent=1 // pred_check_branch
      %6669 = sbr.rel (0) target = $region17
    $region16: #{tpu_custom_call.1} parent=1 // pred_region
      %s6671 = ssub.s32 128, 128
      %6672 = vsyncadd [#allocation4], %s6671
      %s6674 = sshll.u32 [#allocation5], 4
      %s6675 = int_to_ptr.vmem [resolvable:$true] %s6674
      %6677 = dma.vmem_to_hbm [thread:$0]  %s6675, 128, %s2, [#allocation4]
    $region17: #{tpu_custom_call.1} parent=1 // pred_fallthru
      _
    // Predicated region
    $region18: #{tpu_custom_call.1} parent=1 // pred_check
      _
    $region19: #{tpu_custom_call.1} parent=1 // pred_check_branch
      %6679 = sbr.rel (0) target = $region21
    $region20: #{tpu_custom_call.1} parent=1 // pred_region
      %6680 = dma.done [#allocation4], 128
    $region21: #{tpu_custom_call.1} parent=1 // pred_fallthru
      _
    %6681 = vsyncpa [#allocation3], 1
    %6682 = vsyncpa [#allocation4], 1

</llo_original>
